<compile_context>
chip_gen: v7x
topology: tpu7x:2x2x1
jax: 0.10.0
libtpu: 0.0.40
codegen_flags: <defaults>
</compile_context>

<pallas_src>
import jax
import jax.numpy as jnp
from jax import lax
from jax.experimental import pallas as pl
from jax.experimental.pallas import tpu as pltpu


def _im2col_3x3(dst_ref, src_ref, border, B, H, W, Cin):
    """Scatter the 9 3x3 taps of src_ref (B,H,W,Cin) into dst_ref (B,H,W,9*Cin).

    Out-of-bounds taps take the per-channel `border` value (shape (1,1,1,Cin),
    same dtype as dst). Writes are thin border strips plus one in-bounds
    rectangle per tap (no full-buffer zero fill, no padded copy).
    """
    border_row = jnp.broadcast_to(border, (B, 1, W, Cin))   # hoisted (no CSE in loop)
    border_col = jnp.broadcast_to(border, (B, H, 1, Cin))
    for dy in range(3):
        for dx in range(3):
            oy, ox = dy - 1, dx - 1
            j0 = (dy * 3 + dx) * Cin
            j1 = j0 + Cin
            if oy == -1:
                dst_ref[:, 0:1, :, j0:j1] = border_row
            elif oy == 1:
                dst_ref[:, H - 1:H, :, j0:j1] = border_row
            if ox == -1:
                dst_ref[:, :, 0:1, j0:j1] = border_col
            elif ox == 1:
                dst_ref[:, :, W - 1:W, j0:j1] = border_col
            y0, y1 = max(0, -oy), H - max(0, oy)
            x0, x1 = max(0, -ox), W - max(0, ox)
            dst_ref[:, y0:y1, x0:x1, j0:j1] = (
                src_ref[:, y0 + oy:y1 + oy, x0 + ox:x1 + ox, :])


def affine_coupling_kernel(xa_ref, xb_ref, w1_ref, w2_ref, w3t_ref, w3s_ref,
                           b3t_ref, b3s_ref, za_ref, ld_ref,
                           im1_ref, im3_ref, h_ref):
    B, H, W, Ch = xb_ref.shape
    width = w1_ref.shape[-1]
    HW = H * W
    M = B * HW
    M2 = B * (H + 2) * (W + 2)          # conv2 output spatial size (padding=1)

    # ---- conv1: 3x3, pad=1, no bias -> im2col (bf16) + ONE matmul (K=9*Ch) --
    _im2col_3x3(im1_ref, xb_ref, jnp.zeros((1, 1, 1, Ch), jnp.bfloat16),
                B, H, W, Ch)
    h1 = jnp.dot(im1_ref[...].reshape(M, 9 * Ch), w1_ref[...],
                 preferred_element_type=jnp.float32)            # (M, width) f32

    # ---- actnorm1 (first-forward): two-pass centered stats, in registers ----
    mean1 = jnp.sum(h1, axis=0, keepdims=True) * (1.0 / M)
    d1 = h1 - mean1
    var1 = jnp.sum(d1 * d1, axis=0, keepdims=True) * (1.0 / M)
    inv1 = lax.rsqrt(var1 + 1e-12)          # ~= 1/(std + 1e-6) for non-tiny std
    h1n = jnp.maximum(d1 * inv1, 0.0)                           # ReLU, f32

    # ---- conv2: 1x1 kernel, padding=1 -> interior = h @ w2, border stays 0 --
    h2 = jnp.dot(h1n.astype(jnp.bfloat16), w2_ref[...],
                 preferred_element_type=jnp.float32)            # (M, width) f32

    # ---- actnorm2: stats over the (H+2)x(W+2) map incl. its zero border -----
    mean2 = jnp.sum(h2, axis=0, keepdims=True) * (1.0 / M2)     # border adds 0
    d2 = h2 - mean2
    var2 = (jnp.sum(d2 * d2, axis=0, keepdims=True)
            + (M2 - M) * (mean2 * mean2)) * (1.0 / M2)          # border terms
    inv2 = lax.rsqrt(var2 + 1e-12)
    h2n = jnp.maximum(d2 * inv2, 0.0)                           # interior, ReLU
    border2 = jnp.maximum(-mean2 * inv2, 0.0)                   # padded border
    h_ref[...] = h2n.astype(jnp.bfloat16).reshape(B, H, W, width)  # single write

    # ---- conv3: 3x3 valid on the padded map -> im2col + two matmuls ---------
    #      (t / s output halves pre-split in the wrapper; exp(lsf) and conv3
    #       bias folded into w3t/w3s/b3t/b3s; both dots share the same LHS)
    _im2col_3x3(im3_ref, h_ref,
                border2.astype(jnp.bfloat16).reshape(1, 1, 1, width),
                B, H, W, width)
    im3 = im3_ref[...].reshape(M, 9 * width)
    t_full = (jnp.dot(im3, w3t_ref[...], preferred_element_type=jnp.float32)
              + b3t_ref[...])                                   # (M, Ch)
    a_full = (jnp.dot(im3, w3s_ref[...], preferred_element_type=jnp.float32)
              + b3s_ref[...] + 2.0)                             # (M, Ch)

    # ---- affine coupling epilogue, per batch, lane-dense (Ch, H*W) layout ---
    for b in range(B):                      # B is static -> unrolled
        r0 = b * HW
        tb = t_full[r0:r0 + HW, :].T                            # (Ch, HW)
        ab = a_full[r0:r0 + HW, :].T                            # (Ch, HW)
        onep = 1.0 + jnp.exp(-ab)
        sb = 1.0 / onep                                         # exact sigmoid
        za_ref[b] = sb * xa_ref[b] + tb                         # lane-dense store
        # logdet_b = sum log(sigmoid(a)) = sum -log(1 + exp(-a)); same onep as s
        ld_ref[b:b + 1, :] = jnp.sum(-jnp.log(onep), axis=(0, 1), keepdims=True)


def affine_coupling_forward(x_nchw, w1, w2, w3, b3, lsf):
    """x_nchw: (B,C,H,W); parameters in PyTorch layouts (OIHW conv weights)."""
    B, C, H, W = x_nchw.shape
    Ch = C // 2
    width = w1.shape[0]
    M = B * H * W

    x_f32 = x_nchw.astype(jnp.float32)
    x_a = x_f32[:, :Ch].reshape(B, Ch, H * W)                       # (B,Ch,HW) f32
    x_b = jnp.transpose(x_f32[:, Ch:], (0, 2, 3, 1)).astype(jnp.bfloat16)  # NHWC bf16

    # conv weights as im2col matrices (row order = (dy, dx, c_in)), bf16 for MXU.
    w1_mat = jnp.transpose(w1, (2, 3, 1, 0)).reshape(9 * Ch, width).astype(jnp.bfloat16)
    w2_mat = jnp.transpose(w2[:, :, 0, 0], (1, 0)).astype(jnp.bfloat16)
    esf = jnp.exp(lsf.reshape(C)).astype(jnp.float32)
    w3_full = (jnp.transpose(w3, (2, 3, 1, 0)).reshape(9 * width, C).astype(jnp.float32)
               * esf[None, :])                                      # fold exp(lsf)
    b3_full = b3.astype(jnp.float32) * esf
    w3t = w3_full[:, 0::2].astype(jnp.bfloat16)                     # t (even) channels
    w3s = w3_full[:, 1::2].astype(jnp.bfloat16)                     # s (odd) channels
    b3t = b3_full[0::2].reshape(1, Ch)
    b3s = b3_full[1::2].reshape(1, Ch)

    cost = pl.CostEstimate(
        flops=2 * M * (9 * Ch * width + width * width + 9 * width * C) + 16 * M * Ch,
        transcendentals=2 * M * Ch + 2 * width,
        bytes_accessed=(4 * M * Ch + 2 * M * Ch + 4 * M * Ch + 4 * B
                        + 2 * (9 * Ch * width + width * width + 9 * width * C)
                        + 2 * (M * 9 * Ch + M * width + M * 9 * width)),
    )

    z_a, ld = pl.pallas_call(
        affine_coupling_kernel,
        out_shape=(jax.ShapeDtypeStruct((B, Ch, H * W), jnp.float32),
                   jax.ShapeDtypeStruct((B, 1), jnp.float32)),
        in_specs=[pl.BlockSpec(memory_space=pltpu.MemorySpace.VMEM)] * 8,
        out_specs=(pl.BlockSpec(memory_space=pltpu.MemorySpace.VMEM),
                   pl.BlockSpec(memory_space=pltpu.MemorySpace.VMEM)),
        scratch_shapes=[pltpu.VMEM((B, H, W, 9 * Ch), jnp.bfloat16),    # conv1 im2col
                        pltpu.VMEM((B, H, W, 9 * width), jnp.bfloat16),  # conv3 im2col
                        pltpu.VMEM((B, H, W, width), jnp.bfloat16)],     # conv3 input h
        compiler_params=pltpu.CompilerParams(vmem_limit_bytes=32 * 1024 * 1024),
        cost_estimate=cost,
    )(x_a, x_b, w1_mat, w2_mat, w3t, w3s, b3t, b3s)

    # z_b = x_b passthrough: done in XLA, fused with the concat; z_a reshape is free.
    z = jnp.concatenate([z_a.reshape(B, Ch, H, W), x_f32[:, Ch:]], axis=1)
    return z, ld[:, 0]


# ------------------------- pure-JAX reference (NCHW) -------------------------
def _actnorm_ref(h):
    mean = jnp.mean(h, axis=(0, 2, 3), keepdims=True)
    std = jnp.sqrt(jnp.mean((h - mean) ** 2, axis=(0, 2, 3), keepdims=True))
    return (h - mean) / (std + 1e-6)


def reference_forward(x, w1, w2, w3, b3, lsf):
    B, C, H, W = x.shape
    Ch = C // 2
    xa, xb = x[:, :Ch], x[:, Ch:]
    dn = ('NCHW', 'OIHW', 'NCHW')
    prec = lax.Precision.HIGHEST
    h = lax.conv_general_dilated(xb, w1, (1, 1), ((1, 1), (1, 1)),
                                 dimension_numbers=dn, precision=prec)
    h = jax.nn.relu(_actnorm_ref(h))
    h = lax.conv_general_dilated(h, w2, (1, 1), ((1, 1), (1, 1)),
                                 dimension_numbers=dn, precision=prec)
    h = jax.nn.relu(_actnorm_ref(h))
    h = lax.conv_general_dilated(h, w3, (1, 1), ((0, 0), (0, 0)),
                                 dimension_numbers=dn, precision=prec)
    h = (h + b3.reshape(1, C, 1, 1)) * jnp.exp(lsf.reshape(1, C, 1, 1))
    t = h[:, 0::2]
    s = jax.nn.sigmoid(h[:, 1::2] + 2.0)
    z = jnp.concatenate([s * xa + t, xb], axis=1)
    logdet = jnp.log(s).sum(axis=(1, 2, 3))
    return z, logdet


if __name__ == "__main__":
    B, C, H, W, width = 2, 4, 16, 16, 32
    Ch = C // 2
    key = jax.random.PRNGKey(0)
    k1, k2, k3, k4, k5, k6 = jax.random.split(key, 6)
    # Deterministic synthetic parameters (module shapes from __init__).
    # Note: the module zero-inits conv3 / log_scale_factor; we use small nonzero
    # values so the full forward path is exercised — semantics are unchanged.
    w1 = 0.3 * jax.random.normal(k1, (width, Ch, 3, 3), jnp.float32)   # conv1 OIHW
    w2 = 0.3 * jax.random.normal(k2, (width, width, 1, 1), jnp.float32)
    w3 = 0.05 * jax.random.normal(k3, (C, width, 3, 3), jnp.float32)   # conv3 OIHW
    b3 = 0.05 * jax.random.normal(k4, (C,), jnp.float32)
    lsf = 0.1 * jax.random.normal(k5, (C, 1, 1), jnp.float32)
    x = jax.random.normal(k6, (B, C, H, W), jnp.float32)

    fwd = jax.jit(affine_coupling_forward)
    z, logdet = fwd(x, w1, w2, w3, b3, lsf)
    z = jax.block_until_ready(z)
    logdet = jax.block_until_ready(logdet)

    z_ref, ld_ref = reference_forward(x, w1, w2, w3, b3, lsf)
    assert z.shape == (B, C, H, W) and logdet.shape == (B,)
    # bf16 MXU operands (f32 accumulation) -> ~0.5-1% relative error vs the
    # f32 HIGHEST-precision reference; tolerances account for that.
    assert jnp.allclose(z, z_ref, atol=2e-2, rtol=2e-2), \
        float(jnp.max(jnp.abs(z - z_ref)))
    assert jnp.allclose(logdet, ld_ref, atol=5e-1, rtol=2e-2), \
        float(jnp.max(jnp.abs(logdet - ld_ref)))
    print("KERNEL_OK")
</pallas_src>

<mosaic_0001>
module attributes {stable_mosaic.version = 11 : i64} {
  func.func @affine_coupling_kernel(%arg0: memref<2x2x256xf32, #tpu.memory_space<vmem>>, %arg1: memref<2x16x16x2xbf16, #tpu.memory_space<vmem>>, %arg2: memref<18x32xbf16, #tpu.memory_space<vmem>>, %arg3: memref<32x32xbf16, #tpu.memory_space<vmem>>, %arg4: memref<288x2xbf16, #tpu.memory_space<vmem>>, %arg5: memref<288x2xbf16, #tpu.memory_space<vmem>>, %arg6: memref<1x2xf32, #tpu.memory_space<vmem>>, %arg7: memref<1x2xf32, #tpu.memory_space<vmem>>, %arg8: memref<2x2x256xf32, #tpu.memory_space<vmem>>, %arg9: memref<2x1xf32, #tpu.memory_space<vmem>>, %arg10: memref<2x16x16x18xbf16, #tpu.memory_space<vmem>>, %arg11: memref<2x16x16x288xbf16, #tpu.memory_space<vmem>>, %arg12: memref<2x16x16x32xbf16, #tpu.memory_space<vmem>>) attributes {dimension_semantics = [], scalar_prefetch = 0 : i64, scratch_operands = 3 : i64, tpu.core_type = #tpu.core_type<tc>} {
    %cst = arith.constant 0.000000e+00 : bf16
    %0 = vector.broadcast %cst : bf16 to vector<1x1x1x2xbf16>
    %1 = vector.shape_cast %0 : vector<1x1x1x2xbf16> to vector<1x1x1x2xbf16>
    %2 = vector.broadcast %1 : vector<1x1x1x2xbf16> to vector<2x1x16x2xbf16>
    %3 = vector.shape_cast %0 : vector<1x1x1x2xbf16> to vector<1x1x1x2xbf16>
    %4 = vector.broadcast %3 : vector<1x1x1x2xbf16> to vector<2x16x1x2xbf16>
    %c0 = arith.constant 0 : index
    %c0_0 = arith.constant 0 : index
    %c0_1 = arith.constant 0 : index
    %c0_2 = arith.constant 0 : index
    %5 = vector.load %arg10[%c0, %c0_0, %c0_1, %c0_2] : memref<2x16x16x18xbf16, #tpu.memory_space<vmem>>, vector<2x1x16x2xbf16>
    tpu.vector_store %arg10[%c0, %c0_0, %c0_1, %c0_2], %2 {strides = array<i32>} : memref<2x16x16x18xbf16, #tpu.memory_space<vmem>>, vector<2x1x16x2xbf16>,
    %c0_3 = arith.constant 0 : index
    %c0_4 = arith.constant 0 : index
    %c0_5 = arith.constant 0 : index
    %c0_6 = arith.constant 0 : index
    %6 = vector.load %arg10[%c0_3, %c0_4, %c0_5, %c0_6] : memref<2x16x16x18xbf16, #tpu.memory_space<vmem>>, vector<2x16x1x2xbf16>
    tpu.vector_store %arg10[%c0_3, %c0_4, %c0_5, %c0_6], %4 {strides = array<i32>} : memref<2x16x16x18xbf16, #tpu.memory_space<vmem>>, vector<2x16x1x2xbf16>,
    %c0_7 = arith.constant 0 : index
    %c0_8 = arith.constant 0 : index
    %c0_9 = arith.constant 0 : index
    %c0_10 = arith.constant 0 : index
    %7 = vector.load %arg1[%c0_7, %c0_8, %c0_9, %c0_10] : memref<2x16x16x2xbf16, #tpu.memory_space<vmem>>, vector<2x15x15x2xbf16>
    %c0_11 = arith.constant 0 : index
    %c1 = arith.constant 1 : index
    %c1_12 = arith.constant 1 : index
    %c0_13 = arith.constant 0 : index
    %8 = vector.load %arg10[%c0_11, %c1, %c1_12, %c0_13] : memref<2x16x16x18xbf16, #tpu.memory_space<vmem>>, vector<2x15x15x2xbf16>
    tpu.vector_store %arg10[%c0_11, %c1, %c1_12, %c0_13], %7 {strides = array<i32>} : memref<2x16x16x18xbf16, #tpu.memory_space<vmem>>, vector<2x15x15x2xbf16>,
    %c0_14 = arith.constant 0 : index
    %c0_15 = arith.constant 0 : index
    %c0_16 = arith.constant 0 : index
    %c2 = arith.constant 2 : index
    %9 = vector.load %arg10[%c0_14, %c0_15, %c0_16, %c2] : memref<2x16x16x18xbf16, #tpu.memory_space<vmem>>, vector<2x1x16x2xbf16>
    tpu.vector_store %arg10[%c0_14, %c0_15, %c0_16, %c2], %2 {strides = array<i32>} : memref<2x16x16x18xbf16, #tpu.memory_space<vmem>>, vector<2x1x16x2xbf16>,
    %c0_17 = arith.constant 0 : index
    %c0_18 = arith.constant 0 : index
    %c0_19 = arith.constant 0 : index
    %c0_20 = arith.constant 0 : index
    %10 = vector.load %arg1[%c0_17, %c0_18, %c0_19, %c0_20] : memref<2x16x16x2xbf16, #tpu.memory_space<vmem>>, vector<2x15x16x2xbf16>
    %c0_21 = arith.constant 0 : index
    %c1_22 = arith.constant 1 : index
    %c0_23 = arith.constant 0 : index
    %c2_24 = arith.constant 2 : index
    %11 = vector.load %arg10[%c0_21, %c1_22, %c0_23, %c2_24] : memref<2x16x16x18xbf16, #tpu.memory_space<vmem>>, vector<2x15x16x2xbf16>
    tpu.vector_store %arg10[%c0_21, %c1_22, %c0_23, %c2_24], %10 {strides = array<i32>} : memref<2x16x16x18xbf16, #tpu.memory_space<vmem>>, vector<2x15x16x2xbf16>,
    %c0_25 = arith.constant 0 : index
    %c0_26 = arith.constant 0 : index
    %c0_27 = arith.constant 0 : index
    %c4 = arith.constant 4 : index
    %12 = vector.load %arg10[%c0_25, %c0_26, %c0_27, %c4] : memref<2x16x16x18xbf16, #tpu.memory_space<vmem>>, vector<2x1x16x2xbf16>
    tpu.vector_store %arg10[%c0_25, %c0_26, %c0_27, %c4], %2 {strides = array<i32>} : memref<2x16x16x18xbf16, #tpu.memory_space<vmem>>, vector<2x1x16x2xbf16>,
    %c0_28 = arith.constant 0 : index
    %c0_29 = arith.constant 0 : index
    %c15 = arith.constant 15 : index
    %c4_30 = arith.constant 4 : index
    %13 = vector.load %arg10[%c0_28, %c0_29, %c15, %c4_30] : memref<2x16x16x18xbf16, #tpu.memory_space<vmem>>, vector<2x16x1x2xbf16>
    tpu.vector_store %arg10[%c0_28, %c0_29, %c15, %c4_30], %4 {strides = array<i32>} : memref<2x16x16x18xbf16, #tpu.memory_space<vmem>>, vector<2x16x1x2xbf16>,
    %c0_31 = arith.constant 0 : index
    %c0_32 = arith.constant 0 : index
    %c1_33 = arith.constant 1 : index
    %c0_34 = arith.constant 0 : index
    %14 = vector.load %arg1[%c0_31, %c0_32, %c1_33, %c0_34] : memref<2x16x16x2xbf16, #tpu.memory_space<vmem>>, vector<2x15x15x2xbf16>
    %c0_35 = arith.constant 0 : index
    %c1_36 = arith.constant 1 : index
    %c0_37 = arith.constant 0 : index
    %c4_38 = arith.constant 4 : index
    %15 = vector.load %arg10[%c0_35, %c1_36, %c0_37, %c4_38] : memref<2x16x16x18xbf16, #tpu.memory_space<vmem>>, vector<2x15x15x2xbf16>
    tpu.vector_store %arg10[%c0_35, %c1_36, %c0_37, %c4_38], %14 {strides = array<i32>} : memref<2x16x16x18xbf16, #tpu.memory_space<vmem>>, vector<2x15x15x2xbf16>,
    %c0_39 = arith.constant 0 : index
    %c0_40 = arith.constant 0 : index
    %c0_41 = arith.constant 0 : index
    %c6 = arith.constant 6 : index
    %16 = vector.load %arg10[%c0_39, %c0_40, %c0_41, %c6] : memref<2x16x16x18xbf16, #tpu.memory_space<vmem>>, vector<2x16x1x2xbf16>
    tpu.vector_store %arg10[%c0_39, %c0_40, %c0_41, %c6], %4 {strides = array<i32>} : memref<2x16x16x18xbf16, #tpu.memory_space<vmem>>, vector<2x16x1x2xbf16>,
    %c0_42 = arith.constant 0 : index
    %c0_43 = arith.constant 0 : index
    %c0_44 = arith.constant 0 : index
    %c0_45 = arith.constant 0 : index
    %17 = vector.load %arg1[%c0_42, %c0_43, %c0_44, %c0_45] : memref<2x16x16x2xbf16, #tpu.memory_space<vmem>>, vector<2x16x15x2xbf16>
    %c0_46 = arith.constant 0 : index
    %c0_47 = arith.constant 0 : index
    %c1_48 = arith.constant 1 : index
    %c6_49 = arith.constant 6 : index
    %18 = vector.load %arg10[%c0_46, %c0_47, %c1_48, %c6_49] : memref<2x16x16x18xbf16, #tpu.memory_space<vmem>>, vector<2x16x15x2xbf16>
    tpu.vector_store %arg10[%c0_46, %c0_47, %c1_48, %c6_49], %17 {strides = array<i32>} : memref<2x16x16x18xbf16, #tpu.memory_space<vmem>>, vector<2x16x15x2xbf16>,
    %c0_50 = arith.constant 0 : index
    %c0_51 = arith.constant 0 : index
    %c0_52 = arith.constant 0 : index
    %c0_53 = arith.constant 0 : index
    %19 = vector.load %arg1[%c0_50, %c0_51, %c0_52, %c0_53] : memref<2x16x16x2xbf16, #tpu.memory_space<vmem>>, vector<2x16x16x2xbf16>
    %c0_54 = arith.constant 0 : index
    %c0_55 = arith.constant 0 : index
    %c0_56 = arith.constant 0 : index
    %c8 = arith.constant 8 : index
    %20 = vector.load %arg10[%c0_54, %c0_55, %c0_56, %c8] : memref<2x16x16x18xbf16, #tpu.memory_space<vmem>>, vector<2x16x16x2xbf16>
    tpu.vector_store %arg10[%c0_54, %c0_55, %c0_56, %c8], %19 {strides = array<i32>} : memref<2x16x16x18xbf16, #tpu.memory_space<vmem>>, vector<2x16x16x2xbf16>,
    %c0_57 = arith.constant 0 : index
    %c0_58 = arith.constant 0 : index
    %c15_59 = arith.constant 15 : index
    %c10 = arith.constant 10 : index
    %21 = vector.load %arg10[%c0_57, %c0_58, %c15_59, %c10] : memref<2x16x16x18xbf16, #tpu.memory_space<vmem>>, vector<2x16x1x2xbf16>
    tpu.vector_store %arg10[%c0_57, %c0_58, %c15_59, %c10], %4 {strides = array<i32>} : memref<2x16x16x18xbf16, #tpu.memory_space<vmem>>, vector<2x16x1x2xbf16>,
    %c0_60 = arith.constant 0 : index
    %c0_61 = arith.constant 0 : index
    %c1_62 = arith.constant 1 : index
    %c0_63 = arith.constant 0 : index
    %22 = vector.load %arg1[%c0_60, %c0_61, %c1_62, %c0_63] : memref<2x16x16x2xbf16, #tpu.memory_space<vmem>>, vector<2x16x15x2xbf16>
    %c0_64 = arith.constant 0 : index
    %c0_65 = arith.constant 0 : index
    %c0_66 = arith.constant 0 : index
    %c10_67 = arith.constant 10 : index
    %23 = vector.load %arg10[%c0_64, %c0_65, %c0_66, %c10_67] : memref<2x16x16x18xbf16, #tpu.memory_space<vmem>>, vector<2x16x15x2xbf16>
    tpu.vector_store %arg10[%c0_64, %c0_65, %c0_66, %c10_67], %22 {strides = array<i32>} : memref<2x16x16x18xbf16, #tpu.memory_space<vmem>>, vector<2x16x15x2xbf16>,
    %c0_68 = arith.constant 0 : index
    %c15_69 = arith.constant 15 : index
    %c0_70 = arith.constant 0 : index
    %c12 = arith.constant 12 : index
    %24 = vector.load %arg10[%c0_68, %c15_69, %c0_70, %c12] : memref<2x16x16x18xbf16, #tpu.memory_space<vmem>>, vector<2x1x16x2xbf16>
    tpu.vector_store %arg10[%c0_68, %c15_69, %c0_70, %c12], %2 {strides = array<i32>} : memref<2x16x16x18xbf16, #tpu.memory_space<vmem>>, vector<2x1x16x2xbf16>,
    %c0_71 = arith.constant 0 : index
    %c0_72 = arith.constant 0 : index
    %c0_73 = arith.constant 0 : index
    %c12_74 = arith.constant 12 : index
    %25 = vector.load %arg10[%c0_71, %c0_72, %c0_73, %c12_74] : memref<2x16x16x18xbf16, #tpu.memory_space<vmem>>, vector<2x16x1x2xbf16>
    tpu.vector_store %arg10[%c0_71, %c0_72, %c0_73, %c12_74], %4 {strides = array<i32>} : memref<2x16x16x18xbf16, #tpu.memory_space<vmem>>, vector<2x16x1x2xbf16>,
    %c0_75 = arith.constant 0 : index
    %c1_76 = arith.constant 1 : index
    %c0_77 = arith.constant 0 : index
    %c0_78 = arith.constant 0 : index
    %26 = vector.load %arg1[%c0_75, %c1_76, %c0_77, %c0_78] : memref<2x16x16x2xbf16, #tpu.memory_space<vmem>>, vector<2x15x15x2xbf16>
    %c0_79 = arith.constant 0 : index
    %c0_80 = arith.constant 0 : index
    %c1_81 = arith.constant 1 : index
    %c12_82 = arith.constant 12 : index
    %27 = vector.load %arg10[%c0_79, %c0_80, %c1_81, %c12_82] : memref<2x16x16x18xbf16, #tpu.memory_space<vmem>>, vector<2x15x15x2xbf16>
    tpu.vector_store %arg10[%c0_79, %c0_80, %c1_81, %c12_82], %26 {strides = array<i32>} : memref<2x16x16x18xbf16, #tpu.memory_space<vmem>>, vector<2x15x15x2xbf16>,
    %c0_83 = arith.constant 0 : index
    %c15_84 = arith.constant 15 : index
    %c0_85 = arith.constant 0 : index
    %c14 = arith.constant 14 : index
    %28 = vector.load %arg10[%c0_83, %c15_84, %c0_85, %c14] : memref<2x16x16x18xbf16, #tpu.memory_space<vmem>>, vector<2x1x16x2xbf16>
    tpu.vector_store %arg10[%c0_83, %c15_84, %c0_85, %c14], %2 {strides = array<i32>} : memref<2x16x16x18xbf16, #tpu.memory_space<vmem>>, vector<2x1x16x2xbf16>,
    %c0_86 = arith.constant 0 : index
    %c1_87 = arith.constant 1 : index
    %c0_88 = arith.constant 0 : index
    %c0_89 = arith.constant 0 : index
    %29 = vector.load %arg1[%c0_86, %c1_87, %c0_88, %c0_89] : memref<2x16x16x2xbf16, #tpu.memory_space<vmem>>, vector<2x15x16x2xbf16>
    %c0_90 = arith.constant 0 : index
    %c0_91 = arith.constant 0 : index
    %c0_92 = arith.constant 0 : index
    %c14_93 = arith.constant 14 : index
    %30 = vector.load %arg10[%c0_90, %c0_91, %c0_92, %c14_93] : memref<2x16x16x18xbf16, #tpu.memory_space<vmem>>, vector<2x15x16x2xbf16>
    tpu.vector_store %arg10[%c0_90, %c0_91, %c0_92, %c14_93], %29 {strides = array<i32>} : memref<2x16x16x18xbf16, #tpu.memory_space<vmem>>, vector<2x15x16x2xbf16>,
    %c0_94 = arith.constant 0 : index
    %c15_95 = arith.constant 15 : index
    %c0_96 = arith.constant 0 : index
    %c16 = arith.constant 16 : index
    %31 = vector.load %arg10[%c0_94, %c15_95, %c0_96, %c16] : memref<2x16x16x18xbf16, #tpu.memory_space<vmem>>, vector<2x1x16x2xbf16>
    tpu.vector_store %arg10[%c0_94, %c15_95, %c0_96, %c16], %2 {strides = array<i32>} : memref<2x16x16x18xbf16, #tpu.memory_space<vmem>>, vector<2x1x16x2xbf16>,
    %c0_97 = arith.constant 0 : index
    %c0_98 = arith.constant 0 : index
    %c15_99 = arith.constant 15 : index
    %c16_100 = arith.constant 16 : index
    %32 = vector.load %arg10[%c0_97, %c0_98, %c15_99, %c16_100] : memref<2x16x16x18xbf16, #tpu.memory_space<vmem>>, vector<2x16x1x2xbf16>
    tpu.vector_store %arg10[%c0_97, %c0_98, %c15_99, %c16_100], %4 {strides = array<i32>} : memref<2x16x16x18xbf16, #tpu.memory_space<vmem>>, vector<2x16x1x2xbf16>,
    %c0_101 = arith.constant 0 : index
    %c1_102 = arith.constant 1 : index
    %c1_103 = arith.constant 1 : index
    %c0_104 = arith.constant 0 : index
    %33 = vector.load %arg1[%c0_101, %c1_102, %c1_103, %c0_104] : memref<2x16x16x2xbf16, #tpu.memory_space<vmem>>, vector<2x15x15x2xbf16>
    %c0_105 = arith.constant 0 : index
    %c0_106 = arith.constant 0 : index
    %c0_107 = arith.constant 0 : index
    %c16_108 = arith.constant 16 : index
    %34 = vector.load %arg10[%c0_105, %c0_106, %c0_107, %c16_108] : memref<2x16x16x18xbf16, #tpu.memory_space<vmem>>, vector<2x15x15x2xbf16>
    tpu.vector_store %arg10[%c0_105, %c0_106, %c0_107, %c16_108], %33 {strides = array<i32>} : memref<2x16x16x18xbf16, #tpu.memory_space<vmem>>, vector<2x15x15x2xbf16>,
    %c0_109 = arith.constant 0 : index
    %c0_110 = arith.constant 0 : index
    %c0_111 = arith.constant 0 : index
    %c0_112 = arith.constant 0 : index
    %35 = vector.load %arg10[%c0_109, %c0_110, %c0_111, %c0_112] : memref<2x16x16x18xbf16, #tpu.memory_space<vmem>>, vector<2x16x16x18xbf16>
    %36 = vector.shape_cast %35 : vector<2x16x16x18xbf16> to vector<512x18xbf16>
    %c0_113 = arith.constant 0 : index
    %c0_114 = arith.constant 0 : index
    %37 = vector.load %arg2[%c0_113, %c0_114] : memref<18x32xbf16, #tpu.memory_space<vmem>>, vector<18x32xbf16>
    %cst_115 = arith.constant dense<0.000000e+00> : vector<512x32xf32>
    %38 = tpu.matmul %36, %37, %cst_115 {dimension_numbers = #tpu.dot_dimension_numbers<[1], [0], [0], [1], [0, 0, 1, 1], [], []>} : vector<512x18xbf16>, vector<18x32xbf16>, vector<512x32xf32> -> vector<512x32xf32>
    %cst_116 = arith.constant dense<0.000000e+00> : vector<32xf32>
    %39 = vector.multi_reduction <add>, %38, %cst_116 [0] : vector<512x32xf32> to vector<32xf32>
    %40 = vector.shape_cast %39 : vector<32xf32> to vector<1x32xf32>
    %cst_117 = arith.constant 0.001953125 : f32
    %41 = vector.broadcast %cst_117 : f32 to vector<1x32xf32>
    %42 = arith.mulf %40, %41 : vector<1x32xf32>
    %43 = vector.broadcast %42 : vector<1x32xf32> to vector<512x32xf32>
    %44 = arith.subf %38, %43 : vector<512x32xf32>
    %45 = arith.mulf %44, %44 : vector<512x32xf32>
    %cst_118 = arith.constant dense<0.000000e+00> : vector<32xf32>
    %46 = vector.multi_reduction <add>, %45, %cst_118 [0] : vector<512x32xf32> to vector<32xf32>
    %47 = vector.shape_cast %46 : vector<32xf32> to vector<1x32xf32>
    %cst_119 = arith.constant 0.001953125 : f32
    %48 = vector.broadcast %cst_119 : f32 to vector<1x32xf32>
    %49 = arith.mulf %47, %48 : vector<1x32xf32>
    %cst_120 = arith.constant 9.99999996E-13 : f32
    %50 = vector.broadcast %cst_120 : f32 to vector<1x32xf32>
    %51 = arith.addf %49, %50 : vector<1x32xf32>
    %52 = math.rsqrt %51 : vector<1x32xf32>
    %53 = vector.broadcast %52 : vector<1x32xf32> to vector<512x32xf32>
    %54 = arith.mulf %44, %53 : vector<512x32xf32>
    %cst_121 = arith.constant 0.000000e+00 : f32
    %55 = vector.broadcast %cst_121 : f32 to vector<512x32xf32>
    %56 = arith.maximumf %54, %55 : vector<512x32xf32>
    %57 = arith.truncf %56 : vector<512x32xf32> to vector<512x32xbf16>
    %c0_122 = arith.constant 0 : index
    %c0_123 = arith.constant 0 : index
    %58 = vector.load %arg3[%c0_122, %c0_123] : memref<32x32xbf16, #tpu.memory_space<vmem>>, vector<32x32xbf16>
    %cst_124 = arith.constant dense<0.000000e+00> : vector<512x32xf32>
    %59 = tpu.matmul %57, %58, %cst_124 {dimension_numbers = #tpu.dot_dimension_numbers<[1], [0], [0], [1], [0, 0, 1, 1], [], []>} : vector<512x32xbf16>, vector<32x32xbf16>, vector<512x32xf32> -> vector<512x32xf32>
    %cst_125 = arith.constant dense<0.000000e+00> : vector<32xf32>
    %60 = vector.multi_reduction <add>, %59, %cst_125 [0] : vector<512x32xf32> to vector<32xf32>
    %61 = vector.shape_cast %60 : vector<32xf32> to vector<1x32xf32>
    %cst_126 = arith.constant 0.00154320989 : f32
    %62 = vector.broadcast %cst_126 : f32 to vector<1x32xf32>
    %63 = arith.mulf %61, %62 : vector<1x32xf32>
    %64 = vector.broadcast %63 : vector<1x32xf32> to vector<512x32xf32>
    %65 = arith.subf %59, %64 : vector<512x32xf32>
    %66 = arith.mulf %65, %65 : vector<512x32xf32>
    %cst_127 = arith.constant dense<0.000000e+00> : vector<32xf32>
    %67 = vector.multi_reduction <add>, %66, %cst_127 [0] : vector<512x32xf32> to vector<32xf32>
    %68 = vector.shape_cast %67 : vector<32xf32> to vector<1x32xf32>
    %69 = arith.mulf %63, %63 : vector<1x32xf32>
    %cst_128 = arith.constant 1.360000e+02 : f32
    %70 = vector.broadcast %cst_128 : f32 to vector<1x32xf32>
    %71 = arith.mulf %70, %69 : vector<1x32xf32>
    %72 = arith.addf %68, %71 : vector<1x32xf32>
    %cst_129 = arith.constant 0.00154320989 : f32
    %73 = vector.broadcast %cst_129 : f32 to vector<1x32xf32>
    %74 = arith.mulf %72, %73 : vector<1x32xf32>
    %cst_130 = arith.constant 9.99999996E-13 : f32
    %75 = vector.broadcast %cst_130 : f32 to vector<1x32xf32>
    %76 = arith.addf %74, %75 : vector<1x32xf32>
    %77 = math.rsqrt %76 : vector<1x32xf32>
    %78 = vector.broadcast %77 : vector<1x32xf32> to vector<512x32xf32>
    %79 = arith.mulf %65, %78 : vector<512x32xf32>
    %cst_131 = arith.constant 0.000000e+00 : f32
    %80 = vector.broadcast %cst_131 : f32 to vector<512x32xf32>
    %81 = arith.maximumf %79, %80 : vector<512x32xf32>
    %cst_132 = arith.constant 0.000000e+00 : f32
    %82 = vector.broadcast %cst_132 : f32 to vector<1x32xf32>
    %83 = arith.subf %82, %63 : vector<1x32xf32>
    %84 = arith.mulf %83, %77 : vector<1x32xf32>
    %cst_133 = arith.constant 0.000000e+00 : f32
    %85 = vector.broadcast %cst_133 : f32 to vector<1x32xf32>
    %86 = arith.maximumf %84, %85 : vector<1x32xf32>
    %87 = arith.truncf %81 : vector<512x32xf32> to vector<512x32xbf16>
    %88 = vector.shape_cast %87 : vector<512x32xbf16> to vector<2x16x16x32xbf16>
    %c0_134 = arith.constant 0 : index
    %c0_135 = arith.constant 0 : index
    %c0_136 = arith.constant 0 : index
    %c0_137 = arith.constant 0 : index
    %89 = vector.load %arg12[%c0_134, %c0_135, %c0_136, %c0_137] : memref<2x16x16x32xbf16, #tpu.memory_space<vmem>>, vector<2x16x16x32xbf16>
    tpu.vector_store %arg12[%c0_134, %c0_135, %c0_136, %c0_137], %88 {strides = array<i32>} : memref<2x16x16x32xbf16, #tpu.memory_space<vmem>>, vector<2x16x16x32xbf16>,
    %90 = arith.truncf %86 : vector<1x32xf32> to vector<1x32xbf16>
    %91 = vector.shape_cast %90 : vector<1x32xbf16> to vector<1x1x1x32xbf16>
    %92 = vector.shape_cast %91 : vector<1x1x1x32xbf16> to vector<1x1x1x32xbf16>
    %93 = vector.broadcast %92 : vector<1x1x1x32xbf16> to vector<2x1x16x32xbf16>
    %94 = vector.shape_cast %91 : vector<1x1x1x32xbf16> to vector<1x1x1x32xbf16>
    %95 = vector.broadcast %94 : vector<1x1x1x32xbf16> to vector<2x16x1x32xbf16>
    %c0_138 = arith.constant 0 : index
    %c0_139 = arith.constant 0 : index
    %c0_140 = arith.constant 0 : index
    %c0_141 = arith.constant 0 : index
    %96 = vector.load %arg11[%c0_138, %c0_139, %c0_140, %c0_141] : memref<2x16x16x288xbf16, #tpu.memory_space<vmem>>, vector<2x1x16x32xbf16>
    tpu.vector_store %arg11[%c0_138, %c0_139, %c0_140, %c0_141], %93 {strides = array<i32>} : memref<2x16x16x288xbf16, #tpu.memory_space<vmem>>, vector<2x1x16x32xbf16>,
    %c0_142 = arith.constant 0 : index
    %c0_143 = arith.constant 0 : index
    %c0_144 = arith.constant 0 : index
    %c0_145 = arith.constant 0 : index
    %97 = vector.load %arg11[%c0_142, %c0_143, %c0_144, %c0_145] : memref<2x16x16x288xbf16, #tpu.memory_space<vmem>>, vector<2x16x1x32xbf16>
    tpu.vector_store %arg11[%c0_142, %c0_143, %c0_144, %c0_145], %95 {strides = array<i32>} : memref<2x16x16x288xbf16, #tpu.memory_space<vmem>>, vector<2x16x1x32xbf16>,
    %c0_146 = arith.constant 0 : index
    %c0_147 = arith.constant 0 : index
    %c0_148 = arith.constant 0 : index
    %c0_149 = arith.constant 0 : index
    %98 = vector.load %arg12[%c0_146, %c0_147, %c0_148, %c0_149] : memref<2x16x16x32xbf16, #tpu.memory_space<vmem>>, vector<2x15x15x32xbf16>
    %c0_150 = arith.constant 0 : index
    %c1_151 = arith.constant 1 : index
    %c1_152 = arith.constant 1 : index
    %c0_153 = arith.constant 0 : index
    %99 = vector.load %arg11[%c0_150, %c1_151, %c1_152, %c0_153] : memref<2x16x16x288xbf16, #tpu.memory_space<vmem>>, vector<2x15x15x32xbf16>
    tpu.vector_store %arg11[%c0_150, %c1_151, %c1_152, %c0_153], %98 {strides = array<i32>} : memref<2x16x16x288xbf16, #tpu.memory_space<vmem>>, vector<2x15x15x32xbf16>,
    %c0_154 = arith.constant 0 : index
    %c0_155 = arith.constant 0 : index
    %c0_156 = arith.constant 0 : index
    %c32 = arith.constant 32 : index
    %100 = vector.load %arg11[%c0_154, %c0_155, %c0_156, %c32] : memref<2x16x16x288xbf16, #tpu.memory_space<vmem>>, vector<2x1x16x32xbf16>
    tpu.vector_store %arg11[%c0_154, %c0_155, %c0_156, %c32], %93 {strides = array<i32>} : memref<2x16x16x288xbf16, #tpu.memory_space<vmem>>, vector<2x1x16x32xbf16>,
    %c0_157 = arith.constant 0 : index
    %c0_158 = arith.constant 0 : index
    %c0_159 = arith.constant 0 : index
    %c0_160 = arith.constant 0 : index
    %101 = vector.load %arg12[%c0_157, %c0_158, %c0_159, %c0_160] : memref<2x16x16x32xbf16, #tpu.memory_space<vmem>>, vector<2x15x16x32xbf16>
    %c0_161 = arith.constant 0 : index
    %c1_162 = arith.constant 1 : index
    %c0_163 = arith.constant 0 : index
    %c32_164 = arith.constant 32 : index
    %102 = vector.load %arg11[%c0_161, %c1_162, %c0_163, %c32_164] : memref<2x16x16x288xbf16, #tpu.memory_space<vmem>>, vector<2x15x16x32xbf16>
    tpu.vector_store %arg11[%c0_161, %c1_162, %c0_163, %c32_164], %101 {strides = array<i32>} : memref<2x16x16x288xbf16, #tpu.memory_space<vmem>>, vector<2x15x16x32xbf16>,
    %c0_165 = arith.constant 0 : index
    %c0_166 = arith.constant 0 : index
    %c0_167 = arith.constant 0 : index
    %c64 = arith.constant 64 : index
    %103 = vector.load %arg11[%c0_165, %c0_166, %c0_167, %c64] : memref<2x16x16x288xbf16, #tpu.memory_space<vmem>>, vector<2x1x16x32xbf16>
    tpu.vector_store %arg11[%c0_165, %c0_166, %c0_167, %c64], %93 {strides = array<i32>} : memref<2x16x16x288xbf16, #tpu.memory_space<vmem>>, vector<2x1x16x32xbf16>,
    %c0_168 = arith.constant 0 : index
    %c0_169 = arith.constant 0 : index
    %c15_170 = arith.constant 15 : index
    %c64_171 = arith.constant 64 : index
    %104 = vector.load %arg11[%c0_168, %c0_169, %c15_170, %c64_171] : memref<2x16x16x288xbf16, #tpu.memory_space<vmem>>, vector<2x16x1x32xbf16>
    tpu.vector_store %arg11[%c0_168, %c0_169, %c15_170, %c64_171], %95 {strides = array<i32>} : memref<2x16x16x288xbf16, #tpu.memory_space<vmem>>, vector<2x16x1x32xbf16>,
    %c0_172 = arith.constant 0 : index
    %c0_173 = arith.constant 0 : index
    %c1_174 = arith.constant 1 : index
    %c0_175 = arith.constant 0 : index
    %105 = vector.load %arg12[%c0_172, %c0_173, %c1_174, %c0_175] : memref<2x16x16x32xbf16, #tpu.memory_space<vmem>>, vector<2x15x15x32xbf16>
    %c0_176 = arith.constant 0 : index
    %c1_177 = arith.constant 1 : index
    %c0_178 = arith.constant 0 : index
    %c64_179 = arith.constant 64 : index
    %106 = vector.load %arg11[%c0_176, %c1_177, %c0_178, %c64_179] : memref<2x16x16x288xbf16, #tpu.memory_space<vmem>>, vector<2x15x15x32xbf16>
    tpu.vector_store %arg11[%c0_176, %c1_177, %c0_178, %c64_179], %105 {strides = array<i32>} : memref<2x16x16x288xbf16, #tpu.memory_space<vmem>>, vector<2x15x15x32xbf16>,
    %c0_180 = arith.constant 0 : index
    %c0_181 = arith.constant 0 : index
    %c0_182 = arith.constant 0 : index
    %c96 = arith.constant 96 : index
    %107 = vector.load %arg11[%c0_180, %c0_181, %c0_182, %c96] : memref<2x16x16x288xbf16, #tpu.memory_space<vmem>>, vector<2x16x1x32xbf16>
    tpu.vector_store %arg11[%c0_180, %c0_181, %c0_182, %c96], %95 {strides = array<i32>} : memref<2x16x16x288xbf16, #tpu.memory_space<vmem>>, vector<2x16x1x32xbf16>,
    %c0_183 = arith.constant 0 : index
    %c0_184 = arith.constant 0 : index
    %c0_185 = arith.constant 0 : index
    %c0_186 = arith.constant 0 : index
    %108 = vector.load %arg12[%c0_183, %c0_184, %c0_185, %c0_186] : memref<2x16x16x32xbf16, #tpu.memory_space<vmem>>, vector<2x16x15x32xbf16>
    %c0_187 = arith.constant 0 : index
    %c0_188 = arith.constant 0 : index
    %c1_189 = arith.constant 1 : index
    %c96_190 = arith.constant 96 : index
    %109 = vector.load %arg11[%c0_187, %c0_188, %c1_189, %c96_190] : memref<2x16x16x288xbf16, #tpu.memory_space<vmem>>, vector<2x16x15x32xbf16>
    tpu.vector_store %arg11[%c0_187, %c0_188, %c1_189, %c96_190], %108 {strides = array<i32>} : memref<2x16x16x288xbf16, #tpu.memory_space<vmem>>, vector<2x16x15x32xbf16>,
    %c0_191 = arith.constant 0 : index
    %c0_192 = arith.constant 0 : index
    %c0_193 = arith.constant 0 : index
    %c0_194 = arith.constant 0 : index
    %110 = vector.load %arg12[%c0_191, %c0_192, %c0_193, %c0_194] : memref<2x16x16x32xbf16, #tpu.memory_space<vmem>>, vector<2x16x16x32xbf16>
    %c0_195 = arith.constant 0 : index
    %c0_196 = arith.constant 0 : index
    %c0_197 = arith.constant 0 : index
    %c128 = arith.constant 128 : index
    %111 = vector.load %arg11[%c0_195, %c0_196, %c0_197, %c128] : memref<2x16x16x288xbf16, #tpu.memory_space<vmem>>, vector<2x16x16x32xbf16>
    tpu.vector_store %arg11[%c0_195, %c0_196, %c0_197, %c128], %110 {strides = array<i32>} : memref<2x16x16x288xbf16, #tpu.memory_space<vmem>>, vector<2x16x16x32xbf16>,
    %c0_198 = arith.constant 0 : index
    %c0_199 = arith.constant 0 : index
    %c15_200 = arith.constant 15 : index
    %c160 = arith.constant 160 : index
    %112 = vector.load %arg11[%c0_198, %c0_199, %c15_200, %c160] : memref<2x16x16x288xbf16, #tpu.memory_space<vmem>>, vector<2x16x1x32xbf16>
    tpu.vector_store %arg11[%c0_198, %c0_199, %c15_200, %c160], %95 {strides = array<i32>} : memref<2x16x16x288xbf16, #tpu.memory_space<vmem>>, vector<2x16x1x32xbf16>,
    %c0_201 = arith.constant 0 : index
    %c0_202 = arith.constant 0 : index
    %c1_203 = arith.constant 1 : index
    %c0_204 = arith.constant 0 : index
    %113 = vector.load %arg12[%c0_201, %c0_202, %c1_203, %c0_204] : memref<2x16x16x32xbf16, #tpu.memory_space<vmem>>, vector<2x16x15x32xbf16>
    %c0_205 = arith.constant 0 : index
    %c0_206 = arith.constant 0 : index
    %c0_207 = arith.constant 0 : index
    %c160_208 = arith.constant 160 : index
    %114 = vector.load %arg11[%c0_205, %c0_206, %c0_207, %c160_208] : memref<2x16x16x288xbf16, #tpu.memory_space<vmem>>, vector<2x16x15x32xbf16>
    tpu.vector_store %arg11[%c0_205, %c0_206, %c0_207, %c160_208], %113 {strides = array<i32>} : memref<2x16x16x288xbf16, #tpu.memory_space<vmem>>, vector<2x16x15x32xbf16>,
    %c0_209 = arith.constant 0 : index
    %c15_210 = arith.constant 15 : index
    %c0_211 = arith.constant 0 : index
    %c192 = arith.constant 192 : index
    %115 = vector.load %arg11[%c0_209, %c15_210, %c0_211, %c192] : memref<2x16x16x288xbf16, #tpu.memory_space<vmem>>, vector<2x1x16x32xbf16>
    tpu.vector_store %arg11[%c0_209, %c15_210, %c0_211, %c192], %93 {strides = array<i32>} : memref<2x16x16x288xbf16, #tpu.memory_space<vmem>>, vector<2x1x16x32xbf16>,
    %c0_212 = arith.constant 0 : index
    %c0_213 = arith.constant 0 : index
    %c0_214 = arith.constant 0 : index
    %c192_215 = arith.constant 192 : index
    %116 = vector.load %arg11[%c0_212, %c0_213, %c0_214, %c192_215] : memref<2x16x16x288xbf16, #tpu.memory_space<vmem>>, vector<2x16x1x32xbf16>
    tpu.vector_store %arg11[%c0_212, %c0_213, %c0_214, %c192_215], %95 {strides = array<i32>} : memref<2x16x16x288xbf16, #tpu.memory_space<vmem>>, vector<2x16x1x32xbf16>,
    %c0_216 = arith.constant 0 : index
    %c1_217 = arith.constant 1 : index
    %c0_218 = arith.constant 0 : index
    %c0_219 = arith.constant 0 : index
    %117 = vector.load %arg12[%c0_216, %c1_217, %c0_218, %c0_219] : memref<2x16x16x32xbf16, #tpu.memory_space<vmem>>, vector<2x15x15x32xbf16>
    %c0_220 = arith.constant 0 : index
    %c0_221 = arith.constant 0 : index
    %c1_222 = arith.constant 1 : index
    %c192_223 = arith.constant 192 : index
    %118 = vector.load %arg11[%c0_220, %c0_221, %c1_222, %c192_223] : memref<2x16x16x288xbf16, #tpu.memory_space<vmem>>, vector<2x15x15x32xbf16>
    tpu.vector_store %arg11[%c0_220, %c0_221, %c1_222, %c192_223], %117 {strides = array<i32>} : memref<2x16x16x288xbf16, #tpu.memory_space<vmem>>, vector<2x15x15x32xbf16>,
    %c0_224 = arith.constant 0 : index
    %c15_225 = arith.constant 15 : index
    %c0_226 = arith.constant 0 : index
    %c224 = arith.constant 224 : index
    %119 = vector.load %arg11[%c0_224, %c15_225, %c0_226, %c224] : memref<2x16x16x288xbf16, #tpu.memory_space<vmem>>, vector<2x1x16x32xbf16>
    tpu.vector_store %arg11[%c0_224, %c15_225, %c0_226, %c224], %93 {strides = array<i32>} : memref<2x16x16x288xbf16, #tpu.memory_space<vmem>>, vector<2x1x16x32xbf16>,
    %c0_227 = arith.constant 0 : index
    %c1_228 = arith.constant 1 : index
    %c0_229 = arith.constant 0 : index
    %c0_230 = arith.constant 0 : index
    %120 = vector.load %arg12[%c0_227, %c1_228, %c0_229, %c0_230] : memref<2x16x16x32xbf16, #tpu.memory_space<vmem>>, vector<2x15x16x32xbf16>
    %c0_231 = arith.constant 0 : index
    %c0_232 = arith.constant 0 : index
    %c0_233 = arith.constant 0 : index
    %c224_234 = arith.constant 224 : index
    %121 = vector.load %arg11[%c0_231, %c0_232, %c0_233, %c224_234] : memref<2x16x16x288xbf16, #tpu.memory_space<vmem>>, vector<2x15x16x32xbf16>
    tpu.vector_store %arg11[%c0_231, %c0_232, %c0_233, %c224_234], %120 {strides = array<i32>} : memref<2x16x16x288xbf16, #tpu.memory_space<vmem>>, vector<2x15x16x32xbf16>,
    %c0_235 = arith.constant 0 : index
    %c15_236 = arith.constant 15 : index
    %c0_237 = arith.constant 0 : index
    %c256 = arith.constant 256 : index
    %122 = vector.load %arg11[%c0_235, %c15_236, %c0_237, %c256] : memref<2x16x16x288xbf16, #tpu.memory_space<vmem>>, vector<2x1x16x32xbf16>
    tpu.vector_store %arg11[%c0_235, %c15_236, %c0_237, %c256], %93 {strides = array<i32>} : memref<2x16x16x288xbf16, #tpu.memory_space<vmem>>, vector<2x1x16x32xbf16>,
    %c0_238 = arith.constant 0 : index
    %c0_239 = arith.constant 0 : index
    %c15_240 = arith.constant 15 : index
    %c256_241 = arith.constant 256 : index
    %123 = vector.load %arg11[%c0_238, %c0_239, %c15_240, %c256_241] : memref<2x16x16x288xbf16, #tpu.memory_space<vmem>>, vector<2x16x1x32xbf16>
    tpu.vector_store %arg11[%c0_238, %c0_239, %c15_240, %c256_241], %95 {strides = array<i32>} : memref<2x16x16x288xbf16, #tpu.memory_space<vmem>>, vector<2x16x1x32xbf16>,
    %c0_242 = arith.constant 0 : index
    %c1_243 = arith.constant 1 : index
    %c1_244 = arith.constant 1 : index
    %c0_245 = arith.constant 0 : index
    %124 = vector.load %arg12[%c0_242, %c1_243, %c1_244, %c0_245] : memref<2x16x16x32xbf16, #tpu.memory_space<vmem>>, vector<2x15x15x32xbf16>
    %c0_246 = arith.constant 0 : index
    %c0_247 = arith.constant 0 : index
    %c0_248 = arith.constant 0 : index
    %c256_249 = arith.constant 256 : index
    %125 = vector.load %arg11[%c0_246, %c0_247, %c0_248, %c256_249] : memref<2x16x16x288xbf16, #tpu.memory_space<vmem>>, vector<2x15x15x32xbf16>
    tpu.vector_store %arg11[%c0_246, %c0_247, %c0_248, %c256_249], %124 {strides = array<i32>} : memref<2x16x16x288xbf16, #tpu.memory_space<vmem>>, vector<2x15x15x32xbf16>,
    %c0_250 = arith.constant 0 : index
    %c0_251 = arith.constant 0 : index
    %c0_252 = arith.constant 0 : index
    %c0_253 = arith.constant 0 : index
    %126 = vector.load %arg11[%c0_250, %c0_251, %c0_252, %c0_253] : memref<2x16x16x288xbf16, #tpu.memory_space<vmem>>, vector<2x16x16x288xbf16>
    %127 = vector.shape_cast %126 : vector<2x16x16x288xbf16> to vector<512x288xbf16>
    %c0_254 = arith.constant 0 : index
    %c0_255 = arith.constant 0 : index
    %128 = vector.load %arg4[%c0_254, %c0_255] : memref<288x2xbf16, #tpu.memory_space<vmem>>, vector<288x2xbf16>
    %cst_256 = arith.constant dense<0.000000e+00> : vector<512x2xf32>
    %129 = tpu.matmul %127, %128, %cst_256 {dimension_numbers = #tpu.dot_dimension_numbers<[1], [0], [0], [1], [0, 0, 1, 1], [], []>} : vector<512x288xbf16>, vector<288x2xbf16>, vector<512x2xf32> -> vector<512x2xf32>
    %c0_257 = arith.constant 0 : index
    %c0_258 = arith.constant 0 : index
    %130 = vector.load %arg6[%c0_257, %c0_258] : memref<1x2xf32, #tpu.memory_space<vmem>>, vector<1x2xf32>
    %131 = vector.broadcast %130 : vector<1x2xf32> to vector<512x2xf32>
    %132 = arith.addf %129, %131 : vector<512x2xf32>
    %c0_259 = arith.constant 0 : index
    %c0_260 = arith.constant 0 : index
    %133 = vector.load %arg5[%c0_259, %c0_260] : memref<288x2xbf16, #tpu.memory_space<vmem>>, vector<288x2xbf16>
    %cst_261 = arith.constant dense<0.000000e+00> : vector<512x2xf32>
    %134 = tpu.matmul %127, %133, %cst_261 {dimension_numbers = #tpu.dot_dimension_numbers<[1], [0], [0], [1], [0, 0, 1, 1], [], []>} : vector<512x288xbf16>, vector<288x2xbf16>, vector<512x2xf32> -> vector<512x2xf32>
    %c0_262 = arith.constant 0 : index
    %c0_263 = arith.constant 0 : index
    %135 = vector.load %arg7[%c0_262, %c0_263] : memref<1x2xf32, #tpu.memory_space<vmem>>, vector<1x2xf32>
    %136 = vector.broadcast %135 : vector<1x2xf32> to vector<512x2xf32>
    %137 = arith.addf %134, %136 : vector<512x2xf32>
    %cst_264 = arith.constant 2.000000e+00 : f32
    %138 = vector.broadcast %cst_264 : f32 to vector<512x2xf32>
    %139 = arith.addf %137, %138 : vector<512x2xf32>
    %140 = vector.extract_strided_slice %132 {offsets = [0, 0], sizes = [256, 2], strides = [1, 1]} : vector<512x2xf32> to vector<256x2xf32>
    %141 = tpu.transpose %140, [1, 0] : vector<256x2xf32> -> vector<2x256xf32>
    %142 = vector.extract_strided_slice %139 {offsets = [0, 0], sizes = [256, 2], strides = [1, 1]} : vector<512x2xf32> to vector<256x2xf32>
    %143 = tpu.transpose %142, [1, 0] : vector<256x2xf32> -> vector<2x256xf32>
    %cst_265 = arith.constant 0.000000e+00 : f32
    %144 = vector.broadcast %cst_265 : f32 to vector<2x256xf32>
    %145 = arith.subf %144, %143 : vector<2x256xf32>
    %146 = math.exp %145 : vector<2x256xf32>
    %cst_266 = arith.constant 1.000000e+00 : f32
    %147 = vector.broadcast %cst_266 : f32 to vector<2x256xf32>
    %148 = arith.addf %147, %146 : vector<2x256xf32>
    %cst_267 = arith.constant 1.000000e+00 : f32
    %149 = vector.broadcast %cst_267 : f32 to vector<2x256xf32>
    %150 = arith.divf %149, %148 : vector<2x256xf32>
    %c0_268 = arith.constant 0 : index
    %c0_269 = arith.constant 0 : index
    %c0_270 = arith.constant 0 : index
    %151 = vector.load %arg0[%c0_268, %c0_269, %c0_270] : memref<2x2x256xf32, #tpu.memory_space<vmem>>, vector<1x2x256xf32>
    %152 = vector.shape_cast %151 : vector<1x2x256xf32> to vector<2x256xf32>
    %153 = arith.mulf %150, %152 : vector<2x256xf32>
    %154 = arith.addf %153, %141 : vector<2x256xf32>
    %c0_271 = arith.constant 0 : index
    %c0_272 = arith.constant 0 : index
    %c0_273 = arith.constant 0 : index
    %155 = vector.load %arg8[%c0_271, %c0_272, %c0_273] : memref<2x2x256xf32, #tpu.memory_space<vmem>>, vector<1x2x256xf32>
    %156 = vector.shape_cast %155 : vector<1x2x256xf32> to vector<2x256xf32>
    %157 = vector.shape_cast %154 : vector<2x256xf32> to vector<1x2x256xf32>
    tpu.vector_store %arg8[%c0_271, %c0_272, %c0_273], %157 {strides = array<i32>} : memref<2x2x256xf32, #tpu.memory_space<vmem>>, vector<1x2x256xf32>,
    %158 = math.log %148 : vector<2x256xf32>
    %cst_274 = arith.constant 0.000000e+00 : f32
    %159 = vector.broadcast %cst_274 : f32 to vector<2x256xf32>
    %160 = arith.subf %159, %158 : vector<2x256xf32>
    %161 = vector.shape_cast %160 : vector<2x256xf32> to vector<1x2x256xf32>
    %cst_275 = arith.constant dense<0.000000e+00> : vector<1xf32>
    %162 = vector.multi_reduction <add>, %161, %cst_275 [1, 2] : vector<1x2x256xf32> to vector<1xf32>
    %163 = vector.shape_cast %162 : vector<1xf32> to vector<1x1x1xf32>
    %164 = vector.extract %163[0, 0, 0] : f32 from vector<1x1x1xf32>
    %165 = vector.broadcast %164 : f32 to vector<1x1xf32>
    %c0_276 = arith.constant 0 : index
    %c0_277 = arith.constant 0 : index
    %166 = vector.load %arg9[%c0_276, %c0_277] : memref<2x1xf32, #tpu.memory_space<vmem>>, vector<1x1xf32>
    tpu.vector_store %arg9[%c0_276, %c0_277], %165 {strides = array<i32>} : memref<2x1xf32, #tpu.memory_space<vmem>>, vector<1x1xf32>,
    %167 = vector.extract_strided_slice %132 {offsets = [256, 0], sizes = [256, 2], strides = [1, 1]} : vector<512x2xf32> to vector<256x2xf32>
    %168 = tpu.transpose %167, [1, 0] : vector<256x2xf32> -> vector<2x256xf32>
    %169 = vector.extract_strided_slice %139 {offsets = [256, 0], sizes = [256, 2], strides = [1, 1]} : vector<512x2xf32> to vector<256x2xf32>
    %170 = tpu.transpose %169, [1, 0] : vector<256x2xf32> -> vector<2x256xf32>
    %cst_278 = arith.constant 0.000000e+00 : f32
    %171 = vector.broadcast %cst_278 : f32 to vector<2x256xf32>
    %172 = arith.subf %171, %170 : vector<2x256xf32>
    %173 = math.exp %172 : vector<2x256xf32>
    %cst_279 = arith.constant 1.000000e+00 : f32
    %174 = vector.broadcast %cst_279 : f32 to vector<2x256xf32>
    %175 = arith.addf %174, %173 : vector<2x256xf32>
    %cst_280 = arith.constant 1.000000e+00 : f32
    %176 = vector.broadcast %cst_280 : f32 to vector<2x256xf32>
    %177 = arith.divf %176, %175 : vector<2x256xf32>
    %c1_281 = arith.constant 1 : index
    %c0_282 = arith.constant 0 : index
    %c0_283 = arith.constant 0 : index
    %178 = vector.load %arg0[%c1_281, %c0_282, %c0_283] : memref<2x2x256xf32, #tpu.memory_space<vmem>>, vector<1x2x256xf32>
    %179 = vector.shape_cast %178 : vector<1x2x256xf32> to vector<2x256xf32>
    %180 = arith.mulf %177, %179 : vector<2x256xf32>
    %181 = arith.addf %180, %168 : vector<2x256xf32>
    %c1_284 = arith.constant 1 : index
    %c0_285 = arith.constant 0 : index
    %c0_286 = arith.constant 0 : index
    %182 = vector.load %arg8[%c1_284, %c0_285, %c0_286] : memref<2x2x256xf32, #tpu.memory_space<vmem>>, vector<1x2x256xf32>
    %183 = vector.shape_cast %182 : vector<1x2x256xf32> to vector<2x256xf32>
    %184 = vector.shape_cast %181 : vector<2x256xf32> to vector<1x2x256xf32>
    tpu.vector_store %arg8[%c1_284, %c0_285, %c0_286], %184 {strides = array<i32>} : memref<2x2x256xf32, #tpu.memory_space<vmem>>, vector<1x2x256xf32>,
    %185 = math.log %175 : vector<2x256xf32>
    %cst_287 = arith.constant 0.000000e+00 : f32
    %186 = vector.broadcast %cst_287 : f32 to vector<2x256xf32>
    %187 = arith.subf %186, %185 : vector<2x256xf32>
    %188 = vector.shape_cast %187 : vector<2x256xf32> to vector<1x2x256xf32>
    %cst_288 = arith.constant dense<0.000000e+00> : vector<1xf32>
    %189 = vector.multi_reduction <add>, %188, %cst_288 [1, 2] : vector<1x2x256xf32> to vector<1xf32>
    %190 = vector.shape_cast %189 : vector<1xf32> to vector<1x1x1xf32>
    %191 = vector.extract %190[0, 0, 0] : f32 from vector<1x1x1xf32>
    %192 = vector.broadcast %191 : f32 to vector<1x1xf32>
    %c1_289 = arith.constant 1 : index
    %c0_290 = arith.constant 0 : index
    %193 = vector.load %arg9[%c1_289, %c0_290] : memref<2x1xf32, #tpu.memory_space<vmem>>, vector<1x1xf32>
    tpu.vector_store %arg9[%c1_289, %c0_290], %192 {strides = array<i32>} : memref<2x1xf32, #tpu.memory_space<vmem>>, vector<1x1xf32>,
    return
  }
}

</mosaic_0001>

<llo_original>
// kernel: affine_coupling_forward.1
$region0: #{affine_coupling_forward.1}
  #allocation0 [shape = 'u32[]', space=smem, size = 0x4, offset = 0x4, fixed_abs, tag = 'smem constant byte address 0x4 - core index']
  #allocation1 [shape = 'u32[144,128]{1,0:T(1,128)}', space=vmem, size = 0x12000, scoped, tag = 'internal scratch']
  #allocation2 [shape = 'bf16[2,16,16,18]{3,2,1,0:T(16,128)(2,1)}', space=vmem, size = 0x20000, scoped, tag = 'scratch operand']
  #allocation3 [shape = 'bf16[2,16,16,288]{3,2,1,0:T(16,128)(2,1)}', space=vmem, size = 0x60000, scoped, tag = 'scratch operand']
  #allocation4 [shape = 'bf16[2,16,16,32]{3,2,1,0:T(16,128)(2,1)}', space=vmem, size = 0x20000, scoped, tag = 'scratch operand']
  %s0 = inlined_call_operand.vmem [shape: f32[2,2,256], index: 0, kind: input, shape index: {}]
  %s1 = inlined_call_operand.vmem [shape: bf16[2,16,16,2], index: 1, kind: input, shape index: {}]
  %s2 = inlined_call_operand.vmem [shape: bf16[18,32], index: 2, kind: input, shape index: {}]
  %s3 = inlined_call_operand.vmem [shape: bf16[32,32], index: 3, kind: input, shape index: {}]
  %s4 = inlined_call_operand.vmem [shape: bf16[288,2], index: 4, kind: input, shape index: {}]
  %s5 = inlined_call_operand.vmem [shape: bf16[288,2], index: 5, kind: input, shape index: {}]
  %s6 = inlined_call_operand.vmem [shape: f32[1,2], index: 6, kind: input, shape index: {}]
  %s7 = inlined_call_operand.vmem [shape: f32[1,2], index: 7, kind: input, shape index: {}]
  %s8 = inlined_call_operand.vmem [shape: f32[2,2,256], index: 8, kind: output, shape index: {0}]
  %s9 = inlined_call_operand.vmem [shape: f32[2,1], index: 9, kind: output, shape index: {1}]
  %10 = xla_tuple %s8, %s9
  %s11 = sld [smem:[#allocation0]]
  $region50: #{affine_coupling_forward.1} parent=0
    _
  %s13 = ssub.s32 1, %s11
  %s14 = scalar_select 0, %s13, %s11
  // Predicated region
  $region2: #{affine_coupling_forward.1} parent=0 // pred_check
    _
  $region3: #{affine_coupling_forward.1} parent=0 // pred_check_branch
    %16 = sbr.rel (0) target = $region5
  $region4: #{affine_coupling_forward.1} parent=0 // pred_region
    _
  $region5: #{affine_coupling_forward.1} parent=0 // pred_fallthru
    _
  // Predicated region
  $region6: #{affine_coupling_forward.1} parent=0 // pred_check
    _
  $region7: #{affine_coupling_forward.1} parent=0 // pred_check_branch
    %18 = sbr.rel (0) target = $region9
  $region8: #{affine_coupling_forward.1} parent=0 // pred_region
    _
  $region9: #{affine_coupling_forward.1} parent=0 // pred_fallthru
    _
  // Predicated region
  $region10: #{affine_coupling_forward.1} parent=0 // pred_check
    _
  $region11: #{affine_coupling_forward.1} parent=0 // pred_check_branch
    %20 = sbr.rel (0) target = $region13
  $region12: #{affine_coupling_forward.1} parent=0 // pred_region
    _
  $region13: #{affine_coupling_forward.1} parent=0 // pred_fallthru
    _
  // Predicated region
  $region14: #{affine_coupling_forward.1} parent=0 // pred_check
    _
  $region15: #{affine_coupling_forward.1} parent=0 // pred_check_branch
    %22 = sbr.rel (0) target = $region17
  $region16: #{affine_coupling_forward.1} parent=0 // pred_region
    _
  $region17: #{affine_coupling_forward.1} parent=0 // pred_fallthru
    _
  // Predicated region
  $region18: #{affine_coupling_forward.1} parent=0 // pred_check
    _
  $region19: #{affine_coupling_forward.1} parent=0 // pred_check_branch
    %24 = sbr.rel (0) target = $region21
  $region20: #{affine_coupling_forward.1} parent=0 // pred_region
    _
  $region21: #{affine_coupling_forward.1} parent=0 // pred_fallthru
    _
  // Predicated region
  $region22: #{affine_coupling_forward.1} parent=0 // pred_check
    _
  $region23: #{affine_coupling_forward.1} parent=0 // pred_check_branch
    %26 = sbr.rel (0) target = $region25
  $region24: #{affine_coupling_forward.1} parent=0 // pred_region
    _
  $region25: #{affine_coupling_forward.1} parent=0 // pred_fallthru
    _
  // Predicated region
  $region26: #{affine_coupling_forward.1} parent=0 // pred_check
    _
  $region27: #{affine_coupling_forward.1} parent=0 // pred_check_branch
    %28 = sbr.rel (0) target = $region29
  $region28: #{affine_coupling_forward.1} parent=0 // pred_region
    _
  $region29: #{affine_coupling_forward.1} parent=0 // pred_fallthru
    _
  // Predicated region
  $region30: #{affine_coupling_forward.1} parent=0 // pred_check
    _
  $region31: #{affine_coupling_forward.1} parent=0 // pred_check_branch
    %30 = sbr.rel (0) target = $region33
  $region32: #{affine_coupling_forward.1} parent=0 // pred_region
    _
  $region33: #{affine_coupling_forward.1} parent=0 // pred_fallthru
    _
  %vm32 = vcmask 15360
  %33 = vst.msk [vmem:[#allocation2] sm:$0xff] %vm32, 0
  %34 = vst.msk [vmem:[#allocation2 + $0x80] sm:$0xff] %vm32, 0
  %vm35 = vcmask 8192
  %vm36 = vsmask.f32 256
  %vm37 = vmand %vm35, %vm36
  %v38 = vld [vmem:[#allocation2] sm:$0x1]
  %v39 = vsel %vm37, 0, %v38
  %40 = vst [vmem:[#allocation2] sm:$0x1] %v39
  %v41 = vld [vmem:[#allocation2 + $0x8] sm:$0x1]
  %v42 = vsel %vm37, 0, %v41
  %43 = vst [vmem:[#allocation2 + $0x8] sm:$0x1] %v42
  %v44 = vld [vmem:[#allocation2 + $0x10] sm:$0x1]
  %v45 = vsel %vm37, 0, %v44
  %46 = vst [vmem:[#allocation2 + $0x10] sm:$0x1] %v45
  %v47 = vld [vmem:[#allocation2 + $0x18] sm:$0x1]
  %v48 = vsel %vm37, 0, %v47
  %49 = vst [vmem:[#allocation2 + $0x18] sm:$0x1] %v48
  %v50 = vld [vmem:[#allocation2 + $0x20] sm:$0x1]
  %v51 = vsel %vm37, 0, %v50
  %52 = vst [vmem:[#allocation2 + $0x20] sm:$0x1] %v51
  %v53 = vld [vmem:[#allocation2 + $0x28] sm:$0x1]
  %v54 = vsel %vm37, 0, %v53
  %55 = vst [vmem:[#allocation2 + $0x28] sm:$0x1] %v54
  %v56 = vld [vmem:[#allocation2 + $0x30] sm:$0x1]
  %v57 = vsel %vm37, 0, %v56
  %58 = vst [vmem:[#allocation2 + $0x30] sm:$0x1] %v57
  %v59 = vld [vmem:[#allocation2 + $0x38] sm:$0x1]
  %v60 = vsel %vm37, 0, %v59
  %61 = vst [vmem:[#allocation2 + $0x38] sm:$0x1] %v60
  %v62 = vld [vmem:[#allocation2 + $0x40] sm:$0x1]
  %v63 = vsel %vm37, 0, %v62
  %64 = vst [vmem:[#allocation2 + $0x40] sm:$0x1] %v63
  %v65 = vld [vmem:[#allocation2 + $0x48] sm:$0x1]
  %v66 = vsel %vm37, 0, %v65
  %67 = vst [vmem:[#allocation2 + $0x48] sm:$0x1] %v66
  %v68 = vld [vmem:[#allocation2 + $0x50] sm:$0x1]
  %v69 = vsel %vm37, 0, %v68
  %70 = vst [vmem:[#allocation2 + $0x50] sm:$0x1] %v69
  %v71 = vld [vmem:[#allocation2 + $0x58] sm:$0x1]
  %v72 = vsel %vm37, 0, %v71
  %73 = vst [vmem:[#allocation2 + $0x58] sm:$0x1] %v72
  %v74 = vld [vmem:[#allocation2 + $0x60] sm:$0x1]
  %v75 = vsel %vm37, 0, %v74
  %76 = vst [vmem:[#allocation2 + $0x60] sm:$0x1] %v75
  %v77 = vld [vmem:[#allocation2 + $0x68] sm:$0x1]
  %v78 = vsel %vm37, 0, %v77
  %79 = vst [vmem:[#allocation2 + $0x68] sm:$0x1] %v78
  %v80 = vld [vmem:[#allocation2 + $0x70] sm:$0x1]
  %v81 = vsel %vm37, 0, %v80
  %82 = vst [vmem:[#allocation2 + $0x70] sm:$0x1] %v81
  %v83 = vld [vmem:[#allocation2 + $0x78] sm:$0x1]
  %v84 = vsel %vm37, 0, %v83
  %85 = vst [vmem:[#allocation2 + $0x78] sm:$0x1] %v84
  %v86 = vld [vmem:[#allocation2 + $0x80] sm:$0x1]
  %v87 = vsel %vm37, 0, %v86
  %88 = vst [vmem:[#allocation2 + $0x80] sm:$0x1] %v87
  %v89 = vld [vmem:[#allocation2 + $0x88] sm:$0x1]
  %v90 = vsel %vm37, 0, %v89
  %91 = vst [vmem:[#allocation2 + $0x88] sm:$0x1] %v90
  %v92 = vld [vmem:[#allocation2 + $0x90] sm:$0x1]
  %v93 = vsel %vm37, 0, %v92
  %94 = vst [vmem:[#allocation2 + $0x90] sm:$0x1] %v93
  %v95 = vld [vmem:[#allocation2 + $0x98] sm:$0x1]
  %v96 = vsel %vm37, 0, %v95
  %97 = vst [vmem:[#allocation2 + $0x98] sm:$0x1] %v96
  %v98 = vld [vmem:[#allocation2 + $0xa0] sm:$0x1]
  %v99 = vsel %vm37, 0, %v98
  %100 = vst [vmem:[#allocation2 + $0xa0] sm:$0x1] %v99
  %v101 = vld [vmem:[#allocation2 + $0xa8] sm:$0x1]
  %v102 = vsel %vm37, 0, %v101
  %103 = vst [vmem:[#allocation2 + $0xa8] sm:$0x1] %v102
  %v104 = vld [vmem:[#allocation2 + $0xb0] sm:$0x1]
  %v105 = vsel %vm37, 0, %v104
  %106 = vst [vmem:[#allocation2 + $0xb0] sm:$0x1] %v105
  %v107 = vld [vmem:[#allocation2 + $0xb8] sm:$0x1]
  %v108 = vsel %vm37, 0, %v107
  %109 = vst [vmem:[#allocation2 + $0xb8] sm:$0x1] %v108
  %v110 = vld [vmem:[#allocation2 + $0xc0] sm:$0x1]
  %v111 = vsel %vm37, 0, %v110
  %112 = vst [vmem:[#allocation2 + $0xc0] sm:$0x1] %v111
  %v113 = vld [vmem:[#allocation2 + $0xc8] sm:$0x1]
  %v114 = vsel %vm37, 0, %v113
  %115 = vst [vmem:[#allocation2 + $0xc8] sm:$0x1] %v114
  %v116 = vld [vmem:[#allocation2 + $0xd0] sm:$0x1]
  %v117 = vsel %vm37, 0, %v116
  %118 = vst [vmem:[#allocation2 + $0xd0] sm:$0x1] %v117
  %v119 = vld [vmem:[#allocation2 + $0xd8] sm:$0x1]
  %v120 = vsel %vm37, 0, %v119
  %121 = vst [vmem:[#allocation2 + $0xd8] sm:$0x1] %v120
  %v122 = vld [vmem:[#allocation2 + $0xe0] sm:$0x1]
  %v123 = vsel %vm37, 0, %v122
  %124 = vst [vmem:[#allocation2 + $0xe0] sm:$0x1] %v123
  %v125 = vld [vmem:[#allocation2 + $0xe8] sm:$0x1]
  %v126 = vsel %vm37, 0, %v125
  %127 = vst [vmem:[#allocation2 + $0xe8] sm:$0x1] %v126
  %v128 = vld [vmem:[#allocation2 + $0xf0] sm:$0x1]
  %v129 = vsel %vm37, 0, %v128
  %130 = vst [vmem:[#allocation2 + $0xf0] sm:$0x1] %v129
  %v131 = vld [vmem:[#allocation2 + $0xf8] sm:$0x1]
  %v132 = vsel %vm37, 0, %v131
  %133 = vst [vmem:[#allocation2 + $0xf8] sm:$0x1] %v132
  %v134 = vld [vmem:[%s1] sm:$0xf]
  %v135 = vld [vmem:[%s1 + $0x4] sm:$0xf]
  %v136 = vld [vmem:[%s1 + $0x8] sm:$0xf]
  %v137 = vld [vmem:[%s1 + $0xc] sm:$0xf]
  %v138 = vld [vmem:[%s1 + $0x10] sm:$0xf]
  %v139 = vld [vmem:[%s1 + $0x14] sm:$0xf]
  %v140 = vld [vmem:[%s1 + $0x18] sm:$0xf]
  %v141 = vld [vmem:[%s1 + $0x1c] sm:$0xf]
  %v142 = vld [vmem:[%s1 + $0x20] sm:$0xf]
  %v143 = vld [vmem:[%s1 + $0x24] sm:$0xf]
  %v144 = vld [vmem:[%s1 + $0x28] sm:$0xf]
  %v145 = vld [vmem:[%s1 + $0x2c] sm:$0xf]
  %v146 = vld [vmem:[%s1 + $0x30] sm:$0xf]
  %v147 = vld [vmem:[%s1 + $0x34] sm:$0xf]
  %v148 = vld [vmem:[%s1 + $0x38] sm:$0xf]
  %v149 = vld [vmem:[%s1 + $0x3c] sm:$0xf]
  %v150 = vld [vmem:[%s1 + $0x40] sm:$0xf]
  %v151 = vld [vmem:[%s1 + $0x44] sm:$0xf]
  %v152 = vld [vmem:[%s1 + $0x48] sm:$0xf]
  %v153 = vld [vmem:[%s1 + $0x4c] sm:$0xf]
  %v154 = vld [vmem:[%s1 + $0x50] sm:$0xf]
  %v155 = vld [vmem:[%s1 + $0x54] sm:$0xf]
  %v156 = vld [vmem:[%s1 + $0x58] sm:$0xf]
  %v157 = vld [vmem:[%s1 + $0x5c] sm:$0xf]
  %v158 = vld [vmem:[%s1 + $0x60] sm:$0xf]
  %v159 = vld [vmem:[%s1 + $0x64] sm:$0xf]
  %v160 = vld [vmem:[%s1 + $0x68] sm:$0xf]
  %v161 = vld [vmem:[%s1 + $0x6c] sm:$0xf]
  %v162 = vld [vmem:[%s1 + $0x70] sm:$0xf]
  %v163 = vld [vmem:[%s1 + $0x74] sm:$0xf]
  %v164 = vld [vmem:[%s1 + $0x80] sm:$0xf]
  %v165 = vld [vmem:[%s1 + $0x84] sm:$0xf]
  %v166 = vld [vmem:[%s1 + $0x88] sm:$0xf]
  %v167 = vld [vmem:[%s1 + $0x8c] sm:$0xf]
  %v168 = vld [vmem:[%s1 + $0x90] sm:$0xf]
  %v169 = vld [vmem:[%s1 + $0x94] sm:$0xf]
  %v170 = vld [vmem:[%s1 + $0x98] sm:$0xf]
  %v171 = vld [vmem:[%s1 + $0x9c] sm:$0xf]
  %v172 = vld [vmem:[%s1 + $0xa0] sm:$0xf]
  %v173 = vld [vmem:[%s1 + $0xa4] sm:$0xf]
  %v174 = vld [vmem:[%s1 + $0xa8] sm:$0xf]
  %v175 = vld [vmem:[%s1 + $0xac] sm:$0xf]
  %v176 = vld [vmem:[%s1 + $0xb0] sm:$0xf]
  %v177 = vld [vmem:[%s1 + $0xb4] sm:$0xf]
  %v178 = vld [vmem:[%s1 + $0xb8] sm:$0xf]
  %v179 = vld [vmem:[%s1 + $0xbc] sm:$0xf]
  %v180 = vld [vmem:[%s1 + $0xc0] sm:$0xf]
  %v181 = vld [vmem:[%s1 + $0xc4] sm:$0xf]
  %v182 = vld [vmem:[%s1 + $0xc8] sm:$0xf]
  %v183 = vld [vmem:[%s1 + $0xcc] sm:$0xf]
  %v184 = vld [vmem:[%s1 + $0xd0] sm:$0xf]
  %v185 = vld [vmem:[%s1 + $0xd4] sm:$0xf]
  %v186 = vld [vmem:[%s1 + $0xd8] sm:$0xf]
  %v187 = vld [vmem:[%s1 + $0xdc] sm:$0xf]
  %v188 = vld [vmem:[%s1 + $0xe0] sm:$0xf]
  %v189 = vld [vmem:[%s1 + $0xe4] sm:$0xf]
  %v190 = vld [vmem:[%s1 + $0xe8] sm:$0xf]
  %v191 = vld [vmem:[%s1 + $0xec] sm:$0xf]
  %v192 = vld [vmem:[%s1 + $0xf0] sm:$0xf]
  %v193 = vld [vmem:[%s1 + $0xf4] sm:$0xf]
  %v254 = vunpack.c.l.b16 %v134
  %v255 = vunpack.c.l.b16 %v135
  %v256 = vunpack.c.l.b16 %v136
  %v257 = vunpack.c.l.b16 %v137
  %v258 = vunpack.c.l.b16 %v138
  %v259 = vunpack.c.l.b16 %v139
  %v260 = vunpack.c.l.b16 %v140
  %v261 = vunpack.c.l.b16 %v141
  %v262 = vunpack.c.l.b16 %v142
  %v263 = vunpack.c.l.b16 %v143
  %v264 = vunpack.c.l.b16 %v144
  %v265 = vunpack.c.l.b16 %v145
  %v266 = vunpack.c.l.b16 %v146
  %v267 = vunpack.c.l.b16 %v147
  %v268 = vunpack.c.l.b16 %v148
  %v269 = vunpack.c.l.b16 %v149
  %v270 = vunpack.c.l.b16 %v150
  %v271 = vunpack.c.l.b16 %v151
  %v272 = vunpack.c.l.b16 %v152
  %v273 = vunpack.c.l.b16 %v153
  %v274 = vunpack.c.l.b16 %v154
  %v275 = vunpack.c.l.b16 %v155
  %v276 = vunpack.c.l.b16 %v156
  %v277 = vunpack.c.l.b16 %v157
  %v278 = vunpack.c.l.b16 %v158
  %v279 = vunpack.c.l.b16 %v159
  %v280 = vunpack.c.l.b16 %v160
  %v281 = vunpack.c.l.b16 %v161
  %v282 = vunpack.c.l.b16 %v162
  %v283 = vunpack.c.l.b16 %v163
  %v284 = vunpack.c.l.b16 %v164
  %v285 = vunpack.c.l.b16 %v165
  %v286 = vunpack.c.l.b16 %v166
  %v287 = vunpack.c.l.b16 %v167
  %v288 = vunpack.c.l.b16 %v168
  %v289 = vunpack.c.l.b16 %v169
  %v290 = vunpack.c.l.b16 %v170
  %v291 = vunpack.c.l.b16 %v171
  %v292 = vunpack.c.l.b16 %v172
  %v293 = vunpack.c.l.b16 %v173
  %v294 = vunpack.c.l.b16 %v174
  %v295 = vunpack.c.l.b16 %v175
  %v296 = vunpack.c.l.b16 %v176
  %v297 = vunpack.c.l.b16 %v177
  %v298 = vunpack.c.l.b16 %v178
  %v299 = vunpack.c.l.b16 %v179
  %v300 = vunpack.c.l.b16 %v180
  %v301 = vunpack.c.l.b16 %v181
  %v302 = vunpack.c.l.b16 %v182
  %v303 = vunpack.c.l.b16 %v183
  %v304 = vunpack.c.l.b16 %v184
  %v305 = vunpack.c.l.b16 %v185
  %v306 = vunpack.c.l.b16 %v186
  %v307 = vunpack.c.l.b16 %v187
  %v308 = vunpack.c.l.b16 %v188
  %v309 = vunpack.c.l.b16 %v189
  %v310 = vunpack.c.l.b16 %v190
  %v311 = vunpack.c.l.b16 %v191
  %v312 = vunpack.c.l.b16 %v192
  %v313 = vunpack.c.l.b16 %v193
  %v314 = vpack.c.b16 %v255, %v254
  %v315 = vpack.c.b16 %v257, %v256
  %v316 = vpack.c.b16 %v259, %v258
  %v317 = vpack.c.b16 %v261, %v260
  %v318 = vpack.c.b16 %v263, %v262
  %v319 = vpack.c.b16 %v265, %v264
  %v320 = vpack.c.b16 %v267, %v266
  %v321 = vpack.c.b16 %v269, %v268
  %v322 = vpack.c.b16 %v271, %v270
  %v323 = vpack.c.b16 %v273, %v272
  %v324 = vpack.c.b16 %v275, %v274
  %v325 = vpack.c.b16 %v277, %v276
  %v326 = vpack.c.b16 %v279, %v278
  %v327 = vpack.c.b16 %v281, %v280
  %v328 = vpack.c.b16 %v283, %v282
  %v329 = vpack.c.b16 %v285, %v284
  %v330 = vpack.c.b16 %v287, %v286
  %v331 = vpack.c.b16 %v289, %v288
  %v332 = vpack.c.b16 %v291, %v290
  %v333 = vpack.c.b16 %v293, %v292
  %v334 = vpack.c.b16 %v295, %v294
  %v335 = vpack.c.b16 %v297, %v296
  %v336 = vpack.c.b16 %v299, %v298
  %v337 = vpack.c.b16 %v301, %v300
  %v338 = vpack.c.b16 %v303, %v302
  %v339 = vpack.c.b16 %v305, %v304
  %v340 = vpack.c.b16 %v307, %v306
  %v341 = vpack.c.b16 %v309, %v308
  %v342 = vpack.c.b16 %v311, %v310
  %v343 = vpack.c.b16 %v313, %v312
  %v345 = vshrl.u32 %v314, 16
  %v347 = vrot.slane %v345, 7
  %v348 = vshll.u32 %v314, 16
  %v350 = vor.u32 %v347, %v348
  %v352 = vshrl.u32 %v315, 16
  %v354 = vrot.slane %v352, 7
  %v355 = vshll.u32 %v315, 16
  %v357 = vor.u32 %v354, %v355
  %v359 = vshrl.u32 %v316, 16
  %v361 = vrot.slane %v359, 7
  %v362 = vshll.u32 %v316, 16
  %v364 = vor.u32 %v361, %v362
  %v366 = vshrl.u32 %v317, 16
  %v368 = vrot.slane %v366, 7
  %v369 = vshll.u32 %v317, 16
  %v371 = vor.u32 %v368, %v369
  %v373 = vshrl.u32 %v318, 16
  %v375 = vrot.slane %v373, 7
  %v376 = vshll.u32 %v318, 16
  %v378 = vor.u32 %v375, %v376
  %v380 = vshrl.u32 %v319, 16
  %v382 = vrot.slane %v380, 7
  %v383 = vshll.u32 %v319, 16
  %v385 = vor.u32 %v382, %v383
  %v387 = vshrl.u32 %v320, 16
  %v389 = vrot.slane %v387, 7
  %v390 = vshll.u32 %v320, 16
  %v392 = vor.u32 %v389, %v390
  %v394 = vshrl.u32 %v321, 16
  %v396 = vrot.slane %v394, 7
  %v397 = vshll.u32 %v321, 16
  %v399 = vor.u32 %v396, %v397
  %v401 = vshrl.u32 %v322, 16
  %v403 = vrot.slane %v401, 7
  %v404 = vshll.u32 %v322, 16
  %v406 = vor.u32 %v403, %v404
  %v408 = vshrl.u32 %v323, 16
  %v410 = vrot.slane %v408, 7
  %v411 = vshll.u32 %v323, 16
  %v413 = vor.u32 %v410, %v411
  %v415 = vshrl.u32 %v324, 16
  %v417 = vrot.slane %v415, 7
  %v418 = vshll.u32 %v324, 16
  %v420 = vor.u32 %v417, %v418
  %v422 = vshrl.u32 %v325, 16
  %v424 = vrot.slane %v422, 7
  %v425 = vshll.u32 %v325, 16
  %v427 = vor.u32 %v424, %v425
  %v429 = vshrl.u32 %v326, 16
  %v431 = vrot.slane %v429, 7
  %v432 = vshll.u32 %v326, 16
  %v434 = vor.u32 %v431, %v432
  %v436 = vshrl.u32 %v327, 16
  %v438 = vrot.slane %v436, 7
  %v439 = vshll.u32 %v327, 16
  %v441 = vor.u32 %v438, %v439
  %v443 = vshrl.u32 %v328, 16
  %v445 = vrot.slane %v443, 7
  %v446 = vshll.u32 %v328, 16
  %v448 = vor.u32 %v445, %v446
  %v450 = vshrl.u32 %v329, 16
  %v452 = vrot.slane %v450, 7
  %v453 = vshll.u32 %v329, 16
  %v455 = vor.u32 %v452, %v453
  %v457 = vshrl.u32 %v330, 16
  %v459 = vrot.slane %v457, 7
  %v460 = vshll.u32 %v330, 16
  %v462 = vor.u32 %v459, %v460
  %v464 = vshrl.u32 %v331, 16
  %v466 = vrot.slane %v464, 7
  %v467 = vshll.u32 %v331, 16
  %v469 = vor.u32 %v466, %v467
  %v471 = vshrl.u32 %v332, 16
  %v473 = vrot.slane %v471, 7
  %v474 = vshll.u32 %v332, 16
  %v476 = vor.u32 %v473, %v474
  %v478 = vshrl.u32 %v333, 16
  %v480 = vrot.slane %v478, 7
  %v481 = vshll.u32 %v333, 16
  %v483 = vor.u32 %v480, %v481
  %v485 = vshrl.u32 %v334, 16
  %v487 = vrot.slane %v485, 7
  %v488 = vshll.u32 %v334, 16
  %v490 = vor.u32 %v487, %v488
  %v492 = vshrl.u32 %v335, 16
  %v494 = vrot.slane %v492, 7
  %v495 = vshll.u32 %v335, 16
  %v497 = vor.u32 %v494, %v495
  %v499 = vshrl.u32 %v336, 16
  %v501 = vrot.slane %v499, 7
  %v502 = vshll.u32 %v336, 16
  %v504 = vor.u32 %v501, %v502
  %v506 = vshrl.u32 %v337, 16
  %v508 = vrot.slane %v506, 7
  %v509 = vshll.u32 %v337, 16
  %v511 = vor.u32 %v508, %v509
  %v513 = vshrl.u32 %v338, 16
  %v515 = vrot.slane %v513, 7
  %v516 = vshll.u32 %v338, 16
  %v518 = vor.u32 %v515, %v516
  %v520 = vshrl.u32 %v339, 16
  %v522 = vrot.slane %v520, 7
  %v523 = vshll.u32 %v339, 16
  %v525 = vor.u32 %v522, %v523
  %v527 = vshrl.u32 %v340, 16
  %v529 = vrot.slane %v527, 7
  %v530 = vshll.u32 %v340, 16
  %v532 = vor.u32 %v529, %v530
  %v534 = vshrl.u32 %v341, 16
  %v536 = vrot.slane %v534, 7
  %v537 = vshll.u32 %v341, 16
  %v539 = vor.u32 %v536, %v537
  %v541 = vshrl.u32 %v342, 16
  %v543 = vrot.slane %v541, 7
  %v544 = vshll.u32 %v342, 16
  %v546 = vor.u32 %v543, %v544
  %v548 = vshrl.u32 %v343, 16
  %v550 = vrot.slane %v548, 7
  %v551 = vshll.u32 %v343, 16
  %v553 = vor.u32 %v550, %v551
  %s584 = scalar_lea.vmem [#allocation2], 8
  %vm585 = vcmask 15360
  %vm586 = vsmask.f32 7938
  %vm587 = vmand %vm585, %vm586
  %v588 = vld [vmem:[%s584] sm:$0xff]
  %v589 = vsel %vm587, %v350, %v588
  %590 = vst [vmem:[%s584] sm:$0xff] %v589
  %v591 = vld [vmem:[%s584 + $0x8] sm:$0xff]
  %v592 = vsel %vm587, %v357, %v591
  %593 = vst [vmem:[%s584 + $0x8] sm:$0xff] %v592
  %v594 = vld [vmem:[%s584 + $0x10] sm:$0xff]
  %v595 = vsel %vm587, %v364, %v594
  %596 = vst [vmem:[%s584 + $0x10] sm:$0xff] %v595
  %v597 = vld [vmem:[%s584 + $0x18] sm:$0xff]
  %v598 = vsel %vm587, %v371, %v597
  %599 = vst [vmem:[%s584 + $0x18] sm:$0xff] %v598
  %v600 = vld [vmem:[%s584 + $0x20] sm:$0xff]
  %v601 = vsel %vm587, %v378, %v600
  %602 = vst [vmem:[%s584 + $0x20] sm:$0xff] %v601
  %v603 = vld [vmem:[%s584 + $0x28] sm:$0xff]
  %v604 = vsel %vm587, %v385, %v603
  %605 = vst [vmem:[%s584 + $0x28] sm:$0xff] %v604
  %v606 = vld [vmem:[%s584 + $0x30] sm:$0xff]
  %v607 = vsel %vm587, %v392, %v606
  %608 = vst [vmem:[%s584 + $0x30] sm:$0xff] %v607
  %v609 = vld [vmem:[%s584 + $0x38] sm:$0xff]
  %v610 = vsel %vm587, %v399, %v609
  %611 = vst [vmem:[%s584 + $0x38] sm:$0xff] %v610
  %v612 = vld [vmem:[%s584 + $0x40] sm:$0xff]
  %v613 = vsel %vm587, %v406, %v612
  %614 = vst [vmem:[%s584 + $0x40] sm:$0xff] %v613
  %v615 = vld [vmem:[%s584 + $0x48] sm:$0xff]
  %v616 = vsel %vm587, %v413, %v615
  %617 = vst [vmem:[%s584 + $0x48] sm:$0xff] %v616
  %v618 = vld [vmem:[%s584 + $0x50] sm:$0xff]
  %v619 = vsel %vm587, %v420, %v618
  %620 = vst [vmem:[%s584 + $0x50] sm:$0xff] %v619
  %v621 = vld [vmem:[%s584 + $0x58] sm:$0xff]
  %v622 = vsel %vm587, %v427, %v621
  %623 = vst [vmem:[%s584 + $0x58] sm:$0xff] %v622
  %v624 = vld [vmem:[%s584 + $0x60] sm:$0xff]
  %v625 = vsel %vm587, %v434, %v624
  %626 = vst [vmem:[%s584 + $0x60] sm:$0xff] %v625
  %v627 = vld [vmem:[%s584 + $0x68] sm:$0xff]
  %v628 = vsel %vm587, %v441, %v627
  %629 = vst [vmem:[%s584 + $0x68] sm:$0xff] %v628
  %v630 = vld [vmem:[%s584 + $0x70] sm:$0xff]
  %v631 = vsel %vm587, %v448, %v630
  %632 = vst [vmem:[%s584 + $0x70] sm:$0xff] %v631
  %v633 = vld [vmem:[%s584 + $0x80] sm:$0xff]
  %v634 = vsel %vm587, %v455, %v633
  %635 = vst [vmem:[%s584 + $0x80] sm:$0xff] %v634
  %v636 = vld [vmem:[%s584 + $0x88] sm:$0xff]
  %v637 = vsel %vm587, %v462, %v636
  %638 = vst [vmem:[%s584 + $0x88] sm:$0xff] %v637
  %v639 = vld [vmem:[%s584 + $0x90] sm:$0xff]
  %v640 = vsel %vm587, %v469, %v639
  %641 = vst [vmem:[%s584 + $0x90] sm:$0xff] %v640
  %v642 = vld [vmem:[%s584 + $0x98] sm:$0xff]
  %v643 = vsel %vm587, %v476, %v642
  %644 = vst [vmem:[%s584 + $0x98] sm:$0xff] %v643
  %v645 = vld [vmem:[%s584 + $0xa0] sm:$0xff]
  %v646 = vsel %vm587, %v483, %v645
  %647 = vst [vmem:[%s584 + $0xa0] sm:$0xff] %v646
  %v648 = vld [vmem:[%s584 + $0xa8] sm:$0xff]
  %v649 = vsel %vm587, %v490, %v648
  %650 = vst [vmem:[%s584 + $0xa8] sm:$0xff] %v649
  %v651 = vld [vmem:[%s584 + $0xb0] sm:$0xff]
  %v652 = vsel %vm587, %v497, %v651
  %653 = vst [vmem:[%s584 + $0xb0] sm:$0xff] %v652
  %v654 = vld [vmem:[%s584 + $0xb8] sm:$0xff]
  %v655 = vsel %vm587, %v504, %v654
  %656 = vst [vmem:[%s584 + $0xb8] sm:$0xff] %v655
  %v657 = vld [vmem:[%s584 + $0xc0] sm:$0xff]
  %v658 = vsel %vm587, %v511, %v657
  %659 = vst [vmem:[%s584 + $0xc0] sm:$0xff] %v658
  %v660 = vld [vmem:[%s584 + $0xc8] sm:$0xff]
  %v661 = vsel %vm587, %v518, %v660
  %662 = vst [vmem:[%s584 + $0xc8] sm:$0xff] %v661
  %v663 = vld [vmem:[%s584 + $0xd0] sm:$0xff]
  %v664 = vsel %vm587, %v525, %v663
  %665 = vst [vmem:[%s584 + $0xd0] sm:$0xff] %v664
  %v666 = vld [vmem:[%s584 + $0xd8] sm:$0xff]
  %v667 = vsel %vm587, %v532, %v666
  %668 = vst [vmem:[%s584 + $0xd8] sm:$0xff] %v667
  %v669 = vld [vmem:[%s584 + $0xe0] sm:$0xff]
  %v670 = vsel %vm587, %v539, %v669
  %671 = vst [vmem:[%s584 + $0xe0] sm:$0xff] %v670
  %v672 = vld [vmem:[%s584 + $0xe8] sm:$0xff]
  %v673 = vsel %vm587, %v546, %v672
  %674 = vst [vmem:[%s584 + $0xe8] sm:$0xff] %v673
  %v675 = vld [vmem:[%s584 + $0xf0] sm:$0xff]
  %v676 = vsel %vm587, %v553, %v675
  %677 = vst [vmem:[%s584 + $0xf0] sm:$0xff] %v676
  %vm678 = vcmask 31760
  %679 = vst.msk [vmem:[#allocation2] sm:$0xff] %vm678, 0
  %680 = vst.msk [vmem:[#allocation2 + $0x80] sm:$0xff] %vm678, 0
  %v681 = vld [vmem:[%s1] sm:$0xf]
  %v682 = vld [vmem:[%s1 + $0x4] sm:$0xf]
  %v683 = vld [vmem:[%s1 + $0x8] sm:$0xf]
  %v684 = vld [vmem:[%s1 + $0xc] sm:$0xf]
  %v685 = vld [vmem:[%s1 + $0x10] sm:$0xf]
  %v686 = vld [vmem:[%s1 + $0x14] sm:$0xf]
  %v687 = vld [vmem:[%s1 + $0x18] sm:$0xf]
  %v688 = vld [vmem:[%s1 + $0x1c] sm:$0xf]
  %v689 = vld [vmem:[%s1 + $0x20] sm:$0xf]
  %v690 = vld [vmem:[%s1 + $0x24] sm:$0xf]
  %v691 = vld [vmem:[%s1 + $0x28] sm:$0xf]
  %v692 = vld [vmem:[%s1 + $0x2c] sm:$0xf]
  %v693 = vld [vmem:[%s1 + $0x30] sm:$0xf]
  %v694 = vld [vmem:[%s1 + $0x34] sm:$0xf]
  %v695 = vld [vmem:[%s1 + $0x38] sm:$0xf]
  %v696 = vld [vmem:[%s1 + $0x3c] sm:$0xf]
  %v697 = vld [vmem:[%s1 + $0x40] sm:$0xf]
  %v698 = vld [vmem:[%s1 + $0x44] sm:$0xf]
  %v699 = vld [vmem:[%s1 + $0x48] sm:$0xf]
  %v700 = vld [vmem:[%s1 + $0x4c] sm:$0xf]
  %v701 = vld [vmem:[%s1 + $0x50] sm:$0xf]
  %v702 = vld [vmem:[%s1 + $0x54] sm:$0xf]
  %v703 = vld [vmem:[%s1 + $0x58] sm:$0xf]
  %v704 = vld [vmem:[%s1 + $0x5c] sm:$0xf]
  %v705 = vld [vmem:[%s1 + $0x60] sm:$0xf]
  %v706 = vld [vmem:[%s1 + $0x64] sm:$0xf]
  %v707 = vld [vmem:[%s1 + $0x68] sm:$0xf]
  %v708 = vld [vmem:[%s1 + $0x6c] sm:$0xf]
  %v709 = vld [vmem:[%s1 + $0x70] sm:$0xf]
  %v710 = vld [vmem:[%s1 + $0x74] sm:$0xf]
  %v711 = vld [vmem:[%s1 + $0x80] sm:$0xf]
  %v712 = vld [vmem:[%s1 + $0x84] sm:$0xf]
  %v713 = vld [vmem:[%s1 + $0x88] sm:$0xf]
  %v714 = vld [vmem:[%s1 + $0x8c] sm:$0xf]
  %v715 = vld [vmem:[%s1 + $0x90] sm:$0xf]
  %v716 = vld [vmem:[%s1 + $0x94] sm:$0xf]
  %v717 = vld [vmem:[%s1 + $0x98] sm:$0xf]
  %v718 = vld [vmem:[%s1 + $0x9c] sm:$0xf]
  %v719 = vld [vmem:[%s1 + $0xa0] sm:$0xf]
  %v720 = vld [vmem:[%s1 + $0xa4] sm:$0xf]
  %v721 = vld [vmem:[%s1 + $0xa8] sm:$0xf]
  %v722 = vld [vmem:[%s1 + $0xac] sm:$0xf]
  %v723 = vld [vmem:[%s1 + $0xb0] sm:$0xf]
  %v724 = vld [vmem:[%s1 + $0xb4] sm:$0xf]
  %v725 = vld [vmem:[%s1 + $0xb8] sm:$0xf]
  %v726 = vld [vmem:[%s1 + $0xbc] sm:$0xf]
  %v727 = vld [vmem:[%s1 + $0xc0] sm:$0xf]
  %v728 = vld [vmem:[%s1 + $0xc4] sm:$0xf]
  %v729 = vld [vmem:[%s1 + $0xc8] sm:$0xf]
  %v730 = vld [vmem:[%s1 + $0xcc] sm:$0xf]
  %v731 = vld [vmem:[%s1 + $0xd0] sm:$0xf]
  %v732 = vld [vmem:[%s1 + $0xd4] sm:$0xf]
  %v733 = vld [vmem:[%s1 + $0xd8] sm:$0xf]
  %v734 = vld [vmem:[%s1 + $0xdc] sm:$0xf]
  %v735 = vld [vmem:[%s1 + $0xe0] sm:$0xf]
  %v736 = vld [vmem:[%s1 + $0xe4] sm:$0xf]
  %v737 = vld [vmem:[%s1 + $0xe8] sm:$0xf]
  %v738 = vld [vmem:[%s1 + $0xec] sm:$0xf]
  %v739 = vld [vmem:[%s1 + $0xf0] sm:$0xf]
  %v740 = vld [vmem:[%s1 + $0xf4] sm:$0xf]
  %v801 = vunpack.c.l.b16 %v681
  %v802 = vunpack.c.l.b16 %v682
  %v803 = vunpack.c.l.b16 %v683
  %v804 = vunpack.c.l.b16 %v684
  %v805 = vunpack.c.l.b16 %v685
  %v806 = vunpack.c.l.b16 %v686
  %v807 = vunpack.c.l.b16 %v687
  %v808 = vunpack.c.l.b16 %v688
  %v809 = vunpack.c.l.b16 %v689
  %v810 = vunpack.c.l.b16 %v690
  %v811 = vunpack.c.l.b16 %v691
  %v812 = vunpack.c.l.b16 %v692
  %v813 = vunpack.c.l.b16 %v693
  %v814 = vunpack.c.l.b16 %v694
  %v815 = vunpack.c.l.b16 %v695
  %v816 = vunpack.c.l.b16 %v696
  %v817 = vunpack.c.l.b16 %v697
  %v818 = vunpack.c.l.b16 %v698
  %v819 = vunpack.c.l.b16 %v699
  %v820 = vunpack.c.l.b16 %v700
  %v821 = vunpack.c.l.b16 %v701
  %v822 = vunpack.c.l.b16 %v702
  %v823 = vunpack.c.l.b16 %v703
  %v824 = vunpack.c.l.b16 %v704
  %v825 = vunpack.c.l.b16 %v705
  %v826 = vunpack.c.l.b16 %v706
  %v827 = vunpack.c.l.b16 %v707
  %v828 = vunpack.c.l.b16 %v708
  %v829 = vunpack.c.l.b16 %v709
  %v830 = vunpack.c.l.b16 %v710
  %v831 = vunpack.c.l.b16 %v711
  %v832 = vunpack.c.l.b16 %v712
  %v833 = vunpack.c.l.b16 %v713
  %v834 = vunpack.c.l.b16 %v714
  %v835 = vunpack.c.l.b16 %v715
  %v836 = vunpack.c.l.b16 %v716
  %v837 = vunpack.c.l.b16 %v717
  %v838 = vunpack.c.l.b16 %v718
  %v839 = vunpack.c.l.b16 %v719
  %v840 = vunpack.c.l.b16 %v720
  %v841 = vunpack.c.l.b16 %v721
  %v842 = vunpack.c.l.b16 %v722
  %v843 = vunpack.c.l.b16 %v723
  %v844 = vunpack.c.l.b16 %v724
  %v845 = vunpack.c.l.b16 %v725
  %v846 = vunpack.c.l.b16 %v726
  %v847 = vunpack.c.l.b16 %v727
  %v848 = vunpack.c.l.b16 %v728
  %v849 = vunpack.c.l.b16 %v729
  %v850 = vunpack.c.l.b16 %v730
  %v851 = vunpack.c.l.b16 %v731
  %v852 = vunpack.c.l.b16 %v732
  %v853 = vunpack.c.l.b16 %v733
  %v854 = vunpack.c.l.b16 %v734
  %v855 = vunpack.c.l.b16 %v735
  %v856 = vunpack.c.l.b16 %v736
  %v857 = vunpack.c.l.b16 %v737
  %v858 = vunpack.c.l.b16 %v738
  %v859 = vunpack.c.l.b16 %v739
  %v860 = vunpack.c.l.b16 %v740
  %v861 = vpack.c.b16 %v802, %v801
  %v862 = vpack.c.b16 %v804, %v803
  %v863 = vpack.c.b16 %v806, %v805
  %v864 = vpack.c.b16 %v808, %v807
  %v865 = vpack.c.b16 %v810, %v809
  %v866 = vpack.c.b16 %v812, %v811
  %v867 = vpack.c.b16 %v814, %v813
  %v868 = vpack.c.b16 %v816, %v815
  %v869 = vpack.c.b16 %v818, %v817
  %v870 = vpack.c.b16 %v820, %v819
  %v871 = vpack.c.b16 %v822, %v821
  %v872 = vpack.c.b16 %v824, %v823
  %v873 = vpack.c.b16 %v826, %v825
  %v874 = vpack.c.b16 %v828, %v827
  %v875 = vpack.c.b16 %v830, %v829
  %v876 = vpack.c.b16 %v832, %v831
  %v877 = vpack.c.b16 %v834, %v833
  %v878 = vpack.c.b16 %v836, %v835
  %v879 = vpack.c.b16 %v838, %v837
  %v880 = vpack.c.b16 %v840, %v839
  %v881 = vpack.c.b16 %v842, %v841
  %v882 = vpack.c.b16 %v844, %v843
  %v883 = vpack.c.b16 %v846, %v845
  %v884 = vpack.c.b16 %v848, %v847
  %v885 = vpack.c.b16 %v850, %v849
  %v886 = vpack.c.b16 %v852, %v851
  %v887 = vpack.c.b16 %v854, %v853
  %v888 = vpack.c.b16 %v856, %v855
  %v889 = vpack.c.b16 %v858, %v857
  %v890 = vpack.c.b16 %v860, %v859
  %891 = vrot.lane.b32.xlu0 %v861, 2
  %v892 = vpop.permute.xlu0 %891
  %893 = vrot.lane.b32.xlu0 %v862, 2
  %v894 = vpop.permute.xlu0 %893
  %895 = vrot.lane.b32.xlu0 %v863, 2
  %v896 = vpop.permute.xlu0 %895
  %897 = vrot.lane.b32.xlu0 %v864, 2
  %v898 = vpop.permute.xlu0 %897
  %899 = vrot.lane.b32.xlu0 %v865, 2
  %v900 = vpop.permute.xlu0 %899
  %901 = vrot.lane.b32.xlu0 %v866, 2
  %v902 = vpop.permute.xlu0 %901
  %903 = vrot.lane.b32.xlu0 %v867, 2
  %v904 = vpop.permute.xlu0 %903
  %905 = vrot.lane.b32.xlu0 %v868, 2
  %v906 = vpop.permute.xlu0 %905
  %907 = vrot.lane.b32.xlu0 %v869, 2
  %v908 = vpop.permute.xlu0 %907
  %909 = vrot.lane.b32.xlu0 %v870, 2
  %v910 = vpop.permute.xlu0 %909
  %911 = vrot.lane.b32.xlu0 %v871, 2
  %v912 = vpop.permute.xlu0 %911
  %913 = vrot.lane.b32.xlu0 %v872, 2
  %v914 = vpop.permute.xlu0 %913
  %915 = vrot.lane.b32.xlu0 %v873, 2
  %v916 = vpop.permute.xlu0 %915
  %917 = vrot.lane.b32.xlu0 %v874, 2
  %v918 = vpop.permute.xlu0 %917
  %919 = vrot.lane.b32.xlu0 %v875, 2
  %v920 = vpop.permute.xlu0 %919
  %921 = vrot.lane.b32.xlu0 %v876, 2
  %v922 = vpop.permute.xlu0 %921
  %923 = vrot.lane.b32.xlu0 %v877, 2
  %v924 = vpop.permute.xlu0 %923
  %925 = vrot.lane.b32.xlu0 %v878, 2
  %v926 = vpop.permute.xlu0 %925
  %927 = vrot.lane.b32.xlu0 %v879, 2
  %v928 = vpop.permute.xlu0 %927
  %929 = vrot.lane.b32.xlu0 %v880, 2
  %v930 = vpop.permute.xlu0 %929
  %931 = vrot.lane.b32.xlu0 %v881, 2
  %v932 = vpop.permute.xlu0 %931
  %933 = vrot.lane.b32.xlu0 %v882, 2
  %v934 = vpop.permute.xlu0 %933
  %935 = vrot.lane.b32.xlu0 %v883, 2
  %v936 = vpop.permute.xlu0 %935
  %937 = vrot.lane.b32.xlu0 %v884, 2
  %v938 = vpop.permute.xlu0 %937
  %939 = vrot.lane.b32.xlu0 %v885, 2
  %v940 = vpop.permute.xlu0 %939
  %941 = vrot.lane.b32.xlu0 %v886, 2
  %v942 = vpop.permute.xlu0 %941
  %943 = vrot.lane.b32.xlu0 %v887, 2
  %v944 = vpop.permute.xlu0 %943
  %945 = vrot.lane.b32.xlu0 %v888, 2
  %v946 = vpop.permute.xlu0 %945
  %947 = vrot.lane.b32.xlu0 %v889, 2
  %v948 = vpop.permute.xlu0 %947
  %949 = vrot.lane.b32.xlu0 %v890, 2
  %v950 = vpop.permute.xlu0 %949
  %981 = vst.msk [vmem:[%s584] sm:$0xff] %vm678, %v892
  %982 = vst.msk [vmem:[%s584 + $0x8] sm:$0xff] %vm678, %v894
  %983 = vst.msk [vmem:[%s584 + $0x10] sm:$0xff] %vm678, %v896
  %984 = vst.msk [vmem:[%s584 + $0x18] sm:$0xff] %vm678, %v898
  %985 = vst.msk [vmem:[%s584 + $0x20] sm:$0xff] %vm678, %v900
  %986 = vst.msk [vmem:[%s584 + $0x28] sm:$0xff] %vm678, %v902
  %987 = vst.msk [vmem:[%s584 + $0x30] sm:$0xff] %vm678, %v904
  %988 = vst.msk [vmem:[%s584 + $0x38] sm:$0xff] %vm678, %v906
  %989 = vst.msk [vmem:[%s584 + $0x40] sm:$0xff] %vm678, %v908
  %990 = vst.msk [vmem:[%s584 + $0x48] sm:$0xff] %vm678, %v910
  %991 = vst.msk [vmem:[%s584 + $0x50] sm:$0xff] %vm678, %v912
  %992 = vst.msk [vmem:[%s584 + $0x58] sm:$0xff] %vm678, %v914
  %993 = vst.msk [vmem:[%s584 + $0x60] sm:$0xff] %vm678, %v916
  %994 = vst.msk [vmem:[%s584 + $0x68] sm:$0xff] %vm678, %v918
  %995 = vst.msk [vmem:[%s584 + $0x70] sm:$0xff] %vm678, %v920
  %996 = vst.msk [vmem:[%s584 + $0x80] sm:$0xff] %vm678, %v922
  %997 = vst.msk [vmem:[%s584 + $0x88] sm:$0xff] %vm678, %v924
  %998 = vst.msk [vmem:[%s584 + $0x90] sm:$0xff] %vm678, %v926
  %999 = vst.msk [vmem:[%s584 + $0x98] sm:$0xff] %vm678, %v928
  %1000 = vst.msk [vmem:[%s584 + $0xa0] sm:$0xff] %vm678, %v930
  %1001 = vst.msk [vmem:[%s584 + $0xa8] sm:$0xff] %vm678, %v932
  %1002 = vst.msk [vmem:[%s584 + $0xb0] sm:$0xff] %vm678, %v934
  %1003 = vst.msk [vmem:[%s584 + $0xb8] sm:$0xff] %vm678, %v936
  %1004 = vst.msk [vmem:[%s584 + $0xc0] sm:$0xff] %vm678, %v938
  %1005 = vst.msk [vmem:[%s584 + $0xc8] sm:$0xff] %vm678, %v940
  %1006 = vst.msk [vmem:[%s584 + $0xd0] sm:$0xff] %vm678, %v942
  %1007 = vst.msk [vmem:[%s584 + $0xd8] sm:$0xff] %vm678, %v944
  %1008 = vst.msk [vmem:[%s584 + $0xe0] sm:$0xff] %vm678, %v946
  %1009 = vst.msk [vmem:[%s584 + $0xe8] sm:$0xff] %vm678, %v948
  %1010 = vst.msk [vmem:[%s584 + $0xf0] sm:$0xff] %vm678, %v950
  %vm1011 = vcmask 48160
  %1012 = vst.msk [vmem:[#allocation2] sm:$0xff] %vm1011, 0
  %1013 = vst.msk [vmem:[#allocation2 + $0x80] sm:$0xff] %vm1011, 0
  %vm1014 = vcmask 48167
  %vm1015 = vsmask.f32 7966
  %vm1016 = vmand %vm1014, %vm1015
  %v1017 = vld [vmem:[#allocation2] sm:$0x80]
  %v1018 = vsel %vm1016, 0, %v1017
  %1019 = vst [vmem:[#allocation2] sm:$0x80] %v1018
  %v1020 = vld [vmem:[#allocation2 + $0x8] sm:$0x80]
  %v1021 = vsel %vm1016, 0, %v1020
  %1022 = vst [vmem:[#allocation2 + $0x8] sm:$0x80] %v1021
  %v1023 = vld [vmem:[#allocation2 + $0x10] sm:$0x80]
  %v1024 = vsel %vm1016, 0, %v1023
  %1025 = vst [vmem:[#allocation2 + $0x10] sm:$0x80] %v1024
  %v1026 = vld [vmem:[#allocation2 + $0x18] sm:$0x80]
  %v1027 = vsel %vm1016, 0, %v1026
  %1028 = vst [vmem:[#allocation2 + $0x18] sm:$0x80] %v1027
  %v1029 = vld [vmem:[#allocation2 + $0x20] sm:$0x80]
  %v1030 = vsel %vm1016, 0, %v1029
  %1031 = vst [vmem:[#allocation2 + $0x20] sm:$0x80] %v1030
  %v1032 = vld [vmem:[#allocation2 + $0x28] sm:$0x80]
  %v1033 = vsel %vm1016, 0, %v1032
  %1034 = vst [vmem:[#allocation2 + $0x28] sm:$0x80] %v1033
  %v1035 = vld [vmem:[#allocation2 + $0x30] sm:$0x80]
  %v1036 = vsel %vm1016, 0, %v1035
  %1037 = vst [vmem:[#allocation2 + $0x30] sm:$0x80] %v1036
  %v1038 = vld [vmem:[#allocation2 + $0x38] sm:$0x80]
  %v1039 = vsel %vm1016, 0, %v1038
  %1040 = vst [vmem:[#allocation2 + $0x38] sm:$0x80] %v1039
  %v1041 = vld [vmem:[#allocation2 + $0x40] sm:$0x80]
  %v1042 = vsel %vm1016, 0, %v1041
  %1043 = vst [vmem:[#allocation2 + $0x40] sm:$0x80] %v1042
  %v1044 = vld [vmem:[#allocation2 + $0x48] sm:$0x80]
  %v1045 = vsel %vm1016, 0, %v1044
  %1046 = vst [vmem:[#allocation2 + $0x48] sm:$0x80] %v1045
  %v1047 = vld [vmem:[#allocation2 + $0x50] sm:$0x80]
  %v1048 = vsel %vm1016, 0, %v1047
  %1049 = vst [vmem:[#allocation2 + $0x50] sm:$0x80] %v1048
  %v1050 = vld [vmem:[#allocation2 + $0x58] sm:$0x80]
  %v1051 = vsel %vm1016, 0, %v1050
  %1052 = vst [vmem:[#allocation2 + $0x58] sm:$0x80] %v1051
  %v1053 = vld [vmem:[#allocation2 + $0x60] sm:$0x80]
  %v1054 = vsel %vm1016, 0, %v1053
  %1055 = vst [vmem:[#allocation2 + $0x60] sm:$0x80] %v1054
  %v1056 = vld [vmem:[#allocation2 + $0x68] sm:$0x80]
  %v1057 = vsel %vm1016, 0, %v1056
  %1058 = vst [vmem:[#allocation2 + $0x68] sm:$0x80] %v1057
  %v1059 = vld [vmem:[#allocation2 + $0x70] sm:$0x80]
  %v1060 = vsel %vm1016, 0, %v1059
  %1061 = vst [vmem:[#allocation2 + $0x70] sm:$0x80] %v1060
  %v1062 = vld [vmem:[#allocation2 + $0x78] sm:$0x80]
  %v1063 = vsel %vm1016, 0, %v1062
  %1064 = vst [vmem:[#allocation2 + $0x78] sm:$0x80] %v1063
  %v1065 = vld [vmem:[#allocation2 + $0x80] sm:$0x80]
  %v1066 = vsel %vm1016, 0, %v1065
  %1067 = vst [vmem:[#allocation2 + $0x80] sm:$0x80] %v1066
  %v1068 = vld [vmem:[#allocation2 + $0x88] sm:$0x80]
  %v1069 = vsel %vm1016, 0, %v1068
  %1070 = vst [vmem:[#allocation2 + $0x88] sm:$0x80] %v1069
  %v1071 = vld [vmem:[#allocation2 + $0x90] sm:$0x80]
  %v1072 = vsel %vm1016, 0, %v1071
  %1073 = vst [vmem:[#allocation2 + $0x90] sm:$0x80] %v1072
  %v1074 = vld [vmem:[#allocation2 + $0x98] sm:$0x80]
  %v1075 = vsel %vm1016, 0, %v1074
  %1076 = vst [vmem:[#allocation2 + $0x98] sm:$0x80] %v1075
  %v1077 = vld [vmem:[#allocation2 + $0xa0] sm:$0x80]
  %v1078 = vsel %vm1016, 0, %v1077
  %1079 = vst [vmem:[#allocation2 + $0xa0] sm:$0x80] %v1078
  %v1080 = vld [vmem:[#allocation2 + $0xa8] sm:$0x80]
  %v1081 = vsel %vm1016, 0, %v1080
  %1082 = vst [vmem:[#allocation2 + $0xa8] sm:$0x80] %v1081
  %v1083 = vld [vmem:[#allocation2 + $0xb0] sm:$0x80]
  %v1084 = vsel %vm1016, 0, %v1083
  %1085 = vst [vmem:[#allocation2 + $0xb0] sm:$0x80] %v1084
  %v1086 = vld [vmem:[#allocation2 + $0xb8] sm:$0x80]
  %v1087 = vsel %vm1016, 0, %v1086
  %1088 = vst [vmem:[#allocation2 + $0xb8] sm:$0x80] %v1087
  %v1089 = vld [vmem:[#allocation2 + $0xc0] sm:$0x80]
  %v1090 = vsel %vm1016, 0, %v1089
  %1091 = vst [vmem:[#allocation2 + $0xc0] sm:$0x80] %v1090
  %v1092 = vld [vmem:[#allocation2 + $0xc8] sm:$0x80]
  %v1093 = vsel %vm1016, 0, %v1092
  %1094 = vst [vmem:[#allocation2 + $0xc8] sm:$0x80] %v1093
  %v1095 = vld [vmem:[#allocation2 + $0xd0] sm:$0x80]
  %v1096 = vsel %vm1016, 0, %v1095
  %1097 = vst [vmem:[#allocation2 + $0xd0] sm:$0x80] %v1096
  %v1098 = vld [vmem:[#allocation2 + $0xd8] sm:$0x80]
  %v1099 = vsel %vm1016, 0, %v1098
  %1100 = vst [vmem:[#allocation2 + $0xd8] sm:$0x80] %v1099
  %v1101 = vld [vmem:[#allocation2 + $0xe0] sm:$0x80]
  %v1102 = vsel %vm1016, 0, %v1101
  %1103 = vst [vmem:[#allocation2 + $0xe0] sm:$0x80] %v1102
  %v1104 = vld [vmem:[#allocation2 + $0xe8] sm:$0x80]
  %v1105 = vsel %vm1016, 0, %v1104
  %1106 = vst [vmem:[#allocation2 + $0xe8] sm:$0x80] %v1105
  %v1107 = vld [vmem:[#allocation2 + $0xf0] sm:$0x80]
  %v1108 = vsel %vm1016, 0, %v1107
  %1109 = vst [vmem:[#allocation2 + $0xf0] sm:$0x80] %v1108
  %v1110 = vld [vmem:[#allocation2 + $0xf8] sm:$0x80]
  %v1111 = vsel %vm1016, 0, %v1110
  %1112 = vst [vmem:[#allocation2 + $0xf8] sm:$0x80] %v1111
  %v1113 = vld [vmem:[%s1] sm:$0xf]
  %v1114 = vld [vmem:[%s1 + $0x4] sm:$0xf]
  %v1115 = vld [vmem:[%s1 + $0x8] sm:$0xf]
  %v1116 = vld [vmem:[%s1 + $0xc] sm:$0xf]
  %v1117 = vld [vmem:[%s1 + $0x10] sm:$0xf]
  %v1118 = vld [vmem:[%s1 + $0x14] sm:$0xf]
  %v1119 = vld [vmem:[%s1 + $0x18] sm:$0xf]
  %v1120 = vld [vmem:[%s1 + $0x1c] sm:$0xf]
  %v1121 = vld [vmem:[%s1 + $0x20] sm:$0xf]
  %v1122 = vld [vmem:[%s1 + $0x24] sm:$0xf]
  %v1123 = vld [vmem:[%s1 + $0x28] sm:$0xf]
  %v1124 = vld [vmem:[%s1 + $0x2c] sm:$0xf]
  %v1125 = vld [vmem:[%s1 + $0x30] sm:$0xf]
  %v1126 = vld [vmem:[%s1 + $0x34] sm:$0xf]
  %v1127 = vld [vmem:[%s1 + $0x38] sm:$0xf]
  %v1128 = vld [vmem:[%s1 + $0x3c] sm:$0xf]
  %v1129 = vld [vmem:[%s1 + $0x40] sm:$0xf]
  %v1130 = vld [vmem:[%s1 + $0x44] sm:$0xf]
  %v1131 = vld [vmem:[%s1 + $0x48] sm:$0xf]
  %v1132 = vld [vmem:[%s1 + $0x4c] sm:$0xf]
  %v1133 = vld [vmem:[%s1 + $0x50] sm:$0xf]
  %v1134 = vld [vmem:[%s1 + $0x54] sm:$0xf]
  %v1135 = vld [vmem:[%s1 + $0x58] sm:$0xf]
  %v1136 = vld [vmem:[%s1 + $0x5c] sm:$0xf]
  %v1137 = vld [vmem:[%s1 + $0x60] sm:$0xf]
  %v1138 = vld [vmem:[%s1 + $0x64] sm:$0xf]
  %v1139 = vld [vmem:[%s1 + $0x68] sm:$0xf]
  %v1140 = vld [vmem:[%s1 + $0x6c] sm:$0xf]
  %v1141 = vld [vmem:[%s1 + $0x70] sm:$0xf]
  %v1142 = vld [vmem:[%s1 + $0x74] sm:$0xf]
  %v1143 = vld [vmem:[%s1 + $0x80] sm:$0xf]
  %v1144 = vld [vmem:[%s1 + $0x84] sm:$0xf]
  %v1145 = vld [vmem:[%s1 + $0x88] sm:$0xf]
  %v1146 = vld [vmem:[%s1 + $0x8c] sm:$0xf]
  %v1147 = vld [vmem:[%s1 + $0x90] sm:$0xf]
  %v1148 = vld [vmem:[%s1 + $0x94] sm:$0xf]
  %v1149 = vld [vmem:[%s1 + $0x98] sm:$0xf]
  %v1150 = vld [vmem:[%s1 + $0x9c] sm:$0xf]
  %v1151 = vld [vmem:[%s1 + $0xa0] sm:$0xf]
  %v1152 = vld [vmem:[%s1 + $0xa4] sm:$0xf]
  %v1153 = vld [vmem:[%s1 + $0xa8] sm:$0xf]
  %v1154 = vld [vmem:[%s1 + $0xac] sm:$0xf]
  %v1155 = vld [vmem:[%s1 + $0xb0] sm:$0xf]
  %v1156 = vld [vmem:[%s1 + $0xb4] sm:$0xf]
  %v1157 = vld [vmem:[%s1 + $0xb8] sm:$0xf]
  %v1158 = vld [vmem:[%s1 + $0xbc] sm:$0xf]
  %v1159 = vld [vmem:[%s1 + $0xc0] sm:$0xf]
  %v1160 = vld [vmem:[%s1 + $0xc4] sm:$0xf]
  %v1161 = vld [vmem:[%s1 + $0xc8] sm:$0xf]
  %v1162 = vld [vmem:[%s1 + $0xcc] sm:$0xf]
  %v1163 = vld [vmem:[%s1 + $0xd0] sm:$0xf]
  %v1164 = vld [vmem:[%s1 + $0xd4] sm:$0xf]
  %v1165 = vld [vmem:[%s1 + $0xd8] sm:$0xf]
  %v1166 = vld [vmem:[%s1 + $0xdc] sm:$0xf]
  %v1167 = vld [vmem:[%s1 + $0xe0] sm:$0xf]
  %v1168 = vld [vmem:[%s1 + $0xe4] sm:$0xf]
  %v1169 = vld [vmem:[%s1 + $0xe8] sm:$0xf]
  %v1170 = vld [vmem:[%s1 + $0xec] sm:$0xf]
  %v1171 = vld [vmem:[%s1 + $0xf0] sm:$0xf]
  %v1172 = vld [vmem:[%s1 + $0xf4] sm:$0xf]
  %v1233 = vunpack.c.l.b16 %v1113
  %v1234 = vunpack.c.l.b16 %v1114
  %v1235 = vunpack.c.l.b16 %v1115
  %v1236 = vunpack.c.l.b16 %v1116
  %v1237 = vunpack.c.l.b16 %v1117
  %v1238 = vunpack.c.l.b16 %v1118
  %v1239 = vunpack.c.l.b16 %v1119
  %v1240 = vunpack.c.l.b16 %v1120
  %v1241 = vunpack.c.l.b16 %v1121
  %v1242 = vunpack.c.l.b16 %v1122
  %v1243 = vunpack.c.l.b16 %v1123
  %v1244 = vunpack.c.l.b16 %v1124
  %v1245 = vunpack.c.l.b16 %v1125
  %v1246 = vunpack.c.l.b16 %v1126
  %v1247 = vunpack.c.l.b16 %v1127
  %v1248 = vunpack.c.l.b16 %v1128
  %v1249 = vunpack.c.l.b16 %v1129
  %v1250 = vunpack.c.l.b16 %v1130
  %v1251 = vunpack.c.l.b16 %v1131
  %v1252 = vunpack.c.l.b16 %v1132
  %v1253 = vunpack.c.l.b16 %v1133
  %v1254 = vunpack.c.l.b16 %v1134
  %v1255 = vunpack.c.l.b16 %v1135
  %v1256 = vunpack.c.l.b16 %v1136
  %v1257 = vunpack.c.l.b16 %v1137
  %v1258 = vunpack.c.l.b16 %v1138
  %v1259 = vunpack.c.l.b16 %v1139
  %v1260 = vunpack.c.l.b16 %v1140
  %v1261 = vunpack.c.l.b16 %v1141
  %v1262 = vunpack.c.l.b16 %v1142
  %v1263 = vunpack.c.l.b16 %v1143
  %v1264 = vunpack.c.l.b16 %v1144
  %v1265 = vunpack.c.l.b16 %v1145
  %v1266 = vunpack.c.l.b16 %v1146
  %v1267 = vunpack.c.l.b16 %v1147
  %v1268 = vunpack.c.l.b16 %v1148
  %v1269 = vunpack.c.l.b16 %v1149
  %v1270 = vunpack.c.l.b16 %v1150
  %v1271 = vunpack.c.l.b16 %v1151
  %v1272 = vunpack.c.l.b16 %v1152
  %v1273 = vunpack.c.l.b16 %v1153
  %v1274 = vunpack.c.l.b16 %v1154
  %v1275 = vunpack.c.l.b16 %v1155
  %v1276 = vunpack.c.l.b16 %v1156
  %v1277 = vunpack.c.l.b16 %v1157
  %v1278 = vunpack.c.l.b16 %v1158
  %v1279 = vunpack.c.l.b16 %v1159
  %v1280 = vunpack.c.l.b16 %v1160
  %v1281 = vunpack.c.l.b16 %v1161
  %v1282 = vunpack.c.l.b16 %v1162
  %v1283 = vunpack.c.l.b16 %v1163
  %v1284 = vunpack.c.l.b16 %v1164
  %v1285 = vunpack.c.l.b16 %v1165
  %v1286 = vunpack.c.l.b16 %v1166
  %v1287 = vunpack.c.l.b16 %v1167
  %v1288 = vunpack.c.l.b16 %v1168
  %v1289 = vunpack.c.l.b16 %v1169
  %v1290 = vunpack.c.l.b16 %v1170
  %v1291 = vunpack.c.l.b16 %v1171
  %v1292 = vunpack.c.l.b16 %v1172
  %v1293 = vpack.c.b16 %v1234, %v1233
  %v1294 = vpack.c.b16 %v1236, %v1235
  %v1295 = vpack.c.b16 %v1238, %v1237
  %v1296 = vpack.c.b16 %v1240, %v1239
  %v1297 = vpack.c.b16 %v1242, %v1241
  %v1298 = vpack.c.b16 %v1244, %v1243
  %v1299 = vpack.c.b16 %v1246, %v1245
  %v1300 = vpack.c.b16 %v1248, %v1247
  %v1301 = vpack.c.b16 %v1250, %v1249
  %v1302 = vpack.c.b16 %v1252, %v1251
  %v1303 = vpack.c.b16 %v1254, %v1253
  %v1304 = vpack.c.b16 %v1256, %v1255
  %v1305 = vpack.c.b16 %v1258, %v1257
  %v1306 = vpack.c.b16 %v1260, %v1259
  %v1307 = vpack.c.b16 %v1262, %v1261
  %v1308 = vpack.c.b16 %v1264, %v1263
  %v1309 = vpack.c.b16 %v1266, %v1265
  %v1310 = vpack.c.b16 %v1268, %v1267
  %v1311 = vpack.c.b16 %v1270, %v1269
  %v1312 = vpack.c.b16 %v1272, %v1271
  %v1313 = vpack.c.b16 %v1274, %v1273
  %v1314 = vpack.c.b16 %v1276, %v1275
  %v1315 = vpack.c.b16 %v1278, %v1277
  %v1316 = vpack.c.b16 %v1280, %v1279
  %v1317 = vpack.c.b16 %v1282, %v1281
  %v1318 = vpack.c.b16 %v1284, %v1283
  %v1319 = vpack.c.b16 %v1286, %v1285
  %v1320 = vpack.c.b16 %v1288, %v1287
  %v1321 = vpack.c.b16 %v1290, %v1289
  %v1322 = vpack.c.b16 %v1292, %v1291
  %v1324 = vshrl.u32 %v1293, 16
  %v1326 = vshll.u32 %v1293, 16
  %v1328 = vrot.slane %v1326, 1
  %v1329 = vor.u32 %v1324, %v1328
  %v1331 = vshrl.u32 %v1294, 16
  %v1333 = vshll.u32 %v1294, 16
  %v1335 = vrot.slane %v1333, 1
  %v1336 = vor.u32 %v1331, %v1335
  %v1338 = vshrl.u32 %v1295, 16
  %v1340 = vshll.u32 %v1295, 16
  %v1342 = vrot.slane %v1340, 1
  %v1343 = vor.u32 %v1338, %v1342
  %v1345 = vshrl.u32 %v1296, 16
  %v1347 = vshll.u32 %v1296, 16
  %v1349 = vrot.slane %v1347, 1
  %v1350 = vor.u32 %v1345, %v1349
  %v1352 = vshrl.u32 %v1297, 16
  %v1354 = vshll.u32 %v1297, 16
  %v1356 = vrot.slane %v1354, 1
  %v1357 = vor.u32 %v1352, %v1356
  %v1359 = vshrl.u32 %v1298, 16
  %v1361 = vshll.u32 %v1298, 16
  %v1363 = vrot.slane %v1361, 1
  %v1364 = vor.u32 %v1359, %v1363
  %v1366 = vshrl.u32 %v1299, 16
  %v1368 = vshll.u32 %v1299, 16
  %v1370 = vrot.slane %v1368, 1
  %v1371 = vor.u32 %v1366, %v1370
  %v1373 = vshrl.u32 %v1300, 16
  %v1375 = vshll.u32 %v1300, 16
  %v1377 = vrot.slane %v1375, 1
  %v1378 = vor.u32 %v1373, %v1377
  %v1380 = vshrl.u32 %v1301, 16
  %v1382 = vshll.u32 %v1301, 16
  %v1384 = vrot.slane %v1382, 1
  %v1385 = vor.u32 %v1380, %v1384
  %v1387 = vshrl.u32 %v1302, 16
  %v1389 = vshll.u32 %v1302, 16
  %v1391 = vrot.slane %v1389, 1
  %v1392 = vor.u32 %v1387, %v1391
  %v1394 = vshrl.u32 %v1303, 16
  %v1396 = vshll.u32 %v1303, 16
  %v1398 = vrot.slane %v1396, 1
  %v1399 = vor.u32 %v1394, %v1398
  %v1401 = vshrl.u32 %v1304, 16
  %v1403 = vshll.u32 %v1304, 16
  %v1405 = vrot.slane %v1403, 1
  %v1406 = vor.u32 %v1401, %v1405
  %v1408 = vshrl.u32 %v1305, 16
  %v1410 = vshll.u32 %v1305, 16
  %v1412 = vrot.slane %v1410, 1
  %v1413 = vor.u32 %v1408, %v1412
  %v1415 = vshrl.u32 %v1306, 16
  %v1417 = vshll.u32 %v1306, 16
  %v1419 = vrot.slane %v1417, 1
  %v1420 = vor.u32 %v1415, %v1419
  %v1422 = vshrl.u32 %v1307, 16
  %v1424 = vshll.u32 %v1307, 16
  %v1426 = vrot.slane %v1424, 1
  %v1427 = vor.u32 %v1422, %v1426
  %v1429 = vshrl.u32 %v1308, 16
  %v1431 = vshll.u32 %v1308, 16
  %v1433 = vrot.slane %v1431, 1
  %v1434 = vor.u32 %v1429, %v1433
  %v1436 = vshrl.u32 %v1309, 16
  %v1438 = vshll.u32 %v1309, 16
  %v1440 = vrot.slane %v1438, 1
  %v1441 = vor.u32 %v1436, %v1440
  %v1443 = vshrl.u32 %v1310, 16
  %v1445 = vshll.u32 %v1310, 16
  %v1447 = vrot.slane %v1445, 1
  %v1448 = vor.u32 %v1443, %v1447
  %v1450 = vshrl.u32 %v1311, 16
  %v1452 = vshll.u32 %v1311, 16
  %v1454 = vrot.slane %v1452, 1
  %v1455 = vor.u32 %v1450, %v1454
  %v1457 = vshrl.u32 %v1312, 16
  %v1459 = vshll.u32 %v1312, 16
  %v1461 = vrot.slane %v1459, 1
  %v1462 = vor.u32 %v1457, %v1461
  %v1464 = vshrl.u32 %v1313, 16
  %v1466 = vshll.u32 %v1313, 16
  %v1468 = vrot.slane %v1466, 1
  %v1469 = vor.u32 %v1464, %v1468
  %v1471 = vshrl.u32 %v1314, 16
  %v1473 = vshll.u32 %v1314, 16
  %v1475 = vrot.slane %v1473, 1
  %v1476 = vor.u32 %v1471, %v1475
  %v1478 = vshrl.u32 %v1315, 16
  %v1480 = vshll.u32 %v1315, 16
  %v1482 = vrot.slane %v1480, 1
  %v1483 = vor.u32 %v1478, %v1482
  %v1485 = vshrl.u32 %v1316, 16
  %v1487 = vshll.u32 %v1316, 16
  %v1489 = vrot.slane %v1487, 1
  %v1490 = vor.u32 %v1485, %v1489
  %v1492 = vshrl.u32 %v1317, 16
  %v1494 = vshll.u32 %v1317, 16
  %v1496 = vrot.slane %v1494, 1
  %v1497 = vor.u32 %v1492, %v1496
  %v1499 = vshrl.u32 %v1318, 16
  %v1501 = vshll.u32 %v1318, 16
  %v1503 = vrot.slane %v1501, 1
  %v1504 = vor.u32 %v1499, %v1503
  %v1506 = vshrl.u32 %v1319, 16
  %v1508 = vshll.u32 %v1319, 16
  %v1510 = vrot.slane %v1508, 1
  %v1511 = vor.u32 %v1506, %v1510
  %v1513 = vshrl.u32 %v1320, 16
  %v1515 = vshll.u32 %v1320, 16
  %v1517 = vrot.slane %v1515, 1
  %v1518 = vor.u32 %v1513, %v1517
  %v1520 = vshrl.u32 %v1321, 16
  %v1522 = vshll.u32 %v1321, 16
  %v1524 = vrot.slane %v1522, 1
  %v1525 = vor.u32 %v1520, %v1524
  %v1527 = vshrl.u32 %v1322, 16
  %v1529 = vshll.u32 %v1322, 16
  %v1531 = vrot.slane %v1529, 1
  %v1532 = vor.u32 %v1527, %v1531
  %1533 = vrot.lane.b32.xlu0 %v1329, 4
  %v1534 = vpop.permute.xlu0 %1533
  %1535 = vrot.lane.b32.xlu0 %v1336, 4
  %v1536 = vpop.permute.xlu0 %1535
  %1537 = vrot.lane.b32.xlu0 %v1343, 4
  %v1538 = vpop.permute.xlu0 %1537
  %1539 = vrot.lane.b32.xlu0 %v1350, 4
  %v1540 = vpop.permute.xlu0 %1539
  %1541 = vrot.lane.b32.xlu0 %v1357, 4
  %v1542 = vpop.permute.xlu0 %1541
  %1543 = vrot.lane.b32.xlu0 %v1364, 4
  %v1544 = vpop.permute.xlu0 %1543
  %1545 = vrot.lane.b32.xlu0 %v1371, 4
  %v1546 = vpop.permute.xlu0 %1545
  %1547 = vrot.lane.b32.xlu0 %v1378, 4
  %v1548 = vpop.permute.xlu0 %1547
  %1549 = vrot.lane.b32.xlu0 %v1385, 4
  %v1550 = vpop.permute.xlu0 %1549
  %1551 = vrot.lane.b32.xlu0 %v1392, 4
  %v1552 = vpop.permute.xlu0 %1551
  %1553 = vrot.lane.b32.xlu0 %v1399, 4
  %v1554 = vpop.permute.xlu0 %1553
  %1555 = vrot.lane.b32.xlu0 %v1406, 4
  %v1556 = vpop.permute.xlu0 %1555
  %1557 = vrot.lane.b32.xlu0 %v1413, 4
  %v1558 = vpop.permute.xlu0 %1557
  %1559 = vrot.lane.b32.xlu0 %v1420, 4
  %v1560 = vpop.permute.xlu0 %1559
  %1561 = vrot.lane.b32.xlu0 %v1427, 4
  %v1562 = vpop.permute.xlu0 %1561
  %1563 = vrot.lane.b32.xlu0 %v1434, 4
  %v1564 = vpop.permute.xlu0 %1563
  %1565 = vrot.lane.b32.xlu0 %v1441, 4
  %v1566 = vpop.permute.xlu0 %1565
  %1567 = vrot.lane.b32.xlu0 %v1448, 4
  %v1568 = vpop.permute.xlu0 %1567
  %1569 = vrot.lane.b32.xlu0 %v1455, 4
  %v1570 = vpop.permute.xlu0 %1569
  %1571 = vrot.lane.b32.xlu0 %v1462, 4
  %v1572 = vpop.permute.xlu0 %1571
  %1573 = vrot.lane.b32.xlu0 %v1469, 4
  %v1574 = vpop.permute.xlu0 %1573
  %1575 = vrot.lane.b32.xlu0 %v1476, 4
  %v1576 = vpop.permute.xlu0 %1575
  %1577 = vrot.lane.b32.xlu0 %v1483, 4
  %v1578 = vpop.permute.xlu0 %1577
  %1579 = vrot.lane.b32.xlu0 %v1490, 4
  %v1580 = vpop.permute.xlu0 %1579
  %1581 = vrot.lane.b32.xlu0 %v1497, 4
  %v1582 = vpop.permute.xlu0 %1581
  %1583 = vrot.lane.b32.xlu0 %v1504, 4
  %v1584 = vpop.permute.xlu0 %1583
  %1585 = vrot.lane.b32.xlu0 %v1511, 4
  %v1586 = vpop.permute.xlu0 %1585
  %1587 = vrot.lane.b32.xlu0 %v1518, 4
  %v1588 = vpop.permute.xlu0 %1587
  %1589 = vrot.lane.b32.xlu0 %v1525, 4
  %v1590 = vpop.permute.xlu0 %1589
  %1591 = vrot.lane.b32.xlu0 %v1532, 4
  %v1592 = vpop.permute.xlu0 %1591
  %vm1623 = vcmask 48160
  %vm1624 = vsmask.f32 7424
  %vm1625 = vmand %vm1623, %vm1624
  %v1626 = vld [vmem:[%s584] sm:$0xff]
  %v1627 = vsel %vm1625, %v1534, %v1626
  %1628 = vst [vmem:[%s584] sm:$0xff] %v1627
  %v1629 = vld [vmem:[%s584 + $0x8] sm:$0xff]
  %v1630 = vsel %vm1625, %v1536, %v1629
  %1631 = vst [vmem:[%s584 + $0x8] sm:$0xff] %v1630
  %v1632 = vld [vmem:[%s584 + $0x10] sm:$0xff]
  %v1633 = vsel %vm1625, %v1538, %v1632
  %1634 = vst [vmem:[%s584 + $0x10] sm:$0xff] %v1633
  %v1635 = vld [vmem:[%s584 + $0x18] sm:$0xff]
  %v1636 = vsel %vm1625, %v1540, %v1635
  %1637 = vst [vmem:[%s584 + $0x18] sm:$0xff] %v1636
  %v1638 = vld [vmem:[%s584 + $0x20] sm:$0xff]
  %v1639 = vsel %vm1625, %v1542, %v1638
  %1640 = vst [vmem:[%s584 + $0x20] sm:$0xff] %v1639
  %v1641 = vld [vmem:[%s584 + $0x28] sm:$0xff]
  %v1642 = vsel %vm1625, %v1544, %v1641
  %1643 = vst [vmem:[%s584 + $0x28] sm:$0xff] %v1642
  %v1644 = vld [vmem:[%s584 + $0x30] sm:$0xff]
  %v1645 = vsel %vm1625, %v1546, %v1644
  %1646 = vst [vmem:[%s584 + $0x30] sm:$0xff] %v1645
  %v1647 = vld [vmem:[%s584 + $0x38] sm:$0xff]
  %v1648 = vsel %vm1625, %v1548, %v1647
  %1649 = vst [vmem:[%s584 + $0x38] sm:$0xff] %v1648
  %v1650 = vld [vmem:[%s584 + $0x40] sm:$0xff]
  %v1651 = vsel %vm1625, %v1550, %v1650
  %1652 = vst [vmem:[%s584 + $0x40] sm:$0xff] %v1651
  %v1653 = vld [vmem:[%s584 + $0x48] sm:$0xff]
  %v1654 = vsel %vm1625, %v1552, %v1653
  %1655 = vst [vmem:[%s584 + $0x48] sm:$0xff] %v1654
  %v1656 = vld [vmem:[%s584 + $0x50] sm:$0xff]
  %v1657 = vsel %vm1625, %v1554, %v1656
  %1658 = vst [vmem:[%s584 + $0x50] sm:$0xff] %v1657
  %v1659 = vld [vmem:[%s584 + $0x58] sm:$0xff]
  %v1660 = vsel %vm1625, %v1556, %v1659
  %1661 = vst [vmem:[%s584 + $0x58] sm:$0xff] %v1660
  %v1662 = vld [vmem:[%s584 + $0x60] sm:$0xff]
  %v1663 = vsel %vm1625, %v1558, %v1662
  %1664 = vst [vmem:[%s584 + $0x60] sm:$0xff] %v1663
  %v1665 = vld [vmem:[%s584 + $0x68] sm:$0xff]
  %v1666 = vsel %vm1625, %v1560, %v1665
  %1667 = vst [vmem:[%s584 + $0x68] sm:$0xff] %v1666
  %v1668 = vld [vmem:[%s584 + $0x70] sm:$0xff]
  %v1669 = vsel %vm1625, %v1562, %v1668
  %1670 = vst [vmem:[%s584 + $0x70] sm:$0xff] %v1669
  %v1671 = vld [vmem:[%s584 + $0x80] sm:$0xff]
  %v1672 = vsel %vm1625, %v1564, %v1671
  %1673 = vst [vmem:[%s584 + $0x80] sm:$0xff] %v1672
  %v1674 = vld [vmem:[%s584 + $0x88] sm:$0xff]
  %v1675 = vsel %vm1625, %v1566, %v1674
  %1676 = vst [vmem:[%s584 + $0x88] sm:$0xff] %v1675
  %v1677 = vld [vmem:[%s584 + $0x90] sm:$0xff]
  %v1678 = vsel %vm1625, %v1568, %v1677
  %1679 = vst [vmem:[%s584 + $0x90] sm:$0xff] %v1678
  %v1680 = vld [vmem:[%s584 + $0x98] sm:$0xff]
  %v1681 = vsel %vm1625, %v1570, %v1680
  %1682 = vst [vmem:[%s584 + $0x98] sm:$0xff] %v1681
  %v1683 = vld [vmem:[%s584 + $0xa0] sm:$0xff]
  %v1684 = vsel %vm1625, %v1572, %v1683
  %1685 = vst [vmem:[%s584 + $0xa0] sm:$0xff] %v1684
  %v1686 = vld [vmem:[%s584 + $0xa8] sm:$0xff]
  %v1687 = vsel %vm1625, %v1574, %v1686
  %1688 = vst [vmem:[%s584 + $0xa8] sm:$0xff] %v1687
  %v1689 = vld [vmem:[%s584 + $0xb0] sm:$0xff]
  %v1690 = vsel %vm1625, %v1576, %v1689
  %1691 = vst [vmem:[%s584 + $0xb0] sm:$0xff] %v1690
  %v1692 = vld [vmem:[%s584 + $0xb8] sm:$0xff]
  %v1693 = vsel %vm1625, %v1578, %v1692
  %1694 = vst [vmem:[%s584 + $0xb8] sm:$0xff] %v1693
  %v1695 = vld [vmem:[%s584 + $0xc0] sm:$0xff]
  %v1696 = vsel %vm1625, %v1580, %v1695
  %1697 = vst [vmem:[%s584 + $0xc0] sm:$0xff] %v1696
  %v1698 = vld [vmem:[%s584 + $0xc8] sm:$0xff]
  %v1699 = vsel %vm1625, %v1582, %v1698
  %1700 = vst [vmem:[%s584 + $0xc8] sm:$0xff] %v1699
  %v1701 = vld [vmem:[%s584 + $0xd0] sm:$0xff]
  %v1702 = vsel %vm1625, %v1584, %v1701
  %1703 = vst [vmem:[%s584 + $0xd0] sm:$0xff] %v1702
  %v1704 = vld [vmem:[%s584 + $0xd8] sm:$0xff]
  %v1705 = vsel %vm1625, %v1586, %v1704
  %1706 = vst [vmem:[%s584 + $0xd8] sm:$0xff] %v1705
  %v1707 = vld [vmem:[%s584 + $0xe0] sm:$0xff]
  %v1708 = vsel %vm1625, %v1588, %v1707
  %1709 = vst [vmem:[%s584 + $0xe0] sm:$0xff] %v1708
  %v1710 = vld [vmem:[%s584 + $0xe8] sm:$0xff]
  %v1711 = vsel %vm1625, %v1590, %v1710
  %1712 = vst [vmem:[%s584 + $0xe8] sm:$0xff] %v1711
  %v1713 = vld [vmem:[%s584 + $0xf0] sm:$0xff]
  %v1714 = vsel %vm1625, %v1592, %v1713
  %1715 = vst [vmem:[%s584 + $0xf0] sm:$0xff] %v1714
  %vm1716 = vcmask 57392
  %vm1717 = vmand %vm1716, %vm36
  %v1718 = vld [vmem:[#allocation2] sm:$0x1]
  %v1719 = vsel %vm1717, 0, %v1718
  %1720 = vst [vmem:[#allocation2] sm:$0x1] %v1719
  %v1721 = vld [vmem:[#allocation2 + $0x8] sm:$0x1]
  %v1722 = vsel %vm1717, 0, %v1721
  %1723 = vst [vmem:[#allocation2 + $0x8] sm:$0x1] %v1722
  %v1724 = vld [vmem:[#allocation2 + $0x10] sm:$0x1]
  %v1725 = vsel %vm1717, 0, %v1724
  %1726 = vst [vmem:[#allocation2 + $0x10] sm:$0x1] %v1725
  %v1727 = vld [vmem:[#allocation2 + $0x18] sm:$0x1]
  %v1728 = vsel %vm1717, 0, %v1727
  %1729 = vst [vmem:[#allocation2 + $0x18] sm:$0x1] %v1728
  %v1730 = vld [vmem:[#allocation2 + $0x20] sm:$0x1]
  %v1731 = vsel %vm1717, 0, %v1730
  %1732 = vst [vmem:[#allocation2 + $0x20] sm:$0x1] %v1731
  %v1733 = vld [vmem:[#allocation2 + $0x28] sm:$0x1]
  %v1734 = vsel %vm1717, 0, %v1733
  %1735 = vst [vmem:[#allocation2 + $0x28] sm:$0x1] %v1734
  %v1736 = vld [vmem:[#allocation2 + $0x30] sm:$0x1]
  %v1737 = vsel %vm1717, 0, %v1736
  %1738 = vst [vmem:[#allocation2 + $0x30] sm:$0x1] %v1737
  %v1739 = vld [vmem:[#allocation2 + $0x38] sm:$0x1]
  %v1740 = vsel %vm1717, 0, %v1739
  %1741 = vst [vmem:[#allocation2 + $0x38] sm:$0x1] %v1740
  %v1742 = vld [vmem:[#allocation2 + $0x40] sm:$0x1]
  %v1743 = vsel %vm1717, 0, %v1742
  %1744 = vst [vmem:[#allocation2 + $0x40] sm:$0x1] %v1743
  %v1745 = vld [vmem:[#allocation2 + $0x48] sm:$0x1]
  %v1746 = vsel %vm1717, 0, %v1745
  %1747 = vst [vmem:[#allocation2 + $0x48] sm:$0x1] %v1746
  %v1748 = vld [vmem:[#allocation2 + $0x50] sm:$0x1]
  %v1749 = vsel %vm1717, 0, %v1748
  %1750 = vst [vmem:[#allocation2 + $0x50] sm:$0x1] %v1749
  %v1751 = vld [vmem:[#allocation2 + $0x58] sm:$0x1]
  %v1752 = vsel %vm1717, 0, %v1751
  %1753 = vst [vmem:[#allocation2 + $0x58] sm:$0x1] %v1752
  %v1754 = vld [vmem:[#allocation2 + $0x60] sm:$0x1]
  %v1755 = vsel %vm1717, 0, %v1754
  %1756 = vst [vmem:[#allocation2 + $0x60] sm:$0x1] %v1755
  %v1757 = vld [vmem:[#allocation2 + $0x68] sm:$0x1]
  %v1758 = vsel %vm1717, 0, %v1757
  %1759 = vst [vmem:[#allocation2 + $0x68] sm:$0x1] %v1758
  %v1760 = vld [vmem:[#allocation2 + $0x70] sm:$0x1]
  %v1761 = vsel %vm1717, 0, %v1760
  %1762 = vst [vmem:[#allocation2 + $0x70] sm:$0x1] %v1761
  %v1763 = vld [vmem:[#allocation2 + $0x78] sm:$0x1]
  %v1764 = vsel %vm1717, 0, %v1763
  %1765 = vst [vmem:[#allocation2 + $0x78] sm:$0x1] %v1764
  %v1766 = vld [vmem:[#allocation2 + $0x80] sm:$0x1]
  %v1767 = vsel %vm1717, 0, %v1766
  %1768 = vst [vmem:[#allocation2 + $0x80] sm:$0x1] %v1767
  %v1769 = vld [vmem:[#allocation2 + $0x88] sm:$0x1]
  %v1770 = vsel %vm1717, 0, %v1769
  %1771 = vst [vmem:[#allocation2 + $0x88] sm:$0x1] %v1770
  %v1772 = vld [vmem:[#allocation2 + $0x90] sm:$0x1]
  %v1773 = vsel %vm1717, 0, %v1772
  %1774 = vst [vmem:[#allocation2 + $0x90] sm:$0x1] %v1773
  %v1775 = vld [vmem:[#allocation2 + $0x98] sm:$0x1]
  %v1776 = vsel %vm1717, 0, %v1775
  %1777 = vst [vmem:[#allocation2 + $0x98] sm:$0x1] %v1776
  %v1778 = vld [vmem:[#allocation2 + $0xa0] sm:$0x1]
  %v1779 = vsel %vm1717, 0, %v1778
  %1780 = vst [vmem:[#allocation2 + $0xa0] sm:$0x1] %v1779
  %v1781 = vld [vmem:[#allocation2 + $0xa8] sm:$0x1]
  %v1782 = vsel %vm1717, 0, %v1781
  %1783 = vst [vmem:[#allocation2 + $0xa8] sm:$0x1] %v1782
  %v1784 = vld [vmem:[#allocation2 + $0xb0] sm:$0x1]
  %v1785 = vsel %vm1717, 0, %v1784
  %1786 = vst [vmem:[#allocation2 + $0xb0] sm:$0x1] %v1785
  %v1787 = vld [vmem:[#allocation2 + $0xb8] sm:$0x1]
  %v1788 = vsel %vm1717, 0, %v1787
  %1789 = vst [vmem:[#allocation2 + $0xb8] sm:$0x1] %v1788
  %v1790 = vld [vmem:[#allocation2 + $0xc0] sm:$0x1]
  %v1791 = vsel %vm1717, 0, %v1790
  %1792 = vst [vmem:[#allocation2 + $0xc0] sm:$0x1] %v1791
  %v1793 = vld [vmem:[#allocation2 + $0xc8] sm:$0x1]
  %v1794 = vsel %vm1717, 0, %v1793
  %1795 = vst [vmem:[#allocation2 + $0xc8] sm:$0x1] %v1794
  %v1796 = vld [vmem:[#allocation2 + $0xd0] sm:$0x1]
  %v1797 = vsel %vm1717, 0, %v1796
  %1798 = vst [vmem:[#allocation2 + $0xd0] sm:$0x1] %v1797
  %v1799 = vld [vmem:[#allocation2 + $0xd8] sm:$0x1]
  %v1800 = vsel %vm1717, 0, %v1799
  %1801 = vst [vmem:[#allocation2 + $0xd8] sm:$0x1] %v1800
  %v1802 = vld [vmem:[#allocation2 + $0xe0] sm:$0x1]
  %v1803 = vsel %vm1717, 0, %v1802
  %1804 = vst [vmem:[#allocation2 + $0xe0] sm:$0x1] %v1803
  %v1805 = vld [vmem:[#allocation2 + $0xe8] sm:$0x1]
  %v1806 = vsel %vm1717, 0, %v1805
  %1807 = vst [vmem:[#allocation2 + $0xe8] sm:$0x1] %v1806
  %v1808 = vld [vmem:[#allocation2 + $0xf0] sm:$0x1]
  %v1809 = vsel %vm1717, 0, %v1808
  %1810 = vst [vmem:[#allocation2 + $0xf0] sm:$0x1] %v1809
  %v1811 = vld [vmem:[#allocation2 + $0xf8] sm:$0x1]
  %v1812 = vsel %vm1717, 0, %v1811
  %1813 = vst [vmem:[#allocation2 + $0xf8] sm:$0x1] %v1812
  %v1814 = vld [vmem:[%s1] sm:$0xf]
  %v1815 = vld [vmem:[%s1 + $0x4] sm:$0xf]
  %v1816 = vld [vmem:[%s1 + $0x8] sm:$0xf]
  %v1817 = vld [vmem:[%s1 + $0xc] sm:$0xf]
  %v1818 = vld [vmem:[%s1 + $0x10] sm:$0xf]
  %v1819 = vld [vmem:[%s1 + $0x14] sm:$0xf]
  %v1820 = vld [vmem:[%s1 + $0x18] sm:$0xf]
  %v1821 = vld [vmem:[%s1 + $0x1c] sm:$0xf]
  %v1822 = vld [vmem:[%s1 + $0x20] sm:$0xf]
  %v1823 = vld [vmem:[%s1 + $0x24] sm:$0xf]
  %v1824 = vld [vmem:[%s1 + $0x28] sm:$0xf]
  %v1825 = vld [vmem:[%s1 + $0x2c] sm:$0xf]
  %v1826 = vld [vmem:[%s1 + $0x30] sm:$0xf]
  %v1827 = vld [vmem:[%s1 + $0x34] sm:$0xf]
  %v1828 = vld [vmem:[%s1 + $0x38] sm:$0xf]
  %v1829 = vld [vmem:[%s1 + $0x3c] sm:$0xf]
  %v1830 = vld [vmem:[%s1 + $0x40] sm:$0xf]
  %v1831 = vld [vmem:[%s1 + $0x44] sm:$0xf]
  %v1832 = vld [vmem:[%s1 + $0x48] sm:$0xf]
  %v1833 = vld [vmem:[%s1 + $0x4c] sm:$0xf]
  %v1834 = vld [vmem:[%s1 + $0x50] sm:$0xf]
  %v1835 = vld [vmem:[%s1 + $0x54] sm:$0xf]
  %v1836 = vld [vmem:[%s1 + $0x58] sm:$0xf]
  %v1837 = vld [vmem:[%s1 + $0x5c] sm:$0xf]
  %v1838 = vld [vmem:[%s1 + $0x60] sm:$0xf]
  %v1839 = vld [vmem:[%s1 + $0x64] sm:$0xf]
  %v1840 = vld [vmem:[%s1 + $0x68] sm:$0xf]
  %v1841 = vld [vmem:[%s1 + $0x6c] sm:$0xf]
  %v1842 = vld [vmem:[%s1 + $0x70] sm:$0xf]
  %v1843 = vld [vmem:[%s1 + $0x74] sm:$0xf]
  %v1844 = vld [vmem:[%s1 + $0x78] sm:$0xf]
  %v1845 = vld [vmem:[%s1 + $0x7c] sm:$0xf]
  %v1846 = vld [vmem:[%s1 + $0x80] sm:$0xf]
  %v1847 = vld [vmem:[%s1 + $0x84] sm:$0xf]
  %v1848 = vld [vmem:[%s1 + $0x88] sm:$0xf]
  %v1849 = vld [vmem:[%s1 + $0x8c] sm:$0xf]
  %v1850 = vld [vmem:[%s1 + $0x90] sm:$0xf]
  %v1851 = vld [vmem:[%s1 + $0x94] sm:$0xf]
  %v1852 = vld [vmem:[%s1 + $0x98] sm:$0xf]
  %v1853 = vld [vmem:[%s1 + $0x9c] sm:$0xf]
  %v1854 = vld [vmem:[%s1 + $0xa0] sm:$0xf]
  %v1855 = vld [vmem:[%s1 + $0xa4] sm:$0xf]
  %v1856 = vld [vmem:[%s1 + $0xa8] sm:$0xf]
  %v1857 = vld [vmem:[%s1 + $0xac] sm:$0xf]
  %v1858 = vld [vmem:[%s1 + $0xb0] sm:$0xf]
  %v1859 = vld [vmem:[%s1 + $0xb4] sm:$0xf]
  %v1860 = vld [vmem:[%s1 + $0xb8] sm:$0xf]
  %v1861 = vld [vmem:[%s1 + $0xbc] sm:$0xf]
  %v1862 = vld [vmem:[%s1 + $0xc0] sm:$0xf]
  %v1863 = vld [vmem:[%s1 + $0xc4] sm:$0xf]
  %v1864 = vld [vmem:[%s1 + $0xc8] sm:$0xf]
  %v1865 = vld [vmem:[%s1 + $0xcc] sm:$0xf]
  %v1866 = vld [vmem:[%s1 + $0xd0] sm:$0xf]
  %v1867 = vld [vmem:[%s1 + $0xd4] sm:$0xf]
  %v1868 = vld [vmem:[%s1 + $0xd8] sm:$0xf]
  %v1869 = vld [vmem:[%s1 + $0xdc] sm:$0xf]
  %v1870 = vld [vmem:[%s1 + $0xe0] sm:$0xf]
  %v1871 = vld [vmem:[%s1 + $0xe4] sm:$0xf]
  %v1872 = vld [vmem:[%s1 + $0xe8] sm:$0xf]
  %v1873 = vld [vmem:[%s1 + $0xec] sm:$0xf]
  %v1874 = vld [vmem:[%s1 + $0xf0] sm:$0xf]
  %v1875 = vld [vmem:[%s1 + $0xf4] sm:$0xf]
  %v1876 = vld [vmem:[%s1 + $0xf8] sm:$0xf]
  %v1877 = vld [vmem:[%s1 + $0xfc] sm:$0xf]
  %v1942 = vunpack.c.l.b16 %v1814
  %v1943 = vunpack.c.l.b16 %v1815
  %v1944 = vunpack.c.l.b16 %v1816
  %v1945 = vunpack.c.l.b16 %v1817
  %v1946 = vunpack.c.l.b16 %v1818
  %v1947 = vunpack.c.l.b16 %v1819
  %v1948 = vunpack.c.l.b16 %v1820
  %v1949 = vunpack.c.l.b16 %v1821
  %v1950 = vunpack.c.l.b16 %v1822
  %v1951 = vunpack.c.l.b16 %v1823
  %v1952 = vunpack.c.l.b16 %v1824
  %v1953 = vunpack.c.l.b16 %v1825
  %v1954 = vunpack.c.l.b16 %v1826
  %v1955 = vunpack.c.l.b16 %v1827
  %v1956 = vunpack.c.l.b16 %v1828
  %v1957 = vunpack.c.l.b16 %v1829
  %v1958 = vunpack.c.l.b16 %v1830
  %v1959 = vunpack.c.l.b16 %v1831
  %v1960 = vunpack.c.l.b16 %v1832
  %v1961 = vunpack.c.l.b16 %v1833
  %v1962 = vunpack.c.l.b16 %v1834
  %v1963 = vunpack.c.l.b16 %v1835
  %v1964 = vunpack.c.l.b16 %v1836
  %v1965 = vunpack.c.l.b16 %v1837
  %v1966 = vunpack.c.l.b16 %v1838
  %v1967 = vunpack.c.l.b16 %v1839
  %v1968 = vunpack.c.l.b16 %v1840
  %v1969 = vunpack.c.l.b16 %v1841
  %v1970 = vunpack.c.l.b16 %v1842
  %v1971 = vunpack.c.l.b16 %v1843
  %v1972 = vunpack.c.l.b16 %v1844
  %v1973 = vunpack.c.l.b16 %v1845
  %v1974 = vunpack.c.l.b16 %v1846
  %v1975 = vunpack.c.l.b16 %v1847
  %v1976 = vunpack.c.l.b16 %v1848
  %v1977 = vunpack.c.l.b16 %v1849
  %v1978 = vunpack.c.l.b16 %v1850
  %v1979 = vunpack.c.l.b16 %v1851
  %v1980 = vunpack.c.l.b16 %v1852
  %v1981 = vunpack.c.l.b16 %v1853
  %v1982 = vunpack.c.l.b16 %v1854
  %v1983 = vunpack.c.l.b16 %v1855
  %v1984 = vunpack.c.l.b16 %v1856
  %v1985 = vunpack.c.l.b16 %v1857
  %v1986 = vunpack.c.l.b16 %v1858
  %v1987 = vunpack.c.l.b16 %v1859
  %v1988 = vunpack.c.l.b16 %v1860
  %v1989 = vunpack.c.l.b16 %v1861
  %v1990 = vunpack.c.l.b16 %v1862
  %v1991 = vunpack.c.l.b16 %v1863
  %v1992 = vunpack.c.l.b16 %v1864
  %v1993 = vunpack.c.l.b16 %v1865
  %v1994 = vunpack.c.l.b16 %v1866
  %v1995 = vunpack.c.l.b16 %v1867
  %v1996 = vunpack.c.l.b16 %v1868
  %v1997 = vunpack.c.l.b16 %v1869
  %v1998 = vunpack.c.l.b16 %v1870
  %v1999 = vunpack.c.l.b16 %v1871
  %v2000 = vunpack.c.l.b16 %v1872
  %v2001 = vunpack.c.l.b16 %v1873
  %v2002 = vunpack.c.l.b16 %v1874
  %v2003 = vunpack.c.l.b16 %v1875
  %v2004 = vunpack.c.l.b16 %v1876
  %v2005 = vunpack.c.l.b16 %v1877
  %v2006 = vpack.c.b16 %v1943, %v1942
  %v2007 = vpack.c.b16 %v1945, %v1944
  %v2008 = vpack.c.b16 %v1947, %v1946
  %v2009 = vpack.c.b16 %v1949, %v1948
  %v2010 = vpack.c.b16 %v1951, %v1950
  %v2011 = vpack.c.b16 %v1953, %v1952
  %v2012 = vpack.c.b16 %v1955, %v1954
  %v2013 = vpack.c.b16 %v1957, %v1956
  %v2014 = vpack.c.b16 %v1959, %v1958
  %v2015 = vpack.c.b16 %v1961, %v1960
  %v2016 = vpack.c.b16 %v1963, %v1962
  %v2017 = vpack.c.b16 %v1965, %v1964
  %v2018 = vpack.c.b16 %v1967, %v1966
  %v2019 = vpack.c.b16 %v1969, %v1968
  %v2020 = vpack.c.b16 %v1971, %v1970
  %v2021 = vpack.c.b16 %v1973, %v1972
  %v2022 = vpack.c.b16 %v1975, %v1974
  %v2023 = vpack.c.b16 %v1977, %v1976
  %v2024 = vpack.c.b16 %v1979, %v1978
  %v2025 = vpack.c.b16 %v1981, %v1980
  %v2026 = vpack.c.b16 %v1983, %v1982
  %v2027 = vpack.c.b16 %v1985, %v1984
  %v2028 = vpack.c.b16 %v1987, %v1986
  %v2029 = vpack.c.b16 %v1989, %v1988
  %v2030 = vpack.c.b16 %v1991, %v1990
  %v2031 = vpack.c.b16 %v1993, %v1992
  %v2032 = vpack.c.b16 %v1995, %v1994
  %v2033 = vpack.c.b16 %v1997, %v1996
  %v2034 = vpack.c.b16 %v1999, %v1998
  %v2035 = vpack.c.b16 %v2001, %v2000
  %v2036 = vpack.c.b16 %v2003, %v2002
  %v2037 = vpack.c.b16 %v2005, %v2004
  %v2039 = vshrl.u32 %v2006, 16
  %v2041 = vrot.slane %v2039, 7
  %v2042 = vshll.u32 %v2006, 16
  %v2044 = vor.u32 %v2041, %v2042
  %v2046 = vshrl.u32 %v2007, 16
  %v2048 = vrot.slane %v2046, 7
  %v2049 = vshll.u32 %v2007, 16
  %v2051 = vor.u32 %v2048, %v2049
  %v2053 = vshrl.u32 %v2008, 16
  %v2055 = vrot.slane %v2053, 7
  %v2056 = vshll.u32 %v2008, 16
  %v2058 = vor.u32 %v2055, %v2056
  %v2060 = vshrl.u32 %v2009, 16
  %v2062 = vrot.slane %v2060, 7
  %v2063 = vshll.u32 %v2009, 16
  %v2065 = vor.u32 %v2062, %v2063
  %v2067 = vshrl.u32 %v2010, 16
  %v2069 = vrot.slane %v2067, 7
  %v2070 = vshll.u32 %v2010, 16
  %v2072 = vor.u32 %v2069, %v2070
  %v2074 = vshrl.u32 %v2011, 16
  %v2076 = vrot.slane %v2074, 7
  %v2077 = vshll.u32 %v2011, 16
  %v2079 = vor.u32 %v2076, %v2077
  %v2081 = vshrl.u32 %v2012, 16
  %v2083 = vrot.slane %v2081, 7
  %v2084 = vshll.u32 %v2012, 16
  %v2086 = vor.u32 %v2083, %v2084
  %v2088 = vshrl.u32 %v2013, 16
  %v2090 = vrot.slane %v2088, 7
  %v2091 = vshll.u32 %v2013, 16
  %v2093 = vor.u32 %v2090, %v2091
  %v2095 = vshrl.u32 %v2014, 16
  %v2097 = vrot.slane %v2095, 7
  %v2098 = vshll.u32 %v2014, 16
  %v2100 = vor.u32 %v2097, %v2098
  %v2102 = vshrl.u32 %v2015, 16
  %v2104 = vrot.slane %v2102, 7
  %v2105 = vshll.u32 %v2015, 16
  %v2107 = vor.u32 %v2104, %v2105
  %v2109 = vshrl.u32 %v2016, 16
  %v2111 = vrot.slane %v2109, 7
  %v2112 = vshll.u32 %v2016, 16
  %v2114 = vor.u32 %v2111, %v2112
  %v2116 = vshrl.u32 %v2017, 16
  %v2118 = vrot.slane %v2116, 7
  %v2119 = vshll.u32 %v2017, 16
  %v2121 = vor.u32 %v2118, %v2119
  %v2123 = vshrl.u32 %v2018, 16
  %v2125 = vrot.slane %v2123, 7
  %v2126 = vshll.u32 %v2018, 16
  %v2128 = vor.u32 %v2125, %v2126
  %v2130 = vshrl.u32 %v2019, 16
  %v2132 = vrot.slane %v2130, 7
  %v2133 = vshll.u32 %v2019, 16
  %v2135 = vor.u32 %v2132, %v2133
  %v2137 = vshrl.u32 %v2020, 16
  %v2139 = vrot.slane %v2137, 7
  %v2140 = vshll.u32 %v2020, 16
  %v2142 = vor.u32 %v2139, %v2140
  %v2144 = vshrl.u32 %v2021, 16
  %v2146 = vrot.slane %v2144, 7
  %v2147 = vshll.u32 %v2021, 16
  %v2149 = vor.u32 %v2146, %v2147
  %v2151 = vshrl.u32 %v2022, 16
  %v2153 = vrot.slane %v2151, 7
  %v2154 = vshll.u32 %v2022, 16
  %v2156 = vor.u32 %v2153, %v2154
  %v2158 = vshrl.u32 %v2023, 16
  %v2160 = vrot.slane %v2158, 7
  %v2161 = vshll.u32 %v2023, 16
  %v2163 = vor.u32 %v2160, %v2161
  %v2165 = vshrl.u32 %v2024, 16
  %v2167 = vrot.slane %v2165, 7
  %v2168 = vshll.u32 %v2024, 16
  %v2170 = vor.u32 %v2167, %v2168
  %v2172 = vshrl.u32 %v2025, 16
  %v2174 = vrot.slane %v2172, 7
  %v2175 = vshll.u32 %v2025, 16
  %v2177 = vor.u32 %v2174, %v2175
  %v2179 = vshrl.u32 %v2026, 16
  %v2181 = vrot.slane %v2179, 7
  %v2182 = vshll.u32 %v2026, 16
  %v2184 = vor.u32 %v2181, %v2182
  %v2186 = vshrl.u32 %v2027, 16
  %v2188 = vrot.slane %v2186, 7
  %v2189 = vshll.u32 %v2027, 16
  %v2191 = vor.u32 %v2188, %v2189
  %v2193 = vshrl.u32 %v2028, 16
  %v2195 = vrot.slane %v2193, 7
  %v2196 = vshll.u32 %v2028, 16
  %v2198 = vor.u32 %v2195, %v2196
  %v2200 = vshrl.u32 %v2029, 16
  %v2202 = vrot.slane %v2200, 7
  %v2203 = vshll.u32 %v2029, 16
  %v2205 = vor.u32 %v2202, %v2203
  %v2207 = vshrl.u32 %v2030, 16
  %v2209 = vrot.slane %v2207, 7
  %v2210 = vshll.u32 %v2030, 16
  %v2212 = vor.u32 %v2209, %v2210
  %v2214 = vshrl.u32 %v2031, 16
  %v2216 = vrot.slane %v2214, 7
  %v2217 = vshll.u32 %v2031, 16
  %v2219 = vor.u32 %v2216, %v2217
  %v2221 = vshrl.u32 %v2032, 16
  %v2223 = vrot.slane %v2221, 7
  %v2224 = vshll.u32 %v2032, 16
  %v2226 = vor.u32 %v2223, %v2224
  %v2228 = vshrl.u32 %v2033, 16
  %v2230 = vrot.slane %v2228, 7
  %v2231 = vshll.u32 %v2033, 16
  %v2233 = vor.u32 %v2230, %v2231
  %v2235 = vshrl.u32 %v2034, 16
  %v2237 = vrot.slane %v2235, 7
  %v2238 = vshll.u32 %v2034, 16
  %v2240 = vor.u32 %v2237, %v2238
  %v2242 = vshrl.u32 %v2035, 16
  %v2244 = vrot.slane %v2242, 7
  %v2245 = vshll.u32 %v2035, 16
  %v2247 = vor.u32 %v2244, %v2245
  %v2249 = vshrl.u32 %v2036, 16
  %v2251 = vrot.slane %v2249, 7
  %v2252 = vshll.u32 %v2036, 16
  %v2254 = vor.u32 %v2251, %v2252
  %v2256 = vshrl.u32 %v2037, 16
  %v2258 = vrot.slane %v2256, 7
  %v2259 = vshll.u32 %v2037, 16
  %v2261 = vor.u32 %v2258, %v2259
  %2262 = vrot.lane.b32.xlu0 %v2044, 6
  %v2263 = vpop.permute.xlu0 %2262
  %2264 = vrot.lane.b32.xlu0 %v2051, 6
  %v2265 = vpop.permute.xlu0 %2264
  %2266 = vrot.lane.b32.xlu0 %v2058, 6
  %v2267 = vpop.permute.xlu0 %2266
  %2268 = vrot.lane.b32.xlu0 %v2065, 6
  %v2269 = vpop.permute.xlu0 %2268
  %2270 = vrot.lane.b32.xlu0 %v2072, 6
  %v2271 = vpop.permute.xlu0 %2270
  %2272 = vrot.lane.b32.xlu0 %v2079, 6
  %v2273 = vpop.permute.xlu0 %2272
  %2274 = vrot.lane.b32.xlu0 %v2086, 6
  %v2275 = vpop.permute.xlu0 %2274
  %2276 = vrot.lane.b32.xlu0 %v2093, 6
  %v2277 = vpop.permute.xlu0 %2276
  %2278 = vrot.lane.b32.xlu0 %v2100, 6
  %v2279 = vpop.permute.xlu0 %2278
  %2280 = vrot.lane.b32.xlu0 %v2107, 6
  %v2281 = vpop.permute.xlu0 %2280
  %2282 = vrot.lane.b32.xlu0 %v2114, 6
  %v2283 = vpop.permute.xlu0 %2282
  %2284 = vrot.lane.b32.xlu0 %v2121, 6
  %v2285 = vpop.permute.xlu0 %2284
  %2286 = vrot.lane.b32.xlu0 %v2128, 6
  %v2287 = vpop.permute.xlu0 %2286
  %2288 = vrot.lane.b32.xlu0 %v2135, 6
  %v2289 = vpop.permute.xlu0 %2288
  %2290 = vrot.lane.b32.xlu0 %v2142, 6
  %v2291 = vpop.permute.xlu0 %2290
  %2292 = vrot.lane.b32.xlu0 %v2149, 6
  %v2293 = vpop.permute.xlu0 %2292
  %2294 = vrot.lane.b32.xlu0 %v2156, 6
  %v2295 = vpop.permute.xlu0 %2294
  %2296 = vrot.lane.b32.xlu0 %v2163, 6
  %v2297 = vpop.permute.xlu0 %2296
  %2298 = vrot.lane.b32.xlu0 %v2170, 6
  %v2299 = vpop.permute.xlu0 %2298
  %2300 = vrot.lane.b32.xlu0 %v2177, 6
  %v2301 = vpop.permute.xlu0 %2300
  %2302 = vrot.lane.b32.xlu0 %v2184, 6
  %v2303 = vpop.permute.xlu0 %2302
  %2304 = vrot.lane.b32.xlu0 %v2191, 6
  %v2305 = vpop.permute.xlu0 %2304
  %2306 = vrot.lane.b32.xlu0 %v2198, 6
  %v2307 = vpop.permute.xlu0 %2306
  %2308 = vrot.lane.b32.xlu0 %v2205, 6
  %v2309 = vpop.permute.xlu0 %2308
  %2310 = vrot.lane.b32.xlu0 %v2212, 6
  %v2311 = vpop.permute.xlu0 %2310
  %2312 = vrot.lane.b32.xlu0 %v2219, 6
  %v2313 = vpop.permute.xlu0 %2312
  %2314 = vrot.lane.b32.xlu0 %v2226, 6
  %v2315 = vpop.permute.xlu0 %2314
  %2316 = vrot.lane.b32.xlu0 %v2233, 6
  %v2317 = vpop.permute.xlu0 %2316
  %2318 = vrot.lane.b32.xlu0 %v2240, 6
  %v2319 = vpop.permute.xlu0 %2318
  %2320 = vrot.lane.b32.xlu0 %v2247, 6
  %v2321 = vpop.permute.xlu0 %2320
  %2322 = vrot.lane.b32.xlu0 %v2254, 6
  %v2323 = vpop.permute.xlu0 %2322
  %2324 = vrot.lane.b32.xlu0 %v2261, 6
  %v2325 = vpop.permute.xlu0 %2324
  %vm2358 = vcmask 64560
  %vm2359 = vmand %vm2358, %vm586
  %v2360 = vld [vmem:[#allocation2] sm:$0xff]
  %v2361 = vsel %vm2359, %v2263, %v2360
  %2362 = vst [vmem:[#allocation2] sm:$0xff] %v2361
  %v2363 = vld [vmem:[#allocation2 + $0x8] sm:$0xff]
  %v2364 = vsel %vm2359, %v2265, %v2363
  %2365 = vst [vmem:[#allocation2 + $0x8] sm:$0xff] %v2364
  %v2366 = vld [vmem:[#allocation2 + $0x10] sm:$0xff]
  %v2367 = vsel %vm2359, %v2267, %v2366
  %2368 = vst [vmem:[#allocation2 + $0x10] sm:$0xff] %v2367
  %v2369 = vld [vmem:[#allocation2 + $0x18] sm:$0xff]
  %v2370 = vsel %vm2359, %v2269, %v2369
  %2371 = vst [vmem:[#allocation2 + $0x18] sm:$0xff] %v2370
  %v2372 = vld [vmem:[#allocation2 + $0x20] sm:$0xff]
  %v2373 = vsel %vm2359, %v2271, %v2372
  %2374 = vst [vmem:[#allocation2 + $0x20] sm:$0xff] %v2373
  %v2375 = vld [vmem:[#allocation2 + $0x28] sm:$0xff]
  %v2376 = vsel %vm2359, %v2273, %v2375
  %2377 = vst [vmem:[#allocation2 + $0x28] sm:$0xff] %v2376
  %v2378 = vld [vmem:[#allocation2 + $0x30] sm:$0xff]
  %v2379 = vsel %vm2359, %v2275, %v2378
  %2380 = vst [vmem:[#allocation2 + $0x30] sm:$0xff] %v2379
  %v2381 = vld [vmem:[#allocation2 + $0x38] sm:$0xff]
  %v2382 = vsel %vm2359, %v2277, %v2381
  %2383 = vst [vmem:[#allocation2 + $0x38] sm:$0xff] %v2382
  %v2384 = vld [vmem:[#allocation2 + $0x40] sm:$0xff]
  %v2385 = vsel %vm2359, %v2279, %v2384
  %2386 = vst [vmem:[#allocation2 + $0x40] sm:$0xff] %v2385
  %v2387 = vld [vmem:[#allocation2 + $0x48] sm:$0xff]
  %v2388 = vsel %vm2359, %v2281, %v2387
  %2389 = vst [vmem:[#allocation2 + $0x48] sm:$0xff] %v2388
  %v2390 = vld [vmem:[#allocation2 + $0x50] sm:$0xff]
  %v2391 = vsel %vm2359, %v2283, %v2390
  %2392 = vst [vmem:[#allocation2 + $0x50] sm:$0xff] %v2391
  %v2393 = vld [vmem:[#allocation2 + $0x58] sm:$0xff]
  %v2394 = vsel %vm2359, %v2285, %v2393
  %2395 = vst [vmem:[#allocation2 + $0x58] sm:$0xff] %v2394
  %v2396 = vld [vmem:[#allocation2 + $0x60] sm:$0xff]
  %v2397 = vsel %vm2359, %v2287, %v2396
  %2398 = vst [vmem:[#allocation2 + $0x60] sm:$0xff] %v2397
  %v2399 = vld [vmem:[#allocation2 + $0x68] sm:$0xff]
  %v2400 = vsel %vm2359, %v2289, %v2399
  %2401 = vst [vmem:[#allocation2 + $0x68] sm:$0xff] %v2400
  %v2402 = vld [vmem:[#allocation2 + $0x70] sm:$0xff]
  %v2403 = vsel %vm2359, %v2291, %v2402
  %2404 = vst [vmem:[#allocation2 + $0x70] sm:$0xff] %v2403
  %v2405 = vld [vmem:[#allocation2 + $0x78] sm:$0xff]
  %v2406 = vsel %vm2359, %v2293, %v2405
  %2407 = vst [vmem:[#allocation2 + $0x78] sm:$0xff] %v2406
  %v2408 = vld [vmem:[#allocation2 + $0x80] sm:$0xff]
  %v2409 = vsel %vm2359, %v2295, %v2408
  %2410 = vst [vmem:[#allocation2 + $0x80] sm:$0xff] %v2409
  %v2411 = vld [vmem:[#allocation2 + $0x88] sm:$0xff]
  %v2412 = vsel %vm2359, %v2297, %v2411
  %2413 = vst [vmem:[#allocation2 + $0x88] sm:$0xff] %v2412
  %v2414 = vld [vmem:[#allocation2 + $0x90] sm:$0xff]
  %v2415 = vsel %vm2359, %v2299, %v2414
  %2416 = vst [vmem:[#allocation2 + $0x90] sm:$0xff] %v2415
  %v2417 = vld [vmem:[#allocation2 + $0x98] sm:$0xff]
  %v2418 = vsel %vm2359, %v2301, %v2417
  %2419 = vst [vmem:[#allocation2 + $0x98] sm:$0xff] %v2418
  %v2420 = vld [vmem:[#allocation2 + $0xa0] sm:$0xff]
  %v2421 = vsel %vm2359, %v2303, %v2420
  %2422 = vst [vmem:[#allocation2 + $0xa0] sm:$0xff] %v2421
  %v2423 = vld [vmem:[#allocation2 + $0xa8] sm:$0xff]
  %v2424 = vsel %vm2359, %v2305, %v2423
  %2425 = vst [vmem:[#allocation2 + $0xa8] sm:$0xff] %v2424
  %v2426 = vld [vmem:[#allocation2 + $0xb0] sm:$0xff]
  %v2427 = vsel %vm2359, %v2307, %v2426
  %2428 = vst [vmem:[#allocation2 + $0xb0] sm:$0xff] %v2427
  %v2429 = vld [vmem:[#allocation2 + $0xb8] sm:$0xff]
  %v2430 = vsel %vm2359, %v2309, %v2429
  %2431 = vst [vmem:[#allocation2 + $0xb8] sm:$0xff] %v2430
  %v2432 = vld [vmem:[#allocation2 + $0xc0] sm:$0xff]
  %v2433 = vsel %vm2359, %v2311, %v2432
  %2434 = vst [vmem:[#allocation2 + $0xc0] sm:$0xff] %v2433
  %v2435 = vld [vmem:[#allocation2 + $0xc8] sm:$0xff]
  %v2436 = vsel %vm2359, %v2313, %v2435
  %2437 = vst [vmem:[#allocation2 + $0xc8] sm:$0xff] %v2436
  %v2438 = vld [vmem:[#allocation2 + $0xd0] sm:$0xff]
  %v2439 = vsel %vm2359, %v2315, %v2438
  %2440 = vst [vmem:[#allocation2 + $0xd0] sm:$0xff] %v2439
  %v2441 = vld [vmem:[#allocation2 + $0xd8] sm:$0xff]
  %v2442 = vsel %vm2359, %v2317, %v2441
  %2443 = vst [vmem:[#allocation2 + $0xd8] sm:$0xff] %v2442
  %v2444 = vld [vmem:[#allocation2 + $0xe0] sm:$0xff]
  %v2445 = vsel %vm2359, %v2319, %v2444
  %2446 = vst [vmem:[#allocation2 + $0xe0] sm:$0xff] %v2445
  %v2447 = vld [vmem:[#allocation2 + $0xe8] sm:$0xff]
  %v2448 = vsel %vm2359, %v2321, %v2447
  %2449 = vst [vmem:[#allocation2 + $0xe8] sm:$0xff] %v2448
  %v2450 = vld [vmem:[#allocation2 + $0xf0] sm:$0xff]
  %v2451 = vsel %vm2359, %v2323, %v2450
  %2452 = vst [vmem:[#allocation2 + $0xf0] sm:$0xff] %v2451
  %v2453 = vld [vmem:[#allocation2 + $0xf8] sm:$0xff]
  %v2454 = vsel %vm2359, %v2325, %v2453
  %2455 = vst [vmem:[#allocation2 + $0xf8] sm:$0xff] %v2454
  %v2456 = vld [vmem:[%s1] sm:$0xf]
  %v2457 = vld [vmem:[%s1 + $0x4] sm:$0xf]
  %v2458 = vld [vmem:[%s1 + $0x8] sm:$0xf]
  %v2459 = vld [vmem:[%s1 + $0xc] sm:$0xf]
  %v2460 = vld [vmem:[%s1 + $0x10] sm:$0xf]
  %v2461 = vld [vmem:[%s1 + $0x14] sm:$0xf]
  %v2462 = vld [vmem:[%s1 + $0x18] sm:$0xf]
  %v2463 = vld [vmem:[%s1 + $0x1c] sm:$0xf]
  %v2464 = vld [vmem:[%s1 + $0x20] sm:$0xf]
  %v2465 = vld [vmem:[%s1 + $0x24] sm:$0xf]
  %v2466 = vld [vmem:[%s1 + $0x28] sm:$0xf]
  %v2467 = vld [vmem:[%s1 + $0x2c] sm:$0xf]
  %v2468 = vld [vmem:[%s1 + $0x30] sm:$0xf]
  %v2469 = vld [vmem:[%s1 + $0x34] sm:$0xf]
  %v2470 = vld [vmem:[%s1 + $0x38] sm:$0xf]
  %v2471 = vld [vmem:[%s1 + $0x3c] sm:$0xf]
  %v2472 = vld [vmem:[%s1 + $0x40] sm:$0xf]
  %v2473 = vld [vmem:[%s1 + $0x44] sm:$0xf]
  %v2474 = vld [vmem:[%s1 + $0x48] sm:$0xf]
  %v2475 = vld [vmem:[%s1 + $0x4c] sm:$0xf]
  %v2476 = vld [vmem:[%s1 + $0x50] sm:$0xf]
  %v2477 = vld [vmem:[%s1 + $0x54] sm:$0xf]
  %v2478 = vld [vmem:[%s1 + $0x58] sm:$0xf]
  %v2479 = vld [vmem:[%s1 + $0x5c] sm:$0xf]
  %v2480 = vld [vmem:[%s1 + $0x60] sm:$0xf]
  %v2481 = vld [vmem:[%s1 + $0x64] sm:$0xf]
  %v2482 = vld [vmem:[%s1 + $0x68] sm:$0xf]
  %v2483 = vld [vmem:[%s1 + $0x6c] sm:$0xf]
  %v2484 = vld [vmem:[%s1 + $0x70] sm:$0xf]
  %v2485 = vld [vmem:[%s1 + $0x74] sm:$0xf]
  %v2486 = vld [vmem:[%s1 + $0x78] sm:$0xf]
  %v2487 = vld [vmem:[%s1 + $0x7c] sm:$0xf]
  %v2488 = vld [vmem:[%s1 + $0x80] sm:$0xf]
  %v2489 = vld [vmem:[%s1 + $0x84] sm:$0xf]
  %v2490 = vld [vmem:[%s1 + $0x88] sm:$0xf]
  %v2491 = vld [vmem:[%s1 + $0x8c] sm:$0xf]
  %v2492 = vld [vmem:[%s1 + $0x90] sm:$0xf]
  %v2493 = vld [vmem:[%s1 + $0x94] sm:$0xf]
  %v2494 = vld [vmem:[%s1 + $0x98] sm:$0xf]
  %v2495 = vld [vmem:[%s1 + $0x9c] sm:$0xf]
  %v2496 = vld [vmem:[%s1 + $0xa0] sm:$0xf]
  %v2497 = vld [vmem:[%s1 + $0xa4] sm:$0xf]
  %v2498 = vld [vmem:[%s1 + $0xa8] sm:$0xf]
  %v2499 = vld [vmem:[%s1 + $0xac] sm:$0xf]
  %v2500 = vld [vmem:[%s1 + $0xb0] sm:$0xf]
  %v2501 = vld [vmem:[%s1 + $0xb4] sm:$0xf]
  %v2502 = vld [vmem:[%s1 + $0xb8] sm:$0xf]
  %v2503 = vld [vmem:[%s1 + $0xbc] sm:$0xf]
  %v2504 = vld [vmem:[%s1 + $0xc0] sm:$0xf]
  %v2505 = vld [vmem:[%s1 + $0xc4] sm:$0xf]
  %v2506 = vld [vmem:[%s1 + $0xc8] sm:$0xf]
  %v2507 = vld [vmem:[%s1 + $0xcc] sm:$0xf]
  %v2508 = vld [vmem:[%s1 + $0xd0] sm:$0xf]
  %v2509 = vld [vmem:[%s1 + $0xd4] sm:$0xf]
  %v2510 = vld [vmem:[%s1 + $0xd8] sm:$0xf]
  %v2511 = vld [vmem:[%s1 + $0xdc] sm:$0xf]
  %v2512 = vld [vmem:[%s1 + $0xe0] sm:$0xf]
  %v2513 = vld [vmem:[%s1 + $0xe4] sm:$0xf]
  %v2514 = vld [vmem:[%s1 + $0xe8] sm:$0xf]
  %v2515 = vld [vmem:[%s1 + $0xec] sm:$0xf]
  %v2516 = vld [vmem:[%s1 + $0xf0] sm:$0xf]
  %v2517 = vld [vmem:[%s1 + $0xf4] sm:$0xf]
  %v2518 = vld [vmem:[%s1 + $0xf8] sm:$0xf]
  %v2519 = vld [vmem:[%s1 + $0xfc] sm:$0xf]
  %v2584 = vunpack.c.l.b16 %v2456
  %v2585 = vunpack.c.l.b16 %v2457
  %v2586 = vunpack.c.l.b16 %v2458
  %v2587 = vunpack.c.l.b16 %v2459
  %v2588 = vunpack.c.l.b16 %v2460
  %v2589 = vunpack.c.l.b16 %v2461
  %v2590 = vunpack.c.l.b16 %v2462
  %v2591 = vunpack.c.l.b16 %v2463
  %v2592 = vunpack.c.l.b16 %v2464
  %v2593 = vunpack.c.l.b16 %v2465
  %v2594 = vunpack.c.l.b16 %v2466
  %v2595 = vunpack.c.l.b16 %v2467
  %v2596 = vunpack.c.l.b16 %v2468
  %v2597 = vunpack.c.l.b16 %v2469
  %v2598 = vunpack.c.l.b16 %v2470
  %v2599 = vunpack.c.l.b16 %v2471
  %v2600 = vunpack.c.l.b16 %v2472
  %v2601 = vunpack.c.l.b16 %v2473
  %v2602 = vunpack.c.l.b16 %v2474
  %v2603 = vunpack.c.l.b16 %v2475
  %v2604 = vunpack.c.l.b16 %v2476
  %v2605 = vunpack.c.l.b16 %v2477
  %v2606 = vunpack.c.l.b16 %v2478
  %v2607 = vunpack.c.l.b16 %v2479
  %v2608 = vunpack.c.l.b16 %v2480
  %v2609 = vunpack.c.l.b16 %v2481
  %v2610 = vunpack.c.l.b16 %v2482
  %v2611 = vunpack.c.l.b16 %v2483
  %v2612 = vunpack.c.l.b16 %v2484
  %v2613 = vunpack.c.l.b16 %v2485
  %v2614 = vunpack.c.l.b16 %v2486
  %v2615 = vunpack.c.l.b16 %v2487
  %v2616 = vunpack.c.l.b16 %v2488
  %v2617 = vunpack.c.l.b16 %v2489
  %v2618 = vunpack.c.l.b16 %v2490
  %v2619 = vunpack.c.l.b16 %v2491
  %v2620 = vunpack.c.l.b16 %v2492
  %v2621 = vunpack.c.l.b16 %v2493
  %v2622 = vunpack.c.l.b16 %v2494
  %v2623 = vunpack.c.l.b16 %v2495
  %v2624 = vunpack.c.l.b16 %v2496
  %v2625 = vunpack.c.l.b16 %v2497
  %v2626 = vunpack.c.l.b16 %v2498
  %v2627 = vunpack.c.l.b16 %v2499
  %v2628 = vunpack.c.l.b16 %v2500
  %v2629 = vunpack.c.l.b16 %v2501
  %v2630 = vunpack.c.l.b16 %v2502
  %v2631 = vunpack.c.l.b16 %v2503
  %v2632 = vunpack.c.l.b16 %v2504
  %v2633 = vunpack.c.l.b16 %v2505
  %v2634 = vunpack.c.l.b16 %v2506
  %v2635 = vunpack.c.l.b16 %v2507
  %v2636 = vunpack.c.l.b16 %v2508
  %v2637 = vunpack.c.l.b16 %v2509
  %v2638 = vunpack.c.l.b16 %v2510
  %v2639 = vunpack.c.l.b16 %v2511
  %v2640 = vunpack.c.l.b16 %v2512
  %v2641 = vunpack.c.l.b16 %v2513
  %v2642 = vunpack.c.l.b16 %v2514
  %v2643 = vunpack.c.l.b16 %v2515
  %v2644 = vunpack.c.l.b16 %v2516
  %v2645 = vunpack.c.l.b16 %v2517
  %v2646 = vunpack.c.l.b16 %v2518
  %v2647 = vunpack.c.l.b16 %v2519
  %v2648 = vpack.c.b16 %v2585, %v2584
  %v2649 = vpack.c.b16 %v2587, %v2586
  %v2650 = vpack.c.b16 %v2589, %v2588
  %v2651 = vpack.c.b16 %v2591, %v2590
  %v2652 = vpack.c.b16 %v2593, %v2592
  %v2653 = vpack.c.b16 %v2595, %v2594
  %v2654 = vpack.c.b16 %v2597, %v2596
  %v2655 = vpack.c.b16 %v2599, %v2598
  %v2656 = vpack.c.b16 %v2601, %v2600
  %v2657 = vpack.c.b16 %v2603, %v2602
  %v2658 = vpack.c.b16 %v2605, %v2604
  %v2659 = vpack.c.b16 %v2607, %v2606
  %v2660 = vpack.c.b16 %v2609, %v2608
  %v2661 = vpack.c.b16 %v2611, %v2610
  %v2662 = vpack.c.b16 %v2613, %v2612
  %v2663 = vpack.c.b16 %v2615, %v2614
  %v2664 = vpack.c.b16 %v2617, %v2616
  %v2665 = vpack.c.b16 %v2619, %v2618
  %v2666 = vpack.c.b16 %v2621, %v2620
  %v2667 = vpack.c.b16 %v2623, %v2622
  %v2668 = vpack.c.b16 %v2625, %v2624
  %v2669 = vpack.c.b16 %v2627, %v2626
  %v2670 = vpack.c.b16 %v2629, %v2628
  %v2671 = vpack.c.b16 %v2631, %v2630
  %v2672 = vpack.c.b16 %v2633, %v2632
  %v2673 = vpack.c.b16 %v2635, %v2634
  %v2674 = vpack.c.b16 %v2637, %v2636
  %v2675 = vpack.c.b16 %v2639, %v2638
  %v2676 = vpack.c.b16 %v2641, %v2640
  %v2677 = vpack.c.b16 %v2643, %v2642
  %v2678 = vpack.c.b16 %v2645, %v2644
  %v2679 = vpack.c.b16 %v2647, %v2646
  %2680 = vrot.lane.b32.xlu0 %v2648, 8
  %v2681 = vpop.permute.xlu0 %2680
  %2682 = vrot.lane.b32.xlu0 %v2649, 8
  %v2683 = vpop.permute.xlu0 %2682
  %2684 = vrot.lane.b32.xlu0 %v2650, 8
  %v2685 = vpop.permute.xlu0 %2684
  %2686 = vrot.lane.b32.xlu0 %v2651, 8
  %v2687 = vpop.permute.xlu0 %2686
  %2688 = vrot.lane.b32.xlu0 %v2652, 8
  %v2689 = vpop.permute.xlu0 %2688
  %2690 = vrot.lane.b32.xlu0 %v2653, 8
  %v2691 = vpop.permute.xlu0 %2690
  %2692 = vrot.lane.b32.xlu0 %v2654, 8
  %v2693 = vpop.permute.xlu0 %2692
  %2694 = vrot.lane.b32.xlu0 %v2655, 8
  %v2695 = vpop.permute.xlu0 %2694
  %2696 = vrot.lane.b32.xlu0 %v2656, 8
  %v2697 = vpop.permute.xlu0 %2696
  %2698 = vrot.lane.b32.xlu0 %v2657, 8
  %v2699 = vpop.permute.xlu0 %2698
  %2700 = vrot.lane.b32.xlu0 %v2658, 8
  %v2701 = vpop.permute.xlu0 %2700
  %2702 = vrot.lane.b32.xlu0 %v2659, 8
  %v2703 = vpop.permute.xlu0 %2702
  %2704 = vrot.lane.b32.xlu0 %v2660, 8
  %v2705 = vpop.permute.xlu0 %2704
  %2706 = vrot.lane.b32.xlu0 %v2661, 8
  %v2707 = vpop.permute.xlu0 %2706
  %2708 = vrot.lane.b32.xlu0 %v2662, 8
  %v2709 = vpop.permute.xlu0 %2708
  %2710 = vrot.lane.b32.xlu0 %v2663, 8
  %v2711 = vpop.permute.xlu0 %2710
  %2712 = vrot.lane.b32.xlu0 %v2664, 8
  %v2713 = vpop.permute.xlu0 %2712
  %2714 = vrot.lane.b32.xlu0 %v2665, 8
  %v2715 = vpop.permute.xlu0 %2714
  %2716 = vrot.lane.b32.xlu0 %v2666, 8
  %v2717 = vpop.permute.xlu0 %2716
  %2718 = vrot.lane.b32.xlu0 %v2667, 8
  %v2719 = vpop.permute.xlu0 %2718
  %2720 = vrot.lane.b32.xlu0 %v2668, 8
  %v2721 = vpop.permute.xlu0 %2720
  %2722 = vrot.lane.b32.xlu0 %v2669, 8
  %v2723 = vpop.permute.xlu0 %2722
  %2724 = vrot.lane.b32.xlu0 %v2670, 8
  %v2725 = vpop.permute.xlu0 %2724
  %2726 = vrot.lane.b32.xlu0 %v2671, 8
  %v2727 = vpop.permute.xlu0 %2726
  %2728 = vrot.lane.b32.xlu0 %v2672, 8
  %v2729 = vpop.permute.xlu0 %2728
  %2730 = vrot.lane.b32.xlu0 %v2673, 8
  %v2731 = vpop.permute.xlu0 %2730
  %2732 = vrot.lane.b32.xlu0 %v2674, 8
  %v2733 = vpop.permute.xlu0 %2732
  %2734 = vrot.lane.b32.xlu0 %v2675, 8
  %v2735 = vpop.permute.xlu0 %2734
  %2736 = vrot.lane.b32.xlu0 %v2676, 8
  %v2737 = vpop.permute.xlu0 %2736
  %2738 = vrot.lane.b32.xlu0 %v2677, 8
  %v2739 = vpop.permute.xlu0 %2738
  %2740 = vrot.lane.b32.xlu0 %v2678, 8
  %v2741 = vpop.permute.xlu0 %2740
  %2742 = vrot.lane.b32.xlu0 %v2679, 8
  %v2743 = vpop.permute.xlu0 %2742
  %vm2776 = vcmask 80960
  %2777 = vst.msk [vmem:[#allocation2] sm:$0xff] %vm2776, %v2681
  %2778 = vst.msk [vmem:[#allocation2 + $0x8] sm:$0xff] %vm2776, %v2683
  %2779 = vst.msk [vmem:[#allocation2 + $0x10] sm:$0xff] %vm2776, %v2685
  %2780 = vst.msk [vmem:[#allocation2 + $0x18] sm:$0xff] %vm2776, %v2687
  %2781 = vst.msk [vmem:[#allocation2 + $0x20] sm:$0xff] %vm2776, %v2689
  %2782 = vst.msk [vmem:[#allocation2 + $0x28] sm:$0xff] %vm2776, %v2691
  %2783 = vst.msk [vmem:[#allocation2 + $0x30] sm:$0xff] %vm2776, %v2693
  %2784 = vst.msk [vmem:[#allocation2 + $0x38] sm:$0xff] %vm2776, %v2695
  %2785 = vst.msk [vmem:[#allocation2 + $0x40] sm:$0xff] %vm2776, %v2697
  %2786 = vst.msk [vmem:[#allocation2 + $0x48] sm:$0xff] %vm2776, %v2699
  %2787 = vst.msk [vmem:[#allocation2 + $0x50] sm:$0xff] %vm2776, %v2701
  %2788 = vst.msk [vmem:[#allocation2 + $0x58] sm:$0xff] %vm2776, %v2703
  %2789 = vst.msk [vmem:[#allocation2 + $0x60] sm:$0xff] %vm2776, %v2705
  %2790 = vst.msk [vmem:[#allocation2 + $0x68] sm:$0xff] %vm2776, %v2707
  %2791 = vst.msk [vmem:[#allocation2 + $0x70] sm:$0xff] %vm2776, %v2709
  %2792 = vst.msk [vmem:[#allocation2 + $0x78] sm:$0xff] %vm2776, %v2711
  %2793 = vst.msk [vmem:[#allocation2 + $0x80] sm:$0xff] %vm2776, %v2713
  %2794 = vst.msk [vmem:[#allocation2 + $0x88] sm:$0xff] %vm2776, %v2715
  %2795 = vst.msk [vmem:[#allocation2 + $0x90] sm:$0xff] %vm2776, %v2717
  %2796 = vst.msk [vmem:[#allocation2 + $0x98] sm:$0xff] %vm2776, %v2719
  %2797 = vst.msk [vmem:[#allocation2 + $0xa0] sm:$0xff] %vm2776, %v2721
  %2798 = vst.msk [vmem:[#allocation2 + $0xa8] sm:$0xff] %vm2776, %v2723
  %2799 = vst.msk [vmem:[#allocation2 + $0xb0] sm:$0xff] %vm2776, %v2725
  %2800 = vst.msk [vmem:[#allocation2 + $0xb8] sm:$0xff] %vm2776, %v2727
  %2801 = vst.msk [vmem:[#allocation2 + $0xc0] sm:$0xff] %vm2776, %v2729
  %2802 = vst.msk [vmem:[#allocation2 + $0xc8] sm:$0xff] %vm2776, %v2731
  %2803 = vst.msk [vmem:[#allocation2 + $0xd0] sm:$0xff] %vm2776, %v2733
  %2804 = vst.msk [vmem:[#allocation2 + $0xd8] sm:$0xff] %vm2776, %v2735
  %2805 = vst.msk [vmem:[#allocation2 + $0xe0] sm:$0xff] %vm2776, %v2737
  %2806 = vst.msk [vmem:[#allocation2 + $0xe8] sm:$0xff] %vm2776, %v2739
  %2807 = vst.msk [vmem:[#allocation2 + $0xf0] sm:$0xff] %vm2776, %v2741
  %2808 = vst.msk [vmem:[#allocation2 + $0xf8] sm:$0xff] %vm2776, %v2743
  %vm2809 = vcmask 97367
  %vm2810 = vmand %vm2809, %vm1015
  %v2811 = vld [vmem:[#allocation2] sm:$0x80]
  %v2812 = vsel %vm2810, 0, %v2811
  %2813 = vst [vmem:[#allocation2] sm:$0x80] %v2812
  %v2814 = vld [vmem:[#allocation2 + $0x8] sm:$0x80]
  %v2815 = vsel %vm2810, 0, %v2814
  %2816 = vst [vmem:[#allocation2 + $0x8] sm:$0x80] %v2815
  %v2817 = vld [vmem:[#allocation2 + $0x10] sm:$0x80]
  %v2818 = vsel %vm2810, 0, %v2817
  %2819 = vst [vmem:[#allocation2 + $0x10] sm:$0x80] %v2818
  %v2820 = vld [vmem:[#allocation2 + $0x18] sm:$0x80]
  %v2821 = vsel %vm2810, 0, %v2820
  %2822 = vst [vmem:[#allocation2 + $0x18] sm:$0x80] %v2821
  %v2823 = vld [vmem:[#allocation2 + $0x20] sm:$0x80]
  %v2824 = vsel %vm2810, 0, %v2823
  %2825 = vst [vmem:[#allocation2 + $0x20] sm:$0x80] %v2824
  %v2826 = vld [vmem:[#allocation2 + $0x28] sm:$0x80]
  %v2827 = vsel %vm2810, 0, %v2826
  %2828 = vst [vmem:[#allocation2 + $0x28] sm:$0x80] %v2827
  %v2829 = vld [vmem:[#allocation2 + $0x30] sm:$0x80]
  %v2830 = vsel %vm2810, 0, %v2829
  %2831 = vst [vmem:[#allocation2 + $0x30] sm:$0x80] %v2830
  %v2832 = vld [vmem:[#allocation2 + $0x38] sm:$0x80]
  %v2833 = vsel %vm2810, 0, %v2832
  %2834 = vst [vmem:[#allocation2 + $0x38] sm:$0x80] %v2833
  %v2835 = vld [vmem:[#allocation2 + $0x40] sm:$0x80]
  %v2836 = vsel %vm2810, 0, %v2835
  %2837 = vst [vmem:[#allocation2 + $0x40] sm:$0x80] %v2836
  %v2838 = vld [vmem:[#allocation2 + $0x48] sm:$0x80]
  %v2839 = vsel %vm2810, 0, %v2838
  %2840 = vst [vmem:[#allocation2 + $0x48] sm:$0x80] %v2839
  %v2841 = vld [vmem:[#allocation2 + $0x50] sm:$0x80]
  %v2842 = vsel %vm2810, 0, %v2841
  %2843 = vst [vmem:[#allocation2 + $0x50] sm:$0x80] %v2842
  %v2844 = vld [vmem:[#allocation2 + $0x58] sm:$0x80]
  %v2845 = vsel %vm2810, 0, %v2844
  %2846 = vst [vmem:[#allocation2 + $0x58] sm:$0x80] %v2845
  %v2847 = vld [vmem:[#allocation2 + $0x60] sm:$0x80]
  %v2848 = vsel %vm2810, 0, %v2847
  %2849 = vst [vmem:[#allocation2 + $0x60] sm:$0x80] %v2848
  %v2850 = vld [vmem:[#allocation2 + $0x68] sm:$0x80]
  %v2851 = vsel %vm2810, 0, %v2850
  %2852 = vst [vmem:[#allocation2 + $0x68] sm:$0x80] %v2851
  %v2853 = vld [vmem:[#allocation2 + $0x70] sm:$0x80]
  %v2854 = vsel %vm2810, 0, %v2853
  %2855 = vst [vmem:[#allocation2 + $0x70] sm:$0x80] %v2854
  %v2856 = vld [vmem:[#allocation2 + $0x78] sm:$0x80]
  %v2857 = vsel %vm2810, 0, %v2856
  %2858 = vst [vmem:[#allocation2 + $0x78] sm:$0x80] %v2857
  %v2859 = vld [vmem:[#allocation2 + $0x80] sm:$0x80]
  %v2860 = vsel %vm2810, 0, %v2859
  %2861 = vst [vmem:[#allocation2 + $0x80] sm:$0x80] %v2860
  %v2862 = vld [vmem:[#allocation2 + $0x88] sm:$0x80]
  %v2863 = vsel %vm2810, 0, %v2862
  %2864 = vst [vmem:[#allocation2 + $0x88] sm:$0x80] %v2863
  %v2865 = vld [vmem:[#allocation2 + $0x90] sm:$0x80]
  %v2866 = vsel %vm2810, 0, %v2865
  %2867 = vst [vmem:[#allocation2 + $0x90] sm:$0x80] %v2866
  %v2868 = vld [vmem:[#allocation2 + $0x98] sm:$0x80]
  %v2869 = vsel %vm2810, 0, %v2868
  %2870 = vst [vmem:[#allocation2 + $0x98] sm:$0x80] %v2869
  %v2871 = vld [vmem:[#allocation2 + $0xa0] sm:$0x80]
  %v2872 = vsel %vm2810, 0, %v2871
  %2873 = vst [vmem:[#allocation2 + $0xa0] sm:$0x80] %v2872
  %v2874 = vld [vmem:[#allocation2 + $0xa8] sm:$0x80]
  %v2875 = vsel %vm2810, 0, %v2874
  %2876 = vst [vmem:[#allocation2 + $0xa8] sm:$0x80] %v2875
  %v2877 = vld [vmem:[#allocation2 + $0xb0] sm:$0x80]
  %v2878 = vsel %vm2810, 0, %v2877
  %2879 = vst [vmem:[#allocation2 + $0xb0] sm:$0x80] %v2878
  %v2880 = vld [vmem:[#allocation2 + $0xb8] sm:$0x80]
  %v2881 = vsel %vm2810, 0, %v2880
  %2882 = vst [vmem:[#allocation2 + $0xb8] sm:$0x80] %v2881
  %v2883 = vld [vmem:[#allocation2 + $0xc0] sm:$0x80]
  %v2884 = vsel %vm2810, 0, %v2883
  %2885 = vst [vmem:[#allocation2 + $0xc0] sm:$0x80] %v2884
  %v2886 = vld [vmem:[#allocation2 + $0xc8] sm:$0x80]
  %v2887 = vsel %vm2810, 0, %v2886
  %2888 = vst [vmem:[#allocation2 + $0xc8] sm:$0x80] %v2887
  %v2889 = vld [vmem:[#allocation2 + $0xd0] sm:$0x80]
  %v2890 = vsel %vm2810, 0, %v2889
  %2891 = vst [vmem:[#allocation2 + $0xd0] sm:$0x80] %v2890
  %v2892 = vld [vmem:[#allocation2 + $0xd8] sm:$0x80]
  %v2893 = vsel %vm2810, 0, %v2892
  %2894 = vst [vmem:[#allocation2 + $0xd8] sm:$0x80] %v2893
  %v2895 = vld [vmem:[#allocation2 + $0xe0] sm:$0x80]
  %v2896 = vsel %vm2810, 0, %v2895
  %2897 = vst [vmem:[#allocation2 + $0xe0] sm:$0x80] %v2896
  %v2898 = vld [vmem:[#allocation2 + $0xe8] sm:$0x80]
  %v2899 = vsel %vm2810, 0, %v2898
  %2900 = vst [vmem:[#allocation2 + $0xe8] sm:$0x80] %v2899
  %v2901 = vld [vmem:[#allocation2 + $0xf0] sm:$0x80]
  %v2902 = vsel %vm2810, 0, %v2901
  %2903 = vst [vmem:[#allocation2 + $0xf0] sm:$0x80] %v2902
  %v2904 = vld [vmem:[#allocation2 + $0xf8] sm:$0x80]
  %v2905 = vsel %vm2810, 0, %v2904
  %2906 = vst [vmem:[#allocation2 + $0xf8] sm:$0x80] %v2905
  %v2907 = vld [vmem:[%s1] sm:$0xf]
  %v2908 = vld [vmem:[%s1 + $0x4] sm:$0xf]
  %v2909 = vld [vmem:[%s1 + $0x8] sm:$0xf]
  %v2910 = vld [vmem:[%s1 + $0xc] sm:$0xf]
  %v2911 = vld [vmem:[%s1 + $0x10] sm:$0xf]
  %v2912 = vld [vmem:[%s1 + $0x14] sm:$0xf]
  %v2913 = vld [vmem:[%s1 + $0x18] sm:$0xf]
  %v2914 = vld [vmem:[%s1 + $0x1c] sm:$0xf]
  %v2915 = vld [vmem:[%s1 + $0x20] sm:$0xf]
  %v2916 = vld [vmem:[%s1 + $0x24] sm:$0xf]
  %v2917 = vld [vmem:[%s1 + $0x28] sm:$0xf]
  %v2918 = vld [vmem:[%s1 + $0x2c] sm:$0xf]
  %v2919 = vld [vmem:[%s1 + $0x30] sm:$0xf]
  %v2920 = vld [vmem:[%s1 + $0x34] sm:$0xf]
  %v2921 = vld [vmem:[%s1 + $0x38] sm:$0xf]
  %v2922 = vld [vmem:[%s1 + $0x3c] sm:$0xf]
  %v2923 = vld [vmem:[%s1 + $0x40] sm:$0xf]
  %v2924 = vld [vmem:[%s1 + $0x44] sm:$0xf]
  %v2925 = vld [vmem:[%s1 + $0x48] sm:$0xf]
  %v2926 = vld [vmem:[%s1 + $0x4c] sm:$0xf]
  %v2927 = vld [vmem:[%s1 + $0x50] sm:$0xf]
  %v2928 = vld [vmem:[%s1 + $0x54] sm:$0xf]
  %v2929 = vld [vmem:[%s1 + $0x58] sm:$0xf]
  %v2930 = vld [vmem:[%s1 + $0x5c] sm:$0xf]
  %v2931 = vld [vmem:[%s1 + $0x60] sm:$0xf]
  %v2932 = vld [vmem:[%s1 + $0x64] sm:$0xf]
  %v2933 = vld [vmem:[%s1 + $0x68] sm:$0xf]
  %v2934 = vld [vmem:[%s1 + $0x6c] sm:$0xf]
  %v2935 = vld [vmem:[%s1 + $0x70] sm:$0xf]
  %v2936 = vld [vmem:[%s1 + $0x74] sm:$0xf]
  %v2937 = vld [vmem:[%s1 + $0x78] sm:$0xf]
  %v2938 = vld [vmem:[%s1 + $0x7c] sm:$0xf]
  %v2939 = vld [vmem:[%s1 + $0x80] sm:$0xf]
  %v2940 = vld [vmem:[%s1 + $0x84] sm:$0xf]
  %v2941 = vld [vmem:[%s1 + $0x88] sm:$0xf]
  %v2942 = vld [vmem:[%s1 + $0x8c] sm:$0xf]
  %v2943 = vld [vmem:[%s1 + $0x90] sm:$0xf]
  %v2944 = vld [vmem:[%s1 + $0x94] sm:$0xf]
  %v2945 = vld [vmem:[%s1 + $0x98] sm:$0xf]
  %v2946 = vld [vmem:[%s1 + $0x9c] sm:$0xf]
  %v2947 = vld [vmem:[%s1 + $0xa0] sm:$0xf]
  %v2948 = vld [vmem:[%s1 + $0xa4] sm:$0xf]
  %v2949 = vld [vmem:[%s1 + $0xa8] sm:$0xf]
  %v2950 = vld [vmem:[%s1 + $0xac] sm:$0xf]
  %v2951 = vld [vmem:[%s1 + $0xb0] sm:$0xf]
  %v2952 = vld [vmem:[%s1 + $0xb4] sm:$0xf]
  %v2953 = vld [vmem:[%s1 + $0xb8] sm:$0xf]
  %v2954 = vld [vmem:[%s1 + $0xbc] sm:$0xf]
  %v2955 = vld [vmem:[%s1 + $0xc0] sm:$0xf]
  %v2956 = vld [vmem:[%s1 + $0xc4] sm:$0xf]
  %v2957 = vld [vmem:[%s1 + $0xc8] sm:$0xf]
  %v2958 = vld [vmem:[%s1 + $0xcc] sm:$0xf]
  %v2959 = vld [vmem:[%s1 + $0xd0] sm:$0xf]
  %v2960 = vld [vmem:[%s1 + $0xd4] sm:$0xf]
  %v2961 = vld [vmem:[%s1 + $0xd8] sm:$0xf]
  %v2962 = vld [vmem:[%s1 + $0xdc] sm:$0xf]
  %v2963 = vld [vmem:[%s1 + $0xe0] sm:$0xf]
  %v2964 = vld [vmem:[%s1 + $0xe4] sm:$0xf]
  %v2965 = vld [vmem:[%s1 + $0xe8] sm:$0xf]
  %v2966 = vld [vmem:[%s1 + $0xec] sm:$0xf]
  %v2967 = vld [vmem:[%s1 + $0xf0] sm:$0xf]
  %v2968 = vld [vmem:[%s1 + $0xf4] sm:$0xf]
  %v2969 = vld [vmem:[%s1 + $0xf8] sm:$0xf]
  %v2970 = vld [vmem:[%s1 + $0xfc] sm:$0xf]
  %v3035 = vunpack.c.l.b16 %v2907
  %v3036 = vunpack.c.l.b16 %v2908
  %v3037 = vunpack.c.l.b16 %v2909
  %v3038 = vunpack.c.l.b16 %v2910
  %v3039 = vunpack.c.l.b16 %v2911
  %v3040 = vunpack.c.l.b16 %v2912
  %v3041 = vunpack.c.l.b16 %v2913
  %v3042 = vunpack.c.l.b16 %v2914
  %v3043 = vunpack.c.l.b16 %v2915
  %v3044 = vunpack.c.l.b16 %v2916
  %v3045 = vunpack.c.l.b16 %v2917
  %v3046 = vunpack.c.l.b16 %v2918
  %v3047 = vunpack.c.l.b16 %v2919
  %v3048 = vunpack.c.l.b16 %v2920
  %v3049 = vunpack.c.l.b16 %v2921
  %v3050 = vunpack.c.l.b16 %v2922
  %v3051 = vunpack.c.l.b16 %v2923
  %v3052 = vunpack.c.l.b16 %v2924
  %v3053 = vunpack.c.l.b16 %v2925
  %v3054 = vunpack.c.l.b16 %v2926
  %v3055 = vunpack.c.l.b16 %v2927
  %v3056 = vunpack.c.l.b16 %v2928
  %v3057 = vunpack.c.l.b16 %v2929
  %v3058 = vunpack.c.l.b16 %v2930
  %v3059 = vunpack.c.l.b16 %v2931
  %v3060 = vunpack.c.l.b16 %v2932
  %v3061 = vunpack.c.l.b16 %v2933
  %v3062 = vunpack.c.l.b16 %v2934
  %v3063 = vunpack.c.l.b16 %v2935
  %v3064 = vunpack.c.l.b16 %v2936
  %v3065 = vunpack.c.l.b16 %v2937
  %v3066 = vunpack.c.l.b16 %v2938
  %v3067 = vunpack.c.l.b16 %v2939
  %v3068 = vunpack.c.l.b16 %v2940
  %v3069 = vunpack.c.l.b16 %v2941
  %v3070 = vunpack.c.l.b16 %v2942
  %v3071 = vunpack.c.l.b16 %v2943
  %v3072 = vunpack.c.l.b16 %v2944
  %v3073 = vunpack.c.l.b16 %v2945
  %v3074 = vunpack.c.l.b16 %v2946
  %v3075 = vunpack.c.l.b16 %v2947
  %v3076 = vunpack.c.l.b16 %v2948
  %v3077 = vunpack.c.l.b16 %v2949
  %v3078 = vunpack.c.l.b16 %v2950
  %v3079 = vunpack.c.l.b16 %v2951
  %v3080 = vunpack.c.l.b16 %v2952
  %v3081 = vunpack.c.l.b16 %v2953
  %v3082 = vunpack.c.l.b16 %v2954
  %v3083 = vunpack.c.l.b16 %v2955
  %v3084 = vunpack.c.l.b16 %v2956
  %v3085 = vunpack.c.l.b16 %v2957
  %v3086 = vunpack.c.l.b16 %v2958
  %v3087 = vunpack.c.l.b16 %v2959
  %v3088 = vunpack.c.l.b16 %v2960
  %v3089 = vunpack.c.l.b16 %v2961
  %v3090 = vunpack.c.l.b16 %v2962
  %v3091 = vunpack.c.l.b16 %v2963
  %v3092 = vunpack.c.l.b16 %v2964
  %v3093 = vunpack.c.l.b16 %v2965
  %v3094 = vunpack.c.l.b16 %v2966
  %v3095 = vunpack.c.l.b16 %v2967
  %v3096 = vunpack.c.l.b16 %v2968
  %v3097 = vunpack.c.l.b16 %v2969
  %v3098 = vunpack.c.l.b16 %v2970
  %v3099 = vpack.c.b16 %v3036, %v3035
  %v3100 = vpack.c.b16 %v3038, %v3037
  %v3101 = vpack.c.b16 %v3040, %v3039
  %v3102 = vpack.c.b16 %v3042, %v3041
  %v3103 = vpack.c.b16 %v3044, %v3043
  %v3104 = vpack.c.b16 %v3046, %v3045
  %v3105 = vpack.c.b16 %v3048, %v3047
  %v3106 = vpack.c.b16 %v3050, %v3049
  %v3107 = vpack.c.b16 %v3052, %v3051
  %v3108 = vpack.c.b16 %v3054, %v3053
  %v3109 = vpack.c.b16 %v3056, %v3055
  %v3110 = vpack.c.b16 %v3058, %v3057
  %v3111 = vpack.c.b16 %v3060, %v3059
  %v3112 = vpack.c.b16 %v3062, %v3061
  %v3113 = vpack.c.b16 %v3064, %v3063
  %v3114 = vpack.c.b16 %v3066, %v3065
  %v3115 = vpack.c.b16 %v3068, %v3067
  %v3116 = vpack.c.b16 %v3070, %v3069
  %v3117 = vpack.c.b16 %v3072, %v3071
  %v3118 = vpack.c.b16 %v3074, %v3073
  %v3119 = vpack.c.b16 %v3076, %v3075
  %v3120 = vpack.c.b16 %v3078, %v3077
  %v3121 = vpack.c.b16 %v3080, %v3079
  %v3122 = vpack.c.b16 %v3082, %v3081
  %v3123 = vpack.c.b16 %v3084, %v3083
  %v3124 = vpack.c.b16 %v3086, %v3085
  %v3125 = vpack.c.b16 %v3088, %v3087
  %v3126 = vpack.c.b16 %v3090, %v3089
  %v3127 = vpack.c.b16 %v3092, %v3091
  %v3128 = vpack.c.b16 %v3094, %v3093
  %v3129 = vpack.c.b16 %v3096, %v3095
  %v3130 = vpack.c.b16 %v3098, %v3097
  %v3132 = vshrl.u32 %v3099, 16
  %v3134 = vshll.u32 %v3099, 16
  %v3136 = vrot.slane %v3134, 1
  %v3137 = vor.u32 %v3132, %v3136
  %v3139 = vshrl.u32 %v3100, 16
  %v3141 = vshll.u32 %v3100, 16
  %v3143 = vrot.slane %v3141, 1
  %v3144 = vor.u32 %v3139, %v3143
  %v3146 = vshrl.u32 %v3101, 16
  %v3148 = vshll.u32 %v3101, 16
  %v3150 = vrot.slane %v3148, 1
  %v3151 = vor.u32 %v3146, %v3150
  %v3153 = vshrl.u32 %v3102, 16
  %v3155 = vshll.u32 %v3102, 16
  %v3157 = vrot.slane %v3155, 1
  %v3158 = vor.u32 %v3153, %v3157
  %v3160 = vshrl.u32 %v3103, 16
  %v3162 = vshll.u32 %v3103, 16
  %v3164 = vrot.slane %v3162, 1
  %v3165 = vor.u32 %v3160, %v3164
  %v3167 = vshrl.u32 %v3104, 16
  %v3169 = vshll.u32 %v3104, 16
  %v3171 = vrot.slane %v3169, 1
  %v3172 = vor.u32 %v3167, %v3171
  %v3174 = vshrl.u32 %v3105, 16
  %v3176 = vshll.u32 %v3105, 16
  %v3178 = vrot.slane %v3176, 1
  %v3179 = vor.u32 %v3174, %v3178
  %v3181 = vshrl.u32 %v3106, 16
  %v3183 = vshll.u32 %v3106, 16
  %v3185 = vrot.slane %v3183, 1
  %v3186 = vor.u32 %v3181, %v3185
  %v3188 = vshrl.u32 %v3107, 16
  %v3190 = vshll.u32 %v3107, 16
  %v3192 = vrot.slane %v3190, 1
  %v3193 = vor.u32 %v3188, %v3192
  %v3195 = vshrl.u32 %v3108, 16
  %v3197 = vshll.u32 %v3108, 16
  %v3199 = vrot.slane %v3197, 1
  %v3200 = vor.u32 %v3195, %v3199
  %v3202 = vshrl.u32 %v3109, 16
  %v3204 = vshll.u32 %v3109, 16
  %v3206 = vrot.slane %v3204, 1
  %v3207 = vor.u32 %v3202, %v3206
  %v3209 = vshrl.u32 %v3110, 16
  %v3211 = vshll.u32 %v3110, 16
  %v3213 = vrot.slane %v3211, 1
  %v3214 = vor.u32 %v3209, %v3213
  %v3216 = vshrl.u32 %v3111, 16
  %v3218 = vshll.u32 %v3111, 16
  %v3220 = vrot.slane %v3218, 1
  %v3221 = vor.u32 %v3216, %v3220
  %v3223 = vshrl.u32 %v3112, 16
  %v3225 = vshll.u32 %v3112, 16
  %v3227 = vrot.slane %v3225, 1
  %v3228 = vor.u32 %v3223, %v3227
  %v3230 = vshrl.u32 %v3113, 16
  %v3232 = vshll.u32 %v3113, 16
  %v3234 = vrot.slane %v3232, 1
  %v3235 = vor.u32 %v3230, %v3234
  %v3237 = vshrl.u32 %v3114, 16
  %v3239 = vshll.u32 %v3114, 16
  %v3241 = vrot.slane %v3239, 1
  %v3242 = vor.u32 %v3237, %v3241
  %v3244 = vshrl.u32 %v3115, 16
  %v3246 = vshll.u32 %v3115, 16
  %v3248 = vrot.slane %v3246, 1
  %v3249 = vor.u32 %v3244, %v3248
  %v3251 = vshrl.u32 %v3116, 16
  %v3253 = vshll.u32 %v3116, 16
  %v3255 = vrot.slane %v3253, 1
  %v3256 = vor.u32 %v3251, %v3255
  %v3258 = vshrl.u32 %v3117, 16
  %v3260 = vshll.u32 %v3117, 16
  %v3262 = vrot.slane %v3260, 1
  %v3263 = vor.u32 %v3258, %v3262
  %v3265 = vshrl.u32 %v3118, 16
  %v3267 = vshll.u32 %v3118, 16
  %v3269 = vrot.slane %v3267, 1
  %v3270 = vor.u32 %v3265, %v3269
  %v3272 = vshrl.u32 %v3119, 16
  %v3274 = vshll.u32 %v3119, 16
  %v3276 = vrot.slane %v3274, 1
  %v3277 = vor.u32 %v3272, %v3276
  %v3279 = vshrl.u32 %v3120, 16
  %v3281 = vshll.u32 %v3120, 16
  %v3283 = vrot.slane %v3281, 1
  %v3284 = vor.u32 %v3279, %v3283
  %v3286 = vshrl.u32 %v3121, 16
  %v3288 = vshll.u32 %v3121, 16
  %v3290 = vrot.slane %v3288, 1
  %v3291 = vor.u32 %v3286, %v3290
  %v3293 = vshrl.u32 %v3122, 16
  %v3295 = vshll.u32 %v3122, 16
  %v3297 = vrot.slane %v3295, 1
  %v3298 = vor.u32 %v3293, %v3297
  %v3300 = vshrl.u32 %v3123, 16
  %v3302 = vshll.u32 %v3123, 16
  %v3304 = vrot.slane %v3302, 1
  %v3305 = vor.u32 %v3300, %v3304
  %v3307 = vshrl.u32 %v3124, 16
  %v3309 = vshll.u32 %v3124, 16
  %v3311 = vrot.slane %v3309, 1
  %v3312 = vor.u32 %v3307, %v3311
  %v3314 = vshrl.u32 %v3125, 16
  %v3316 = vshll.u32 %v3125, 16
  %v3318 = vrot.slane %v3316, 1
  %v3319 = vor.u32 %v3314, %v3318
  %v3321 = vshrl.u32 %v3126, 16
  %v3323 = vshll.u32 %v3126, 16
  %v3325 = vrot.slane %v3323, 1
  %v3326 = vor.u32 %v3321, %v3325
  %v3328 = vshrl.u32 %v3127, 16
  %v3330 = vshll.u32 %v3127, 16
  %v3332 = vrot.slane %v3330, 1
  %v3333 = vor.u32 %v3328, %v3332
  %v3335 = vshrl.u32 %v3128, 16
  %v3337 = vshll.u32 %v3128, 16
  %v3339 = vrot.slane %v3337, 1
  %v3340 = vor.u32 %v3335, %v3339
  %v3342 = vshrl.u32 %v3129, 16
  %v3344 = vshll.u32 %v3129, 16
  %v3346 = vrot.slane %v3344, 1
  %v3347 = vor.u32 %v3342, %v3346
  %v3349 = vshrl.u32 %v3130, 16
  %v3351 = vshll.u32 %v3130, 16
  %v3353 = vrot.slane %v3351, 1
  %v3354 = vor.u32 %v3349, %v3353
  %3355 = vrot.lane.b32.xlu0 %v3137, 10
  %v3356 = vpop.permute.xlu0 %3355
  %3357 = vrot.lane.b32.xlu0 %v3144, 10
  %v3358 = vpop.permute.xlu0 %3357
  %3359 = vrot.lane.b32.xlu0 %v3151, 10
  %v3360 = vpop.permute.xlu0 %3359
  %3361 = vrot.lane.b32.xlu0 %v3158, 10
  %v3362 = vpop.permute.xlu0 %3361
  %3363 = vrot.lane.b32.xlu0 %v3165, 10
  %v3364 = vpop.permute.xlu0 %3363
  %3365 = vrot.lane.b32.xlu0 %v3172, 10
  %v3366 = vpop.permute.xlu0 %3365
  %3367 = vrot.lane.b32.xlu0 %v3179, 10
  %v3368 = vpop.permute.xlu0 %3367
  %3369 = vrot.lane.b32.xlu0 %v3186, 10
  %v3370 = vpop.permute.xlu0 %3369
  %3371 = vrot.lane.b32.xlu0 %v3193, 10
  %v3372 = vpop.permute.xlu0 %3371
  %3373 = vrot.lane.b32.xlu0 %v3200, 10
  %v3374 = vpop.permute.xlu0 %3373
  %3375 = vrot.lane.b32.xlu0 %v3207, 10
  %v3376 = vpop.permute.xlu0 %3375
  %3377 = vrot.lane.b32.xlu0 %v3214, 10
  %v3378 = vpop.permute.xlu0 %3377
  %3379 = vrot.lane.b32.xlu0 %v3221, 10
  %v3380 = vpop.permute.xlu0 %3379
  %3381 = vrot.lane.b32.xlu0 %v3228, 10
  %v3382 = vpop.permute.xlu0 %3381
  %3383 = vrot.lane.b32.xlu0 %v3235, 10
  %v3384 = vpop.permute.xlu0 %3383
  %3385 = vrot.lane.b32.xlu0 %v3242, 10
  %v3386 = vpop.permute.xlu0 %3385
  %3387 = vrot.lane.b32.xlu0 %v3249, 10
  %v3388 = vpop.permute.xlu0 %3387
  %3389 = vrot.lane.b32.xlu0 %v3256, 10
  %v3390 = vpop.permute.xlu0 %3389
  %3391 = vrot.lane.b32.xlu0 %v3263, 10
  %v3392 = vpop.permute.xlu0 %3391
  %3393 = vrot.lane.b32.xlu0 %v3270, 10
  %v3394 = vpop.permute.xlu0 %3393
  %3395 = vrot.lane.b32.xlu0 %v3277, 10
  %v3396 = vpop.permute.xlu0 %3395
  %3397 = vrot.lane.b32.xlu0 %v3284, 10
  %v3398 = vpop.permute.xlu0 %3397
  %3399 = vrot.lane.b32.xlu0 %v3291, 10
  %v3400 = vpop.permute.xlu0 %3399
  %3401 = vrot.lane.b32.xlu0 %v3298, 10
  %v3402 = vpop.permute.xlu0 %3401
  %3403 = vrot.lane.b32.xlu0 %v3305, 10
  %v3404 = vpop.permute.xlu0 %3403
  %3405 = vrot.lane.b32.xlu0 %v3312, 10
  %v3406 = vpop.permute.xlu0 %3405
  %3407 = vrot.lane.b32.xlu0 %v3319, 10
  %v3408 = vpop.permute.xlu0 %3407
  %3409 = vrot.lane.b32.xlu0 %v3326, 10
  %v3410 = vpop.permute.xlu0 %3409
  %3411 = vrot.lane.b32.xlu0 %v3333, 10
  %v3412 = vpop.permute.xlu0 %3411
  %3413 = vrot.lane.b32.xlu0 %v3340, 10
  %v3414 = vpop.permute.xlu0 %3413
  %3415 = vrot.lane.b32.xlu0 %v3347, 10
  %v3416 = vpop.permute.xlu0 %3415
  %3417 = vrot.lane.b32.xlu0 %v3354, 10
  %v3418 = vpop.permute.xlu0 %3417
  %vm3451 = vcmask 97360
  %vm3452 = vmand %vm3451, %vm1624
  %v3453 = vld [vmem:[#allocation2] sm:$0xff]
  %v3454 = vsel %vm3452, %v3356, %v3453
  %3455 = vst [vmem:[#allocation2] sm:$0xff] %v3454
  %v3456 = vld [vmem:[#allocation2 + $0x8] sm:$0xff]
  %v3457 = vsel %vm3452, %v3358, %v3456
  %3458 = vst [vmem:[#allocation2 + $0x8] sm:$0xff] %v3457
  %v3459 = vld [vmem:[#allocation2 + $0x10] sm:$0xff]
  %v3460 = vsel %vm3452, %v3360, %v3459
  %3461 = vst [vmem:[#allocation2 + $0x10] sm:$0xff] %v3460
  %v3462 = vld [vmem:[#allocation2 + $0x18] sm:$0xff]
  %v3463 = vsel %vm3452, %v3362, %v3462
  %3464 = vst [vmem:[#allocation2 + $0x18] sm:$0xff] %v3463
  %v3465 = vld [vmem:[#allocation2 + $0x20] sm:$0xff]
  %v3466 = vsel %vm3452, %v3364, %v3465
  %3467 = vst [vmem:[#allocation2 + $0x20] sm:$0xff] %v3466
  %v3468 = vld [vmem:[#allocation2 + $0x28] sm:$0xff]
  %v3469 = vsel %vm3452, %v3366, %v3468
  %3470 = vst [vmem:[#allocation2 + $0x28] sm:$0xff] %v3469
  %v3471 = vld [vmem:[#allocation2 + $0x30] sm:$0xff]
  %v3472 = vsel %vm3452, %v3368, %v3471
  %3473 = vst [vmem:[#allocation2 + $0x30] sm:$0xff] %v3472
  %v3474 = vld [vmem:[#allocation2 + $0x38] sm:$0xff]
  %v3475 = vsel %vm3452, %v3370, %v3474
  %3476 = vst [vmem:[#allocation2 + $0x38] sm:$0xff] %v3475
  %v3477 = vld [vmem:[#allocation2 + $0x40] sm:$0xff]
  %v3478 = vsel %vm3452, %v3372, %v3477
  %3479 = vst [vmem:[#allocation2 + $0x40] sm:$0xff] %v3478
  %v3480 = vld [vmem:[#allocation2 + $0x48] sm:$0xff]
  %v3481 = vsel %vm3452, %v3374, %v3480
  %3482 = vst [vmem:[#allocation2 + $0x48] sm:$0xff] %v3481
  %v3483 = vld [vmem:[#allocation2 + $0x50] sm:$0xff]
  %v3484 = vsel %vm3452, %v3376, %v3483
  %3485 = vst [vmem:[#allocation2 + $0x50] sm:$0xff] %v3484
  %v3486 = vld [vmem:[#allocation2 + $0x58] sm:$0xff]
  %v3487 = vsel %vm3452, %v3378, %v3486
  %3488 = vst [vmem:[#allocation2 + $0x58] sm:$0xff] %v3487
  %v3489 = vld [vmem:[#allocation2 + $0x60] sm:$0xff]
  %v3490 = vsel %vm3452, %v3380, %v3489
  %3491 = vst [vmem:[#allocation2 + $0x60] sm:$0xff] %v3490
  %v3492 = vld [vmem:[#allocation2 + $0x68] sm:$0xff]
  %v3493 = vsel %vm3452, %v3382, %v3492
  %3494 = vst [vmem:[#allocation2 + $0x68] sm:$0xff] %v3493
  %v3495 = vld [vmem:[#allocation2 + $0x70] sm:$0xff]
  %v3496 = vsel %vm3452, %v3384, %v3495
  %3497 = vst [vmem:[#allocation2 + $0x70] sm:$0xff] %v3496
  %v3498 = vld [vmem:[#allocation2 + $0x78] sm:$0xff]
  %v3499 = vsel %vm3452, %v3386, %v3498
  %3500 = vst [vmem:[#allocation2 + $0x78] sm:$0xff] %v3499
  %v3501 = vld [vmem:[#allocation2 + $0x80] sm:$0xff]
  %v3502 = vsel %vm3452, %v3388, %v3501
  %3503 = vst [vmem:[#allocation2 + $0x80] sm:$0xff] %v3502
  %v3504 = vld [vmem:[#allocation2 + $0x88] sm:$0xff]
  %v3505 = vsel %vm3452, %v3390, %v3504
  %3506 = vst [vmem:[#allocation2 + $0x88] sm:$0xff] %v3505
  %v3507 = vld [vmem:[#allocation2 + $0x90] sm:$0xff]
  %v3508 = vsel %vm3452, %v3392, %v3507
  %3509 = vst [vmem:[#allocation2 + $0x90] sm:$0xff] %v3508
  %v3510 = vld [vmem:[#allocation2 + $0x98] sm:$0xff]
  %v3511 = vsel %vm3452, %v3394, %v3510
  %3512 = vst [vmem:[#allocation2 + $0x98] sm:$0xff] %v3511
  %v3513 = vld [vmem:[#allocation2 + $0xa0] sm:$0xff]
  %v3514 = vsel %vm3452, %v3396, %v3513
  %3515 = vst [vmem:[#allocation2 + $0xa0] sm:$0xff] %v3514
  %v3516 = vld [vmem:[#allocation2 + $0xa8] sm:$0xff]
  %v3517 = vsel %vm3452, %v3398, %v3516
  %3518 = vst [vmem:[#allocation2 + $0xa8] sm:$0xff] %v3517
  %v3519 = vld [vmem:[#allocation2 + $0xb0] sm:$0xff]
  %v3520 = vsel %vm3452, %v3400, %v3519
  %3521 = vst [vmem:[#allocation2 + $0xb0] sm:$0xff] %v3520
  %v3522 = vld [vmem:[#allocation2 + $0xb8] sm:$0xff]
  %v3523 = vsel %vm3452, %v3402, %v3522
  %3524 = vst [vmem:[#allocation2 + $0xb8] sm:$0xff] %v3523
  %v3525 = vld [vmem:[#allocation2 + $0xc0] sm:$0xff]
  %v3526 = vsel %vm3452, %v3404, %v3525
  %3527 = vst [vmem:[#allocation2 + $0xc0] sm:$0xff] %v3526
  %v3528 = vld [vmem:[#allocation2 + $0xc8] sm:$0xff]
  %v3529 = vsel %vm3452, %v3406, %v3528
  %3530 = vst [vmem:[#allocation2 + $0xc8] sm:$0xff] %v3529
  %v3531 = vld [vmem:[#allocation2 + $0xd0] sm:$0xff]
  %v3532 = vsel %vm3452, %v3408, %v3531
  %3533 = vst [vmem:[#allocation2 + $0xd0] sm:$0xff] %v3532
  %v3534 = vld [vmem:[#allocation2 + $0xd8] sm:$0xff]
  %v3535 = vsel %vm3452, %v3410, %v3534
  %3536 = vst [vmem:[#allocation2 + $0xd8] sm:$0xff] %v3535
  %v3537 = vld [vmem:[#allocation2 + $0xe0] sm:$0xff]
  %v3538 = vsel %vm3452, %v3412, %v3537
  %3539 = vst [vmem:[#allocation2 + $0xe0] sm:$0xff] %v3538
  %v3540 = vld [vmem:[#allocation2 + $0xe8] sm:$0xff]
  %v3541 = vsel %vm3452, %v3414, %v3540
  %3542 = vst [vmem:[#allocation2 + $0xe8] sm:$0xff] %v3541
  %v3543 = vld [vmem:[#allocation2 + $0xf0] sm:$0xff]
  %v3544 = vsel %vm3452, %v3416, %v3543
  %3545 = vst [vmem:[#allocation2 + $0xf0] sm:$0xff] %v3544
  %v3546 = vld [vmem:[#allocation2 + $0xf8] sm:$0xff]
  %v3547 = vsel %vm3452, %v3418, %v3546
  %3548 = vst [vmem:[#allocation2 + $0xf8] sm:$0xff] %v3547
  %s3549 = scalar_lea.vmem [#allocation2], 120
  %vm3550 = vcmask 113760
  %3551 = vst.msk [vmem:[%s3549] sm:$0xff] %vm3550, 0
  %3552 = vst.msk [vmem:[%s3549 + $0x80] sm:$0xff] %vm3550, 0
  %vm3553 = vcmask 106592
  %vm3554 = vmand %vm3553, %vm36
  %v3555 = vld [vmem:[#allocation2] sm:$0x1]
  %v3556 = vsel %vm3554, 0, %v3555
  %3557 = vst [vmem:[#allocation2] sm:$0x1] %v3556
  %v3558 = vld [vmem:[#allocation2 + $0x8] sm:$0x1]
  %v3559 = vsel %vm3554, 0, %v3558
  %3560 = vst [vmem:[#allocation2 + $0x8] sm:$0x1] %v3559
  %v3561 = vld [vmem:[#allocation2 + $0x10] sm:$0x1]
  %v3562 = vsel %vm3554, 0, %v3561
  %3563 = vst [vmem:[#allocation2 + $0x10] sm:$0x1] %v3562
  %v3564 = vld [vmem:[#allocation2 + $0x18] sm:$0x1]
  %v3565 = vsel %vm3554, 0, %v3564
  %3566 = vst [vmem:[#allocation2 + $0x18] sm:$0x1] %v3565
  %v3567 = vld [vmem:[#allocation2 + $0x20] sm:$0x1]
  %v3568 = vsel %vm3554, 0, %v3567
  %3569 = vst [vmem:[#allocation2 + $0x20] sm:$0x1] %v3568
  %v3570 = vld [vmem:[#allocation2 + $0x28] sm:$0x1]
  %v3571 = vsel %vm3554, 0, %v3570
  %3572 = vst [vmem:[#allocation2 + $0x28] sm:$0x1] %v3571
  %v3573 = vld [vmem:[#allocation2 + $0x30] sm:$0x1]
  %v3574 = vsel %vm3554, 0, %v3573
  %3575 = vst [vmem:[#allocation2 + $0x30] sm:$0x1] %v3574
  %v3576 = vld [vmem:[#allocation2 + $0x38] sm:$0x1]
  %v3577 = vsel %vm3554, 0, %v3576
  %3578 = vst [vmem:[#allocation2 + $0x38] sm:$0x1] %v3577
  %v3579 = vld [vmem:[#allocation2 + $0x40] sm:$0x1]
  %v3580 = vsel %vm3554, 0, %v3579
  %3581 = vst [vmem:[#allocation2 + $0x40] sm:$0x1] %v3580
  %v3582 = vld [vmem:[#allocation2 + $0x48] sm:$0x1]
  %v3583 = vsel %vm3554, 0, %v3582
  %3584 = vst [vmem:[#allocation2 + $0x48] sm:$0x1] %v3583
  %v3585 = vld [vmem:[#allocation2 + $0x50] sm:$0x1]
  %v3586 = vsel %vm3554, 0, %v3585
  %3587 = vst [vmem:[#allocation2 + $0x50] sm:$0x1] %v3586
  %v3588 = vld [vmem:[#allocation2 + $0x58] sm:$0x1]
  %v3589 = vsel %vm3554, 0, %v3588
  %3590 = vst [vmem:[#allocation2 + $0x58] sm:$0x1] %v3589
  %v3591 = vld [vmem:[#allocation2 + $0x60] sm:$0x1]
  %v3592 = vsel %vm3554, 0, %v3591
  %3593 = vst [vmem:[#allocation2 + $0x60] sm:$0x1] %v3592
  %v3594 = vld [vmem:[#allocation2 + $0x68] sm:$0x1]
  %v3595 = vsel %vm3554, 0, %v3594
  %3596 = vst [vmem:[#allocation2 + $0x68] sm:$0x1] %v3595
  %v3597 = vld [vmem:[#allocation2 + $0x70] sm:$0x1]
  %v3598 = vsel %vm3554, 0, %v3597
  %3599 = vst [vmem:[#allocation2 + $0x70] sm:$0x1] %v3598
  %v3600 = vld [vmem:[#allocation2 + $0x78] sm:$0x1]
  %v3601 = vsel %vm3554, 0, %v3600
  %3602 = vst [vmem:[#allocation2 + $0x78] sm:$0x1] %v3601
  %v3603 = vld [vmem:[#allocation2 + $0x80] sm:$0x1]
  %v3604 = vsel %vm3554, 0, %v3603
  %3605 = vst [vmem:[#allocation2 + $0x80] sm:$0x1] %v3604
  %v3606 = vld [vmem:[#allocation2 + $0x88] sm:$0x1]
  %v3607 = vsel %vm3554, 0, %v3606
  %3608 = vst [vmem:[#allocation2 + $0x88] sm:$0x1] %v3607
  %v3609 = vld [vmem:[#allocation2 + $0x90] sm:$0x1]
  %v3610 = vsel %vm3554, 0, %v3609
  %3611 = vst [vmem:[#allocation2 + $0x90] sm:$0x1] %v3610
  %v3612 = vld [vmem:[#allocation2 + $0x98] sm:$0x1]
  %v3613 = vsel %vm3554, 0, %v3612
  %3614 = vst [vmem:[#allocation2 + $0x98] sm:$0x1] %v3613
  %v3615 = vld [vmem:[#allocation2 + $0xa0] sm:$0x1]
  %v3616 = vsel %vm3554, 0, %v3615
  %3617 = vst [vmem:[#allocation2 + $0xa0] sm:$0x1] %v3616
  %v3618 = vld [vmem:[#allocation2 + $0xa8] sm:$0x1]
  %v3619 = vsel %vm3554, 0, %v3618
  %3620 = vst [vmem:[#allocation2 + $0xa8] sm:$0x1] %v3619
  %v3621 = vld [vmem:[#allocation2 + $0xb0] sm:$0x1]
  %v3622 = vsel %vm3554, 0, %v3621
  %3623 = vst [vmem:[#allocation2 + $0xb0] sm:$0x1] %v3622
  %v3624 = vld [vmem:[#allocation2 + $0xb8] sm:$0x1]
  %v3625 = vsel %vm3554, 0, %v3624
  %3626 = vst [vmem:[#allocation2 + $0xb8] sm:$0x1] %v3625
  %v3627 = vld [vmem:[#allocation2 + $0xc0] sm:$0x1]
  %v3628 = vsel %vm3554, 0, %v3627
  %3629 = vst [vmem:[#allocation2 + $0xc0] sm:$0x1] %v3628
  %v3630 = vld [vmem:[#allocation2 + $0xc8] sm:$0x1]
  %v3631 = vsel %vm3554, 0, %v3630
  %3632 = vst [vmem:[#allocation2 + $0xc8] sm:$0x1] %v3631
  %v3633 = vld [vmem:[#allocation2 + $0xd0] sm:$0x1]
  %v3634 = vsel %vm3554, 0, %v3633
  %3635 = vst [vmem:[#allocation2 + $0xd0] sm:$0x1] %v3634
  %v3636 = vld [vmem:[#allocation2 + $0xd8] sm:$0x1]
  %v3637 = vsel %vm3554, 0, %v3636
  %3638 = vst [vmem:[#allocation2 + $0xd8] sm:$0x1] %v3637
  %v3639 = vld [vmem:[#allocation2 + $0xe0] sm:$0x1]
  %v3640 = vsel %vm3554, 0, %v3639
  %3641 = vst [vmem:[#allocation2 + $0xe0] sm:$0x1] %v3640
  %v3642 = vld [vmem:[#allocation2 + $0xe8] sm:$0x1]
  %v3643 = vsel %vm3554, 0, %v3642
  %3644 = vst [vmem:[#allocation2 + $0xe8] sm:$0x1] %v3643
  %v3645 = vld [vmem:[#allocation2 + $0xf0] sm:$0x1]
  %v3646 = vsel %vm3554, 0, %v3645
  %3647 = vst [vmem:[#allocation2 + $0xf0] sm:$0x1] %v3646
  %v3648 = vld [vmem:[#allocation2 + $0xf8] sm:$0x1]
  %v3649 = vsel %vm3554, 0, %v3648
  %3650 = vst [vmem:[#allocation2 + $0xf8] sm:$0x1] %v3649
  %s3651 = scalar_lea.vmem %s1, 8
  %v3652 = vld [vmem:[%s3651] sm:$0xf]
  %v3653 = vld [vmem:[%s3651 + $0x4] sm:$0xf]
  %v3654 = vld [vmem:[%s3651 + $0x8] sm:$0xf]
  %v3655 = vld [vmem:[%s3651 + $0xc] sm:$0xf]
  %v3656 = vld [vmem:[%s3651 + $0x10] sm:$0xf]
  %v3657 = vld [vmem:[%s3651 + $0x14] sm:$0xf]
  %v3658 = vld [vmem:[%s3651 + $0x18] sm:$0xf]
  %v3659 = vld [vmem:[%s3651 + $0x1c] sm:$0xf]
  %v3660 = vld [vmem:[%s3651 + $0x20] sm:$0xf]
  %v3661 = vld [vmem:[%s3651 + $0x24] sm:$0xf]
  %v3662 = vld [vmem:[%s3651 + $0x28] sm:$0xf]
  %v3663 = vld [vmem:[%s3651 + $0x2c] sm:$0xf]
  %v3664 = vld [vmem:[%s3651 + $0x30] sm:$0xf]
  %v3665 = vld [vmem:[%s3651 + $0x34] sm:$0xf]
  %v3666 = vld [vmem:[%s3651 + $0x38] sm:$0xf]
  %v3667 = vld [vmem:[%s3651 + $0x3c] sm:$0xf]
  %v3668 = vld [vmem:[%s3651 + $0x40] sm:$0xf]
  %v3669 = vld [vmem:[%s3651 + $0x44] sm:$0xf]
  %v3670 = vld [vmem:[%s3651 + $0x48] sm:$0xf]
  %v3671 = vld [vmem:[%s3651 + $0x4c] sm:$0xf]
  %v3672 = vld [vmem:[%s3651 + $0x50] sm:$0xf]
  %v3673 = vld [vmem:[%s3651 + $0x54] sm:$0xf]
  %v3674 = vld [vmem:[%s3651 + $0x58] sm:$0xf]
  %v3675 = vld [vmem:[%s3651 + $0x5c] sm:$0xf]
  %v3676 = vld [vmem:[%s3651 + $0x60] sm:$0xf]
  %v3677 = vld [vmem:[%s3651 + $0x64] sm:$0xf]
  %v3678 = vld [vmem:[%s3651 + $0x68] sm:$0xf]
  %v3679 = vld [vmem:[%s3651 + $0x6c] sm:$0xf]
  %v3680 = vld [vmem:[%s3651 + $0x70] sm:$0xf]
  %v3681 = vld [vmem:[%s3651 + $0x74] sm:$0xf]
  %v3682 = vld [vmem:[%s3651 + $0x80] sm:$0xf]
  %v3683 = vld [vmem:[%s3651 + $0x84] sm:$0xf]
  %v3684 = vld [vmem:[%s3651 + $0x88] sm:$0xf]
  %v3685 = vld [vmem:[%s3651 + $0x8c] sm:$0xf]
  %v3686 = vld [vmem:[%s3651 + $0x90] sm:$0xf]
  %v3687 = vld [vmem:[%s3651 + $0x94] sm:$0xf]
  %v3688 = vld [vmem:[%s3651 + $0x98] sm:$0xf]
  %v3689 = vld [vmem:[%s3651 + $0x9c] sm:$0xf]
  %v3690 = vld [vmem:[%s3651 + $0xa0] sm:$0xf]
  %v3691 = vld [vmem:[%s3651 + $0xa4] sm:$0xf]
  %v3692 = vld [vmem:[%s3651 + $0xa8] sm:$0xf]
  %v3693 = vld [vmem:[%s3651 + $0xac] sm:$0xf]
  %v3694 = vld [vmem:[%s3651 + $0xb0] sm:$0xf]
  %v3695 = vld [vmem:[%s3651 + $0xb4] sm:$0xf]
  %v3696 = vld [vmem:[%s3651 + $0xb8] sm:$0xf]
  %v3697 = vld [vmem:[%s3651 + $0xbc] sm:$0xf]
  %v3698 = vld [vmem:[%s3651 + $0xc0] sm:$0xf]
  %v3699 = vld [vmem:[%s3651 + $0xc4] sm:$0xf]
  %v3700 = vld [vmem:[%s3651 + $0xc8] sm:$0xf]
  %v3701 = vld [vmem:[%s3651 + $0xcc] sm:$0xf]
  %v3702 = vld [vmem:[%s3651 + $0xd0] sm:$0xf]
  %v3703 = vld [vmem:[%s3651 + $0xd4] sm:$0xf]
  %v3704 = vld [vmem:[%s3651 + $0xd8] sm:$0xf]
  %v3705 = vld [vmem:[%s3651 + $0xdc] sm:$0xf]
  %v3706 = vld [vmem:[%s3651 + $0xe0] sm:$0xf]
  %v3707 = vld [vmem:[%s3651 + $0xe4] sm:$0xf]
  %v3708 = vld [vmem:[%s3651 + $0xe8] sm:$0xf]
  %v3709 = vld [vmem:[%s3651 + $0xec] sm:$0xf]
  %v3710 = vld [vmem:[%s3651 + $0xf0] sm:$0xf]
  %v3711 = vld [vmem:[%s3651 + $0xf4] sm:$0xf]
  %v3772 = vunpack.c.l.b16 %v3652
  %v3773 = vunpack.c.l.b16 %v3653
  %v3774 = vunpack.c.l.b16 %v3654
  %v3775 = vunpack.c.l.b16 %v3655
  %v3776 = vunpack.c.l.b16 %v3656
  %v3777 = vunpack.c.l.b16 %v3657
  %v3778 = vunpack.c.l.b16 %v3658
  %v3779 = vunpack.c.l.b16 %v3659
  %v3780 = vunpack.c.l.b16 %v3660
  %v3781 = vunpack.c.l.b16 %v3661
  %v3782 = vunpack.c.l.b16 %v3662
  %v3783 = vunpack.c.l.b16 %v3663
  %v3784 = vunpack.c.l.b16 %v3664
  %v3785 = vunpack.c.l.b16 %v3665
  %v3786 = vunpack.c.l.b16 %v3666
  %v3787 = vunpack.c.l.b16 %v3667
  %v3788 = vunpack.c.l.b16 %v3668
  %v3789 = vunpack.c.l.b16 %v3669
  %v3790 = vunpack.c.l.b16 %v3670
  %v3791 = vunpack.c.l.b16 %v3671
  %v3792 = vunpack.c.l.b16 %v3672
  %v3793 = vunpack.c.l.b16 %v3673
  %v3794 = vunpack.c.l.b16 %v3674
  %v3795 = vunpack.c.l.b16 %v3675
  %v3796 = vunpack.c.l.b16 %v3676
  %v3797 = vunpack.c.l.b16 %v3677
  %v3798 = vunpack.c.l.b16 %v3678
  %v3799 = vunpack.c.l.b16 %v3679
  %v3800 = vunpack.c.l.b16 %v3680
  %v3801 = vunpack.c.l.b16 %v3681
  %v3802 = vunpack.c.l.b16 %v3682
  %v3803 = vunpack.c.l.b16 %v3683
  %v3804 = vunpack.c.l.b16 %v3684
  %v3805 = vunpack.c.l.b16 %v3685
  %v3806 = vunpack.c.l.b16 %v3686
  %v3807 = vunpack.c.l.b16 %v3687
  %v3808 = vunpack.c.l.b16 %v3688
  %v3809 = vunpack.c.l.b16 %v3689
  %v3810 = vunpack.c.l.b16 %v3690
  %v3811 = vunpack.c.l.b16 %v3691
  %v3812 = vunpack.c.l.b16 %v3692
  %v3813 = vunpack.c.l.b16 %v3693
  %v3814 = vunpack.c.l.b16 %v3694
  %v3815 = vunpack.c.l.b16 %v3695
  %v3816 = vunpack.c.l.b16 %v3696
  %v3817 = vunpack.c.l.b16 %v3697
  %v3818 = vunpack.c.l.b16 %v3698
  %v3819 = vunpack.c.l.b16 %v3699
  %v3820 = vunpack.c.l.b16 %v3700
  %v3821 = vunpack.c.l.b16 %v3701
  %v3822 = vunpack.c.l.b16 %v3702
  %v3823 = vunpack.c.l.b16 %v3703
  %v3824 = vunpack.c.l.b16 %v3704
  %v3825 = vunpack.c.l.b16 %v3705
  %v3826 = vunpack.c.l.b16 %v3706
  %v3827 = vunpack.c.l.b16 %v3707
  %v3828 = vunpack.c.l.b16 %v3708
  %v3829 = vunpack.c.l.b16 %v3709
  %v3830 = vunpack.c.l.b16 %v3710
  %v3831 = vunpack.c.l.b16 %v3711
  %v3832 = vpack.c.b16 %v3773, %v3772
  %v3833 = vpack.c.b16 %v3775, %v3774
  %v3834 = vpack.c.b16 %v3777, %v3776
  %v3835 = vpack.c.b16 %v3779, %v3778
  %v3836 = vpack.c.b16 %v3781, %v3780
  %v3837 = vpack.c.b16 %v3783, %v3782
  %v3838 = vpack.c.b16 %v3785, %v3784
  %v3839 = vpack.c.b16 %v3787, %v3786
  %v3840 = vpack.c.b16 %v3789, %v3788
  %v3841 = vpack.c.b16 %v3791, %v3790
  %v3842 = vpack.c.b16 %v3793, %v3792
  %v3843 = vpack.c.b16 %v3795, %v3794
  %v3844 = vpack.c.b16 %v3797, %v3796
  %v3845 = vpack.c.b16 %v3799, %v3798
  %v3846 = vpack.c.b16 %v3801, %v3800
  %v3847 = vpack.c.b16 %v3803, %v3802
  %v3848 = vpack.c.b16 %v3805, %v3804
  %v3849 = vpack.c.b16 %v3807, %v3806
  %v3850 = vpack.c.b16 %v3809, %v3808
  %v3851 = vpack.c.b16 %v3811, %v3810
  %v3852 = vpack.c.b16 %v3813, %v3812
  %v3853 = vpack.c.b16 %v3815, %v3814
  %v3854 = vpack.c.b16 %v3817, %v3816
  %v3855 = vpack.c.b16 %v3819, %v3818
  %v3856 = vpack.c.b16 %v3821, %v3820
  %v3857 = vpack.c.b16 %v3823, %v3822
  %v3858 = vpack.c.b16 %v3825, %v3824
  %v3859 = vpack.c.b16 %v3827, %v3826
  %v3860 = vpack.c.b16 %v3829, %v3828
  %v3861 = vpack.c.b16 %v3831, %v3830
  %v3863 = vshrl.u32 %v3832, 16
  %v3865 = vrot.slane %v3863, 7
  %v3866 = vshll.u32 %v3832, 16
  %v3868 = vor.u32 %v3865, %v3866
  %v3870 = vshrl.u32 %v3833, 16
  %v3872 = vrot.slane %v3870, 7
  %v3873 = vshll.u32 %v3833, 16
  %v3875 = vor.u32 %v3872, %v3873
  %v3877 = vshrl.u32 %v3834, 16
  %v3879 = vrot.slane %v3877, 7
  %v3880 = vshll.u32 %v3834, 16
  %v3882 = vor.u32 %v3879, %v3880
  %v3884 = vshrl.u32 %v3835, 16
  %v3886 = vrot.slane %v3884, 7
  %v3887 = vshll.u32 %v3835, 16
  %v3889 = vor.u32 %v3886, %v3887
  %v3891 = vshrl.u32 %v3836, 16
  %v3893 = vrot.slane %v3891, 7
  %v3894 = vshll.u32 %v3836, 16
  %v3896 = vor.u32 %v3893, %v3894
  %v3898 = vshrl.u32 %v3837, 16
  %v3900 = vrot.slane %v3898, 7
  %v3901 = vshll.u32 %v3837, 16
  %v3903 = vor.u32 %v3900, %v3901
  %v3905 = vshrl.u32 %v3838, 16
  %v3907 = vrot.slane %v3905, 7
  %v3908 = vshll.u32 %v3838, 16
  %v3910 = vor.u32 %v3907, %v3908
  %v3912 = vshrl.u32 %v3839, 16
  %v3914 = vrot.slane %v3912, 7
  %v3915 = vshll.u32 %v3839, 16
  %v3917 = vor.u32 %v3914, %v3915
  %v3919 = vshrl.u32 %v3840, 16
  %v3921 = vrot.slane %v3919, 7
  %v3922 = vshll.u32 %v3840, 16
  %v3924 = vor.u32 %v3921, %v3922
  %v3926 = vshrl.u32 %v3841, 16
  %v3928 = vrot.slane %v3926, 7
  %v3929 = vshll.u32 %v3841, 16
  %v3931 = vor.u32 %v3928, %v3929
  %v3933 = vshrl.u32 %v3842, 16
  %v3935 = vrot.slane %v3933, 7
  %v3936 = vshll.u32 %v3842, 16
  %v3938 = vor.u32 %v3935, %v3936
  %v3940 = vshrl.u32 %v3843, 16
  %v3942 = vrot.slane %v3940, 7
  %v3943 = vshll.u32 %v3843, 16
  %v3945 = vor.u32 %v3942, %v3943
  %v3947 = vshrl.u32 %v3844, 16
  %v3949 = vrot.slane %v3947, 7
  %v3950 = vshll.u32 %v3844, 16
  %v3952 = vor.u32 %v3949, %v3950
  %v3954 = vshrl.u32 %v3845, 16
  %v3956 = vrot.slane %v3954, 7
  %v3957 = vshll.u32 %v3845, 16
  %v3959 = vor.u32 %v3956, %v3957
  %v3961 = vshrl.u32 %v3846, 16
  %v3963 = vrot.slane %v3961, 7
  %v3964 = vshll.u32 %v3846, 16
  %v3966 = vor.u32 %v3963, %v3964
  %v3968 = vshrl.u32 %v3847, 16
  %v3970 = vrot.slane %v3968, 7
  %v3971 = vshll.u32 %v3847, 16
  %v3973 = vor.u32 %v3970, %v3971
  %v3975 = vshrl.u32 %v3848, 16
  %v3977 = vrot.slane %v3975, 7
  %v3978 = vshll.u32 %v3848, 16
  %v3980 = vor.u32 %v3977, %v3978
  %v3982 = vshrl.u32 %v3849, 16
  %v3984 = vrot.slane %v3982, 7
  %v3985 = vshll.u32 %v3849, 16
  %v3987 = vor.u32 %v3984, %v3985
  %v3989 = vshrl.u32 %v3850, 16
  %v3991 = vrot.slane %v3989, 7
  %v3992 = vshll.u32 %v3850, 16
  %v3994 = vor.u32 %v3991, %v3992
  %v3996 = vshrl.u32 %v3851, 16
  %v3998 = vrot.slane %v3996, 7
  %v3999 = vshll.u32 %v3851, 16
  %v4001 = vor.u32 %v3998, %v3999
  %v4003 = vshrl.u32 %v3852, 16
  %v4005 = vrot.slane %v4003, 7
  %v4006 = vshll.u32 %v3852, 16
  %v4008 = vor.u32 %v4005, %v4006
  %v4010 = vshrl.u32 %v3853, 16
  %v4012 = vrot.slane %v4010, 7
  %v4013 = vshll.u32 %v3853, 16
  %v4015 = vor.u32 %v4012, %v4013
  %v4017 = vshrl.u32 %v3854, 16
  %v4019 = vrot.slane %v4017, 7
  %v4020 = vshll.u32 %v3854, 16
  %v4022 = vor.u32 %v4019, %v4020
  %v4024 = vshrl.u32 %v3855, 16
  %v4026 = vrot.slane %v4024, 7
  %v4027 = vshll.u32 %v3855, 16
  %v4029 = vor.u32 %v4026, %v4027
  %v4031 = vshrl.u32 %v3856, 16
  %v4033 = vrot.slane %v4031, 7
  %v4034 = vshll.u32 %v3856, 16
  %v4036 = vor.u32 %v4033, %v4034
  %v4038 = vshrl.u32 %v3857, 16
  %v4040 = vrot.slane %v4038, 7
  %v4041 = vshll.u32 %v3857, 16
  %v4043 = vor.u32 %v4040, %v4041
  %v4045 = vshrl.u32 %v3858, 16
  %v4047 = vrot.slane %v4045, 7
  %v4048 = vshll.u32 %v3858, 16
  %v4050 = vor.u32 %v4047, %v4048
  %v4052 = vshrl.u32 %v3859, 16
  %v4054 = vrot.slane %v4052, 7
  %v4055 = vshll.u32 %v3859, 16
  %v4057 = vor.u32 %v4054, %v4055
  %v4059 = vshrl.u32 %v3860, 16
  %v4061 = vrot.slane %v4059, 7
  %v4062 = vshll.u32 %v3860, 16
  %v4064 = vor.u32 %v4061, %v4062
  %v4066 = vshrl.u32 %v3861, 16
  %v4068 = vrot.slane %v4066, 7
  %v4069 = vshll.u32 %v3861, 16
  %v4071 = vor.u32 %v4068, %v4069
  %4072 = vrot.lane.b32.xlu0 %v3868, 12
  %v4073 = vpop.permute.xlu0 %4072
  %4074 = vrot.lane.b32.xlu0 %v3875, 12
  %v4075 = vpop.permute.xlu0 %4074
  %4076 = vrot.lane.b32.xlu0 %v3882, 12
  %v4077 = vpop.permute.xlu0 %4076
  %4078 = vrot.lane.b32.xlu0 %v3889, 12
  %v4079 = vpop.permute.xlu0 %4078
  %4080 = vrot.lane.b32.xlu0 %v3896, 12
  %v4081 = vpop.permute.xlu0 %4080
  %4082 = vrot.lane.b32.xlu0 %v3903, 12
  %v4083 = vpop.permute.xlu0 %4082
  %4084 = vrot.lane.b32.xlu0 %v3910, 12
  %v4085 = vpop.permute.xlu0 %4084
  %4086 = vrot.lane.b32.xlu0 %v3917, 12
  %v4087 = vpop.permute.xlu0 %4086
  %4088 = vrot.lane.b32.xlu0 %v3924, 12
  %v4089 = vpop.permute.xlu0 %4088
  %4090 = vrot.lane.b32.xlu0 %v3931, 12
  %v4091 = vpop.permute.xlu0 %4090
  %4092 = vrot.lane.b32.xlu0 %v3938, 12
  %v4093 = vpop.permute.xlu0 %4092
  %4094 = vrot.lane.b32.xlu0 %v3945, 12
  %v4095 = vpop.permute.xlu0 %4094
  %4096 = vrot.lane.b32.xlu0 %v3952, 12
  %v4097 = vpop.permute.xlu0 %4096
  %4098 = vrot.lane.b32.xlu0 %v3959, 12
  %v4099 = vpop.permute.xlu0 %4098
  %4100 = vrot.lane.b32.xlu0 %v3966, 12
  %v4101 = vpop.permute.xlu0 %4100
  %4102 = vrot.lane.b32.xlu0 %v3973, 12
  %v4103 = vpop.permute.xlu0 %4102
  %4104 = vrot.lane.b32.xlu0 %v3980, 12
  %v4105 = vpop.permute.xlu0 %4104
  %4106 = vrot.lane.b32.xlu0 %v3987, 12
  %v4107 = vpop.permute.xlu0 %4106
  %4108 = vrot.lane.b32.xlu0 %v3994, 12
  %v4109 = vpop.permute.xlu0 %4108
  %4110 = vrot.lane.b32.xlu0 %v4001, 12
  %v4111 = vpop.permute.xlu0 %4110
  %4112 = vrot.lane.b32.xlu0 %v4008, 12
  %v4113 = vpop.permute.xlu0 %4112
  %4114 = vrot.lane.b32.xlu0 %v4015, 12
  %v4115 = vpop.permute.xlu0 %4114
  %4116 = vrot.lane.b32.xlu0 %v4022, 12
  %v4117 = vpop.permute.xlu0 %4116
  %4118 = vrot.lane.b32.xlu0 %v4029, 12
  %v4119 = vpop.permute.xlu0 %4118
  %4120 = vrot.lane.b32.xlu0 %v4036, 12
  %v4121 = vpop.permute.xlu0 %4120
  %4122 = vrot.lane.b32.xlu0 %v4043, 12
  %v4123 = vpop.permute.xlu0 %4122
  %4124 = vrot.lane.b32.xlu0 %v4050, 12
  %v4125 = vpop.permute.xlu0 %4124
  %4126 = vrot.lane.b32.xlu0 %v4057, 12
  %v4127 = vpop.permute.xlu0 %4126
  %4128 = vrot.lane.b32.xlu0 %v4064, 12
  %v4129 = vpop.permute.xlu0 %4128
  %4130 = vrot.lane.b32.xlu0 %v4071, 12
  %v4131 = vpop.permute.xlu0 %4130
  %vm4162 = vcmask 113760
  %vm4163 = vmand %vm4162, %vm586
  %v4164 = vld [vmem:[#allocation2] sm:$0xff]
  %v4165 = vsel %vm4163, %v4073, %v4164
  %4166 = vst [vmem:[#allocation2] sm:$0xff] %v4165
  %v4167 = vld [vmem:[#allocation2 + $0x8] sm:$0xff]
  %v4168 = vsel %vm4163, %v4075, %v4167
  %4169 = vst [vmem:[#allocation2 + $0x8] sm:$0xff] %v4168
  %v4170 = vld [vmem:[#allocation2 + $0x10] sm:$0xff]
  %v4171 = vsel %vm4163, %v4077, %v4170
  %4172 = vst [vmem:[#allocation2 + $0x10] sm:$0xff] %v4171
  %v4173 = vld [vmem:[#allocation2 + $0x18] sm:$0xff]
  %v4174 = vsel %vm4163, %v4079, %v4173
  %4175 = vst [vmem:[#allocation2 + $0x18] sm:$0xff] %v4174
  %v4176 = vld [vmem:[#allocation2 + $0x20] sm:$0xff]
  %v4177 = vsel %vm4163, %v4081, %v4176
  %4178 = vst [vmem:[#allocation2 + $0x20] sm:$0xff] %v4177
  %v4179 = vld [vmem:[#allocation2 + $0x28] sm:$0xff]
  %v4180 = vsel %vm4163, %v4083, %v4179
  %4181 = vst [vmem:[#allocation2 + $0x28] sm:$0xff] %v4180
  %v4182 = vld [vmem:[#allocation2 + $0x30] sm:$0xff]
  %v4183 = vsel %vm4163, %v4085, %v4182
  %4184 = vst [vmem:[#allocation2 + $0x30] sm:$0xff] %v4183
  %v4185 = vld [vmem:[#allocation2 + $0x38] sm:$0xff]
  %v4186 = vsel %vm4163, %v4087, %v4185
  %4187 = vst [vmem:[#allocation2 + $0x38] sm:$0xff] %v4186
  %v4188 = vld [vmem:[#allocation2 + $0x40] sm:$0xff]
  %v4189 = vsel %vm4163, %v4089, %v4188
  %4190 = vst [vmem:[#allocation2 + $0x40] sm:$0xff] %v4189
  %v4191 = vld [vmem:[#allocation2 + $0x48] sm:$0xff]
  %v4192 = vsel %vm4163, %v4091, %v4191
  %4193 = vst [vmem:[#allocation2 + $0x48] sm:$0xff] %v4192
  %v4194 = vld [vmem:[#allocation2 + $0x50] sm:$0xff]
  %v4195 = vsel %vm4163, %v4093, %v4194
  %4196 = vst [vmem:[#allocation2 + $0x50] sm:$0xff] %v4195
  %v4197 = vld [vmem:[#allocation2 + $0x58] sm:$0xff]
  %v4198 = vsel %vm4163, %v4095, %v4197
  %4199 = vst [vmem:[#allocation2 + $0x58] sm:$0xff] %v4198
  %v4200 = vld [vmem:[#allocation2 + $0x60] sm:$0xff]
  %v4201 = vsel %vm4163, %v4097, %v4200
  %4202 = vst [vmem:[#allocation2 + $0x60] sm:$0xff] %v4201
  %v4203 = vld [vmem:[#allocation2 + $0x68] sm:$0xff]
  %v4204 = vsel %vm4163, %v4099, %v4203
  %4205 = vst [vmem:[#allocation2 + $0x68] sm:$0xff] %v4204
  %v4206 = vld [vmem:[#allocation2 + $0x70] sm:$0xff]
  %v4207 = vsel %vm4163, %v4101, %v4206
  %4208 = vst [vmem:[#allocation2 + $0x70] sm:$0xff] %v4207
  %v4209 = vld [vmem:[#allocation2 + $0x80] sm:$0xff]
  %v4210 = vsel %vm4163, %v4103, %v4209
  %4211 = vst [vmem:[#allocation2 + $0x80] sm:$0xff] %v4210
  %v4212 = vld [vmem:[#allocation2 + $0x88] sm:$0xff]
  %v4213 = vsel %vm4163, %v4105, %v4212
  %4214 = vst [vmem:[#allocation2 + $0x88] sm:$0xff] %v4213
  %v4215 = vld [vmem:[#allocation2 + $0x90] sm:$0xff]
  %v4216 = vsel %vm4163, %v4107, %v4215
  %4217 = vst [vmem:[#allocation2 + $0x90] sm:$0xff] %v4216
  %v4218 = vld [vmem:[#allocation2 + $0x98] sm:$0xff]
  %v4219 = vsel %vm4163, %v4109, %v4218
  %4220 = vst [vmem:[#allocation2 + $0x98] sm:$0xff] %v4219
  %v4221 = vld [vmem:[#allocation2 + $0xa0] sm:$0xff]
  %v4222 = vsel %vm4163, %v4111, %v4221
  %4223 = vst [vmem:[#allocation2 + $0xa0] sm:$0xff] %v4222
  %v4224 = vld [vmem:[#allocation2 + $0xa8] sm:$0xff]
  %v4225 = vsel %vm4163, %v4113, %v4224
  %4226 = vst [vmem:[#allocation2 + $0xa8] sm:$0xff] %v4225
  %v4227 = vld [vmem:[#allocation2 + $0xb0] sm:$0xff]
  %v4228 = vsel %vm4163, %v4115, %v4227
  %4229 = vst [vmem:[#allocation2 + $0xb0] sm:$0xff] %v4228
  %v4230 = vld [vmem:[#allocation2 + $0xb8] sm:$0xff]
  %v4231 = vsel %vm4163, %v4117, %v4230
  %4232 = vst [vmem:[#allocation2 + $0xb8] sm:$0xff] %v4231
  %v4233 = vld [vmem:[#allocation2 + $0xc0] sm:$0xff]
  %v4234 = vsel %vm4163, %v4119, %v4233
  %4235 = vst [vmem:[#allocation2 + $0xc0] sm:$0xff] %v4234
  %v4236 = vld [vmem:[#allocation2 + $0xc8] sm:$0xff]
  %v4237 = vsel %vm4163, %v4121, %v4236
  %4238 = vst [vmem:[#allocation2 + $0xc8] sm:$0xff] %v4237
  %v4239 = vld [vmem:[#allocation2 + $0xd0] sm:$0xff]
  %v4240 = vsel %vm4163, %v4123, %v4239
  %4241 = vst [vmem:[#allocation2 + $0xd0] sm:$0xff] %v4240
  %v4242 = vld [vmem:[#allocation2 + $0xd8] sm:$0xff]
  %v4243 = vsel %vm4163, %v4125, %v4242
  %4244 = vst [vmem:[#allocation2 + $0xd8] sm:$0xff] %v4243
  %v4245 = vld [vmem:[#allocation2 + $0xe0] sm:$0xff]
  %v4246 = vsel %vm4163, %v4127, %v4245
  %4247 = vst [vmem:[#allocation2 + $0xe0] sm:$0xff] %v4246
  %v4248 = vld [vmem:[#allocation2 + $0xe8] sm:$0xff]
  %v4249 = vsel %vm4163, %v4129, %v4248
  %4250 = vst [vmem:[#allocation2 + $0xe8] sm:$0xff] %v4249
  %v4251 = vld [vmem:[#allocation2 + $0xf0] sm:$0xff]
  %v4252 = vsel %vm4163, %v4131, %v4251
  %4253 = vst [vmem:[#allocation2 + $0xf0] sm:$0xff] %v4252
  %vm4254 = vcmask 130160
  %4255 = vst.msk [vmem:[%s3549] sm:$0xff] %vm4254, 0
  %4256 = vst.msk [vmem:[%s3549 + $0x80] sm:$0xff] %vm4254, 0
  %v4257 = vld [vmem:[%s3651] sm:$0xf]
  %v4258 = vld [vmem:[%s3651 + $0x4] sm:$0xf]
  %v4259 = vld [vmem:[%s3651 + $0x8] sm:$0xf]
  %v4260 = vld [vmem:[%s3651 + $0xc] sm:$0xf]
  %v4261 = vld [vmem:[%s3651 + $0x10] sm:$0xf]
  %v4262 = vld [vmem:[%s3651 + $0x14] sm:$0xf]
  %v4263 = vld [vmem:[%s3651 + $0x18] sm:$0xf]
  %v4264 = vld [vmem:[%s3651 + $0x1c] sm:$0xf]
  %v4265 = vld [vmem:[%s3651 + $0x20] sm:$0xf]
  %v4266 = vld [vmem:[%s3651 + $0x24] sm:$0xf]
  %v4267 = vld [vmem:[%s3651 + $0x28] sm:$0xf]
  %v4268 = vld [vmem:[%s3651 + $0x2c] sm:$0xf]
  %v4269 = vld [vmem:[%s3651 + $0x30] sm:$0xf]
  %v4270 = vld [vmem:[%s3651 + $0x34] sm:$0xf]
  %v4271 = vld [vmem:[%s3651 + $0x38] sm:$0xf]
  %v4272 = vld [vmem:[%s3651 + $0x3c] sm:$0xf]
  %v4273 = vld [vmem:[%s3651 + $0x40] sm:$0xf]
  %v4274 = vld [vmem:[%s3651 + $0x44] sm:$0xf]
  %v4275 = vld [vmem:[%s3651 + $0x48] sm:$0xf]
  %v4276 = vld [vmem:[%s3651 + $0x4c] sm:$0xf]
  %v4277 = vld [vmem:[%s3651 + $0x50] sm:$0xf]
  %v4278 = vld [vmem:[%s3651 + $0x54] sm:$0xf]
  %v4279 = vld [vmem:[%s3651 + $0x58] sm:$0xf]
  %v4280 = vld [vmem:[%s3651 + $0x5c] sm:$0xf]
  %v4281 = vld [vmem:[%s3651 + $0x60] sm:$0xf]
  %v4282 = vld [vmem:[%s3651 + $0x64] sm:$0xf]
  %v4283 = vld [vmem:[%s3651 + $0x68] sm:$0xf]
  %v4284 = vld [vmem:[%s3651 + $0x6c] sm:$0xf]
  %v4285 = vld [vmem:[%s3651 + $0x70] sm:$0xf]
  %v4286 = vld [vmem:[%s3651 + $0x74] sm:$0xf]
  %v4287 = vld [vmem:[%s3651 + $0x80] sm:$0xf]
  %v4288 = vld [vmem:[%s3651 + $0x84] sm:$0xf]
  %v4289 = vld [vmem:[%s3651 + $0x88] sm:$0xf]
  %v4290 = vld [vmem:[%s3651 + $0x8c] sm:$0xf]
  %v4291 = vld [vmem:[%s3651 + $0x90] sm:$0xf]
  %v4292 = vld [vmem:[%s3651 + $0x94] sm:$0xf]
  %v4293 = vld [vmem:[%s3651 + $0x98] sm:$0xf]
  %v4294 = vld [vmem:[%s3651 + $0x9c] sm:$0xf]
  %v4295 = vld [vmem:[%s3651 + $0xa0] sm:$0xf]
  %v4296 = vld [vmem:[%s3651 + $0xa4] sm:$0xf]
  %v4297 = vld [vmem:[%s3651 + $0xa8] sm:$0xf]
  %v4298 = vld [vmem:[%s3651 + $0xac] sm:$0xf]
  %v4299 = vld [vmem:[%s3651 + $0xb0] sm:$0xf]
  %v4300 = vld [vmem:[%s3651 + $0xb4] sm:$0xf]
  %v4301 = vld [vmem:[%s3651 + $0xb8] sm:$0xf]
  %v4302 = vld [vmem:[%s3651 + $0xbc] sm:$0xf]
  %v4303 = vld [vmem:[%s3651 + $0xc0] sm:$0xf]
  %v4304 = vld [vmem:[%s3651 + $0xc4] sm:$0xf]
  %v4305 = vld [vmem:[%s3651 + $0xc8] sm:$0xf]
  %v4306 = vld [vmem:[%s3651 + $0xcc] sm:$0xf]
  %v4307 = vld [vmem:[%s3651 + $0xd0] sm:$0xf]
  %v4308 = vld [vmem:[%s3651 + $0xd4] sm:$0xf]
  %v4309 = vld [vmem:[%s3651 + $0xd8] sm:$0xf]
  %v4310 = vld [vmem:[%s3651 + $0xdc] sm:$0xf]
  %v4311 = vld [vmem:[%s3651 + $0xe0] sm:$0xf]
  %v4312 = vld [vmem:[%s3651 + $0xe4] sm:$0xf]
  %v4313 = vld [vmem:[%s3651 + $0xe8] sm:$0xf]
  %v4314 = vld [vmem:[%s3651 + $0xec] sm:$0xf]
  %v4315 = vld [vmem:[%s3651 + $0xf0] sm:$0xf]
  %v4316 = vld [vmem:[%s3651 + $0xf4] sm:$0xf]
  %v4377 = vunpack.c.l.b16 %v4257
  %v4378 = vunpack.c.l.b16 %v4258
  %v4379 = vunpack.c.l.b16 %v4259
  %v4380 = vunpack.c.l.b16 %v4260
  %v4381 = vunpack.c.l.b16 %v4261
  %v4382 = vunpack.c.l.b16 %v4262
  %v4383 = vunpack.c.l.b16 %v4263
  %v4384 = vunpack.c.l.b16 %v4264
  %v4385 = vunpack.c.l.b16 %v4265
  %v4386 = vunpack.c.l.b16 %v4266
  %v4387 = vunpack.c.l.b16 %v4267
  %v4388 = vunpack.c.l.b16 %v4268
  %v4389 = vunpack.c.l.b16 %v4269
  %v4390 = vunpack.c.l.b16 %v4270
  %v4391 = vunpack.c.l.b16 %v4271
  %v4392 = vunpack.c.l.b16 %v4272
  %v4393 = vunpack.c.l.b16 %v4273
  %v4394 = vunpack.c.l.b16 %v4274
  %v4395 = vunpack.c.l.b16 %v4275
  %v4396 = vunpack.c.l.b16 %v4276
  %v4397 = vunpack.c.l.b16 %v4277
  %v4398 = vunpack.c.l.b16 %v4278
  %v4399 = vunpack.c.l.b16 %v4279
  %v4400 = vunpack.c.l.b16 %v4280
  %v4401 = vunpack.c.l.b16 %v4281
  %v4402 = vunpack.c.l.b16 %v4282
  %v4403 = vunpack.c.l.b16 %v4283
  %v4404 = vunpack.c.l.b16 %v4284
  %v4405 = vunpack.c.l.b16 %v4285
  %v4406 = vunpack.c.l.b16 %v4286
  %v4407 = vunpack.c.l.b16 %v4287
  %v4408 = vunpack.c.l.b16 %v4288
  %v4409 = vunpack.c.l.b16 %v4289
  %v4410 = vunpack.c.l.b16 %v4290
  %v4411 = vunpack.c.l.b16 %v4291
  %v4412 = vunpack.c.l.b16 %v4292
  %v4413 = vunpack.c.l.b16 %v4293
  %v4414 = vunpack.c.l.b16 %v4294
  %v4415 = vunpack.c.l.b16 %v4295
  %v4416 = vunpack.c.l.b16 %v4296
  %v4417 = vunpack.c.l.b16 %v4297
  %v4418 = vunpack.c.l.b16 %v4298
  %v4419 = vunpack.c.l.b16 %v4299
  %v4420 = vunpack.c.l.b16 %v4300
  %v4421 = vunpack.c.l.b16 %v4301
  %v4422 = vunpack.c.l.b16 %v4302
  %v4423 = vunpack.c.l.b16 %v4303
  %v4424 = vunpack.c.l.b16 %v4304
  %v4425 = vunpack.c.l.b16 %v4305
  %v4426 = vunpack.c.l.b16 %v4306
  %v4427 = vunpack.c.l.b16 %v4307
  %v4428 = vunpack.c.l.b16 %v4308
  %v4429 = vunpack.c.l.b16 %v4309
  %v4430 = vunpack.c.l.b16 %v4310
  %v4431 = vunpack.c.l.b16 %v4311
  %v4432 = vunpack.c.l.b16 %v4312
  %v4433 = vunpack.c.l.b16 %v4313
  %v4434 = vunpack.c.l.b16 %v4314
  %v4435 = vunpack.c.l.b16 %v4315
  %v4436 = vunpack.c.l.b16 %v4316
  %v4437 = vpack.c.b16 %v4378, %v4377
  %v4438 = vpack.c.b16 %v4380, %v4379
  %v4439 = vpack.c.b16 %v4382, %v4381
  %v4440 = vpack.c.b16 %v4384, %v4383
  %v4441 = vpack.c.b16 %v4386, %v4385
  %v4442 = vpack.c.b16 %v4388, %v4387
  %v4443 = vpack.c.b16 %v4390, %v4389
  %v4444 = vpack.c.b16 %v4392, %v4391
  %v4445 = vpack.c.b16 %v4394, %v4393
  %v4446 = vpack.c.b16 %v4396, %v4395
  %v4447 = vpack.c.b16 %v4398, %v4397
  %v4448 = vpack.c.b16 %v4400, %v4399
  %v4449 = vpack.c.b16 %v4402, %v4401
  %v4450 = vpack.c.b16 %v4404, %v4403
  %v4451 = vpack.c.b16 %v4406, %v4405
  %v4452 = vpack.c.b16 %v4408, %v4407
  %v4453 = vpack.c.b16 %v4410, %v4409
  %v4454 = vpack.c.b16 %v4412, %v4411
  %v4455 = vpack.c.b16 %v4414, %v4413
  %v4456 = vpack.c.b16 %v4416, %v4415
  %v4457 = vpack.c.b16 %v4418, %v4417
  %v4458 = vpack.c.b16 %v4420, %v4419
  %v4459 = vpack.c.b16 %v4422, %v4421
  %v4460 = vpack.c.b16 %v4424, %v4423
  %v4461 = vpack.c.b16 %v4426, %v4425
  %v4462 = vpack.c.b16 %v4428, %v4427
  %v4463 = vpack.c.b16 %v4430, %v4429
  %v4464 = vpack.c.b16 %v4432, %v4431
  %v4465 = vpack.c.b16 %v4434, %v4433
  %v4466 = vpack.c.b16 %v4436, %v4435
  %4467 = vrot.lane.b32.xlu0 %v4437, 14
  %v4468 = vpop.permute.xlu0 %4467
  %4469 = vrot.lane.b32.xlu0 %v4438, 14
  %v4470 = vpop.permute.xlu0 %4469
  %4471 = vrot.lane.b32.xlu0 %v4439, 14
  %v4472 = vpop.permute.xlu0 %4471
  %4473 = vrot.lane.b32.xlu0 %v4440, 14
  %v4474 = vpop.permute.xlu0 %4473
  %4475 = vrot.lane.b32.xlu0 %v4441, 14
  %v4476 = vpop.permute.xlu0 %4475
  %4477 = vrot.lane.b32.xlu0 %v4442, 14
  %v4478 = vpop.permute.xlu0 %4477
  %4479 = vrot.lane.b32.xlu0 %v4443, 14
  %v4480 = vpop.permute.xlu0 %4479
  %4481 = vrot.lane.b32.xlu0 %v4444, 14
  %v4482 = vpop.permute.xlu0 %4481
  %4483 = vrot.lane.b32.xlu0 %v4445, 14
  %v4484 = vpop.permute.xlu0 %4483
  %4485 = vrot.lane.b32.xlu0 %v4446, 14
  %v4486 = vpop.permute.xlu0 %4485
  %4487 = vrot.lane.b32.xlu0 %v4447, 14
  %v4488 = vpop.permute.xlu0 %4487
  %4489 = vrot.lane.b32.xlu0 %v4448, 14
  %v4490 = vpop.permute.xlu0 %4489
  %4491 = vrot.lane.b32.xlu0 %v4449, 14
  %v4492 = vpop.permute.xlu0 %4491
  %4493 = vrot.lane.b32.xlu0 %v4450, 14
  %v4494 = vpop.permute.xlu0 %4493
  %4495 = vrot.lane.b32.xlu0 %v4451, 14
  %v4496 = vpop.permute.xlu0 %4495
  %4497 = vrot.lane.b32.xlu0 %v4452, 14
  %v4498 = vpop.permute.xlu0 %4497
  %4499 = vrot.lane.b32.xlu0 %v4453, 14
  %v4500 = vpop.permute.xlu0 %4499
  %4501 = vrot.lane.b32.xlu0 %v4454, 14
  %v4502 = vpop.permute.xlu0 %4501
  %4503 = vrot.lane.b32.xlu0 %v4455, 14
  %v4504 = vpop.permute.xlu0 %4503
  %4505 = vrot.lane.b32.xlu0 %v4456, 14
  %v4506 = vpop.permute.xlu0 %4505
  %4507 = vrot.lane.b32.xlu0 %v4457, 14
  %v4508 = vpop.permute.xlu0 %4507
  %4509 = vrot.lane.b32.xlu0 %v4458, 14
  %v4510 = vpop.permute.xlu0 %4509
  %4511 = vrot.lane.b32.xlu0 %v4459, 14
  %v4512 = vpop.permute.xlu0 %4511
  %4513 = vrot.lane.b32.xlu0 %v4460, 14
  %v4514 = vpop.permute.xlu0 %4513
  %4515 = vrot.lane.b32.xlu0 %v4461, 14
  %v4516 = vpop.permute.xlu0 %4515
  %4517 = vrot.lane.b32.xlu0 %v4462, 14
  %v4518 = vpop.permute.xlu0 %4517
  %4519 = vrot.lane.b32.xlu0 %v4463, 14
  %v4520 = vpop.permute.xlu0 %4519
  %4521 = vrot.lane.b32.xlu0 %v4464, 14
  %v4522 = vpop.permute.xlu0 %4521
  %4523 = vrot.lane.b32.xlu0 %v4465, 14
  %v4524 = vpop.permute.xlu0 %4523
  %4525 = vrot.lane.b32.xlu0 %v4466, 14
  %v4526 = vpop.permute.xlu0 %4525
  %4557 = vst.msk [vmem:[#allocation2] sm:$0xff] %vm4254, %v4468
  %4558 = vst.msk [vmem:[#allocation2 + $0x8] sm:$0xff] %vm4254, %v4470
  %4559 = vst.msk [vmem:[#allocation2 + $0x10] sm:$0xff] %vm4254, %v4472
  %4560 = vst.msk [vmem:[#allocation2 + $0x18] sm:$0xff] %vm4254, %v4474
  %4561 = vst.msk [vmem:[#allocation2 + $0x20] sm:$0xff] %vm4254, %v4476
  %4562 = vst.msk [vmem:[#allocation2 + $0x28] sm:$0xff] %vm4254, %v4478
  %4563 = vst.msk [vmem:[#allocation2 + $0x30] sm:$0xff] %vm4254, %v4480
  %4564 = vst.msk [vmem:[#allocation2 + $0x38] sm:$0xff] %vm4254, %v4482
  %4565 = vst.msk [vmem:[#allocation2 + $0x40] sm:$0xff] %vm4254, %v4484
  %4566 = vst.msk [vmem:[#allocation2 + $0x48] sm:$0xff] %vm4254, %v4486
  %4567 = vst.msk [vmem:[#allocation2 + $0x50] sm:$0xff] %vm4254, %v4488
  %4568 = vst.msk [vmem:[#allocation2 + $0x58] sm:$0xff] %vm4254, %v4490
  %4569 = vst.msk [vmem:[#allocation2 + $0x60] sm:$0xff] %vm4254, %v4492
  %4570 = vst.msk [vmem:[#allocation2 + $0x68] sm:$0xff] %vm4254, %v4494
  %4571 = vst.msk [vmem:[#allocation2 + $0x70] sm:$0xff] %vm4254, %v4496
  %4572 = vst.msk [vmem:[#allocation2 + $0x80] sm:$0xff] %vm4254, %v4498
  %4573 = vst.msk [vmem:[#allocation2 + $0x88] sm:$0xff] %vm4254, %v4500
  %4574 = vst.msk [vmem:[#allocation2 + $0x90] sm:$0xff] %vm4254, %v4502
  %4575 = vst.msk [vmem:[#allocation2 + $0x98] sm:$0xff] %vm4254, %v4504
  %4576 = vst.msk [vmem:[#allocation2 + $0xa0] sm:$0xff] %vm4254, %v4506
  %4577 = vst.msk [vmem:[#allocation2 + $0xa8] sm:$0xff] %vm4254, %v4508
  %4578 = vst.msk [vmem:[#allocation2 + $0xb0] sm:$0xff] %vm4254, %v4510
  %4579 = vst.msk [vmem:[#allocation2 + $0xb8] sm:$0xff] %vm4254, %v4512
  %4580 = vst.msk [vmem:[#allocation2 + $0xc0] sm:$0xff] %vm4254, %v4514
  %4581 = vst.msk [vmem:[#allocation2 + $0xc8] sm:$0xff] %vm4254, %v4516
  %4582 = vst.msk [vmem:[#allocation2 + $0xd0] sm:$0xff] %vm4254, %v4518
  %4583 = vst.msk [vmem:[#allocation2 + $0xd8] sm:$0xff] %vm4254, %v4520
  %4584 = vst.msk [vmem:[#allocation2 + $0xe0] sm:$0xff] %vm4254, %v4522
  %4585 = vst.msk [vmem:[#allocation2 + $0xe8] sm:$0xff] %vm4254, %v4524
  %4586 = vst.msk [vmem:[#allocation2 + $0xf0] sm:$0xff] %vm4254, %v4526
  %vm4587 = vcmask 146560
  %4588 = vst.msk [vmem:[%s3549] sm:$0xff] %vm4587, 0
  %4589 = vst.msk [vmem:[%s3549 + $0x80] sm:$0xff] %vm4587, 0
  %vm4590 = vcmask 146567
  %vm4591 = vmand %vm4590, %vm1015
  %v4592 = vld [vmem:[#allocation2] sm:$0x80]
  %v4593 = vsel %vm4591, 0, %v4592
  %4594 = vst [vmem:[#allocation2] sm:$0x80] %v4593
  %v4595 = vld [vmem:[#allocation2 + $0x8] sm:$0x80]
  %v4596 = vsel %vm4591, 0, %v4595
  %4597 = vst [vmem:[#allocation2 + $0x8] sm:$0x80] %v4596
  %v4598 = vld [vmem:[#allocation2 + $0x10] sm:$0x80]
  %v4599 = vsel %vm4591, 0, %v4598
  %4600 = vst [vmem:[#allocation2 + $0x10] sm:$0x80] %v4599
  %v4601 = vld [vmem:[#allocation2 + $0x18] sm:$0x80]
  %v4602 = vsel %vm4591, 0, %v4601
  %4603 = vst [vmem:[#allocation2 + $0x18] sm:$0x80] %v4602
  %v4604 = vld [vmem:[#allocation2 + $0x20] sm:$0x80]
  %v4605 = vsel %vm4591, 0, %v4604
  %4606 = vst [vmem:[#allocation2 + $0x20] sm:$0x80] %v4605
  %v4607 = vld [vmem:[#allocation2 + $0x28] sm:$0x80]
  %v4608 = vsel %vm4591, 0, %v4607
  %4609 = vst [vmem:[#allocation2 + $0x28] sm:$0x80] %v4608
  %v4610 = vld [vmem:[#allocation2 + $0x30] sm:$0x80]
  %v4611 = vsel %vm4591, 0, %v4610
  %4612 = vst [vmem:[#allocation2 + $0x30] sm:$0x80] %v4611
  %v4613 = vld [vmem:[#allocation2 + $0x38] sm:$0x80]
  %v4614 = vsel %vm4591, 0, %v4613
  %4615 = vst [vmem:[#allocation2 + $0x38] sm:$0x80] %v4614
  %v4616 = vld [vmem:[#allocation2 + $0x40] sm:$0x80]
  %v4617 = vsel %vm4591, 0, %v4616
  %4618 = vst [vmem:[#allocation2 + $0x40] sm:$0x80] %v4617
  %v4619 = vld [vmem:[#allocation2 + $0x48] sm:$0x80]
  %v4620 = vsel %vm4591, 0, %v4619
  %4621 = vst [vmem:[#allocation2 + $0x48] sm:$0x80] %v4620
  %v4622 = vld [vmem:[#allocation2 + $0x50] sm:$0x80]
  %v4623 = vsel %vm4591, 0, %v4622
  %4624 = vst [vmem:[#allocation2 + $0x50] sm:$0x80] %v4623
  %v4625 = vld [vmem:[#allocation2 + $0x58] sm:$0x80]
  %v4626 = vsel %vm4591, 0, %v4625
  %4627 = vst [vmem:[#allocation2 + $0x58] sm:$0x80] %v4626
  %v4628 = vld [vmem:[#allocation2 + $0x60] sm:$0x80]
  %v4629 = vsel %vm4591, 0, %v4628
  %4630 = vst [vmem:[#allocation2 + $0x60] sm:$0x80] %v4629
  %v4631 = vld [vmem:[#allocation2 + $0x68] sm:$0x80]
  %v4632 = vsel %vm4591, 0, %v4631
  %4633 = vst [vmem:[#allocation2 + $0x68] sm:$0x80] %v4632
  %v4634 = vld [vmem:[#allocation2 + $0x70] sm:$0x80]
  %v4635 = vsel %vm4591, 0, %v4634
  %4636 = vst [vmem:[#allocation2 + $0x70] sm:$0x80] %v4635
  %v4637 = vld [vmem:[#allocation2 + $0x78] sm:$0x80]
  %v4638 = vsel %vm4591, 0, %v4637
  %4639 = vst [vmem:[#allocation2 + $0x78] sm:$0x80] %v4638
  %v4640 = vld [vmem:[#allocation2 + $0x80] sm:$0x80]
  %v4641 = vsel %vm4591, 0, %v4640
  %4642 = vst [vmem:[#allocation2 + $0x80] sm:$0x80] %v4641
  %v4643 = vld [vmem:[#allocation2 + $0x88] sm:$0x80]
  %v4644 = vsel %vm4591, 0, %v4643
  %4645 = vst [vmem:[#allocation2 + $0x88] sm:$0x80] %v4644
  %v4646 = vld [vmem:[#allocation2 + $0x90] sm:$0x80]
  %v4647 = vsel %vm4591, 0, %v4646
  %4648 = vst [vmem:[#allocation2 + $0x90] sm:$0x80] %v4647
  %v4649 = vld [vmem:[#allocation2 + $0x98] sm:$0x80]
  %v4650 = vsel %vm4591, 0, %v4649
  %4651 = vst [vmem:[#allocation2 + $0x98] sm:$0x80] %v4650
  %v4652 = vld [vmem:[#allocation2 + $0xa0] sm:$0x80]
  %v4653 = vsel %vm4591, 0, %v4652
  %4654 = vst [vmem:[#allocation2 + $0xa0] sm:$0x80] %v4653
  %v4655 = vld [vmem:[#allocation2 + $0xa8] sm:$0x80]
  %v4656 = vsel %vm4591, 0, %v4655
  %4657 = vst [vmem:[#allocation2 + $0xa8] sm:$0x80] %v4656
  %v4658 = vld [vmem:[#allocation2 + $0xb0] sm:$0x80]
  %v4659 = vsel %vm4591, 0, %v4658
  %4660 = vst [vmem:[#allocation2 + $0xb0] sm:$0x80] %v4659
  %v4661 = vld [vmem:[#allocation2 + $0xb8] sm:$0x80]
  %v4662 = vsel %vm4591, 0, %v4661
  %4663 = vst [vmem:[#allocation2 + $0xb8] sm:$0x80] %v4662
  %v4664 = vld [vmem:[#allocation2 + $0xc0] sm:$0x80]
  %v4665 = vsel %vm4591, 0, %v4664
  %4666 = vst [vmem:[#allocation2 + $0xc0] sm:$0x80] %v4665
  %v4667 = vld [vmem:[#allocation2 + $0xc8] sm:$0x80]
  %v4668 = vsel %vm4591, 0, %v4667
  %4669 = vst [vmem:[#allocation2 + $0xc8] sm:$0x80] %v4668
  %v4670 = vld [vmem:[#allocation2 + $0xd0] sm:$0x80]
  %v4671 = vsel %vm4591, 0, %v4670
  %4672 = vst [vmem:[#allocation2 + $0xd0] sm:$0x80] %v4671
  %v4673 = vld [vmem:[#allocation2 + $0xd8] sm:$0x80]
  %v4674 = vsel %vm4591, 0, %v4673
  %4675 = vst [vmem:[#allocation2 + $0xd8] sm:$0x80] %v4674
  %v4676 = vld [vmem:[#allocation2 + $0xe0] sm:$0x80]
  %v4677 = vsel %vm4591, 0, %v4676
  %4678 = vst [vmem:[#allocation2 + $0xe0] sm:$0x80] %v4677
  %v4679 = vld [vmem:[#allocation2 + $0xe8] sm:$0x80]
  %v4680 = vsel %vm4591, 0, %v4679
  %4681 = vst [vmem:[#allocation2 + $0xe8] sm:$0x80] %v4680
  %v4682 = vld [vmem:[#allocation2 + $0xf0] sm:$0x80]
  %v4683 = vsel %vm4591, 0, %v4682
  %4684 = vst [vmem:[#allocation2 + $0xf0] sm:$0x80] %v4683
  %v4685 = vld [vmem:[#allocation2 + $0xf8] sm:$0x80]
  %v4686 = vsel %vm4591, 0, %v4685
  %4687 = vst [vmem:[#allocation2 + $0xf8] sm:$0x80] %v4686
  %v4688 = vld [vmem:[%s3651] sm:$0xf]
  %v4689 = vld [vmem:[%s3651 + $0x4] sm:$0xf]
  %v4690 = vld [vmem:[%s3651 + $0x8] sm:$0xf]
  %v4691 = vld [vmem:[%s3651 + $0xc] sm:$0xf]
  %v4692 = vld [vmem:[%s3651 + $0x10] sm:$0xf]
  %v4693 = vld [vmem:[%s3651 + $0x14] sm:$0xf]
  %v4694 = vld [vmem:[%s3651 + $0x18] sm:$0xf]
  %v4695 = vld [vmem:[%s3651 + $0x1c] sm:$0xf]
  %v4696 = vld [vmem:[%s3651 + $0x20] sm:$0xf]
  %v4697 = vld [vmem:[%s3651 + $0x24] sm:$0xf]
  %v4698 = vld [vmem:[%s3651 + $0x28] sm:$0xf]
  %v4699 = vld [vmem:[%s3651 + $0x2c] sm:$0xf]
  %v4700 = vld [vmem:[%s3651 + $0x30] sm:$0xf]
  %v4701 = vld [vmem:[%s3651 + $0x34] sm:$0xf]
  %v4702 = vld [vmem:[%s3651 + $0x38] sm:$0xf]
  %v4703 = vld [vmem:[%s3651 + $0x3c] sm:$0xf]
  %v4704 = vld [vmem:[%s3651 + $0x40] sm:$0xf]
  %v4705 = vld [vmem:[%s3651 + $0x44] sm:$0xf]
  %v4706 = vld [vmem:[%s3651 + $0x48] sm:$0xf]
  %v4707 = vld [vmem:[%s3651 + $0x4c] sm:$0xf]
  %v4708 = vld [vmem:[%s3651 + $0x50] sm:$0xf]
  %v4709 = vld [vmem:[%s3651 + $0x54] sm:$0xf]
  %v4710 = vld [vmem:[%s3651 + $0x58] sm:$0xf]
  %v4711 = vld [vmem:[%s3651 + $0x5c] sm:$0xf]
  %v4712 = vld [vmem:[%s3651 + $0x60] sm:$0xf]
  %v4713 = vld [vmem:[%s3651 + $0x64] sm:$0xf]
  %v4714 = vld [vmem:[%s3651 + $0x68] sm:$0xf]
  %v4715 = vld [vmem:[%s3651 + $0x6c] sm:$0xf]
  %v4716 = vld [vmem:[%s3651 + $0x70] sm:$0xf]
  %v4717 = vld [vmem:[%s3651 + $0x74] sm:$0xf]
  %v4718 = vld [vmem:[%s3651 + $0x80] sm:$0xf]
  %v4719 = vld [vmem:[%s3651 + $0x84] sm:$0xf]
  %v4720 = vld [vmem:[%s3651 + $0x88] sm:$0xf]
  %v4721 = vld [vmem:[%s3651 + $0x8c] sm:$0xf]
  %v4722 = vld [vmem:[%s3651 + $0x90] sm:$0xf]
  %v4723 = vld [vmem:[%s3651 + $0x94] sm:$0xf]
  %v4724 = vld [vmem:[%s3651 + $0x98] sm:$0xf]
  %v4725 = vld [vmem:[%s3651 + $0x9c] sm:$0xf]
  %v4726 = vld [vmem:[%s3651 + $0xa0] sm:$0xf]
  %v4727 = vld [vmem:[%s3651 + $0xa4] sm:$0xf]
  %v4728 = vld [vmem:[%s3651 + $0xa8] sm:$0xf]
  %v4729 = vld [vmem:[%s3651 + $0xac] sm:$0xf]
  %v4730 = vld [vmem:[%s3651 + $0xb0] sm:$0xf]
  %v4731 = vld [vmem:[%s3651 + $0xb4] sm:$0xf]
  %v4732 = vld [vmem:[%s3651 + $0xb8] sm:$0xf]
  %v4733 = vld [vmem:[%s3651 + $0xbc] sm:$0xf]
  %v4734 = vld [vmem:[%s3651 + $0xc0] sm:$0xf]
  %v4735 = vld [vmem:[%s3651 + $0xc4] sm:$0xf]
  %v4736 = vld [vmem:[%s3651 + $0xc8] sm:$0xf]
  %v4737 = vld [vmem:[%s3651 + $0xcc] sm:$0xf]
  %v4738 = vld [vmem:[%s3651 + $0xd0] sm:$0xf]
  %v4739 = vld [vmem:[%s3651 + $0xd4] sm:$0xf]
  %v4740 = vld [vmem:[%s3651 + $0xd8] sm:$0xf]
  %v4741 = vld [vmem:[%s3651 + $0xdc] sm:$0xf]
  %v4742 = vld [vmem:[%s3651 + $0xe0] sm:$0xf]
  %v4743 = vld [vmem:[%s3651 + $0xe4] sm:$0xf]
  %v4744 = vld [vmem:[%s3651 + $0xe8] sm:$0xf]
  %v4745 = vld [vmem:[%s3651 + $0xec] sm:$0xf]
  %v4746 = vld [vmem:[%s3651 + $0xf0] sm:$0xf]
  %v4747 = vld [vmem:[%s3651 + $0xf4] sm:$0xf]
  %v4808 = vunpack.c.l.b16 %v4688
  %v4809 = vunpack.c.l.b16 %v4689
  %v4810 = vunpack.c.l.b16 %v4690
  %v4811 = vunpack.c.l.b16 %v4691
  %v4812 = vunpack.c.l.b16 %v4692
  %v4813 = vunpack.c.l.b16 %v4693
  %v4814 = vunpack.c.l.b16 %v4694
  %v4815 = vunpack.c.l.b16 %v4695
  %v4816 = vunpack.c.l.b16 %v4696
  %v4817 = vunpack.c.l.b16 %v4697
  %v4818 = vunpack.c.l.b16 %v4698
  %v4819 = vunpack.c.l.b16 %v4699
  %v4820 = vunpack.c.l.b16 %v4700
  %v4821 = vunpack.c.l.b16 %v4701
  %v4822 = vunpack.c.l.b16 %v4702
  %v4823 = vunpack.c.l.b16 %v4703
  %v4824 = vunpack.c.l.b16 %v4704
  %v4825 = vunpack.c.l.b16 %v4705
  %v4826 = vunpack.c.l.b16 %v4706
  %v4827 = vunpack.c.l.b16 %v4707
  %v4828 = vunpack.c.l.b16 %v4708
  %v4829 = vunpack.c.l.b16 %v4709
  %v4830 = vunpack.c.l.b16 %v4710
  %v4831 = vunpack.c.l.b16 %v4711
  %v4832 = vunpack.c.l.b16 %v4712
  %v4833 = vunpack.c.l.b16 %v4713
  %v4834 = vunpack.c.l.b16 %v4714
  %v4835 = vunpack.c.l.b16 %v4715
  %v4836 = vunpack.c.l.b16 %v4716
  %v4837 = vunpack.c.l.b16 %v4717
  %v4838 = vunpack.c.l.b16 %v4718
  %v4839 = vunpack.c.l.b16 %v4719
  %v4840 = vunpack.c.l.b16 %v4720
  %v4841 = vunpack.c.l.b16 %v4721
  %v4842 = vunpack.c.l.b16 %v4722
  %v4843 = vunpack.c.l.b16 %v4723
  %v4844 = vunpack.c.l.b16 %v4724
  %v4845 = vunpack.c.l.b16 %v4725
  %v4846 = vunpack.c.l.b16 %v4726
  %v4847 = vunpack.c.l.b16 %v4727
  %v4848 = vunpack.c.l.b16 %v4728
  %v4849 = vunpack.c.l.b16 %v4729
  %v4850 = vunpack.c.l.b16 %v4730
  %v4851 = vunpack.c.l.b16 %v4731
  %v4852 = vunpack.c.l.b16 %v4732
  %v4853 = vunpack.c.l.b16 %v4733
  %v4854 = vunpack.c.l.b16 %v4734
  %v4855 = vunpack.c.l.b16 %v4735
  %v4856 = vunpack.c.l.b16 %v4736
  %v4857 = vunpack.c.l.b16 %v4737
  %v4858 = vunpack.c.l.b16 %v4738
  %v4859 = vunpack.c.l.b16 %v4739
  %v4860 = vunpack.c.l.b16 %v4740
  %v4861 = vunpack.c.l.b16 %v4741
  %v4862 = vunpack.c.l.b16 %v4742
  %v4863 = vunpack.c.l.b16 %v4743
  %v4864 = vunpack.c.l.b16 %v4744
  %v4865 = vunpack.c.l.b16 %v4745
  %v4866 = vunpack.c.l.b16 %v4746
  %v4867 = vunpack.c.l.b16 %v4747
  %v4868 = vpack.c.b16 %v4809, %v4808
  %v4869 = vpack.c.b16 %v4811, %v4810
  %v4870 = vpack.c.b16 %v4813, %v4812
  %v4871 = vpack.c.b16 %v4815, %v4814
  %v4872 = vpack.c.b16 %v4817, %v4816
  %v4873 = vpack.c.b16 %v4819, %v4818
  %v4874 = vpack.c.b16 %v4821, %v4820
  %v4875 = vpack.c.b16 %v4823, %v4822
  %v4876 = vpack.c.b16 %v4825, %v4824
  %v4877 = vpack.c.b16 %v4827, %v4826
  %v4878 = vpack.c.b16 %v4829, %v4828
  %v4879 = vpack.c.b16 %v4831, %v4830
  %v4880 = vpack.c.b16 %v4833, %v4832
  %v4881 = vpack.c.b16 %v4835, %v4834
  %v4882 = vpack.c.b16 %v4837, %v4836
  %v4883 = vpack.c.b16 %v4839, %v4838
  %v4884 = vpack.c.b16 %v4841, %v4840
  %v4885 = vpack.c.b16 %v4843, %v4842
  %v4886 = vpack.c.b16 %v4845, %v4844
  %v4887 = vpack.c.b16 %v4847, %v4846
  %v4888 = vpack.c.b16 %v4849, %v4848
  %v4889 = vpack.c.b16 %v4851, %v4850
  %v4890 = vpack.c.b16 %v4853, %v4852
  %v4891 = vpack.c.b16 %v4855, %v4854
  %v4892 = vpack.c.b16 %v4857, %v4856
  %v4893 = vpack.c.b16 %v4859, %v4858
  %v4894 = vpack.c.b16 %v4861, %v4860
  %v4895 = vpack.c.b16 %v4863, %v4862
  %v4896 = vpack.c.b16 %v4865, %v4864
  %v4897 = vpack.c.b16 %v4867, %v4866
  %v4899 = vshrl.u32 %v4868, 16
  %v4901 = vshll.u32 %v4868, 16
  %v4903 = vrot.slane %v4901, 1
  %v4904 = vor.u32 %v4899, %v4903
  %v4906 = vshrl.u32 %v4869, 16
  %v4908 = vshll.u32 %v4869, 16
  %v4910 = vrot.slane %v4908, 1
  %v4911 = vor.u32 %v4906, %v4910
  %v4913 = vshrl.u32 %v4870, 16
  %v4915 = vshll.u32 %v4870, 16
  %v4917 = vrot.slane %v4915, 1
  %v4918 = vor.u32 %v4913, %v4917
  %v4920 = vshrl.u32 %v4871, 16
  %v4922 = vshll.u32 %v4871, 16
  %v4924 = vrot.slane %v4922, 1
  %v4925 = vor.u32 %v4920, %v4924
  %v4927 = vshrl.u32 %v4872, 16
  %v4929 = vshll.u32 %v4872, 16
  %v4931 = vrot.slane %v4929, 1
  %v4932 = vor.u32 %v4927, %v4931
  %v4934 = vshrl.u32 %v4873, 16
  %v4936 = vshll.u32 %v4873, 16
  %v4938 = vrot.slane %v4936, 1
  %v4939 = vor.u32 %v4934, %v4938
  %v4941 = vshrl.u32 %v4874, 16
  %v4943 = vshll.u32 %v4874, 16
  %v4945 = vrot.slane %v4943, 1
  %v4946 = vor.u32 %v4941, %v4945
  %v4948 = vshrl.u32 %v4875, 16
  %v4950 = vshll.u32 %v4875, 16
  %v4952 = vrot.slane %v4950, 1
  %v4953 = vor.u32 %v4948, %v4952
  %v4955 = vshrl.u32 %v4876, 16
  %v4957 = vshll.u32 %v4876, 16
  %v4959 = vrot.slane %v4957, 1
  %v4960 = vor.u32 %v4955, %v4959
  %v4962 = vshrl.u32 %v4877, 16
  %v4964 = vshll.u32 %v4877, 16
  %v4966 = vrot.slane %v4964, 1
  %v4967 = vor.u32 %v4962, %v4966
  %v4969 = vshrl.u32 %v4878, 16
  %v4971 = vshll.u32 %v4878, 16
  %v4973 = vrot.slane %v4971, 1
  %v4974 = vor.u32 %v4969, %v4973
  %v4976 = vshrl.u32 %v4879, 16
  %v4978 = vshll.u32 %v4879, 16
  %v4980 = vrot.slane %v4978, 1
  %v4981 = vor.u32 %v4976, %v4980
  %v4983 = vshrl.u32 %v4880, 16
  %v4985 = vshll.u32 %v4880, 16
  %v4987 = vrot.slane %v4985, 1
  %v4988 = vor.u32 %v4983, %v4987
  %v4990 = vshrl.u32 %v4881, 16
  %v4992 = vshll.u32 %v4881, 16
  %v4994 = vrot.slane %v4992, 1
  %v4995 = vor.u32 %v4990, %v4994
  %v4997 = vshrl.u32 %v4882, 16
  %v4999 = vshll.u32 %v4882, 16
  %v5001 = vrot.slane %v4999, 1
  %v5002 = vor.u32 %v4997, %v5001
  %v5004 = vshrl.u32 %v4883, 16
  %v5006 = vshll.u32 %v4883, 16
  %v5008 = vrot.slane %v5006, 1
  %v5009 = vor.u32 %v5004, %v5008
  %v5011 = vshrl.u32 %v4884, 16
  %v5013 = vshll.u32 %v4884, 16
  %v5015 = vrot.slane %v5013, 1
  %v5016 = vor.u32 %v5011, %v5015
  %v5018 = vshrl.u32 %v4885, 16
  %v5020 = vshll.u32 %v4885, 16
  %v5022 = vrot.slane %v5020, 1
  %v5023 = vor.u32 %v5018, %v5022
  %v5025 = vshrl.u32 %v4886, 16
  %v5027 = vshll.u32 %v4886, 16
  %v5029 = vrot.slane %v5027, 1
  %v5030 = vor.u32 %v5025, %v5029
  %v5032 = vshrl.u32 %v4887, 16
  %v5034 = vshll.u32 %v4887, 16
  %v5036 = vrot.slane %v5034, 1
  %v5037 = vor.u32 %v5032, %v5036
  %v5039 = vshrl.u32 %v4888, 16
  %v5041 = vshll.u32 %v4888, 16
  %v5043 = vrot.slane %v5041, 1
  %v5044 = vor.u32 %v5039, %v5043
  %v5046 = vshrl.u32 %v4889, 16
  %v5048 = vshll.u32 %v4889, 16
  %v5050 = vrot.slane %v5048, 1
  %v5051 = vor.u32 %v5046, %v5050
  %v5053 = vshrl.u32 %v4890, 16
  %v5055 = vshll.u32 %v4890, 16
  %v5057 = vrot.slane %v5055, 1
  %v5058 = vor.u32 %v5053, %v5057
  %v5060 = vshrl.u32 %v4891, 16
  %v5062 = vshll.u32 %v4891, 16
  %v5064 = vrot.slane %v5062, 1
  %v5065 = vor.u32 %v5060, %v5064
  %v5067 = vshrl.u32 %v4892, 16
  %v5069 = vshll.u32 %v4892, 16
  %v5071 = vrot.slane %v5069, 1
  %v5072 = vor.u32 %v5067, %v5071
  %v5074 = vshrl.u32 %v4893, 16
  %v5076 = vshll.u32 %v4893, 16
  %v5078 = vrot.slane %v5076, 1
  %v5079 = vor.u32 %v5074, %v5078
  %v5081 = vshrl.u32 %v4894, 16
  %v5083 = vshll.u32 %v4894, 16
  %v5085 = vrot.slane %v5083, 1
  %v5086 = vor.u32 %v5081, %v5085
  %v5088 = vshrl.u32 %v4895, 16
  %v5090 = vshll.u32 %v4895, 16
  %v5092 = vrot.slane %v5090, 1
  %v5093 = vor.u32 %v5088, %v5092
  %v5095 = vshrl.u32 %v4896, 16
  %v5097 = vshll.u32 %v4896, 16
  %v5099 = vrot.slane %v5097, 1
  %v5100 = vor.u32 %v5095, %v5099
  %v5102 = vshrl.u32 %v4897, 16
  %v5104 = vshll.u32 %v4897, 16
  %v5106 = vrot.slane %v5104, 1
  %v5107 = vor.u32 %v5102, %v5106
  %5108 = vrot.lane.b32.xlu0 %v4904, 16
  %v5109 = vpop.permute.xlu0 %5108
  %5110 = vrot.lane.b32.xlu0 %v4911, 16
  %v5111 = vpop.permute.xlu0 %5110
  %5112 = vrot.lane.b32.xlu0 %v4918, 16
  %v5113 = vpop.permute.xlu0 %5112
  %5114 = vrot.lane.b32.xlu0 %v4925, 16
  %v5115 = vpop.permute.xlu0 %5114
  %5116 = vrot.lane.b32.xlu0 %v4932, 16
  %v5117 = vpop.permute.xlu0 %5116
  %5118 = vrot.lane.b32.xlu0 %v4939, 16
  %v5119 = vpop.permute.xlu0 %5118
  %5120 = vrot.lane.b32.xlu0 %v4946, 16
  %v5121 = vpop.permute.xlu0 %5120
  %5122 = vrot.lane.b32.xlu0 %v4953, 16
  %v5123 = vpop.permute.xlu0 %5122
  %5124 = vrot.lane.b32.xlu0 %v4960, 16
  %v5125 = vpop.permute.xlu0 %5124
  %5126 = vrot.lane.b32.xlu0 %v4967, 16
  %v5127 = vpop.permute.xlu0 %5126
  %5128 = vrot.lane.b32.xlu0 %v4974, 16
  %v5129 = vpop.permute.xlu0 %5128
  %5130 = vrot.lane.b32.xlu0 %v4981, 16
  %v5131 = vpop.permute.xlu0 %5130
  %5132 = vrot.lane.b32.xlu0 %v4988, 16
  %v5133 = vpop.permute.xlu0 %5132
  %5134 = vrot.lane.b32.xlu0 %v4995, 16
  %v5135 = vpop.permute.xlu0 %5134
  %5136 = vrot.lane.b32.xlu0 %v5002, 16
  %v5137 = vpop.permute.xlu0 %5136
  %5138 = vrot.lane.b32.xlu0 %v5009, 16
  %v5139 = vpop.permute.xlu0 %5138
  %5140 = vrot.lane.b32.xlu0 %v5016, 16
  %v5141 = vpop.permute.xlu0 %5140
  %5142 = vrot.lane.b32.xlu0 %v5023, 16
  %v5143 = vpop.permute.xlu0 %5142
  %5144 = vrot.lane.b32.xlu0 %v5030, 16
  %v5145 = vpop.permute.xlu0 %5144
  %5146 = vrot.lane.b32.xlu0 %v5037, 16
  %v5147 = vpop.permute.xlu0 %5146
  %5148 = vrot.lane.b32.xlu0 %v5044, 16
  %v5149 = vpop.permute.xlu0 %5148
  %5150 = vrot.lane.b32.xlu0 %v5051, 16
  %v5151 = vpop.permute.xlu0 %5150
  %5152 = vrot.lane.b32.xlu0 %v5058, 16
  %v5153 = vpop.permute.xlu0 %5152
  %5154 = vrot.lane.b32.xlu0 %v5065, 16
  %v5155 = vpop.permute.xlu0 %5154
  %5156 = vrot.lane.b32.xlu0 %v5072, 16
  %v5157 = vpop.permute.xlu0 %5156
  %5158 = vrot.lane.b32.xlu0 %v5079, 16
  %v5159 = vpop.permute.xlu0 %5158
  %5160 = vrot.lane.b32.xlu0 %v5086, 16
  %v5161 = vpop.permute.xlu0 %5160
  %5162 = vrot.lane.b32.xlu0 %v5093, 16
  %v5163 = vpop.permute.xlu0 %5162
  %5164 = vrot.lane.b32.xlu0 %v5100, 16
  %v5165 = vpop.permute.xlu0 %5164
  %5166 = vrot.lane.b32.xlu0 %v5107, 16
  %v5167 = vpop.permute.xlu0 %5166
  %vm5198 = vcmask 146560
  %vm5199 = vmand %vm5198, %vm1624
  %v5200 = vld [vmem:[#allocation2] sm:$0xff]
  %v5201 = vsel %vm5199, %v5109, %v5200
  %5202 = vst [vmem:[#allocation2] sm:$0xff] %v5201
  %v5203 = vld [vmem:[#allocation2 + $0x8] sm:$0xff]
  %v5204 = vsel %vm5199, %v5111, %v5203
  %5205 = vst [vmem:[#allocation2 + $0x8] sm:$0xff] %v5204
  %v5206 = vld [vmem:[#allocation2 + $0x10] sm:$0xff]
  %v5207 = vsel %vm5199, %v5113, %v5206
  %5208 = vst [vmem:[#allocation2 + $0x10] sm:$0xff] %v5207
  %v5209 = vld [vmem:[#allocation2 + $0x18] sm:$0xff]
  %v5210 = vsel %vm5199, %v5115, %v5209
  %5211 = vst [vmem:[#allocation2 + $0x18] sm:$0xff] %v5210
  %v5212 = vld [vmem:[#allocation2 + $0x20] sm:$0xff]
  %v5213 = vsel %vm5199, %v5117, %v5212
  %5214 = vst [vmem:[#allocation2 + $0x20] sm:$0xff] %v5213
  %v5215 = vld [vmem:[#allocation2 + $0x28] sm:$0xff]
  %v5216 = vsel %vm5199, %v5119, %v5215
  %5217 = vst [vmem:[#allocation2 + $0x28] sm:$0xff] %v5216
  %v5218 = vld [vmem:[#allocation2 + $0x30] sm:$0xff]
  %v5219 = vsel %vm5199, %v5121, %v5218
  %5220 = vst [vmem:[#allocation2 + $0x30] sm:$0xff] %v5219
  %v5221 = vld [vmem:[#allocation2 + $0x38] sm:$0xff]
  %v5222 = vsel %vm5199, %v5123, %v5221
  %5223 = vst [vmem:[#allocation2 + $0x38] sm:$0xff] %v5222
  %v5224 = vld [vmem:[#allocation2 + $0x40] sm:$0xff]
  %v5225 = vsel %vm5199, %v5125, %v5224
  %5226 = vst [vmem:[#allocation2 + $0x40] sm:$0xff] %v5225
  %v5227 = vld [vmem:[#allocation2 + $0x48] sm:$0xff]
  %v5228 = vsel %vm5199, %v5127, %v5227
  %5229 = vst [vmem:[#allocation2 + $0x48] sm:$0xff] %v5228
  %v5230 = vld [vmem:[#allocation2 + $0x50] sm:$0xff]
  %v5231 = vsel %vm5199, %v5129, %v5230
  %5232 = vst [vmem:[#allocation2 + $0x50] sm:$0xff] %v5231
  %v5233 = vld [vmem:[#allocation2 + $0x58] sm:$0xff]
  %v5234 = vsel %vm5199, %v5131, %v5233
  %5235 = vst [vmem:[#allocation2 + $0x58] sm:$0xff] %v5234
  %v5236 = vld [vmem:[#allocation2 + $0x60] sm:$0xff]
  %v5237 = vsel %vm5199, %v5133, %v5236
  %5238 = vst [vmem:[#allocation2 + $0x60] sm:$0xff] %v5237
  %v5239 = vld [vmem:[#allocation2 + $0x68] sm:$0xff]
  %v5240 = vsel %vm5199, %v5135, %v5239
  %5241 = vst [vmem:[#allocation2 + $0x68] sm:$0xff] %v5240
  %v5242 = vld [vmem:[#allocation2 + $0x70] sm:$0xff]
  %v5243 = vsel %vm5199, %v5137, %v5242
  %5244 = vst [vmem:[#allocation2 + $0x70] sm:$0xff] %v5243
  %v5245 = vld [vmem:[#allocation2 + $0x80] sm:$0xff]
  %v5246 = vsel %vm5199, %v5139, %v5245
  %5247 = vst [vmem:[#allocation2 + $0x80] sm:$0xff] %v5246
  %v5248 = vld [vmem:[#allocation2 + $0x88] sm:$0xff]
  %v5249 = vsel %vm5199, %v5141, %v5248
  %5250 = vst [vmem:[#allocation2 + $0x88] sm:$0xff] %v5249
  %v5251 = vld [vmem:[#allocation2 + $0x90] sm:$0xff]
  %v5252 = vsel %vm5199, %v5143, %v5251
  %5253 = vst [vmem:[#allocation2 + $0x90] sm:$0xff] %v5252
  %v5254 = vld [vmem:[#allocation2 + $0x98] sm:$0xff]
  %v5255 = vsel %vm5199, %v5145, %v5254
  %5256 = vst [vmem:[#allocation2 + $0x98] sm:$0xff] %v5255
  %v5257 = vld [vmem:[#allocation2 + $0xa0] sm:$0xff]
  %v5258 = vsel %vm5199, %v5147, %v5257
  %5259 = vst [vmem:[#allocation2 + $0xa0] sm:$0xff] %v5258
  %v5260 = vld [vmem:[#allocation2 + $0xa8] sm:$0xff]
  %v5261 = vsel %vm5199, %v5149, %v5260
  %5262 = vst [vmem:[#allocation2 + $0xa8] sm:$0xff] %v5261
  %v5263 = vld [vmem:[#allocation2 + $0xb0] sm:$0xff]
  %v5264 = vsel %vm5199, %v5151, %v5263
  %5265 = vst [vmem:[#allocation2 + $0xb0] sm:$0xff] %v5264
  %v5266 = vld [vmem:[#allocation2 + $0xb8] sm:$0xff]
  %v5267 = vsel %vm5199, %v5153, %v5266
  %5268 = vst [vmem:[#allocation2 + $0xb8] sm:$0xff] %v5267
  %v5269 = vld [vmem:[#allocation2 + $0xc0] sm:$0xff]
  %v5270 = vsel %vm5199, %v5155, %v5269
  %5271 = vst [vmem:[#allocation2 + $0xc0] sm:$0xff] %v5270
  %v5272 = vld [vmem:[#allocation2 + $0xc8] sm:$0xff]
  %v5273 = vsel %vm5199, %v5157, %v5272
  %5274 = vst [vmem:[#allocation2 + $0xc8] sm:$0xff] %v5273
  %v5275 = vld [vmem:[#allocation2 + $0xd0] sm:$0xff]
  %v5276 = vsel %vm5199, %v5159, %v5275
  %5277 = vst [vmem:[#allocation2 + $0xd0] sm:$0xff] %v5276
  %v5278 = vld [vmem:[#allocation2 + $0xd8] sm:$0xff]
  %v5279 = vsel %vm5199, %v5161, %v5278
  %5280 = vst [vmem:[#allocation2 + $0xd8] sm:$0xff] %v5279
  %v5281 = vld [vmem:[#allocation2 + $0xe0] sm:$0xff]
  %v5282 = vsel %vm5199, %v5163, %v5281
  %5283 = vst [vmem:[#allocation2 + $0xe0] sm:$0xff] %v5282
  %v5284 = vld [vmem:[#allocation2 + $0xe8] sm:$0xff]
  %v5285 = vsel %vm5199, %v5165, %v5284
  %5286 = vst [vmem:[#allocation2 + $0xe8] sm:$0xff] %v5285
  %v5287 = vld [vmem:[#allocation2 + $0xf0] sm:$0xff]
  %v5288 = vsel %vm5199, %v5167, %v5287
  %5289 = vst [vmem:[#allocation2 + $0xf0] sm:$0xff] %v5288
  %v5290 = vld [vmem:[#allocation2] sm:$0xff]
  %v5291 = vld [vmem:[#allocation2 + $0x8] sm:$0xff]
  %v5292 = vld [vmem:[#allocation2 + $0x10] sm:$0xff]
  %v5293 = vld [vmem:[#allocation2 + $0x18] sm:$0xff]
  %v5294 = vld [vmem:[#allocation2 + $0x20] sm:$0xff]
  %v5295 = vld [vmem:[#allocation2 + $0x28] sm:$0xff]
  %v5296 = vld [vmem:[#allocation2 + $0x30] sm:$0xff]
  %v5297 = vld [vmem:[#allocation2 + $0x38] sm:$0xff]
  %v5298 = vld [vmem:[#allocation2 + $0x40] sm:$0xff]
  %v5299 = vld [vmem:[#allocation2 + $0x48] sm:$0xff]
  %v5300 = vld [vmem:[#allocation2 + $0x50] sm:$0xff]
  %v5301 = vld [vmem:[#allocation2 + $0x58] sm:$0xff]
  %v5302 = vld [vmem:[#allocation2 + $0x60] sm:$0xff]
  %v5303 = vld [vmem:[#allocation2 + $0x68] sm:$0xff]
  %v5304 = vld [vmem:[#allocation2 + $0x70] sm:$0xff]
  %v5305 = vld [vmem:[#allocation2 + $0x78] sm:$0xff]
  %v5306 = vld [vmem:[#allocation2 + $0x80] sm:$0xff]
  %v5307 = vld [vmem:[#allocation2 + $0x88] sm:$0xff]
  %v5308 = vld [vmem:[#allocation2 + $0x90] sm:$0xff]
  %v5309 = vld [vmem:[#allocation2 + $0x98] sm:$0xff]
  %v5310 = vld [vmem:[#allocation2 + $0xa0] sm:$0xff]
  %v5311 = vld [vmem:[#allocation2 + $0xa8] sm:$0xff]
  %v5312 = vld [vmem:[#allocation2 + $0xb0] sm:$0xff]
  %v5313 = vld [vmem:[#allocation2 + $0xb8] sm:$0xff]
  %v5314 = vld [vmem:[#allocation2 + $0xc0] sm:$0xff]
  %v5315 = vld [vmem:[#allocation2 + $0xc8] sm:$0xff]
  %v5316 = vld [vmem:[#allocation2 + $0xd0] sm:$0xff]
  %v5317 = vld [vmem:[#allocation2 + $0xd8] sm:$0xff]
  %v5318 = vld [vmem:[#allocation2 + $0xe0] sm:$0xff]
  %v5319 = vld [vmem:[#allocation2 + $0xe8] sm:$0xff]
  %v5320 = vld [vmem:[#allocation2 + $0xf0] sm:$0xff]
  %v5321 = vld [vmem:[#allocation2 + $0xf8] sm:$0xff]
  %v5322 = vld [vmem:[%s2] sm:$0xf]
  %v5323 = vld [vmem:[%s2 + $0x4] sm:$0xf]
  %v5324 = vld [vmem:[%s2 + $0x8] sm:$0x1]
  %v5328 = vunpack.c.l.b16 %v5322
  %v5329 = vunpack.c.l.b16 %v5323
  %v5330 = vunpack.c.l.b16 %v5324
  %v5331 = vpack.c.b16 %v5329, %v5328
  %v5332 = vpack.c.b16 %v5330, %v5330
  %vm5334 = vcmask 146432
  %v5336 = vsel %vm5334, %v5290, 0
  %v5339 = vsel %vm5334, %v5291, 0
  %v5342 = vsel %vm5334, %v5292, 0
  %v5345 = vsel %vm5334, %v5293, 0
  %v5348 = vsel %vm5334, %v5294, 0
  %v5351 = vsel %vm5334, %v5295, 0
  %v5354 = vsel %vm5334, %v5296, 0
  %v5357 = vsel %vm5334, %v5297, 0
  %v5360 = vsel %vm5334, %v5298, 0
  %v5363 = vsel %vm5334, %v5299, 0
  %v5366 = vsel %vm5334, %v5300, 0
  %v5369 = vsel %vm5334, %v5301, 0
  %v5372 = vsel %vm5334, %v5302, 0
  %v5375 = vsel %vm5334, %v5303, 0
  %v5378 = vsel %vm5334, %v5304, 0
  %v5381 = vsel %vm5334, %v5305, 0
  %v5384 = vsel %vm5334, %v5306, 0
  %v5387 = vsel %vm5334, %v5307, 0
  %v5390 = vsel %vm5334, %v5308, 0
  %v5393 = vsel %vm5334, %v5309, 0
  %v5396 = vsel %vm5334, %v5310, 0
  %v5399 = vsel %vm5334, %v5311, 0
  %v5402 = vsel %vm5334, %v5312, 0
  %v5405 = vsel %vm5334, %v5313, 0
  %v5408 = vsel %vm5334, %v5314, 0
  %v5411 = vsel %vm5334, %v5315, 0
  %v5414 = vsel %vm5334, %v5316, 0
  %v5417 = vsel %vm5334, %v5317, 0
  %v5420 = vsel %vm5334, %v5318, 0
  %v5423 = vsel %vm5334, %v5319, 0
  %v5426 = vsel %vm5334, %v5320, 0
  %v5429 = vsel %vm5334, %v5321, 0
  %vm5431 = vcmask 1040384
  %v5433 = vsel %vm5431, %v5332, 0
  %5435 = vmatprep.subr.bf16.mxu0 0
  %5436 = vmatpush1.bf16.msra.mxu0 %v5331
  %5437 = vmatprep.subr.bf16.mxu0 0
  %5438 = vmatpush1.bf16.msra.mxu0 %v5433
  %5439 = vmatprep.subr.bf16.mxu0 0
  %5440 = vmatpush1.bf16.msra.mxu0 0
  %5441 = vmatprep.subr.bf16.mxu0 0
  %5442 = vmatpush1.bf16.msra.mxu0 0
  %5443 = vmatprep.subr.bf16.mxu0 0
  %5444 = vmatpush1.bf16.msra.mxu0 0
  %5445 = vmatprep.subr.bf16.mxu0 0
  %5446 = vmatpush1.bf16.msra.mxu0 0
  %5447 = vmatprep.subr.bf16.mxu0 0
  %5448 = vmatpush1.bf16.msra.mxu0 0
  %5449 = vmatprep.subr.bf16.mxu0 0
  %5450 = vmatpush1.bf16.msra.mxu0 0
  %5451 = vmatprep.subr.bf16.mxu0 0
  %5452 = vmatpush1.bf16.msra.mxu0 0
  %5453 = vmatprep.subr.bf16.mxu0 0
  %5454 = vmatpush1.bf16.msra.mxu0 0
  %5455 = vmatprep.subr.bf16.mxu0 0
  %5456 = vmatpush1.bf16.msra.mxu0 0
  %5457 = vmatprep.subr.bf16.mxu0 0
  %5458 = vmatpush1.bf16.msra.mxu0 0
  %5459 = vmatprep.subr.bf16.mxu0 0
  %5460 = vmatpush1.bf16.msra.mxu0 0
  %5461 = vmatprep.subr.bf16.mxu0 0
  %5462 = vmatpush1.bf16.msra.mxu0 0
  %5463 = vmatprep.subr.bf16.mxu0 0
  %5464 = vmatpush1.bf16.msra.mxu0 0
  %5465 = vmatprep.subr.bf16.mxu0 0
  %5466 = vmatpush1.bf16.msra.mxu0 0
  %5467 = vmatprep.mubr.bf16.mxu0 0
  %5468 = vmatmul.mubr.bf16.gmra.mrb[0].mxu0 %v5336
  %v5469 = vpop.f32.mrb[0].mxu0
  %v5470 = vadd.f32 0.0, %v5469
  %v5471 = vpop.f32.mrb[0].mxu0
  %v5472 = vpop.f32.mrb[0].mxu0
  %v5473 = vadd.f32 0.0, %v5472
  %v5474 = vpop.f32.mrb[0].mxu0
  %5475 = vmatprep.mubr.bf16.mxu0 0
  %5476 = vmatmul.mubr.bf16.gmra.mrb[0].mxu0 %v5339
  %v5477 = vpop.f32.mrb[0].mxu0
  %v5478 = vadd.f32 0.0, %v5477
  %v5479 = vpop.f32.mrb[0].mxu0
  %v5480 = vpop.f32.mrb[0].mxu0
  %v5481 = vadd.f32 0.0, %v5480
  %v5482 = vpop.f32.mrb[0].mxu0
  %5483 = vmatprep.mubr.bf16.mxu0 0
  %5484 = vmatmul.mubr.bf16.gmra.mrb[0].mxu0 %v5342
  %v5485 = vpop.f32.mrb[0].mxu0
  %v5486 = vadd.f32 0.0, %v5485
  %v5487 = vpop.f32.mrb[0].mxu0
  %v5488 = vpop.f32.mrb[0].mxu0
  %v5489 = vadd.f32 0.0, %v5488
  %v5490 = vpop.f32.mrb[0].mxu0
  %5491 = vmatprep.mubr.bf16.mxu0 0
  %5492 = vmatmul.mubr.bf16.gmra.mrb[0].mxu0 %v5345
  %v5493 = vpop.f32.mrb[0].mxu0
  %v5494 = vadd.f32 0.0, %v5493
  %v5495 = vpop.f32.mrb[0].mxu0
  %v5496 = vpop.f32.mrb[0].mxu0
  %v5497 = vadd.f32 0.0, %v5496
  %v5498 = vpop.f32.mrb[0].mxu0
  %5499 = vmatprep.mubr.bf16.mxu0 0
  %5500 = vmatmul.mubr.bf16.gmra.mrb[0].mxu0 %v5348
  %v5501 = vpop.f32.mrb[0].mxu0
  %v5502 = vadd.f32 0.0, %v5501
  %v5503 = vpop.f32.mrb[0].mxu0
  %v5504 = vpop.f32.mrb[0].mxu0
  %v5505 = vadd.f32 0.0, %v5504
  %v5506 = vpop.f32.mrb[0].mxu0
  %5507 = vmatprep.mubr.bf16.mxu0 0
  %5508 = vmatmul.mubr.bf16.gmra.mrb[0].mxu0 %v5351
  %v5509 = vpop.f32.mrb[0].mxu0
  %v5510 = vadd.f32 0.0, %v5509
  %v5511 = vpop.f32.mrb[0].mxu0
  %v5512 = vpop.f32.mrb[0].mxu0
  %v5513 = vadd.f32 0.0, %v5512
  %v5514 = vpop.f32.mrb[0].mxu0
  %5515 = vmatprep.mubr.bf16.mxu0 0
  %5516 = vmatmul.mubr.bf16.gmra.mrb[0].mxu0 %v5354
  %v5517 = vpop.f32.mrb[0].mxu0
  %v5518 = vadd.f32 0.0, %v5517
  %v5519 = vpop.f32.mrb[0].mxu0
  %v5520 = vpop.f32.mrb[0].mxu0
  %v5521 = vadd.f32 0.0, %v5520
  %v5522 = vpop.f32.mrb[0].mxu0
  %5523 = vmatprep.mubr.bf16.mxu0 0
  %5524 = vmatmul.mubr.bf16.gmra.mrb[0].mxu0 %v5357
  %v5525 = vpop.f32.mrb[0].mxu0
  %v5526 = vadd.f32 0.0, %v5525
  %v5527 = vpop.f32.mrb[0].mxu0
  %v5528 = vpop.f32.mrb[0].mxu0
  %v5529 = vadd.f32 0.0, %v5528
  %v5530 = vpop.f32.mrb[0].mxu0
  %5531 = vmatprep.mubr.bf16.mxu0 0
  %5532 = vmatmul.mubr.bf16.gmra.mrb[0].mxu0 %v5360
  %v5533 = vpop.f32.mrb[0].mxu0
  %v5534 = vadd.f32 0.0, %v5533
  %v5535 = vpop.f32.mrb[0].mxu0
  %v5536 = vpop.f32.mrb[0].mxu0
  %v5537 = vadd.f32 0.0, %v5536
  %v5538 = vpop.f32.mrb[0].mxu0
  %5539 = vmatprep.mubr.bf16.mxu0 0
  %5540 = vmatmul.mubr.bf16.gmra.mrb[0].mxu0 %v5363
  %v5541 = vpop.f32.mrb[0].mxu0
  %v5542 = vadd.f32 0.0, %v5541
  %v5543 = vpop.f32.mrb[0].mxu0
  %v5544 = vpop.f32.mrb[0].mxu0
  %v5545 = vadd.f32 0.0, %v5544
  %v5546 = vpop.f32.mrb[0].mxu0
  %5547 = vmatprep.mubr.bf16.mxu0 0
  %5548 = vmatmul.mubr.bf16.gmra.mrb[0].mxu0 %v5366
  %v5549 = vpop.f32.mrb[0].mxu0
  %v5550 = vadd.f32 0.0, %v5549
  %v5551 = vpop.f32.mrb[0].mxu0
  %v5552 = vpop.f32.mrb[0].mxu0
  %v5553 = vadd.f32 0.0, %v5552
  %v5554 = vpop.f32.mrb[0].mxu0
  %5555 = vmatprep.mubr.bf16.mxu0 0
  %5556 = vmatmul.mubr.bf16.gmra.mrb[0].mxu0 %v5369
  %v5557 = vpop.f32.mrb[0].mxu0
  %v5558 = vadd.f32 0.0, %v5557
  %v5559 = vpop.f32.mrb[0].mxu0
  %v5560 = vpop.f32.mrb[0].mxu0
  %v5561 = vadd.f32 0.0, %v5560
  %v5562 = vpop.f32.mrb[0].mxu0
  %5563 = vmatprep.mubr.bf16.mxu0 0
  %5564 = vmatmul.mubr.bf16.gmra.mrb[0].mxu0 %v5372
  %v5565 = vpop.f32.mrb[0].mxu0
  %v5566 = vadd.f32 0.0, %v5565
  %v5567 = vpop.f32.mrb[0].mxu0
  %v5568 = vpop.f32.mrb[0].mxu0
  %v5569 = vadd.f32 0.0, %v5568
  %v5570 = vpop.f32.mrb[0].mxu0
  %5571 = vmatprep.mubr.bf16.mxu0 0
  %5572 = vmatmul.mubr.bf16.gmra.mrb[0].mxu0 %v5375
  %v5573 = vpop.f32.mrb[0].mxu0
  %v5574 = vadd.f32 0.0, %v5573
  %v5575 = vpop.f32.mrb[0].mxu0
  %v5576 = vpop.f32.mrb[0].mxu0
  %v5577 = vadd.f32 0.0, %v5576
  %v5578 = vpop.f32.mrb[0].mxu0
  %5579 = vmatprep.mubr.bf16.mxu0 0
  %5580 = vmatmul.mubr.bf16.gmra.mrb[0].mxu0 %v5378
  %v5581 = vpop.f32.mrb[0].mxu0
  %v5582 = vadd.f32 0.0, %v5581
  %v5583 = vpop.f32.mrb[0].mxu0
  %v5584 = vpop.f32.mrb[0].mxu0
  %v5585 = vadd.f32 0.0, %v5584
  %v5586 = vpop.f32.mrb[0].mxu0
  %5587 = vmatprep.mubr.bf16.mxu0 0
  %5588 = vmatmul.mubr.bf16.gmra.mrb[0].mxu0 %v5381
  %v5589 = vpop.f32.mrb[0].mxu0
  %v5590 = vadd.f32 0.0, %v5589
  %v5591 = vpop.f32.mrb[0].mxu0
  %v5592 = vpop.f32.mrb[0].mxu0
  %v5593 = vadd.f32 0.0, %v5592
  %v5594 = vpop.f32.mrb[0].mxu0
  %5595 = vmatprep.mubr.bf16.mxu0 0
  %5596 = vmatmul.mubr.bf16.gmra.mrb[0].mxu0 %v5384
  %v5597 = vpop.f32.mrb[0].mxu0
  %v5598 = vadd.f32 0.0, %v5597
  %v5599 = vpop.f32.mrb[0].mxu0
  %v5600 = vpop.f32.mrb[0].mxu0
  %v5601 = vadd.f32 0.0, %v5600
  %v5602 = vpop.f32.mrb[0].mxu0
  %5603 = vmatprep.mubr.bf16.mxu0 0
  %5604 = vmatmul.mubr.bf16.gmra.mrb[0].mxu0 %v5387
  %v5605 = vpop.f32.mrb[0].mxu0
  %v5606 = vadd.f32 0.0, %v5605
  %v5607 = vpop.f32.mrb[0].mxu0
  %v5608 = vpop.f32.mrb[0].mxu0
  %v5609 = vadd.f32 0.0, %v5608
  %v5610 = vpop.f32.mrb[0].mxu0
  %5611 = vmatprep.mubr.bf16.mxu0 0
  %5612 = vmatmul.mubr.bf16.gmra.mrb[0].mxu0 %v5390
  %v5613 = vpop.f32.mrb[0].mxu0
  %v5614 = vadd.f32 0.0, %v5613
  %v5615 = vpop.f32.mrb[0].mxu0
  %v5616 = vpop.f32.mrb[0].mxu0
  %v5617 = vadd.f32 0.0, %v5616
  %v5618 = vpop.f32.mrb[0].mxu0
  %5619 = vmatprep.mubr.bf16.mxu0 0
  %5620 = vmatmul.mubr.bf16.gmra.mrb[0].mxu0 %v5393
  %v5621 = vpop.f32.mrb[0].mxu0
  %v5622 = vadd.f32 0.0, %v5621
  %v5623 = vpop.f32.mrb[0].mxu0
  %v5624 = vpop.f32.mrb[0].mxu0
  %v5625 = vadd.f32 0.0, %v5624
  %v5626 = vpop.f32.mrb[0].mxu0
  %5627 = vmatprep.mubr.bf16.mxu0 0
  %5628 = vmatmul.mubr.bf16.gmra.mrb[0].mxu0 %v5396
  %v5629 = vpop.f32.mrb[0].mxu0
  %v5630 = vadd.f32 0.0, %v5629
  %v5631 = vpop.f32.mrb[0].mxu0
  %v5632 = vpop.f32.mrb[0].mxu0
  %v5633 = vadd.f32 0.0, %v5632
  %v5634 = vpop.f32.mrb[0].mxu0
  %5635 = vmatprep.mubr.bf16.mxu0 0
  %5636 = vmatmul.mubr.bf16.gmra.mrb[0].mxu0 %v5399
  %v5637 = vpop.f32.mrb[0].mxu0
  %v5638 = vadd.f32 0.0, %v5637
  %v5639 = vpop.f32.mrb[0].mxu0
  %v5640 = vpop.f32.mrb[0].mxu0
  %v5641 = vadd.f32 0.0, %v5640
  %v5642 = vpop.f32.mrb[0].mxu0
  %5643 = vmatprep.mubr.bf16.mxu0 0
  %5644 = vmatmul.mubr.bf16.gmra.mrb[0].mxu0 %v5402
  %v5645 = vpop.f32.mrb[0].mxu0
  %v5646 = vadd.f32 0.0, %v5645
  %v5647 = vpop.f32.mrb[0].mxu0
  %v5648 = vpop.f32.mrb[0].mxu0
  %v5649 = vadd.f32 0.0, %v5648
  %v5650 = vpop.f32.mrb[0].mxu0
  %5651 = vmatprep.mubr.bf16.mxu0 0
  %5652 = vmatmul.mubr.bf16.gmra.mrb[0].mxu0 %v5405
  %v5653 = vpop.f32.mrb[0].mxu0
  %v5654 = vadd.f32 0.0, %v5653
  %v5655 = vpop.f32.mrb[0].mxu0
  %v5656 = vpop.f32.mrb[0].mxu0
  %v5657 = vadd.f32 0.0, %v5656
  %v5658 = vpop.f32.mrb[0].mxu0
  %5659 = vmatprep.mubr.bf16.mxu0 0
  %5660 = vmatmul.mubr.bf16.gmra.mrb[0].mxu0 %v5408
  %v5661 = vpop.f32.mrb[0].mxu0
  %v5662 = vadd.f32 0.0, %v5661
  %v5663 = vpop.f32.mrb[0].mxu0
  %v5664 = vpop.f32.mrb[0].mxu0
  %v5665 = vadd.f32 0.0, %v5664
  %v5666 = vpop.f32.mrb[0].mxu0
  %5667 = vmatprep.mubr.bf16.mxu0 0
  %5668 = vmatmul.mubr.bf16.gmra.mrb[0].mxu0 %v5411
  %v5669 = vpop.f32.mrb[0].mxu0
  %v5670 = vadd.f32 0.0, %v5669
  %v5671 = vpop.f32.mrb[0].mxu0
  %v5672 = vpop.f32.mrb[0].mxu0
  %v5673 = vadd.f32 0.0, %v5672
  %v5674 = vpop.f32.mrb[0].mxu0
  %5675 = vmatprep.mubr.bf16.mxu0 0
  %5676 = vmatmul.mubr.bf16.gmra.mrb[0].mxu0 %v5414
  %v5677 = vpop.f32.mrb[0].mxu0
  %v5678 = vadd.f32 0.0, %v5677
  %v5679 = vpop.f32.mrb[0].mxu0
  %v5680 = vpop.f32.mrb[0].mxu0
  %v5681 = vadd.f32 0.0, %v5680
  %v5682 = vpop.f32.mrb[0].mxu0
  %5683 = vmatprep.mubr.bf16.mxu0 0
  %5684 = vmatmul.mubr.bf16.gmra.mrb[0].mxu0 %v5417
  %v5685 = vpop.f32.mrb[0].mxu0
  %v5686 = vadd.f32 0.0, %v5685
  %v5687 = vpop.f32.mrb[0].mxu0
  %v5688 = vpop.f32.mrb[0].mxu0
  %v5689 = vadd.f32 0.0, %v5688
  %v5690 = vpop.f32.mrb[0].mxu0
  %5691 = vmatprep.mubr.bf16.mxu0 0
  %5692 = vmatmul.mubr.bf16.gmra.mrb[0].mxu0 %v5420
  %v5693 = vpop.f32.mrb[0].mxu0
  %v5694 = vadd.f32 0.0, %v5693
  %v5695 = vpop.f32.mrb[0].mxu0
  %v5696 = vpop.f32.mrb[0].mxu0
  %v5697 = vadd.f32 0.0, %v5696
  %v5698 = vpop.f32.mrb[0].mxu0
  %5699 = vmatprep.mubr.bf16.mxu0 0
  %5700 = vmatmul.mubr.bf16.gmra.mrb[0].mxu0 %v5423
  %v5701 = vpop.f32.mrb[0].mxu0
  %v5702 = vadd.f32 0.0, %v5701
  %v5703 = vpop.f32.mrb[0].mxu0
  %v5704 = vpop.f32.mrb[0].mxu0
  %v5705 = vadd.f32 0.0, %v5704
  %v5706 = vpop.f32.mrb[0].mxu0
  %5707 = vmatprep.mubr.bf16.mxu0 0
  %5708 = vmatmul.mubr.bf16.gmra.mrb[0].mxu0 %v5426
  %v5709 = vpop.f32.mrb[0].mxu0
  %v5710 = vadd.f32 0.0, %v5709
  %v5711 = vpop.f32.mrb[0].mxu0
  %v5712 = vpop.f32.mrb[0].mxu0
  %v5713 = vadd.f32 0.0, %v5712
  %v5714 = vpop.f32.mrb[0].mxu0
  %5715 = vmatprep.mubr.bf16.mxu0 0
  %5716 = vmatmul.mubr.bf16.gmra.mrb[0].mxu0 %v5429
  %v5717 = vpop.f32.mrb[0].mxu0
  %v5718 = vadd.f32 0.0, %v5717
  %v5719 = vpop.f32.mrb[0].mxu0
  %v5720 = vpop.f32.mrb[0].mxu0
  %v5721 = vadd.f32 0.0, %v5720
  %v5722 = vpop.f32.mrb[0].mxu0
  %5723 = vdwg.mxu0
  %vm5724 = vcmask 261120
  %v5725 = vsel %vm5724, %v5470, 0.0
  %v5726 = vsel %vm5724, %v5473, 0.0
  %v5727 = vadd.f32 %v5725, %v5726
  %v5728 = vsel %vm5724, %v5478, 0.0
  %v5729 = vadd.f32 %v5727, %v5728
  %v5730 = vsel %vm5724, %v5481, 0.0
  %v5731 = vadd.f32 %v5729, %v5730
  %v5732 = vsel %vm5724, %v5486, 0.0
  %v5733 = vadd.f32 %v5731, %v5732
  %v5734 = vsel %vm5724, %v5489, 0.0
  %v5735 = vadd.f32 %v5733, %v5734
  %v5736 = vsel %vm5724, %v5494, 0.0
  %v5737 = vadd.f32 %v5735, %v5736
  %v5738 = vsel %vm5724, %v5497, 0.0
  %v5739 = vadd.f32 %v5737, %v5738
  %v5740 = vsel %vm5724, %v5502, 0.0
  %v5741 = vadd.f32 %v5739, %v5740
  %v5742 = vsel %vm5724, %v5505, 0.0
  %v5743 = vadd.f32 %v5741, %v5742
  %v5744 = vsel %vm5724, %v5510, 0.0
  %v5745 = vadd.f32 %v5743, %v5744
  %v5746 = vsel %vm5724, %v5513, 0.0
  %v5747 = vadd.f32 %v5745, %v5746
  %v5748 = vsel %vm5724, %v5518, 0.0
  %v5749 = vadd.f32 %v5747, %v5748
  %v5750 = vsel %vm5724, %v5521, 0.0
  %v5751 = vadd.f32 %v5749, %v5750
  %v5752 = vsel %vm5724, %v5526, 0.0
  %v5753 = vadd.f32 %v5751, %v5752
  %v5754 = vsel %vm5724, %v5529, 0.0
  %v5755 = vadd.f32 %v5753, %v5754
  %v5756 = vsel %vm5724, %v5534, 0.0
  %v5757 = vadd.f32 %v5755, %v5756
  %v5758 = vsel %vm5724, %v5537, 0.0
  %v5759 = vadd.f32 %v5757, %v5758
  %v5760 = vsel %vm5724, %v5542, 0.0
  %v5761 = vadd.f32 %v5759, %v5760
  %v5762 = vsel %vm5724, %v5545, 0.0
  %v5763 = vadd.f32 %v5761, %v5762
  %v5764 = vsel %vm5724, %v5550, 0.0
  %v5765 = vadd.f32 %v5763, %v5764
  %v5766 = vsel %vm5724, %v5553, 0.0
  %v5767 = vadd.f32 %v5765, %v5766
  %v5768 = vsel %vm5724, %v5558, 0.0
  %v5769 = vadd.f32 %v5767, %v5768
  %v5770 = vsel %vm5724, %v5561, 0.0
  %v5771 = vadd.f32 %v5769, %v5770
  %v5772 = vsel %vm5724, %v5566, 0.0
  %v5773 = vadd.f32 %v5771, %v5772
  %v5774 = vsel %vm5724, %v5569, 0.0
  %v5775 = vadd.f32 %v5773, %v5774
  %v5776 = vsel %vm5724, %v5574, 0.0
  %v5777 = vadd.f32 %v5775, %v5776
  %v5778 = vsel %vm5724, %v5577, 0.0
  %v5779 = vadd.f32 %v5777, %v5778
  %v5780 = vsel %vm5724, %v5582, 0.0
  %v5781 = vadd.f32 %v5779, %v5780
  %v5782 = vsel %vm5724, %v5585, 0.0
  %v5783 = vadd.f32 %v5781, %v5782
  %v5784 = vsel %vm5724, %v5590, 0.0
  %v5785 = vadd.f32 %v5783, %v5784
  %v5786 = vsel %vm5724, %v5593, 0.0
  %v5787 = vadd.f32 %v5785, %v5786
  %v5788 = vsel %vm5724, %v5598, 0.0
  %v5789 = vadd.f32 %v5787, %v5788
  %v5790 = vsel %vm5724, %v5601, 0.0
  %v5791 = vadd.f32 %v5789, %v5790
  %v5792 = vsel %vm5724, %v5606, 0.0
  %v5793 = vadd.f32 %v5791, %v5792
  %v5794 = vsel %vm5724, %v5609, 0.0
  %v5795 = vadd.f32 %v5793, %v5794
  %v5796 = vsel %vm5724, %v5614, 0.0
  %v5797 = vadd.f32 %v5795, %v5796
  %v5798 = vsel %vm5724, %v5617, 0.0
  %v5799 = vadd.f32 %v5797, %v5798
  %v5800 = vsel %vm5724, %v5622, 0.0
  %v5801 = vadd.f32 %v5799, %v5800
  %v5802 = vsel %vm5724, %v5625, 0.0
  %v5803 = vadd.f32 %v5801, %v5802
  %v5804 = vsel %vm5724, %v5630, 0.0
  %v5805 = vadd.f32 %v5803, %v5804
  %v5806 = vsel %vm5724, %v5633, 0.0
  %v5807 = vadd.f32 %v5805, %v5806
  %v5808 = vsel %vm5724, %v5638, 0.0
  %v5809 = vadd.f32 %v5807, %v5808
  %v5810 = vsel %vm5724, %v5641, 0.0
  %v5811 = vadd.f32 %v5809, %v5810
  %v5812 = vsel %vm5724, %v5646, 0.0
  %v5813 = vadd.f32 %v5811, %v5812
  %v5814 = vsel %vm5724, %v5649, 0.0
  %v5815 = vadd.f32 %v5813, %v5814
  %v5816 = vsel %vm5724, %v5654, 0.0
  %v5817 = vadd.f32 %v5815, %v5816
  %v5818 = vsel %vm5724, %v5657, 0.0
  %v5819 = vadd.f32 %v5817, %v5818
  %v5820 = vsel %vm5724, %v5662, 0.0
  %v5821 = vadd.f32 %v5819, %v5820
  %v5822 = vsel %vm5724, %v5665, 0.0
  %v5823 = vadd.f32 %v5821, %v5822
  %v5824 = vsel %vm5724, %v5670, 0.0
  %v5825 = vadd.f32 %v5823, %v5824
  %v5826 = vsel %vm5724, %v5673, 0.0
  %v5827 = vadd.f32 %v5825, %v5826
  %v5828 = vsel %vm5724, %v5678, 0.0
  %v5829 = vadd.f32 %v5827, %v5828
  %v5830 = vsel %vm5724, %v5681, 0.0
  %v5831 = vadd.f32 %v5829, %v5830
  %v5832 = vsel %vm5724, %v5686, 0.0
  %v5833 = vadd.f32 %v5831, %v5832
  %v5834 = vsel %vm5724, %v5689, 0.0
  %v5835 = vadd.f32 %v5833, %v5834
  %v5836 = vsel %vm5724, %v5694, 0.0
  %v5837 = vadd.f32 %v5835, %v5836
  %v5838 = vsel %vm5724, %v5697, 0.0
  %v5839 = vadd.f32 %v5837, %v5838
  %v5840 = vsel %vm5724, %v5702, 0.0
  %v5841 = vadd.f32 %v5839, %v5840
  %v5842 = vsel %vm5724, %v5705, 0.0
  %v5843 = vadd.f32 %v5841, %v5842
  %v5844 = vsel %vm5724, %v5710, 0.0
  %v5845 = vadd.f32 %v5843, %v5844
  %v5846 = vsel %vm5724, %v5713, 0.0
  %v5847 = vadd.f32 %v5845, %v5846
  %v5848 = vsel %vm5724, %v5718, 0.0
  %v5849 = vadd.f32 %v5847, %v5848
  %v5850 = vsel %vm5724, %v5721, 0.0
  %v5851 = vadd.f32 %v5849, %v5850
  %v5852 = vrot.slane %v5851, 4
  %v5853 = vadd.f32 %v5851, %v5852
  %v5854 = vrot.slane %v5853, 2
  %v5855 = vadd.f32 %v5853, %v5854
  %v5856 = vrot.slane %v5855, 1
  %v5857 = vadd.f32 %v5855, %v5856
  %v5858 = vmul.f32 %v5857, 0.001953125
  %v5859 = vsub.f32 %v5470, %v5858
  %v5860 = vsub.f32 %v5473, %v5858
  %v5861 = vsub.f32 %v5478, %v5858
  %v5862 = vsub.f32 %v5481, %v5858
  %v5863 = vsub.f32 %v5486, %v5858
  %v5864 = vsub.f32 %v5489, %v5858
  %v5865 = vsub.f32 %v5494, %v5858
  %v5866 = vsub.f32 %v5497, %v5858
  %v5867 = vsub.f32 %v5502, %v5858
  %v5868 = vsub.f32 %v5505, %v5858
  %v5869 = vsub.f32 %v5510, %v5858
  %v5870 = vsub.f32 %v5513, %v5858
  %v5871 = vsub.f32 %v5518, %v5858
  %v5872 = vsub.f32 %v5521, %v5858
  %v5873 = vsub.f32 %v5526, %v5858
  %v5874 = vsub.f32 %v5529, %v5858
  %v5875 = vsub.f32 %v5534, %v5858
  %v5876 = vsub.f32 %v5537, %v5858
  %v5877 = vsub.f32 %v5542, %v5858
  %v5878 = vsub.f32 %v5545, %v5858
  %v5879 = vsub.f32 %v5550, %v5858
  %v5880 = vsub.f32 %v5553, %v5858
  %v5881 = vsub.f32 %v5558, %v5858
  %v5882 = vsub.f32 %v5561, %v5858
  %v5883 = vsub.f32 %v5566, %v5858
  %v5884 = vsub.f32 %v5569, %v5858
  %v5885 = vsub.f32 %v5574, %v5858
  %v5886 = vsub.f32 %v5577, %v5858
  %v5887 = vsub.f32 %v5582, %v5858
  %v5888 = vsub.f32 %v5585, %v5858
  %v5889 = vsub.f32 %v5590, %v5858
  %v5890 = vsub.f32 %v5593, %v5858
  %v5891 = vsub.f32 %v5598, %v5858
  %v5892 = vsub.f32 %v5601, %v5858
  %v5893 = vsub.f32 %v5606, %v5858
  %v5894 = vsub.f32 %v5609, %v5858
  %v5895 = vsub.f32 %v5614, %v5858
  %v5896 = vsub.f32 %v5617, %v5858
  %v5897 = vsub.f32 %v5622, %v5858
  %v5898 = vsub.f32 %v5625, %v5858
  %v5899 = vsub.f32 %v5630, %v5858
  %v5900 = vsub.f32 %v5633, %v5858
  %v5901 = vsub.f32 %v5638, %v5858
  %v5902 = vsub.f32 %v5641, %v5858
  %v5903 = vsub.f32 %v5646, %v5858
  %v5904 = vsub.f32 %v5649, %v5858
  %v5905 = vsub.f32 %v5654, %v5858
  %v5906 = vsub.f32 %v5657, %v5858
  %v5907 = vsub.f32 %v5662, %v5858
  %v5908 = vsub.f32 %v5665, %v5858
  %v5909 = vsub.f32 %v5670, %v5858
  %v5910 = vsub.f32 %v5673, %v5858
  %v5911 = vsub.f32 %v5678, %v5858
  %v5912 = vsub.f32 %v5681, %v5858
  %v5913 = vsub.f32 %v5686, %v5858
  %v5914 = vsub.f32 %v5689, %v5858
  %v5915 = vsub.f32 %v5694, %v5858
  %v5916 = vsub.f32 %v5697, %v5858
  %v5917 = vsub.f32 %v5702, %v5858
  %v5918 = vsub.f32 %v5705, %v5858
  %v5919 = vsub.f32 %v5710, %v5858
  %v5920 = vsub.f32 %v5713, %v5858
  %v5921 = vsub.f32 %v5718, %v5858
  %v5922 = vsub.f32 %v5721, %v5858
  %v5923 = vmul.f32 %v5859, %v5859
  %v5924 = vmul.f32 %v5860, %v5860
  %v5925 = vmul.f32 %v5861, %v5861
  %v5926 = vmul.f32 %v5862, %v5862
  %v5927 = vmul.f32 %v5863, %v5863
  %v5928 = vmul.f32 %v5864, %v5864
  %v5929 = vmul.f32 %v5865, %v5865
  %v5930 = vmul.f32 %v5866, %v5866
  %v5931 = vmul.f32 %v5867, %v5867
  %v5932 = vmul.f32 %v5868, %v5868
  %v5933 = vmul.f32 %v5869, %v5869
  %v5934 = vmul.f32 %v5870, %v5870
  %v5935 = vmul.f32 %v5871, %v5871
  %v5936 = vmul.f32 %v5872, %v5872
  %v5937 = vmul.f32 %v5873, %v5873
  %v5938 = vmul.f32 %v5874, %v5874
  %v5939 = vmul.f32 %v5875, %v5875
  %v5940 = vmul.f32 %v5876, %v5876
  %v5941 = vmul.f32 %v5877, %v5877
  %v5942 = vmul.f32 %v5878, %v5878
  %v5943 = vmul.f32 %v5879, %v5879
  %v5944 = vmul.f32 %v5880, %v5880
  %v5945 = vmul.f32 %v5881, %v5881
  %v5946 = vmul.f32 %v5882, %v5882
  %v5947 = vmul.f32 %v5883, %v5883
  %v5948 = vmul.f32 %v5884, %v5884
  %v5949 = vmul.f32 %v5885, %v5885
  %v5950 = vmul.f32 %v5886, %v5886
  %v5951 = vmul.f32 %v5887, %v5887
  %v5952 = vmul.f32 %v5888, %v5888
  %v5953 = vmul.f32 %v5889, %v5889
  %v5954 = vmul.f32 %v5890, %v5890
  %v5955 = vmul.f32 %v5891, %v5891
  %v5956 = vmul.f32 %v5892, %v5892
  %v5957 = vmul.f32 %v5893, %v5893
  %v5958 = vmul.f32 %v5894, %v5894
  %v5959 = vmul.f32 %v5895, %v5895
  %v5960 = vmul.f32 %v5896, %v5896
  %v5961 = vmul.f32 %v5897, %v5897
  %v5962 = vmul.f32 %v5898, %v5898
  %v5963 = vmul.f32 %v5899, %v5899
  %v5964 = vmul.f32 %v5900, %v5900
  %v5965 = vmul.f32 %v5901, %v5901
  %v5966 = vmul.f32 %v5902, %v5902
  %v5967 = vmul.f32 %v5903, %v5903
  %v5968 = vmul.f32 %v5904, %v5904
  %v5969 = vmul.f32 %v5905, %v5905
  %v5970 = vmul.f32 %v5906, %v5906
  %v5971 = vmul.f32 %v5907, %v5907
  %v5972 = vmul.f32 %v5908, %v5908
  %v5973 = vmul.f32 %v5909, %v5909
  %v5974 = vmul.f32 %v5910, %v5910
  %v5975 = vmul.f32 %v5911, %v5911
  %v5976 = vmul.f32 %v5912, %v5912
  %v5977 = vmul.f32 %v5913, %v5913
  %v5978 = vmul.f32 %v5914, %v5914
  %v5979 = vmul.f32 %v5915, %v5915
  %v5980 = vmul.f32 %v5916, %v5916
  %v5981 = vmul.f32 %v5917, %v5917
  %v5982 = vmul.f32 %v5918, %v5918
  %v5983 = vmul.f32 %v5919, %v5919
  %v5984 = vmul.f32 %v5920, %v5920
  %v5985 = vmul.f32 %v5921, %v5921
  %v5986 = vmul.f32 %v5922, %v5922
  %v5987 = vsel %vm5724, %v5923, 0.0
  %v5988 = vsel %vm5724, %v5924, 0.0
  %v5989 = vadd.f32 %v5987, %v5988
  %v5990 = vsel %vm5724, %v5925, 0.0
  %v5991 = vadd.f32 %v5989, %v5990
  %v5992 = vsel %vm5724, %v5926, 0.0
  %v5993 = vadd.f32 %v5991, %v5992
  %v5994 = vsel %vm5724, %v5927, 0.0
  %v5995 = vadd.f32 %v5993, %v5994
  %v5996 = vsel %vm5724, %v5928, 0.0
  %v5997 = vadd.f32 %v5995, %v5996
  %v5998 = vsel %vm5724, %v5929, 0.0
  %v5999 = vadd.f32 %v5997, %v5998
  %v6000 = vsel %vm5724, %v5930, 0.0
  %v6001 = vadd.f32 %v5999, %v6000
  %v6002 = vsel %vm5724, %v5931, 0.0
  %v6003 = vadd.f32 %v6001, %v6002
  %v6004 = vsel %vm5724, %v5932, 0.0
  %v6005 = vadd.f32 %v6003, %v6004
  %v6006 = vsel %vm5724, %v5933, 0.0
  %v6007 = vadd.f32 %v6005, %v6006
  %v6008 = vsel %vm5724, %v5934, 0.0
  %v6009 = vadd.f32 %v6007, %v6008
  %v6010 = vsel %vm5724, %v5935, 0.0
  %v6011 = vadd.f32 %v6009, %v6010
  %v6012 = vsel %vm5724, %v5936, 0.0
  %v6013 = vadd.f32 %v6011, %v6012
  %v6014 = vsel %vm5724, %v5937, 0.0
  %v6015 = vadd.f32 %v6013, %v6014
  %v6016 = vsel %vm5724, %v5938, 0.0
  %v6017 = vadd.f32 %v6015, %v6016
  %v6018 = vsel %vm5724, %v5939, 0.0
  %v6019 = vadd.f32 %v6017, %v6018
  %v6020 = vsel %vm5724, %v5940, 0.0
  %v6021 = vadd.f32 %v6019, %v6020
  %v6022 = vsel %vm5724, %v5941, 0.0
  %v6023 = vadd.f32 %v6021, %v6022
  %v6024 = vsel %vm5724, %v5942, 0.0
  %v6025 = vadd.f32 %v6023, %v6024
  %v6026 = vsel %vm5724, %v5943, 0.0
  %v6027 = vadd.f32 %v6025, %v6026
  %v6028 = vsel %vm5724, %v5944, 0.0
  %v6029 = vadd.f32 %v6027, %v6028
  %v6030 = vsel %vm5724, %v5945, 0.0
  %v6031 = vadd.f32 %v6029, %v6030
  %v6032 = vsel %vm5724, %v5946, 0.0
  %v6033 = vadd.f32 %v6031, %v6032
  %v6034 = vsel %vm5724, %v5947, 0.0
  %v6035 = vadd.f32 %v6033, %v6034
  %v6036 = vsel %vm5724, %v5948, 0.0
  %v6037 = vadd.f32 %v6035, %v6036
  %v6038 = vsel %vm5724, %v5949, 0.0
  %v6039 = vadd.f32 %v6037, %v6038
  %v6040 = vsel %vm5724, %v5950, 0.0
  %v6041 = vadd.f32 %v6039, %v6040
  %v6042 = vsel %vm5724, %v5951, 0.0
  %v6043 = vadd.f32 %v6041, %v6042
  %v6044 = vsel %vm5724, %v5952, 0.0
  %v6045 = vadd.f32 %v6043, %v6044
  %v6046 = vsel %vm5724, %v5953, 0.0
  %v6047 = vadd.f32 %v6045, %v6046
  %v6048 = vsel %vm5724, %v5954, 0.0
  %v6049 = vadd.f32 %v6047, %v6048
  %v6050 = vsel %vm5724, %v5955, 0.0
  %v6051 = vadd.f32 %v6049, %v6050
  %v6052 = vsel %vm5724, %v5956, 0.0
  %v6053 = vadd.f32 %v6051, %v6052
  %v6054 = vsel %vm5724, %v5957, 0.0
  %v6055 = vadd.f32 %v6053, %v6054
  %v6056 = vsel %vm5724, %v5958, 0.0
  %v6057 = vadd.f32 %v6055, %v6056
  %v6058 = vsel %vm5724, %v5959, 0.0
  %v6059 = vadd.f32 %v6057, %v6058
  %v6060 = vsel %vm5724, %v5960, 0.0
  %v6061 = vadd.f32 %v6059, %v6060
  %v6062 = vsel %vm5724, %v5961, 0.0
  %v6063 = vadd.f32 %v6061, %v6062
  %v6064 = vsel %vm5724, %v5962, 0.0
  %v6065 = vadd.f32 %v6063, %v6064
  %v6066 = vsel %vm5724, %v5963, 0.0
  %v6067 = vadd.f32 %v6065, %v6066
  %v6068 = vsel %vm5724, %v5964, 0.0
  %v6069 = vadd.f32 %v6067, %v6068
  %v6070 = vsel %vm5724, %v5965, 0.0
  %v6071 = vadd.f32 %v6069, %v6070
  %v6072 = vsel %vm5724, %v5966, 0.0
  %v6073 = vadd.f32 %v6071, %v6072
  %v6074 = vsel %vm5724, %v5967, 0.0
  %v6075 = vadd.f32 %v6073, %v6074
  %v6076 = vsel %vm5724, %v5968, 0.0
  %v6077 = vadd.f32 %v6075, %v6076
  %v6078 = vsel %vm5724, %v5969, 0.0
  %v6079 = vadd.f32 %v6077, %v6078
  %v6080 = vsel %vm5724, %v5970, 0.0
  %v6081 = vadd.f32 %v6079, %v6080
  %v6082 = vsel %vm5724, %v5971, 0.0
  %v6083 = vadd.f32 %v6081, %v6082
  %v6084 = vsel %vm5724, %v5972, 0.0
  %v6085 = vadd.f32 %v6083, %v6084
  %v6086 = vsel %vm5724, %v5973, 0.0
  %v6087 = vadd.f32 %v6085, %v6086
  %v6088 = vsel %vm5724, %v5974, 0.0
  %v6089 = vadd.f32 %v6087, %v6088
  %v6090 = vsel %vm5724, %v5975, 0.0
  %v6091 = vadd.f32 %v6089, %v6090
  %v6092 = vsel %vm5724, %v5976, 0.0
  %v6093 = vadd.f32 %v6091, %v6092
  %v6094 = vsel %vm5724, %v5977, 0.0
  %v6095 = vadd.f32 %v6093, %v6094
  %v6096 = vsel %vm5724, %v5978, 0.0
  %v6097 = vadd.f32 %v6095, %v6096
  %v6098 = vsel %vm5724, %v5979, 0.0
  %v6099 = vadd.f32 %v6097, %v6098
  %v6100 = vsel %vm5724, %v5980, 0.0
  %v6101 = vadd.f32 %v6099, %v6100
  %v6102 = vsel %vm5724, %v5981, 0.0
  %v6103 = vadd.f32 %v6101, %v6102
  %v6104 = vsel %vm5724, %v5982, 0.0
  %v6105 = vadd.f32 %v6103, %v6104
  %v6106 = vsel %vm5724, %v5983, 0.0
  %v6107 = vadd.f32 %v6105, %v6106
  %v6108 = vsel %vm5724, %v5984, 0.0
  %v6109 = vadd.f32 %v6107, %v6108
  %v6110 = vsel %vm5724, %v5985, 0.0
  %v6111 = vadd.f32 %v6109, %v6110
  %v6112 = vsel %vm5724, %v5986, 0.0
  %v6113 = vadd.f32 %v6111, %v6112
  %v6114 = vrot.slane %v6113, 4
  %v6115 = vadd.f32 %v6113, %v6114
  %v6116 = vrot.slane %v6115, 2
  %v6117 = vadd.f32 %v6115, %v6116
  %v6118 = vrot.slane %v6117, 1
  %v6119 = vadd.f32 %v6117, %v6118
  %v6120 = vmul.f32 %v6119, 0.001953125
  %v6121 = vadd.f32 %v6120, 1e-12
  %v6122 = vrsqrt.pop %v6121
  %v6123 = vmul.f32 %v5859, %v6122
  %v6124 = vmul.f32 %v5860, %v6122
  %v6125 = vmul.f32 %v5861, %v6122
  %v6126 = vmul.f32 %v5862, %v6122
  %v6127 = vmul.f32 %v5863, %v6122
  %v6128 = vmul.f32 %v5864, %v6122
  %v6129 = vmul.f32 %v5865, %v6122
  %v6130 = vmul.f32 %v5866, %v6122
  %v6131 = vmul.f32 %v5867, %v6122
  %v6132 = vmul.f32 %v5868, %v6122
  %v6133 = vmul.f32 %v5869, %v6122
  %v6134 = vmul.f32 %v5870, %v6122
  %v6135 = vmul.f32 %v5871, %v6122
  %v6136 = vmul.f32 %v5872, %v6122
  %v6137 = vmul.f32 %v5873, %v6122
  %v6138 = vmul.f32 %v5874, %v6122
  %v6139 = vmul.f32 %v5875, %v6122
  %v6140 = vmul.f32 %v5876, %v6122
  %v6141 = vmul.f32 %v5877, %v6122
  %v6142 = vmul.f32 %v5878, %v6122
  %v6143 = vmul.f32 %v5879, %v6122
  %v6144 = vmul.f32 %v5880, %v6122
  %v6145 = vmul.f32 %v5881, %v6122
  %v6146 = vmul.f32 %v5882, %v6122
  %v6147 = vmul.f32 %v5883, %v6122
  %v6148 = vmul.f32 %v5884, %v6122
  %v6149 = vmul.f32 %v5885, %v6122
  %v6150 = vmul.f32 %v5886, %v6122
  %v6151 = vmul.f32 %v5887, %v6122
  %v6152 = vmul.f32 %v5888, %v6122
  %v6153 = vmul.f32 %v5889, %v6122
  %v6154 = vmul.f32 %v5890, %v6122
  %v6155 = vmul.f32 %v5891, %v6122
  %v6156 = vmul.f32 %v5892, %v6122
  %v6157 = vmul.f32 %v5893, %v6122
  %v6158 = vmul.f32 %v5894, %v6122
  %v6159 = vmul.f32 %v5895, %v6122
  %v6160 = vmul.f32 %v5896, %v6122
  %v6161 = vmul.f32 %v5897, %v6122
  %v6162 = vmul.f32 %v5898, %v6122
  %v6163 = vmul.f32 %v5899, %v6122
  %v6164 = vmul.f32 %v5900, %v6122
  %v6165 = vmul.f32 %v5901, %v6122
  %v6166 = vmul.f32 %v5902, %v6122
  %v6167 = vmul.f32 %v5903, %v6122
  %v6168 = vmul.f32 %v5904, %v6122
  %v6169 = vmul.f32 %v5905, %v6122
  %v6170 = vmul.f32 %v5906, %v6122
  %v6171 = vmul.f32 %v5907, %v6122
  %v6172 = vmul.f32 %v5908, %v6122
  %v6173 = vmul.f32 %v5909, %v6122
  %v6174 = vmul.f32 %v5910, %v6122
  %v6175 = vmul.f32 %v5911, %v6122
  %v6176 = vmul.f32 %v5912, %v6122
  %v6177 = vmul.f32 %v5913, %v6122
  %v6178 = vmul.f32 %v5914, %v6122
  %v6179 = vmul.f32 %v5915, %v6122
  %v6180 = vmul.f32 %v5916, %v6122
  %v6181 = vmul.f32 %v5917, %v6122
  %v6182 = vmul.f32 %v5918, %v6122
  %v6183 = vmul.f32 %v5919, %v6122
  %v6184 = vmul.f32 %v5920, %v6122
  %v6185 = vmul.f32 %v5921, %v6122
  %v6186 = vmul.f32 %v5922, %v6122
  %v6187 = vmax.f32 %v6123, 0.0
  %v6188 = vmax.f32 %v6124, 0.0
  %v6189 = vmax.f32 %v6125, 0.0
  %v6190 = vmax.f32 %v6126, 0.0
  %v6191 = vmax.f32 %v6127, 0.0
  %v6192 = vmax.f32 %v6128, 0.0
  %v6193 = vmax.f32 %v6129, 0.0
  %v6194 = vmax.f32 %v6130, 0.0
  %v6195 = vmax.f32 %v6131, 0.0
  %v6196 = vmax.f32 %v6132, 0.0
  %v6197 = vmax.f32 %v6133, 0.0
  %v6198 = vmax.f32 %v6134, 0.0
  %v6199 = vmax.f32 %v6135, 0.0
  %v6200 = vmax.f32 %v6136, 0.0
  %v6201 = vmax.f32 %v6137, 0.0
  %v6202 = vmax.f32 %v6138, 0.0
  %v6203 = vmax.f32 %v6139, 0.0
  %v6204 = vmax.f32 %v6140, 0.0
  %v6205 = vmax.f32 %v6141, 0.0
  %v6206 = vmax.f32 %v6142, 0.0
  %v6207 = vmax.f32 %v6143, 0.0
  %v6208 = vmax.f32 %v6144, 0.0
  %v6209 = vmax.f32 %v6145, 0.0
  %v6210 = vmax.f32 %v6146, 0.0
  %v6211 = vmax.f32 %v6147, 0.0
  %v6212 = vmax.f32 %v6148, 0.0
  %v6213 = vmax.f32 %v6149, 0.0
  %v6214 = vmax.f32 %v6150, 0.0
  %v6215 = vmax.f32 %v6151, 0.0
  %v6216 = vmax.f32 %v6152, 0.0
  %v6217 = vmax.f32 %v6153, 0.0
  %v6218 = vmax.f32 %v6154, 0.0
  %v6219 = vmax.f32 %v6155, 0.0
  %v6220 = vmax.f32 %v6156, 0.0
  %v6221 = vmax.f32 %v6157, 0.0
  %v6222 = vmax.f32 %v6158, 0.0
  %v6223 = vmax.f32 %v6159, 0.0
  %v6224 = vmax.f32 %v6160, 0.0
  %v6225 = vmax.f32 %v6161, 0.0
  %v6226 = vmax.f32 %v6162, 0.0
  %v6227 = vmax.f32 %v6163, 0.0
  %v6228 = vmax.f32 %v6164, 0.0
  %v6229 = vmax.f32 %v6165, 0.0
  %v6230 = vmax.f32 %v6166, 0.0
  %v6231 = vmax.f32 %v6167, 0.0
  %v6232 = vmax.f32 %v6168, 0.0
  %v6233 = vmax.f32 %v6169, 0.0
  %v6234 = vmax.f32 %v6170, 0.0
  %v6235 = vmax.f32 %v6171, 0.0
  %v6236 = vmax.f32 %v6172, 0.0
  %v6237 = vmax.f32 %v6173, 0.0
  %v6238 = vmax.f32 %v6174, 0.0
  %v6239 = vmax.f32 %v6175, 0.0
  %v6240 = vmax.f32 %v6176, 0.0
  %v6241 = vmax.f32 %v6177, 0.0
  %v6242 = vmax.f32 %v6178, 0.0
  %v6243 = vmax.f32 %v6179, 0.0
  %v6244 = vmax.f32 %v6180, 0.0
  %v6245 = vmax.f32 %v6181, 0.0
  %v6246 = vmax.f32 %v6182, 0.0
  %v6247 = vmax.f32 %v6183, 0.0
  %v6248 = vmax.f32 %v6184, 0.0
  %v6249 = vmax.f32 %v6185, 0.0
  %v6250 = vmax.f32 %v6186, 0.0
  %v6251 = vpack.c.bf16 %v6188, %v6187
  %v6252 = vpack.c.bf16 %v6190, %v6189
  %v6253 = vpack.c.bf16 %v6192, %v6191
  %v6254 = vpack.c.bf16 %v6194, %v6193
  %v6255 = vpack.c.bf16 %v6196, %v6195
  %v6256 = vpack.c.bf16 %v6198, %v6197
  %v6257 = vpack.c.bf16 %v6200, %v6199
  %v6258 = vpack.c.bf16 %v6202, %v6201
  %v6259 = vpack.c.bf16 %v6204, %v6203
  %v6260 = vpack.c.bf16 %v6206, %v6205
  %v6261 = vpack.c.bf16 %v6208, %v6207
  %v6262 = vpack.c.bf16 %v6210, %v6209
  %v6263 = vpack.c.bf16 %v6212, %v6211
  %v6264 = vpack.c.bf16 %v6214, %v6213
  %v6265 = vpack.c.bf16 %v6216, %v6215
  %v6266 = vpack.c.bf16 %v6218, %v6217
  %v6267 = vpack.c.bf16 %v6220, %v6219
  %v6268 = vpack.c.bf16 %v6222, %v6221
  %v6269 = vpack.c.bf16 %v6224, %v6223
  %v6270 = vpack.c.bf16 %v6226, %v6225
  %v6271 = vpack.c.bf16 %v6228, %v6227
  %v6272 = vpack.c.bf16 %v6230, %v6229
  %v6273 = vpack.c.bf16 %v6232, %v6231
  %v6274 = vpack.c.bf16 %v6234, %v6233
  %v6275 = vpack.c.bf16 %v6236, %v6235
  %v6276 = vpack.c.bf16 %v6238, %v6237
  %v6277 = vpack.c.bf16 %v6240, %v6239
  %v6278 = vpack.c.bf16 %v6242, %v6241
  %v6279 = vpack.c.bf16 %v6244, %v6243
  %v6280 = vpack.c.bf16 %v6246, %v6245
  %v6281 = vpack.c.bf16 %v6248, %v6247
  %v6282 = vpack.c.bf16 %v6250, %v6249
  %v6283 = vld [vmem:[%s3] sm:$0xf]
  %v6284 = vld [vmem:[%s3 + $0x4] sm:$0xf]
  %v6285 = vld [vmem:[%s3 + $0x8] sm:$0xf]
  %v6286 = vld [vmem:[%s3 + $0xc] sm:$0xf]
  %v6291 = vunpack.c.l.b16 %v6283
  %v6292 = vunpack.c.l.b16 %v6284
  %v6293 = vunpack.c.l.b16 %v6285
  %v6294 = vunpack.c.l.b16 %v6286
  %v6295 = vpack.c.b16 %v6292, %v6291
  %v6296 = vpack.c.b16 %v6294, %v6293
  %v6300 = vsel %vm5724, %v6251, 0
  %v6303 = vsel %vm5724, %v6252, 0
  %v6306 = vsel %vm5724, %v6253, 0
  %v6309 = vsel %vm5724, %v6254, 0
  %v6312 = vsel %vm5724, %v6255, 0
  %v6315 = vsel %vm5724, %v6256, 0
  %v6318 = vsel %vm5724, %v6257, 0
  %v6321 = vsel %vm5724, %v6258, 0
  %v6324 = vsel %vm5724, %v6259, 0
  %v6327 = vsel %vm5724, %v6260, 0
  %v6330 = vsel %vm5724, %v6261, 0
  %v6333 = vsel %vm5724, %v6262, 0
  %v6336 = vsel %vm5724, %v6263, 0
  %v6339 = vsel %vm5724, %v6264, 0
  %v6342 = vsel %vm5724, %v6265, 0
  %v6345 = vsel %vm5724, %v6266, 0
  %v6348 = vsel %vm5724, %v6267, 0
  %v6351 = vsel %vm5724, %v6268, 0
  %v6354 = vsel %vm5724, %v6269, 0
  %v6357 = vsel %vm5724, %v6270, 0
  %v6360 = vsel %vm5724, %v6271, 0
  %v6363 = vsel %vm5724, %v6272, 0
  %v6366 = vsel %vm5724, %v6273, 0
  %v6369 = vsel %vm5724, %v6274, 0
  %v6372 = vsel %vm5724, %v6275, 0
  %v6375 = vsel %vm5724, %v6276, 0
  %v6378 = vsel %vm5724, %v6277, 0
  %v6381 = vsel %vm5724, %v6278, 0
  %v6384 = vsel %vm5724, %v6279, 0
  %v6387 = vsel %vm5724, %v6280, 0
  %v6390 = vsel %vm5724, %v6281, 0
  %v6393 = vsel %vm5724, %v6282, 0
  %6395 = vmatprep.subr.bf16.mxu0 0
  %6396 = vmatpush1.bf16.msra.mxu0 %v6295
  %6397 = vmatprep.subr.bf16.mxu0 0
  %6398 = vmatpush1.bf16.msra.mxu0 %v6296
  %6399 = vmatprep.subr.bf16.mxu0 0
  %6400 = vmatpush1.bf16.msra.mxu0 0
  %6401 = vmatprep.subr.bf16.mxu0 0
  %6402 = vmatpush1.bf16.msra.mxu0 0
  %6403 = vmatprep.subr.bf16.mxu0 0
  %6404 = vmatpush1.bf16.msra.mxu0 0
  %6405 = vmatprep.subr.bf16.mxu0 0
  %6406 = vmatpush1.bf16.msra.mxu0 0
  %6407 = vmatprep.subr.bf16.mxu0 0
  %6408 = vmatpush1.bf16.msra.mxu0 0
  %6409 = vmatprep.subr.bf16.mxu0 0
  %6410 = vmatpush1.bf16.msra.mxu0 0
  %6411 = vmatprep.subr.bf16.mxu0 0
  %6412 = vmatpush1.bf16.msra.mxu0 0
  %6413 = vmatprep.subr.bf16.mxu0 0
  %6414 = vmatpush1.bf16.msra.mxu0 0
  %6415 = vmatprep.subr.bf16.mxu0 0
  %6416 = vmatpush1.bf16.msra.mxu0 0
  %6417 = vmatprep.subr.bf16.mxu0 0
  %6418 = vmatpush1.bf16.msra.mxu0 0
  %6419 = vmatprep.subr.bf16.mxu0 0
  %6420 = vmatpush1.bf16.msra.mxu0 0
  %6421 = vmatprep.subr.bf16.mxu0 0
  %6422 = vmatpush1.bf16.msra.mxu0 0
  %6423 = vmatprep.subr.bf16.mxu0 0
  %6424 = vmatpush1.bf16.msra.mxu0 0
  %6425 = vmatprep.subr.bf16.mxu0 0
  %6426 = vmatpush1.bf16.msra.mxu0 0
  %6427 = vmatprep.mubr.bf16.mxu0 0
  %6428 = vmatmul.mubr.bf16.gmra.mrb[0].mxu0 %v6300
  %v6429 = vpop.f32.mrb[0].mxu0
  %v6430 = vadd.f32 0.0, %v6429
  %v6431 = vpop.f32.mrb[0].mxu0
  %v6432 = vpop.f32.mrb[0].mxu0
  %v6433 = vadd.f32 0.0, %v6432
  %v6434 = vpop.f32.mrb[0].mxu0
  %6435 = vmatprep.mubr.bf16.mxu0 0
  %6436 = vmatmul.mubr.bf16.gmra.mrb[0].mxu0 %v6303
  %v6437 = vpop.f32.mrb[0].mxu0
  %v6438 = vadd.f32 0.0, %v6437
  %v6439 = vpop.f32.mrb[0].mxu0
  %v6440 = vpop.f32.mrb[0].mxu0
  %v6441 = vadd.f32 0.0, %v6440
  %v6442 = vpop.f32.mrb[0].mxu0
  %6443 = vmatprep.mubr.bf16.mxu0 0
  %6444 = vmatmul.mubr.bf16.gmra.mrb[0].mxu0 %v6306
  %v6445 = vpop.f32.mrb[0].mxu0
  %v6446 = vadd.f32 0.0, %v6445
  %v6447 = vpop.f32.mrb[0].mxu0
  %v6448 = vpop.f32.mrb[0].mxu0
  %v6449 = vadd.f32 0.0, %v6448
  %v6450 = vpop.f32.mrb[0].mxu0
  %6451 = vmatprep.mubr.bf16.mxu0 0
  %6452 = vmatmul.mubr.bf16.gmra.mrb[0].mxu0 %v6309
  %v6453 = vpop.f32.mrb[0].mxu0
  %v6454 = vadd.f32 0.0, %v6453
  %v6455 = vpop.f32.mrb[0].mxu0
  %v6456 = vpop.f32.mrb[0].mxu0
  %v6457 = vadd.f32 0.0, %v6456
  %v6458 = vpop.f32.mrb[0].mxu0
  %6459 = vmatprep.mubr.bf16.mxu0 0
  %6460 = vmatmul.mubr.bf16.gmra.mrb[0].mxu0 %v6312
  %v6461 = vpop.f32.mrb[0].mxu0
  %v6462 = vadd.f32 0.0, %v6461
  %v6463 = vpop.f32.mrb[0].mxu0
  %v6464 = vpop.f32.mrb[0].mxu0
  %v6465 = vadd.f32 0.0, %v6464
  %v6466 = vpop.f32.mrb[0].mxu0
  %6467 = vmatprep.mubr.bf16.mxu0 0
  %6468 = vmatmul.mubr.bf16.gmra.mrb[0].mxu0 %v6315
  %v6469 = vpop.f32.mrb[0].mxu0
  %v6470 = vadd.f32 0.0, %v6469
  %v6471 = vpop.f32.mrb[0].mxu0
  %v6472 = vpop.f32.mrb[0].mxu0
  %v6473 = vadd.f32 0.0, %v6472
  %v6474 = vpop.f32.mrb[0].mxu0
  %6475 = vmatprep.mubr.bf16.mxu0 0
  %6476 = vmatmul.mubr.bf16.gmra.mrb[0].mxu0 %v6318
  %v6477 = vpop.f32.mrb[0].mxu0
  %v6478 = vadd.f32 0.0, %v6477
  %v6479 = vpop.f32.mrb[0].mxu0
  %v6480 = vpop.f32.mrb[0].mxu0
  %v6481 = vadd.f32 0.0, %v6480
  %v6482 = vpop.f32.mrb[0].mxu0
  %6483 = vmatprep.mubr.bf16.mxu0 0
  %6484 = vmatmul.mubr.bf16.gmra.mrb[0].mxu0 %v6321
  %v6485 = vpop.f32.mrb[0].mxu0
  %v6486 = vadd.f32 0.0, %v6485
  %v6487 = vpop.f32.mrb[0].mxu0
  %v6488 = vpop.f32.mrb[0].mxu0
  %v6489 = vadd.f32 0.0, %v6488
  %v6490 = vpop.f32.mrb[0].mxu0
  %6491 = vmatprep.mubr.bf16.mxu0 0
  %6492 = vmatmul.mubr.bf16.gmra.mrb[0].mxu0 %v6324
  %v6493 = vpop.f32.mrb[0].mxu0
  %v6494 = vadd.f32 0.0, %v6493
  %v6495 = vpop.f32.mrb[0].mxu0
  %v6496 = vpop.f32.mrb[0].mxu0
  %v6497 = vadd.f32 0.0, %v6496
  %v6498 = vpop.f32.mrb[0].mxu0
  %6499 = vmatprep.mubr.bf16.mxu0 0
  %6500 = vmatmul.mubr.bf16.gmra.mrb[0].mxu0 %v6327
  %v6501 = vpop.f32.mrb[0].mxu0
  %v6502 = vadd.f32 0.0, %v6501
  %v6503 = vpop.f32.mrb[0].mxu0
  %v6504 = vpop.f32.mrb[0].mxu0
  %v6505 = vadd.f32 0.0, %v6504
  %v6506 = vpop.f32.mrb[0].mxu0
  %6507 = vmatprep.mubr.bf16.mxu0 0
  %6508 = vmatmul.mubr.bf16.gmra.mrb[0].mxu0 %v6330
  %v6509 = vpop.f32.mrb[0].mxu0
  %v6510 = vadd.f32 0.0, %v6509
  %v6511 = vpop.f32.mrb[0].mxu0
  %v6512 = vpop.f32.mrb[0].mxu0
  %v6513 = vadd.f32 0.0, %v6512
  %v6514 = vpop.f32.mrb[0].mxu0
  %6515 = vmatprep.mubr.bf16.mxu0 0
  %6516 = vmatmul.mubr.bf16.gmra.mrb[0].mxu0 %v6333
  %v6517 = vpop.f32.mrb[0].mxu0
  %v6518 = vadd.f32 0.0, %v6517
  %v6519 = vpop.f32.mrb[0].mxu0
  %v6520 = vpop.f32.mrb[0].mxu0
  %v6521 = vadd.f32 0.0, %v6520
  %v6522 = vpop.f32.mrb[0].mxu0
  %6523 = vmatprep.mubr.bf16.mxu0 0
  %6524 = vmatmul.mubr.bf16.gmra.mrb[0].mxu0 %v6336
  %v6525 = vpop.f32.mrb[0].mxu0
  %v6526 = vadd.f32 0.0, %v6525
  %v6527 = vpop.f32.mrb[0].mxu0
  %v6528 = vpop.f32.mrb[0].mxu0
  %v6529 = vadd.f32 0.0, %v6528
  %v6530 = vpop.f32.mrb[0].mxu0
  %6531 = vmatprep.mubr.bf16.mxu0 0
  %6532 = vmatmul.mubr.bf16.gmra.mrb[0].mxu0 %v6339
  %v6533 = vpop.f32.mrb[0].mxu0
  %v6534 = vadd.f32 0.0, %v6533
  %v6535 = vpop.f32.mrb[0].mxu0
  %v6536 = vpop.f32.mrb[0].mxu0
  %v6537 = vadd.f32 0.0, %v6536
  %v6538 = vpop.f32.mrb[0].mxu0
  %6539 = vmatprep.mubr.bf16.mxu0 0
  %6540 = vmatmul.mubr.bf16.gmra.mrb[0].mxu0 %v6342
  %v6541 = vpop.f32.mrb[0].mxu0
  %v6542 = vadd.f32 0.0, %v6541
  %v6543 = vpop.f32.mrb[0].mxu0
  %v6544 = vpop.f32.mrb[0].mxu0
  %v6545 = vadd.f32 0.0, %v6544
  %v6546 = vpop.f32.mrb[0].mxu0
  %6547 = vmatprep.mubr.bf16.mxu0 0
  %6548 = vmatmul.mubr.bf16.gmra.mrb[0].mxu0 %v6345
  %v6549 = vpop.f32.mrb[0].mxu0
  %v6550 = vadd.f32 0.0, %v6549
  %v6551 = vpop.f32.mrb[0].mxu0
  %v6552 = vpop.f32.mrb[0].mxu0
  %v6553 = vadd.f32 0.0, %v6552
  %v6554 = vpop.f32.mrb[0].mxu0
  %6555 = vmatprep.mubr.bf16.mxu0 0
  %6556 = vmatmul.mubr.bf16.gmra.mrb[0].mxu0 %v6348
  %v6557 = vpop.f32.mrb[0].mxu0
  %v6558 = vadd.f32 0.0, %v6557
  %v6559 = vpop.f32.mrb[0].mxu0
  %v6560 = vpop.f32.mrb[0].mxu0
  %v6561 = vadd.f32 0.0, %v6560
  %v6562 = vpop.f32.mrb[0].mxu0
  %6563 = vmatprep.mubr.bf16.mxu0 0
  %6564 = vmatmul.mubr.bf16.gmra.mrb[0].mxu0 %v6351
  %v6565 = vpop.f32.mrb[0].mxu0
  %v6566 = vadd.f32 0.0, %v6565
  %v6567 = vpop.f32.mrb[0].mxu0
  %v6568 = vpop.f32.mrb[0].mxu0
  %v6569 = vadd.f32 0.0, %v6568
  %v6570 = vpop.f32.mrb[0].mxu0
  %6571 = vmatprep.mubr.bf16.mxu0 0
  %6572 = vmatmul.mubr.bf16.gmra.mrb[0].mxu0 %v6354
  %v6573 = vpop.f32.mrb[0].mxu0
  %v6574 = vadd.f32 0.0, %v6573
  %v6575 = vpop.f32.mrb[0].mxu0
  %v6576 = vpop.f32.mrb[0].mxu0
  %v6577 = vadd.f32 0.0, %v6576
  %v6578 = vpop.f32.mrb[0].mxu0
  %6579 = vmatprep.mubr.bf16.mxu0 0
  %6580 = vmatmul.mubr.bf16.gmra.mrb[0].mxu0 %v6357
  %v6581 = vpop.f32.mrb[0].mxu0
  %v6582 = vadd.f32 0.0, %v6581
  %v6583 = vpop.f32.mrb[0].mxu0
  %v6584 = vpop.f32.mrb[0].mxu0
  %v6585 = vadd.f32 0.0, %v6584
  %v6586 = vpop.f32.mrb[0].mxu0
  %6587 = vmatprep.mubr.bf16.mxu0 0
  %6588 = vmatmul.mubr.bf16.gmra.mrb[0].mxu0 %v6360
  %v6589 = vpop.f32.mrb[0].mxu0
  %v6590 = vadd.f32 0.0, %v6589
  %v6591 = vpop.f32.mrb[0].mxu0
  %v6592 = vpop.f32.mrb[0].mxu0
  %v6593 = vadd.f32 0.0, %v6592
  %v6594 = vpop.f32.mrb[0].mxu0
  %6595 = vmatprep.mubr.bf16.mxu0 0
  %6596 = vmatmul.mubr.bf16.gmra.mrb[0].mxu0 %v6363
  %v6597 = vpop.f32.mrb[0].mxu0
  %v6598 = vadd.f32 0.0, %v6597
  %v6599 = vpop.f32.mrb[0].mxu0
  %v6600 = vpop.f32.mrb[0].mxu0
  %v6601 = vadd.f32 0.0, %v6600
  %v6602 = vpop.f32.mrb[0].mxu0
  %6603 = vmatprep.mubr.bf16.mxu0 0
  %6604 = vmatmul.mubr.bf16.gmra.mrb[0].mxu0 %v6366
  %v6605 = vpop.f32.mrb[0].mxu0
  %v6606 = vadd.f32 0.0, %v6605
  %v6607 = vpop.f32.mrb[0].mxu0
  %v6608 = vpop.f32.mrb[0].mxu0
  %v6609 = vadd.f32 0.0, %v6608
  %v6610 = vpop.f32.mrb[0].mxu0
  %6611 = vmatprep.mubr.bf16.mxu0 0
  %6612 = vmatmul.mubr.bf16.gmra.mrb[0].mxu0 %v6369
  %v6613 = vpop.f32.mrb[0].mxu0
  %v6614 = vadd.f32 0.0, %v6613
  %v6615 = vpop.f32.mrb[0].mxu0
  %v6616 = vpop.f32.mrb[0].mxu0
  %v6617 = vadd.f32 0.0, %v6616
  %v6618 = vpop.f32.mrb[0].mxu0
  %6619 = vmatprep.mubr.bf16.mxu0 0
  %6620 = vmatmul.mubr.bf16.gmra.mrb[0].mxu0 %v6372
  %v6621 = vpop.f32.mrb[0].mxu0
  %v6622 = vadd.f32 0.0, %v6621
  %v6623 = vpop.f32.mrb[0].mxu0
  %v6624 = vpop.f32.mrb[0].mxu0
  %v6625 = vadd.f32 0.0, %v6624
  %v6626 = vpop.f32.mrb[0].mxu0
  %6627 = vmatprep.mubr.bf16.mxu0 0
  %6628 = vmatmul.mubr.bf16.gmra.mrb[0].mxu0 %v6375
  %v6629 = vpop.f32.mrb[0].mxu0
  %v6630 = vadd.f32 0.0, %v6629
  %v6631 = vpop.f32.mrb[0].mxu0
  %v6632 = vpop.f32.mrb[0].mxu0
  %v6633 = vadd.f32 0.0, %v6632
  %v6634 = vpop.f32.mrb[0].mxu0
  %6635 = vmatprep.mubr.bf16.mxu0 0
  %6636 = vmatmul.mubr.bf16.gmra.mrb[0].mxu0 %v6378
  %v6637 = vpop.f32.mrb[0].mxu0
  %v6638 = vadd.f32 0.0, %v6637
  %v6639 = vpop.f32.mrb[0].mxu0
  %v6640 = vpop.f32.mrb[0].mxu0
  %v6641 = vadd.f32 0.0, %v6640
  %v6642 = vpop.f32.mrb[0].mxu0
  %6643 = vmatprep.mubr.bf16.mxu0 0
  %6644 = vmatmul.mubr.bf16.gmra.mrb[0].mxu0 %v6381
  %v6645 = vpop.f32.mrb[0].mxu0
  %v6646 = vadd.f32 0.0, %v6645
  %v6647 = vpop.f32.mrb[0].mxu0
  %v6648 = vpop.f32.mrb[0].mxu0
  %v6649 = vadd.f32 0.0, %v6648
  %v6650 = vpop.f32.mrb[0].mxu0
  %6651 = vmatprep.mubr.bf16.mxu0 0
  %6652 = vmatmul.mubr.bf16.gmra.mrb[0].mxu0 %v6384
  %v6653 = vpop.f32.mrb[0].mxu0
  %v6654 = vadd.f32 0.0, %v6653
  %v6655 = vpop.f32.mrb[0].mxu0
  %v6656 = vpop.f32.mrb[0].mxu0
  %v6657 = vadd.f32 0.0, %v6656
  %v6658 = vpop.f32.mrb[0].mxu0
  %6659 = vmatprep.mubr.bf16.mxu0 0
  %6660 = vmatmul.mubr.bf16.gmra.mrb[0].mxu0 %v6387
  %v6661 = vpop.f32.mrb[0].mxu0
  %v6662 = vadd.f32 0.0, %v6661
  %v6663 = vpop.f32.mrb[0].mxu0
  %v6664 = vpop.f32.mrb[0].mxu0
  %v6665 = vadd.f32 0.0, %v6664
  %v6666 = vpop.f32.mrb[0].mxu0
  %6667 = vmatprep.mubr.bf16.mxu0 0
  %6668 = vmatmul.mubr.bf16.gmra.mrb[0].mxu0 %v6390
  %v6669 = vpop.f32.mrb[0].mxu0
  %v6670 = vadd.f32 0.0, %v6669
  %v6671 = vpop.f32.mrb[0].mxu0
  %v6672 = vpop.f32.mrb[0].mxu0
  %v6673 = vadd.f32 0.0, %v6672
  %v6674 = vpop.f32.mrb[0].mxu0
  %6675 = vmatprep.mubr.bf16.mxu0 0
  %6676 = vmatmul.mubr.bf16.gmra.mrb[0].mxu0 %v6393
  %v6677 = vpop.f32.mrb[0].mxu0
  %v6678 = vadd.f32 0.0, %v6677
  %v6679 = vpop.f32.mrb[0].mxu0
  %v6680 = vpop.f32.mrb[0].mxu0
  %v6681 = vadd.f32 0.0, %v6680
  %v6682 = vpop.f32.mrb[0].mxu0
  %6683 = vdwg.mxu0
  %v6684 = vsel %vm5724, %v6430, 0.0
  %v6685 = vsel %vm5724, %v6433, 0.0
  %v6686 = vadd.f32 %v6684, %v6685
  %v6687 = vsel %vm5724, %v6438, 0.0
  %v6688 = vadd.f32 %v6686, %v6687
  %v6689 = vsel %vm5724, %v6441, 0.0
  %v6690 = vadd.f32 %v6688, %v6689
  %v6691 = vsel %vm5724, %v6446, 0.0
  %v6692 = vadd.f32 %v6690, %v6691
  %v6693 = vsel %vm5724, %v6449, 0.0
  %v6694 = vadd.f32 %v6692, %v6693
  %v6695 = vsel %vm5724, %v6454, 0.0
  %v6696 = vadd.f32 %v6694, %v6695
  %v6697 = vsel %vm5724, %v6457, 0.0
  %v6698 = vadd.f32 %v6696, %v6697
  %v6699 = vsel %vm5724, %v6462, 0.0
  %v6700 = vadd.f32 %v6698, %v6699
  %v6701 = vsel %vm5724, %v6465, 0.0
  %v6702 = vadd.f32 %v6700, %v6701
  %v6703 = vsel %vm5724, %v6470, 0.0
  %v6704 = vadd.f32 %v6702, %v6703
  %v6705 = vsel %vm5724, %v6473, 0.0
  %v6706 = vadd.f32 %v6704, %v6705
  %v6707 = vsel %vm5724, %v6478, 0.0
  %v6708 = vadd.f32 %v6706, %v6707
  %v6709 = vsel %vm5724, %v6481, 0.0
  %v6710 = vadd.f32 %v6708, %v6709
  %v6711 = vsel %vm5724, %v6486, 0.0
  %v6712 = vadd.f32 %v6710, %v6711
  %v6713 = vsel %vm5724, %v6489, 0.0
  %v6714 = vadd.f32 %v6712, %v6713
  %v6715 = vsel %vm5724, %v6494, 0.0
  %v6716 = vadd.f32 %v6714, %v6715
  %v6717 = vsel %vm5724, %v6497, 0.0
  %v6718 = vadd.f32 %v6716, %v6717
  %v6719 = vsel %vm5724, %v6502, 0.0
  %v6720 = vadd.f32 %v6718, %v6719
  %v6721 = vsel %vm5724, %v6505, 0.0
  %v6722 = vadd.f32 %v6720, %v6721
  %v6723 = vsel %vm5724, %v6510, 0.0
  %v6724 = vadd.f32 %v6722, %v6723
  %v6725 = vsel %vm5724, %v6513, 0.0
  %v6726 = vadd.f32 %v6724, %v6725
  %v6727 = vsel %vm5724, %v6518, 0.0
  %v6728 = vadd.f32 %v6726, %v6727
  %v6729 = vsel %vm5724, %v6521, 0.0
  %v6730 = vadd.f32 %v6728, %v6729
  %v6731 = vsel %vm5724, %v6526, 0.0
  %v6732 = vadd.f32 %v6730, %v6731
  %v6733 = vsel %vm5724, %v6529, 0.0
  %v6734 = vadd.f32 %v6732, %v6733
  %v6735 = vsel %vm5724, %v6534, 0.0
  %v6736 = vadd.f32 %v6734, %v6735
  %v6737 = vsel %vm5724, %v6537, 0.0
  %v6738 = vadd.f32 %v6736, %v6737
  %v6739 = vsel %vm5724, %v6542, 0.0
  %v6740 = vadd.f32 %v6738, %v6739
  %v6741 = vsel %vm5724, %v6545, 0.0
  %v6742 = vadd.f32 %v6740, %v6741
  %v6743 = vsel %vm5724, %v6550, 0.0
  %v6744 = vadd.f32 %v6742, %v6743
  %v6745 = vsel %vm5724, %v6553, 0.0
  %v6746 = vadd.f32 %v6744, %v6745
  %v6747 = vsel %vm5724, %v6558, 0.0
  %v6748 = vadd.f32 %v6746, %v6747
  %v6749 = vsel %vm5724, %v6561, 0.0
  %v6750 = vadd.f32 %v6748, %v6749
  %v6751 = vsel %vm5724, %v6566, 0.0
  %v6752 = vadd.f32 %v6750, %v6751
  %v6753 = vsel %vm5724, %v6569, 0.0
  %v6754 = vadd.f32 %v6752, %v6753
  %v6755 = vsel %vm5724, %v6574, 0.0
  %v6756 = vadd.f32 %v6754, %v6755
  %v6757 = vsel %vm5724, %v6577, 0.0
  %v6758 = vadd.f32 %v6756, %v6757
  %v6759 = vsel %vm5724, %v6582, 0.0
  %v6760 = vadd.f32 %v6758, %v6759
  %v6761 = vsel %vm5724, %v6585, 0.0
  %v6762 = vadd.f32 %v6760, %v6761
  %v6763 = vsel %vm5724, %v6590, 0.0
  %v6764 = vadd.f32 %v6762, %v6763
  %v6765 = vsel %vm5724, %v6593, 0.0
  %v6766 = vadd.f32 %v6764, %v6765
  %v6767 = vsel %vm5724, %v6598, 0.0
  %v6768 = vadd.f32 %v6766, %v6767
  %v6769 = vsel %vm5724, %v6601, 0.0
  %v6770 = vadd.f32 %v6768, %v6769
  %v6771 = vsel %vm5724, %v6606, 0.0
  %v6772 = vadd.f32 %v6770, %v6771
  %v6773 = vsel %vm5724, %v6609, 0.0
  %v6774 = vadd.f32 %v6772, %v6773
  %v6775 = vsel %vm5724, %v6614, 0.0
  %v6776 = vadd.f32 %v6774, %v6775
  %v6777 = vsel %vm5724, %v6617, 0.0
  %v6778 = vadd.f32 %v6776, %v6777
  %v6779 = vsel %vm5724, %v6622, 0.0
  %v6780 = vadd.f32 %v6778, %v6779
  %v6781 = vsel %vm5724, %v6625, 0.0
  %v6782 = vadd.f32 %v6780, %v6781
  %v6783 = vsel %vm5724, %v6630, 0.0
  %v6784 = vadd.f32 %v6782, %v6783
  %v6785 = vsel %vm5724, %v6633, 0.0
  %v6786 = vadd.f32 %v6784, %v6785
  %v6787 = vsel %vm5724, %v6638, 0.0
  %v6788 = vadd.f32 %v6786, %v6787
  %v6789 = vsel %vm5724, %v6641, 0.0
  %v6790 = vadd.f32 %v6788, %v6789
  %v6791 = vsel %vm5724, %v6646, 0.0
  %v6792 = vadd.f32 %v6790, %v6791
  %v6793 = vsel %vm5724, %v6649, 0.0
  %v6794 = vadd.f32 %v6792, %v6793
  %v6795 = vsel %vm5724, %v6654, 0.0
  %v6796 = vadd.f32 %v6794, %v6795
  %v6797 = vsel %vm5724, %v6657, 0.0
  %v6798 = vadd.f32 %v6796, %v6797
  %v6799 = vsel %vm5724, %v6662, 0.0
  %v6800 = vadd.f32 %v6798, %v6799
  %v6801 = vsel %vm5724, %v6665, 0.0
  %v6802 = vadd.f32 %v6800, %v6801
  %v6803 = vsel %vm5724, %v6670, 0.0
  %v6804 = vadd.f32 %v6802, %v6803
  %v6805 = vsel %vm5724, %v6673, 0.0
  %v6806 = vadd.f32 %v6804, %v6805
  %v6807 = vsel %vm5724, %v6678, 0.0
  %v6808 = vadd.f32 %v6806, %v6807
  %v6809 = vsel %vm5724, %v6681, 0.0
  %v6810 = vadd.f32 %v6808, %v6809
  %v6811 = vrot.slane %v6810, 4
  %v6812 = vadd.f32 %v6810, %v6811
  %v6813 = vrot.slane %v6812, 2
  %v6814 = vadd.f32 %v6812, %v6813
  %v6815 = vrot.slane %v6814, 1
  %v6816 = vadd.f32 %v6814, %v6815
  %v6817 = vmul.f32 %v6816, 0.0015432099
  %v6818 = vsub.f32 %v6430, %v6817
  %v6819 = vsub.f32 %v6433, %v6817
  %v6820 = vsub.f32 %v6438, %v6817
  %v6821 = vsub.f32 %v6441, %v6817
  %v6822 = vsub.f32 %v6446, %v6817
  %v6823 = vsub.f32 %v6449, %v6817
  %v6824 = vsub.f32 %v6454, %v6817
  %v6825 = vsub.f32 %v6457, %v6817
  %v6826 = vsub.f32 %v6462, %v6817
  %v6827 = vsub.f32 %v6465, %v6817
  %v6828 = vsub.f32 %v6470, %v6817
  %v6829 = vsub.f32 %v6473, %v6817
  %v6830 = vsub.f32 %v6478, %v6817
  %v6831 = vsub.f32 %v6481, %v6817
  %v6832 = vsub.f32 %v6486, %v6817
  %v6833 = vsub.f32 %v6489, %v6817
  %v6834 = vsub.f32 %v6494, %v6817
  %v6835 = vsub.f32 %v6497, %v6817
  %v6836 = vsub.f32 %v6502, %v6817
  %v6837 = vsub.f32 %v6505, %v6817
  %v6838 = vsub.f32 %v6510, %v6817
  %v6839 = vsub.f32 %v6513, %v6817
  %v6840 = vsub.f32 %v6518, %v6817
  %v6841 = vsub.f32 %v6521, %v6817
  %v6842 = vsub.f32 %v6526, %v6817
  %v6843 = vsub.f32 %v6529, %v6817
  %v6844 = vsub.f32 %v6534, %v6817
  %v6845 = vsub.f32 %v6537, %v6817
  %v6846 = vsub.f32 %v6542, %v6817
  %v6847 = vsub.f32 %v6545, %v6817
  %v6848 = vsub.f32 %v6550, %v6817
  %v6849 = vsub.f32 %v6553, %v6817
  %v6850 = vsub.f32 %v6558, %v6817
  %v6851 = vsub.f32 %v6561, %v6817
  %v6852 = vsub.f32 %v6566, %v6817
  %v6853 = vsub.f32 %v6569, %v6817
  %v6854 = vsub.f32 %v6574, %v6817
  %v6855 = vsub.f32 %v6577, %v6817
  %v6856 = vsub.f32 %v6582, %v6817
  %v6857 = vsub.f32 %v6585, %v6817
  %v6858 = vsub.f32 %v6590, %v6817
  %v6859 = vsub.f32 %v6593, %v6817
  %v6860 = vsub.f32 %v6598, %v6817
  %v6861 = vsub.f32 %v6601, %v6817
  %v6862 = vsub.f32 %v6606, %v6817
  %v6863 = vsub.f32 %v6609, %v6817
  %v6864 = vsub.f32 %v6614, %v6817
  %v6865 = vsub.f32 %v6617, %v6817
  %v6866 = vsub.f32 %v6622, %v6817
  %v6867 = vsub.f32 %v6625, %v6817
  %v6868 = vsub.f32 %v6630, %v6817
  %v6869 = vsub.f32 %v6633, %v6817
  %v6870 = vsub.f32 %v6638, %v6817
  %v6871 = vsub.f32 %v6641, %v6817
  %v6872 = vsub.f32 %v6646, %v6817
  %v6873 = vsub.f32 %v6649, %v6817
  %v6874 = vsub.f32 %v6654, %v6817
  %v6875 = vsub.f32 %v6657, %v6817
  %v6876 = vsub.f32 %v6662, %v6817
  %v6877 = vsub.f32 %v6665, %v6817
  %v6878 = vsub.f32 %v6670, %v6817
  %v6879 = vsub.f32 %v6673, %v6817
  %v6880 = vsub.f32 %v6678, %v6817
  %v6881 = vsub.f32 %v6681, %v6817
  %v6882 = vmul.f32 %v6818, %v6818
  %v6883 = vmul.f32 %v6819, %v6819
  %v6884 = vmul.f32 %v6820, %v6820
  %v6885 = vmul.f32 %v6821, %v6821
  %v6886 = vmul.f32 %v6822, %v6822
  %v6887 = vmul.f32 %v6823, %v6823
  %v6888 = vmul.f32 %v6824, %v6824
  %v6889 = vmul.f32 %v6825, %v6825
  %v6890 = vmul.f32 %v6826, %v6826
  %v6891 = vmul.f32 %v6827, %v6827
  %v6892 = vmul.f32 %v6828, %v6828
  %v6893 = vmul.f32 %v6829, %v6829
  %v6894 = vmul.f32 %v6830, %v6830
  %v6895 = vmul.f32 %v6831, %v6831
  %v6896 = vmul.f32 %v6832, %v6832
  %v6897 = vmul.f32 %v6833, %v6833
  %v6898 = vmul.f32 %v6834, %v6834
  %v6899 = vmul.f32 %v6835, %v6835
  %v6900 = vmul.f32 %v6836, %v6836
  %v6901 = vmul.f32 %v6837, %v6837
  %v6902 = vmul.f32 %v6838, %v6838
  %v6903 = vmul.f32 %v6839, %v6839
  %v6904 = vmul.f32 %v6840, %v6840
  %v6905 = vmul.f32 %v6841, %v6841
  %v6906 = vmul.f32 %v6842, %v6842
  %v6907 = vmul.f32 %v6843, %v6843
  %v6908 = vmul.f32 %v6844, %v6844
  %v6909 = vmul.f32 %v6845, %v6845
  %v6910 = vmul.f32 %v6846, %v6846
  %v6911 = vmul.f32 %v6847, %v6847
  %v6912 = vmul.f32 %v6848, %v6848
  %v6913 = vmul.f32 %v6849, %v6849
  %v6914 = vmul.f32 %v6850, %v6850
  %v6915 = vmul.f32 %v6851, %v6851
  %v6916 = vmul.f32 %v6852, %v6852
  %v6917 = vmul.f32 %v6853, %v6853
  %v6918 = vmul.f32 %v6854, %v6854
  %v6919 = vmul.f32 %v6855, %v6855
  %v6920 = vmul.f32 %v6856, %v6856
  %v6921 = vmul.f32 %v6857, %v6857
  %v6922 = vmul.f32 %v6858, %v6858
  %v6923 = vmul.f32 %v6859, %v6859
  %v6924 = vmul.f32 %v6860, %v6860
  %v6925 = vmul.f32 %v6861, %v6861
  %v6926 = vmul.f32 %v6862, %v6862
  %v6927 = vmul.f32 %v6863, %v6863
  %v6928 = vmul.f32 %v6864, %v6864
  %v6929 = vmul.f32 %v6865, %v6865
  %v6930 = vmul.f32 %v6866, %v6866
  %v6931 = vmul.f32 %v6867, %v6867
  %v6932 = vmul.f32 %v6868, %v6868
  %v6933 = vmul.f32 %v6869, %v6869
  %v6934 = vmul.f32 %v6870, %v6870
  %v6935 = vmul.f32 %v6871, %v6871
  %v6936 = vmul.f32 %v6872, %v6872
  %v6937 = vmul.f32 %v6873, %v6873
  %v6938 = vmul.f32 %v6874, %v6874
  %v6939 = vmul.f32 %v6875, %v6875
  %v6940 = vmul.f32 %v6876, %v6876
  %v6941 = vmul.f32 %v6877, %v6877
  %v6942 = vmul.f32 %v6878, %v6878
  %v6943 = vmul.f32 %v6879, %v6879
  %v6944 = vmul.f32 %v6880, %v6880
  %v6945 = vmul.f32 %v6881, %v6881
  %v6946 = vsel %vm5724, %v6882, 0.0
  %v6947 = vsel %vm5724, %v6883, 0.0
  %v6948 = vadd.f32 %v6946, %v6947
  %v6949 = vsel %vm5724, %v6884, 0.0
  %v6950 = vadd.f32 %v6948, %v6949
  %v6951 = vsel %vm5724, %v6885, 0.0
  %v6952 = vadd.f32 %v6950, %v6951
  %v6953 = vsel %vm5724, %v6886, 0.0
  %v6954 = vadd.f32 %v6952, %v6953
  %v6955 = vsel %vm5724, %v6887, 0.0
  %v6956 = vadd.f32 %v6954, %v6955
  %v6957 = vsel %vm5724, %v6888, 0.0
  %v6958 = vadd.f32 %v6956, %v6957
  %v6959 = vsel %vm5724, %v6889, 0.0
  %v6960 = vadd.f32 %v6958, %v6959
  %v6961 = vsel %vm5724, %v6890, 0.0
  %v6962 = vadd.f32 %v6960, %v6961
  %v6963 = vsel %vm5724, %v6891, 0.0
  %v6964 = vadd.f32 %v6962, %v6963
  %v6965 = vsel %vm5724, %v6892, 0.0
  %v6966 = vadd.f32 %v6964, %v6965
  %v6967 = vsel %vm5724, %v6893, 0.0
  %v6968 = vadd.f32 %v6966, %v6967
  %v6969 = vsel %vm5724, %v6894, 0.0
  %v6970 = vadd.f32 %v6968, %v6969
  %v6971 = vsel %vm5724, %v6895, 0.0
  %v6972 = vadd.f32 %v6970, %v6971
  %v6973 = vsel %vm5724, %v6896, 0.0
  %v6974 = vadd.f32 %v6972, %v6973
  %v6975 = vsel %vm5724, %v6897, 0.0
  %v6976 = vadd.f32 %v6974, %v6975
  %v6977 = vsel %vm5724, %v6898, 0.0
  %v6978 = vadd.f32 %v6976, %v6977
  %v6979 = vsel %vm5724, %v6899, 0.0
  %v6980 = vadd.f32 %v6978, %v6979
  %v6981 = vsel %vm5724, %v6900, 0.0
  %v6982 = vadd.f32 %v6980, %v6981
  %v6983 = vsel %vm5724, %v6901, 0.0
  %v6984 = vadd.f32 %v6982, %v6983
  %v6985 = vsel %vm5724, %v6902, 0.0
  %v6986 = vadd.f32 %v6984, %v6985
  %v6987 = vsel %vm5724, %v6903, 0.0
  %v6988 = vadd.f32 %v6986, %v6987
  %v6989 = vsel %vm5724, %v6904, 0.0
  %v6990 = vadd.f32 %v6988, %v6989
  %v6991 = vsel %vm5724, %v6905, 0.0
  %v6992 = vadd.f32 %v6990, %v6991
  %v6993 = vsel %vm5724, %v6906, 0.0
  %v6994 = vadd.f32 %v6992, %v6993
  %v6995 = vsel %vm5724, %v6907, 0.0
  %v6996 = vadd.f32 %v6994, %v6995
  %v6997 = vsel %vm5724, %v6908, 0.0
  %v6998 = vadd.f32 %v6996, %v6997
  %v6999 = vsel %vm5724, %v6909, 0.0
  %v7000 = vadd.f32 %v6998, %v6999
  %v7001 = vsel %vm5724, %v6910, 0.0
  %v7002 = vadd.f32 %v7000, %v7001
  %v7003 = vsel %vm5724, %v6911, 0.0
  %v7004 = vadd.f32 %v7002, %v7003
  %v7005 = vsel %vm5724, %v6912, 0.0
  %v7006 = vadd.f32 %v7004, %v7005
  %v7007 = vsel %vm5724, %v6913, 0.0
  %v7008 = vadd.f32 %v7006, %v7007
  %v7009 = vsel %vm5724, %v6914, 0.0
  %v7010 = vadd.f32 %v7008, %v7009
  %v7011 = vsel %vm5724, %v6915, 0.0
  %v7012 = vadd.f32 %v7010, %v7011
  %v7013 = vsel %vm5724, %v6916, 0.0
  %v7014 = vadd.f32 %v7012, %v7013
  %v7015 = vsel %vm5724, %v6917, 0.0
  %v7016 = vadd.f32 %v7014, %v7015
  %v7017 = vsel %vm5724, %v6918, 0.0
  %v7018 = vadd.f32 %v7016, %v7017
  %v7019 = vsel %vm5724, %v6919, 0.0
  %v7020 = vadd.f32 %v7018, %v7019
  %v7021 = vsel %vm5724, %v6920, 0.0
  %v7022 = vadd.f32 %v7020, %v7021
  %v7023 = vsel %vm5724, %v6921, 0.0
  %v7024 = vadd.f32 %v7022, %v7023
  %v7025 = vsel %vm5724, %v6922, 0.0
  %v7026 = vadd.f32 %v7024, %v7025
  %v7027 = vsel %vm5724, %v6923, 0.0
  %v7028 = vadd.f32 %v7026, %v7027
  %v7029 = vsel %vm5724, %v6924, 0.0
  %v7030 = vadd.f32 %v7028, %v7029
  %v7031 = vsel %vm5724, %v6925, 0.0
  %v7032 = vadd.f32 %v7030, %v7031
  %v7033 = vsel %vm5724, %v6926, 0.0
  %v7034 = vadd.f32 %v7032, %v7033
  %v7035 = vsel %vm5724, %v6927, 0.0
  %v7036 = vadd.f32 %v7034, %v7035
  %v7037 = vsel %vm5724, %v6928, 0.0
  %v7038 = vadd.f32 %v7036, %v7037
  %v7039 = vsel %vm5724, %v6929, 0.0
  %v7040 = vadd.f32 %v7038, %v7039
  %v7041 = vsel %vm5724, %v6930, 0.0
  %v7042 = vadd.f32 %v7040, %v7041
  %v7043 = vsel %vm5724, %v6931, 0.0
  %v7044 = vadd.f32 %v7042, %v7043
  %v7045 = vsel %vm5724, %v6932, 0.0
  %v7046 = vadd.f32 %v7044, %v7045
  %v7047 = vsel %vm5724, %v6933, 0.0
  %v7048 = vadd.f32 %v7046, %v7047
  %v7049 = vsel %vm5724, %v6934, 0.0
  %v7050 = vadd.f32 %v7048, %v7049
  %v7051 = vsel %vm5724, %v6935, 0.0
  %v7052 = vadd.f32 %v7050, %v7051
  %v7053 = vsel %vm5724, %v6936, 0.0
  %v7054 = vadd.f32 %v7052, %v7053
  %v7055 = vsel %vm5724, %v6937, 0.0
  %v7056 = vadd.f32 %v7054, %v7055
  %v7057 = vsel %vm5724, %v6938, 0.0
  %v7058 = vadd.f32 %v7056, %v7057
  %v7059 = vsel %vm5724, %v6939, 0.0
  %v7060 = vadd.f32 %v7058, %v7059
  %v7061 = vsel %vm5724, %v6940, 0.0
  %v7062 = vadd.f32 %v7060, %v7061
  %v7063 = vsel %vm5724, %v6941, 0.0
  %v7064 = vadd.f32 %v7062, %v7063
  %v7065 = vsel %vm5724, %v6942, 0.0
  %v7066 = vadd.f32 %v7064, %v7065
  %v7067 = vsel %vm5724, %v6943, 0.0
  %v7068 = vadd.f32 %v7066, %v7067
  %v7069 = vsel %vm5724, %v6944, 0.0
  %v7070 = vadd.f32 %v7068, %v7069
  %v7071 = vsel %vm5724, %v6945, 0.0
  %v7072 = vadd.f32 %v7070, %v7071
  %v7073 = vrot.slane %v7072, 4
  %v7074 = vadd.f32 %v7072, %v7073
  %v7075 = vrot.slane %v7074, 2
  %v7076 = vadd.f32 %v7074, %v7075
  %v7077 = vrot.slane %v7076, 1
  %v7078 = vadd.f32 %v7076, %v7077
  %v7079 = vmul.f32 %v6817, %v6817
  %v7080 = vmul.f32 %v7079, 136.0
  %v7081 = vadd.f32 %v7078, %v7080
  %v7082 = vmul.f32 %v7081, 0.0015432099
  %v7083 = vadd.f32 %v7082, 1e-12
  %v7084 = vrsqrt.pop %v7083
  %v7085 = vmul.f32 %v6818, %v7084
  %v7086 = vmul.f32 %v6819, %v7084
  %v7087 = vmul.f32 %v6820, %v7084
  %v7088 = vmul.f32 %v6821, %v7084
  %v7089 = vmul.f32 %v6822, %v7084
  %v7090 = vmul.f32 %v6823, %v7084
  %v7091 = vmul.f32 %v6824, %v7084
  %v7092 = vmul.f32 %v6825, %v7084
  %v7093 = vmul.f32 %v6826, %v7084
  %v7094 = vmul.f32 %v6827, %v7084
  %v7095 = vmul.f32 %v6828, %v7084
  %v7096 = vmul.f32 %v6829, %v7084
  %v7097 = vmul.f32 %v6830, %v7084
  %v7098 = vmul.f32 %v6831, %v7084
  %v7099 = vmul.f32 %v6832, %v7084
  %v7100 = vmul.f32 %v6833, %v7084
  %v7101 = vmul.f32 %v6834, %v7084
  %v7102 = vmul.f32 %v6835, %v7084
  %v7103 = vmul.f32 %v6836, %v7084
  %v7104 = vmul.f32 %v6837, %v7084
  %v7105 = vmul.f32 %v6838, %v7084
  %v7106 = vmul.f32 %v6839, %v7084
  %v7107 = vmul.f32 %v6840, %v7084
  %v7108 = vmul.f32 %v6841, %v7084
  %v7109 = vmul.f32 %v6842, %v7084
  %v7110 = vmul.f32 %v6843, %v7084
  %v7111 = vmul.f32 %v6844, %v7084
  %v7112 = vmul.f32 %v6845, %v7084
  %v7113 = vmul.f32 %v6846, %v7084
  %v7114 = vmul.f32 %v6847, %v7084
  %v7115 = vmul.f32 %v6848, %v7084
  %v7116 = vmul.f32 %v6849, %v7084
  %v7117 = vmul.f32 %v6850, %v7084
  %v7118 = vmul.f32 %v6851, %v7084
  %v7119 = vmul.f32 %v6852, %v7084
  %v7120 = vmul.f32 %v6853, %v7084
  %v7121 = vmul.f32 %v6854, %v7084
  %v7122 = vmul.f32 %v6855, %v7084
  %v7123 = vmul.f32 %v6856, %v7084
  %v7124 = vmul.f32 %v6857, %v7084
  %v7125 = vmul.f32 %v6858, %v7084
  %v7126 = vmul.f32 %v6859, %v7084
  %v7127 = vmul.f32 %v6860, %v7084
  %v7128 = vmul.f32 %v6861, %v7084
  %v7129 = vmul.f32 %v6862, %v7084
  %v7130 = vmul.f32 %v6863, %v7084
  %v7131 = vmul.f32 %v6864, %v7084
  %v7132 = vmul.f32 %v6865, %v7084
  %v7133 = vmul.f32 %v6866, %v7084
  %v7134 = vmul.f32 %v6867, %v7084
  %v7135 = vmul.f32 %v6868, %v7084
  %v7136 = vmul.f32 %v6869, %v7084
  %v7137 = vmul.f32 %v6870, %v7084
  %v7138 = vmul.f32 %v6871, %v7084
  %v7139 = vmul.f32 %v6872, %v7084
  %v7140 = vmul.f32 %v6873, %v7084
  %v7141 = vmul.f32 %v6874, %v7084
  %v7142 = vmul.f32 %v6875, %v7084
  %v7143 = vmul.f32 %v6876, %v7084
  %v7144 = vmul.f32 %v6877, %v7084
  %v7145 = vmul.f32 %v6878, %v7084
  %v7146 = vmul.f32 %v6879, %v7084
  %v7147 = vmul.f32 %v6880, %v7084
  %v7148 = vmul.f32 %v6881, %v7084
  %v7149 = vmax.f32 %v7085, 0.0
  %v7150 = vmax.f32 %v7086, 0.0
  %v7151 = vmax.f32 %v7087, 0.0
  %v7152 = vmax.f32 %v7088, 0.0
  %v7153 = vmax.f32 %v7089, 0.0
  %v7154 = vmax.f32 %v7090, 0.0
  %v7155 = vmax.f32 %v7091, 0.0
  %v7156 = vmax.f32 %v7092, 0.0
  %v7157 = vmax.f32 %v7093, 0.0
  %v7158 = vmax.f32 %v7094, 0.0
  %v7159 = vmax.f32 %v7095, 0.0
  %v7160 = vmax.f32 %v7096, 0.0
  %v7161 = vmax.f32 %v7097, 0.0
  %v7162 = vmax.f32 %v7098, 0.0
  %v7163 = vmax.f32 %v7099, 0.0
  %v7164 = vmax.f32 %v7100, 0.0
  %v7165 = vmax.f32 %v7101, 0.0
  %v7166 = vmax.f32 %v7102, 0.0
  %v7167 = vmax.f32 %v7103, 0.0
  %v7168 = vmax.f32 %v7104, 0.0
  %v7169 = vmax.f32 %v7105, 0.0
  %v7170 = vmax.f32 %v7106, 0.0
  %v7171 = vmax.f32 %v7107, 0.0
  %v7172 = vmax.f32 %v7108, 0.0
  %v7173 = vmax.f32 %v7109, 0.0
  %v7174 = vmax.f32 %v7110, 0.0
  %v7175 = vmax.f32 %v7111, 0.0
  %v7176 = vmax.f32 %v7112, 0.0
  %v7177 = vmax.f32 %v7113, 0.0
  %v7178 = vmax.f32 %v7114, 0.0
  %v7179 = vmax.f32 %v7115, 0.0
  %v7180 = vmax.f32 %v7116, 0.0
  %v7181 = vmax.f32 %v7117, 0.0
  %v7182 = vmax.f32 %v7118, 0.0
  %v7183 = vmax.f32 %v7119, 0.0
  %v7184 = vmax.f32 %v7120, 0.0
  %v7185 = vmax.f32 %v7121, 0.0
  %v7186 = vmax.f32 %v7122, 0.0
  %v7187 = vmax.f32 %v7123, 0.0
  %v7188 = vmax.f32 %v7124, 0.0
  %v7189 = vmax.f32 %v7125, 0.0
  %v7190 = vmax.f32 %v7126, 0.0
  %v7191 = vmax.f32 %v7127, 0.0
  %v7192 = vmax.f32 %v7128, 0.0
  %v7193 = vmax.f32 %v7129, 0.0
  %v7194 = vmax.f32 %v7130, 0.0
  %v7195 = vmax.f32 %v7131, 0.0
  %v7196 = vmax.f32 %v7132, 0.0
  %v7197 = vmax.f32 %v7133, 0.0
  %v7198 = vmax.f32 %v7134, 0.0
  %v7199 = vmax.f32 %v7135, 0.0
  %v7200 = vmax.f32 %v7136, 0.0
  %v7201 = vmax.f32 %v7137, 0.0
  %v7202 = vmax.f32 %v7138, 0.0
  %v7203 = vmax.f32 %v7139, 0.0
  %v7204 = vmax.f32 %v7140, 0.0
  %v7205 = vmax.f32 %v7141, 0.0
  %v7206 = vmax.f32 %v7142, 0.0
  %v7207 = vmax.f32 %v7143, 0.0
  %v7208 = vmax.f32 %v7144, 0.0
  %v7209 = vmax.f32 %v7145, 0.0
  %v7210 = vmax.f32 %v7146, 0.0
  %v7211 = vmax.f32 %v7147, 0.0
  %v7212 = vmax.f32 %v7148, 0.0
  %v7213 = vsub.f32 0.0, %v6817
  %v7214 = vmul.f32 %v7213, %v7084
  %v7215 = vmax.f32 %v7214, 0.0
  %v7216 = vpack.c.bf16 %v7150, %v7149
  %v7217 = vpack.c.bf16 %v7152, %v7151
  %v7218 = vpack.c.bf16 %v7154, %v7153
  %v7219 = vpack.c.bf16 %v7156, %v7155
  %v7220 = vpack.c.bf16 %v7158, %v7157
  %v7221 = vpack.c.bf16 %v7160, %v7159
  %v7222 = vpack.c.bf16 %v7162, %v7161
  %v7223 = vpack.c.bf16 %v7164, %v7163
  %v7224 = vpack.c.bf16 %v7166, %v7165
  %v7225 = vpack.c.bf16 %v7168, %v7167
  %v7226 = vpack.c.bf16 %v7170, %v7169
  %v7227 = vpack.c.bf16 %v7172, %v7171
  %v7228 = vpack.c.bf16 %v7174, %v7173
  %v7229 = vpack.c.bf16 %v7176, %v7175
  %v7230 = vpack.c.bf16 %v7178, %v7177
  %v7231 = vpack.c.bf16 %v7180, %v7179
  %v7232 = vpack.c.bf16 %v7182, %v7181
  %v7233 = vpack.c.bf16 %v7184, %v7183
  %v7234 = vpack.c.bf16 %v7186, %v7185
  %v7235 = vpack.c.bf16 %v7188, %v7187
  %v7236 = vpack.c.bf16 %v7190, %v7189
  %v7237 = vpack.c.bf16 %v7192, %v7191
  %v7238 = vpack.c.bf16 %v7194, %v7193
  %v7239 = vpack.c.bf16 %v7196, %v7195
  %v7240 = vpack.c.bf16 %v7198, %v7197
  %v7241 = vpack.c.bf16 %v7200, %v7199
  %v7242 = vpack.c.bf16 %v7202, %v7201
  %v7243 = vpack.c.bf16 %v7204, %v7203
  %v7244 = vpack.c.bf16 %v7206, %v7205
  %v7245 = vpack.c.bf16 %v7208, %v7207
  %v7246 = vpack.c.bf16 %v7210, %v7209
  %v7247 = vpack.c.bf16 %v7212, %v7211
  %7248 = vst.msk [vmem:[#allocation4] sm:$0xff] %vm5724, %v7216
  %7249 = vst.msk [vmem:[#allocation4 + $0x8] sm:$0xff] %vm5724, %v7217
  %7250 = vst.msk [vmem:[#allocation4 + $0x10] sm:$0xff] %vm5724, %v7218
  %7251 = vst.msk [vmem:[#allocation4 + $0x18] sm:$0xff] %vm5724, %v7219
  %7252 = vst.msk [vmem:[#allocation4 + $0x20] sm:$0xff] %vm5724, %v7220
  %7253 = vst.msk [vmem:[#allocation4 + $0x28] sm:$0xff] %vm5724, %v7221
  %7254 = vst.msk [vmem:[#allocation4 + $0x30] sm:$0xff] %vm5724, %v7222
  %7255 = vst.msk [vmem:[#allocation4 + $0x38] sm:$0xff] %vm5724, %v7223
  %7256 = vst.msk [vmem:[#allocation4 + $0x40] sm:$0xff] %vm5724, %v7224
  %7257 = vst.msk [vmem:[#allocation4 + $0x48] sm:$0xff] %vm5724, %v7225
  %7258 = vst.msk [vmem:[#allocation4 + $0x50] sm:$0xff] %vm5724, %v7226
  %7259 = vst.msk [vmem:[#allocation4 + $0x58] sm:$0xff] %vm5724, %v7227
  %7260 = vst.msk [vmem:[#allocation4 + $0x60] sm:$0xff] %vm5724, %v7228
  %7261 = vst.msk [vmem:[#allocation4 + $0x68] sm:$0xff] %vm5724, %v7229
  %7262 = vst.msk [vmem:[#allocation4 + $0x70] sm:$0xff] %vm5724, %v7230
  %7263 = vst.msk [vmem:[#allocation4 + $0x78] sm:$0xff] %vm5724, %v7231
  %7264 = vst.msk [vmem:[#allocation4 + $0x80] sm:$0xff] %vm5724, %v7232
  %7265 = vst.msk [vmem:[#allocation4 + $0x88] sm:$0xff] %vm5724, %v7233
  %7266 = vst.msk [vmem:[#allocation4 + $0x90] sm:$0xff] %vm5724, %v7234
  %7267 = vst.msk [vmem:[#allocation4 + $0x98] sm:$0xff] %vm5724, %v7235
  %7268 = vst.msk [vmem:[#allocation4 + $0xa0] sm:$0xff] %vm5724, %v7236
  %7269 = vst.msk [vmem:[#allocation4 + $0xa8] sm:$0xff] %vm5724, %v7237
  %7270 = vst.msk [vmem:[#allocation4 + $0xb0] sm:$0xff] %vm5724, %v7238
  %7271 = vst.msk [vmem:[#allocation4 + $0xb8] sm:$0xff] %vm5724, %v7239
  %7272 = vst.msk [vmem:[#allocation4 + $0xc0] sm:$0xff] %vm5724, %v7240
  %7273 = vst.msk [vmem:[#allocation4 + $0xc8] sm:$0xff] %vm5724, %v7241
  %7274 = vst.msk [vmem:[#allocation4 + $0xd0] sm:$0xff] %vm5724, %v7242
  %7275 = vst.msk [vmem:[#allocation4 + $0xd8] sm:$0xff] %vm5724, %v7243
  %7276 = vst.msk [vmem:[#allocation4 + $0xe0] sm:$0xff] %vm5724, %v7244
  %7277 = vst.msk [vmem:[#allocation4 + $0xe8] sm:$0xff] %vm5724, %v7245
  %7278 = vst.msk [vmem:[#allocation4 + $0xf0] sm:$0xff] %vm5724, %v7246
  %7279 = vst.msk [vmem:[#allocation4 + $0xf8] sm:$0xff] %vm5724, %v7247
  %v7280 = vpack.c.bf16 %v7215, %v7215
  %7281 = vst.msk [vmem:[#allocation3] sm:$0xff] %vm5724, %v7280
  %7282 = vst.msk [vmem:[#allocation3 + $0x180] sm:$0xff] %vm5724, %v7280
  %vm7283 = vcmask 253952
  %vm7284 = vmand %vm7283, %vm36
  %v7285 = vld [vmem:[#allocation3] sm:$0x1]
  %v7286 = vsel %vm7284, %v7280, %v7285
  %7287 = vst [vmem:[#allocation3] sm:$0x1] %v7286
  %v7288 = vld [vmem:[#allocation3 + $0x18] sm:$0x1]
  %v7289 = vsel %vm7284, %v7280, %v7288
  %7290 = vst [vmem:[#allocation3 + $0x18] sm:$0x1] %v7289
  %v7291 = vld [vmem:[#allocation3 + $0x30] sm:$0x1]
  %v7292 = vsel %vm7284, %v7280, %v7291
  %7293 = vst [vmem:[#allocation3 + $0x30] sm:$0x1] %v7292
  %v7294 = vld [vmem:[#allocation3 + $0x48] sm:$0x1]
  %v7295 = vsel %vm7284, %v7280, %v7294
  %7296 = vst [vmem:[#allocation3 + $0x48] sm:$0x1] %v7295
  %v7297 = vld [vmem:[#allocation3 + $0x60] sm:$0x1]
  %v7298 = vsel %vm7284, %v7280, %v7297
  %7299 = vst [vmem:[#allocation3 + $0x60] sm:$0x1] %v7298
  %v7300 = vld [vmem:[#allocation3 + $0x78] sm:$0x1]
  %v7301 = vsel %vm7284, %v7280, %v7300
  %7302 = vst [vmem:[#allocation3 + $0x78] sm:$0x1] %v7301
  %v7303 = vld [vmem:[#allocation3 + $0x90] sm:$0x1]
  %v7304 = vsel %vm7284, %v7280, %v7303
  %7305 = vst [vmem:[#allocation3 + $0x90] sm:$0x1] %v7304
  %v7306 = vld [vmem:[#allocation3 + $0xa8] sm:$0x1]
  %v7307 = vsel %vm7284, %v7280, %v7306
  %7308 = vst [vmem:[#allocation3 + $0xa8] sm:$0x1] %v7307
  %v7309 = vld [vmem:[#allocation3 + $0xc0] sm:$0x1]
  %v7310 = vsel %vm7284, %v7280, %v7309
  %7311 = vst [vmem:[#allocation3 + $0xc0] sm:$0x1] %v7310
  %v7312 = vld [vmem:[#allocation3 + $0xd8] sm:$0x1]
  %v7313 = vsel %vm7284, %v7280, %v7312
  %7314 = vst [vmem:[#allocation3 + $0xd8] sm:$0x1] %v7313
  %v7315 = vld [vmem:[#allocation3 + $0xf0] sm:$0x1]
  %v7316 = vsel %vm7284, %v7280, %v7315
  %7317 = vst [vmem:[#allocation3 + $0xf0] sm:$0x1] %v7316
  %v7318 = vld [vmem:[#allocation3 + $0x108] sm:$0x1]
  %v7319 = vsel %vm7284, %v7280, %v7318
  %7320 = vst [vmem:[#allocation3 + $0x108] sm:$0x1] %v7319
  %v7321 = vld [vmem:[#allocation3 + $0x120] sm:$0x1]
  %v7322 = vsel %vm7284, %v7280, %v7321
  %7323 = vst [vmem:[#allocation3 + $0x120] sm:$0x1] %v7322
  %v7324 = vld [vmem:[#allocation3 + $0x138] sm:$0x1]
  %v7325 = vsel %vm7284, %v7280, %v7324
  %7326 = vst [vmem:[#allocation3 + $0x138] sm:$0x1] %v7325
  %v7327 = vld [vmem:[#allocation3 + $0x150] sm:$0x1]
  %v7328 = vsel %vm7284, %v7280, %v7327
  %7329 = vst [vmem:[#allocation3 + $0x150] sm:$0x1] %v7328
  %v7330 = vld [vmem:[#allocation3 + $0x168] sm:$0x1]
  %v7331 = vsel %vm7284, %v7280, %v7330
  %7332 = vst [vmem:[#allocation3 + $0x168] sm:$0x1] %v7331
  %v7333 = vld [vmem:[#allocation3 + $0x180] sm:$0x1]
  %v7334 = vsel %vm7284, %v7280, %v7333
  %7335 = vst [vmem:[#allocation3 + $0x180] sm:$0x1] %v7334
  %v7336 = vld [vmem:[#allocation3 + $0x198] sm:$0x1]
  %v7337 = vsel %vm7284, %v7280, %v7336
  %7338 = vst [vmem:[#allocation3 + $0x198] sm:$0x1] %v7337
  %v7339 = vld [vmem:[#allocation3 + $0x1b0] sm:$0x1]
  %v7340 = vsel %vm7284, %v7280, %v7339
  %7341 = vst [vmem:[#allocation3 + $0x1b0] sm:$0x1] %v7340
  %v7342 = vld [vmem:[#allocation3 + $0x1c8] sm:$0x1]
  %v7343 = vsel %vm7284, %v7280, %v7342
  %7344 = vst [vmem:[#allocation3 + $0x1c8] sm:$0x1] %v7343
  %v7345 = vld [vmem:[#allocation3 + $0x1e0] sm:$0x1]
  %v7346 = vsel %vm7284, %v7280, %v7345
  %7347 = vst [vmem:[#allocation3 + $0x1e0] sm:$0x1] %v7346
  %v7348 = vld [vmem:[#allocation3 + $0x1f8] sm:$0x1]
  %v7349 = vsel %vm7284, %v7280, %v7348
  %7350 = vst [vmem:[#allocation3 + $0x1f8] sm:$0x1] %v7349
  %v7351 = vld [vmem:[#allocation3 + $0x210] sm:$0x1]
  %v7352 = vsel %vm7284, %v7280, %v7351
  %7353 = vst [vmem:[#allocation3 + $0x210] sm:$0x1] %v7352
  %v7354 = vld [vmem:[#allocation3 + $0x228] sm:$0x1]
  %v7355 = vsel %vm7284, %v7280, %v7354
  %7356 = vst [vmem:[#allocation3 + $0x228] sm:$0x1] %v7355
  %v7357 = vld [vmem:[#allocation3 + $0x240] sm:$0x1]
  %v7358 = vsel %vm7284, %v7280, %v7357
  %7359 = vst [vmem:[#allocation3 + $0x240] sm:$0x1] %v7358
  %v7360 = vld [vmem:[#allocation3 + $0x258] sm:$0x1]
  %v7361 = vsel %vm7284, %v7280, %v7360
  %7362 = vst [vmem:[#allocation3 + $0x258] sm:$0x1] %v7361
  %v7363 = vld [vmem:[#allocation3 + $0x270] sm:$0x1]
  %v7364 = vsel %vm7284, %v7280, %v7363
  %7365 = vst [vmem:[#allocation3 + $0x270] sm:$0x1] %v7364
  %v7366 = vld [vmem:[#allocation3 + $0x288] sm:$0x1]
  %v7367 = vsel %vm7284, %v7280, %v7366
  %7368 = vst [vmem:[#allocation3 + $0x288] sm:$0x1] %v7367
  %v7369 = vld [vmem:[#allocation3 + $0x2a0] sm:$0x1]
  %v7370 = vsel %vm7284, %v7280, %v7369
  %7371 = vst [vmem:[#allocation3 + $0x2a0] sm:$0x1] %v7370
  %v7372 = vld [vmem:[#allocation3 + $0x2b8] sm:$0x1]
  %v7373 = vsel %vm7284, %v7280, %v7372
  %7374 = vst [vmem:[#allocation3 + $0x2b8] sm:$0x1] %v7373
  %v7375 = vld [vmem:[#allocation3 + $0x2d0] sm:$0x1]
  %v7376 = vsel %vm7284, %v7280, %v7375
  %7377 = vst [vmem:[#allocation3 + $0x2d0] sm:$0x1] %v7376
  %v7378 = vld [vmem:[#allocation3 + $0x2e8] sm:$0x1]
  %v7379 = vsel %vm7284, %v7280, %v7378
  %7380 = vst [vmem:[#allocation3 + $0x2e8] sm:$0x1] %v7379
  %v7381 = vld [vmem:[#allocation4] sm:$0xff]
  %v7382 = vld [vmem:[#allocation4 + $0x8] sm:$0xff]
  %v7383 = vld [vmem:[#allocation4 + $0x10] sm:$0xff]
  %v7384 = vld [vmem:[#allocation4 + $0x18] sm:$0xff]
  %v7385 = vld [vmem:[#allocation4 + $0x20] sm:$0xff]
  %v7386 = vld [vmem:[#allocation4 + $0x28] sm:$0xff]
  %v7387 = vld [vmem:[#allocation4 + $0x30] sm:$0xff]
  %v7388 = vld [vmem:[#allocation4 + $0x38] sm:$0xff]
  %v7389 = vld [vmem:[#allocation4 + $0x40] sm:$0xff]
  %v7390 = vld [vmem:[#allocation4 + $0x48] sm:$0xff]
  %v7391 = vld [vmem:[#allocation4 + $0x50] sm:$0xff]
  %v7392 = vld [vmem:[#allocation4 + $0x58] sm:$0xff]
  %v7393 = vld [vmem:[#allocation4 + $0x60] sm:$0xff]
  %v7394 = vld [vmem:[#allocation4 + $0x68] sm:$0xff]
  %v7395 = vld [vmem:[#allocation4 + $0x70] sm:$0xff]
  %v7396 = vld [vmem:[#allocation4 + $0x80] sm:$0xff]
  %v7397 = vld [vmem:[#allocation4 + $0x88] sm:$0xff]
  %v7398 = vld [vmem:[#allocation4 + $0x90] sm:$0xff]
  %v7399 = vld [vmem:[#allocation4 + $0x98] sm:$0xff]
  %v7400 = vld [vmem:[#allocation4 + $0xa0] sm:$0xff]
  %v7401 = vld [vmem:[#allocation4 + $0xa8] sm:$0xff]
  %v7402 = vld [vmem:[#allocation4 + $0xb0] sm:$0xff]
  %v7403 = vld [vmem:[#allocation4 + $0xb8] sm:$0xff]
  %v7404 = vld [vmem:[#allocation4 + $0xc0] sm:$0xff]
  %v7405 = vld [vmem:[#allocation4 + $0xc8] sm:$0xff]
  %v7406 = vld [vmem:[#allocation4 + $0xd0] sm:$0xff]
  %v7407 = vld [vmem:[#allocation4 + $0xd8] sm:$0xff]
  %v7408 = vld [vmem:[#allocation4 + $0xe0] sm:$0xff]
  %v7409 = vld [vmem:[#allocation4 + $0xe8] sm:$0xff]
  %v7410 = vld [vmem:[#allocation4 + $0xf0] sm:$0xff]
  %v7412 = vshrl.u32 %v7381, 16
  %v7414 = vrot.slane %v7412, 7
  %v7415 = vshll.u32 %v7381, 16
  %v7417 = vor.u32 %v7414, %v7415
  %v7419 = vshrl.u32 %v7382, 16
  %v7421 = vrot.slane %v7419, 7
  %v7422 = vshll.u32 %v7382, 16
  %v7424 = vor.u32 %v7421, %v7422
  %v7426 = vshrl.u32 %v7383, 16
  %v7428 = vrot.slane %v7426, 7
  %v7429 = vshll.u32 %v7383, 16
  %v7431 = vor.u32 %v7428, %v7429
  %v7433 = vshrl.u32 %v7384, 16
  %v7435 = vrot.slane %v7433, 7
  %v7436 = vshll.u32 %v7384, 16
  %v7438 = vor.u32 %v7435, %v7436
  %v7440 = vshrl.u32 %v7385, 16
  %v7442 = vrot.slane %v7440, 7
  %v7443 = vshll.u32 %v7385, 16
  %v7445 = vor.u32 %v7442, %v7443
  %v7447 = vshrl.u32 %v7386, 16
  %v7449 = vrot.slane %v7447, 7
  %v7450 = vshll.u32 %v7386, 16
  %v7452 = vor.u32 %v7449, %v7450
  %v7454 = vshrl.u32 %v7387, 16
  %v7456 = vrot.slane %v7454, 7
  %v7457 = vshll.u32 %v7387, 16
  %v7459 = vor.u32 %v7456, %v7457
  %v7461 = vshrl.u32 %v7388, 16
  %v7463 = vrot.slane %v7461, 7
  %v7464 = vshll.u32 %v7388, 16
  %v7466 = vor.u32 %v7463, %v7464
  %v7468 = vshrl.u32 %v7389, 16
  %v7470 = vrot.slane %v7468, 7
  %v7471 = vshll.u32 %v7389, 16
  %v7473 = vor.u32 %v7470, %v7471
  %v7475 = vshrl.u32 %v7390, 16
  %v7477 = vrot.slane %v7475, 7
  %v7478 = vshll.u32 %v7390, 16
  %v7480 = vor.u32 %v7477, %v7478
  %v7482 = vshrl.u32 %v7391, 16
  %v7484 = vrot.slane %v7482, 7
  %v7485 = vshll.u32 %v7391, 16
  %v7487 = vor.u32 %v7484, %v7485
  %v7489 = vshrl.u32 %v7392, 16
  %v7491 = vrot.slane %v7489, 7
  %v7492 = vshll.u32 %v7392, 16
  %v7494 = vor.u32 %v7491, %v7492
  %v7496 = vshrl.u32 %v7393, 16
  %v7498 = vrot.slane %v7496, 7
  %v7499 = vshll.u32 %v7393, 16
  %v7501 = vor.u32 %v7498, %v7499
  %v7503 = vshrl.u32 %v7394, 16
  %v7505 = vrot.slane %v7503, 7
  %v7506 = vshll.u32 %v7394, 16
  %v7508 = vor.u32 %v7505, %v7506
  %v7510 = vshrl.u32 %v7395, 16
  %v7512 = vrot.slane %v7510, 7
  %v7513 = vshll.u32 %v7395, 16
  %v7515 = vor.u32 %v7512, %v7513
  %v7517 = vshrl.u32 %v7396, 16
  %v7519 = vrot.slane %v7517, 7
  %v7520 = vshll.u32 %v7396, 16
  %v7522 = vor.u32 %v7519, %v7520
  %v7524 = vshrl.u32 %v7397, 16
  %v7526 = vrot.slane %v7524, 7
  %v7527 = vshll.u32 %v7397, 16
  %v7529 = vor.u32 %v7526, %v7527
  %v7531 = vshrl.u32 %v7398, 16
  %v7533 = vrot.slane %v7531, 7
  %v7534 = vshll.u32 %v7398, 16
  %v7536 = vor.u32 %v7533, %v7534
  %v7538 = vshrl.u32 %v7399, 16
  %v7540 = vrot.slane %v7538, 7
  %v7541 = vshll.u32 %v7399, 16
  %v7543 = vor.u32 %v7540, %v7541
  %v7545 = vshrl.u32 %v7400, 16
  %v7547 = vrot.slane %v7545, 7
  %v7548 = vshll.u32 %v7400, 16
  %v7550 = vor.u32 %v7547, %v7548
  %v7552 = vshrl.u32 %v7401, 16
  %v7554 = vrot.slane %v7552, 7
  %v7555 = vshll.u32 %v7401, 16
  %v7557 = vor.u32 %v7554, %v7555
  %v7559 = vshrl.u32 %v7402, 16
  %v7561 = vrot.slane %v7559, 7
  %v7562 = vshll.u32 %v7402, 16
  %v7564 = vor.u32 %v7561, %v7562
  %v7566 = vshrl.u32 %v7403, 16
  %v7568 = vrot.slane %v7566, 7
  %v7569 = vshll.u32 %v7403, 16
  %v7571 = vor.u32 %v7568, %v7569
  %v7573 = vshrl.u32 %v7404, 16
  %v7575 = vrot.slane %v7573, 7
  %v7576 = vshll.u32 %v7404, 16
  %v7578 = vor.u32 %v7575, %v7576
  %v7580 = vshrl.u32 %v7405, 16
  %v7582 = vrot.slane %v7580, 7
  %v7583 = vshll.u32 %v7405, 16
  %v7585 = vor.u32 %v7582, %v7583
  %v7587 = vshrl.u32 %v7406, 16
  %v7589 = vrot.slane %v7587, 7
  %v7590 = vshll.u32 %v7406, 16
  %v7592 = vor.u32 %v7589, %v7590
  %v7594 = vshrl.u32 %v7407, 16
  %v7596 = vrot.slane %v7594, 7
  %v7597 = vshll.u32 %v7407, 16
  %v7599 = vor.u32 %v7596, %v7597
  %v7601 = vshrl.u32 %v7408, 16
  %v7603 = vrot.slane %v7601, 7
  %v7604 = vshll.u32 %v7408, 16
  %v7606 = vor.u32 %v7603, %v7604
  %v7608 = vshrl.u32 %v7409, 16
  %v7610 = vrot.slane %v7608, 7
  %v7611 = vshll.u32 %v7409, 16
  %v7613 = vor.u32 %v7610, %v7611
  %v7615 = vshrl.u32 %v7410, 16
  %v7617 = vrot.slane %v7615, 7
  %v7618 = vshll.u32 %v7410, 16
  %v7620 = vor.u32 %v7617, %v7618
  %s7651 = scalar_lea.vmem [#allocation3], 24
  %vm7652 = vcmask 261120
  %vm7653 = vmand %vm7652, %vm586
  %v7654 = vld [vmem:[%s7651] sm:$0xff]
  %v7655 = vsel %vm7653, %v7417, %v7654
  %7656 = vst [vmem:[%s7651] sm:$0xff] %v7655
  %v7657 = vld [vmem:[%s7651 + $0x18] sm:$0xff]
  %v7658 = vsel %vm7653, %v7424, %v7657
  %7659 = vst [vmem:[%s7651 + $0x18] sm:$0xff] %v7658
  %v7660 = vld [vmem:[%s7651 + $0x30] sm:$0xff]
  %v7661 = vsel %vm7653, %v7431, %v7660
  %7662 = vst [vmem:[%s7651 + $0x30] sm:$0xff] %v7661
  %v7663 = vld [vmem:[%s7651 + $0x48] sm:$0xff]
  %v7664 = vsel %vm7653, %v7438, %v7663
  %7665 = vst [vmem:[%s7651 + $0x48] sm:$0xff] %v7664
  %v7666 = vld [vmem:[%s7651 + $0x60] sm:$0xff]
  %v7667 = vsel %vm7653, %v7445, %v7666
  %7668 = vst [vmem:[%s7651 + $0x60] sm:$0xff] %v7667
  %v7669 = vld [vmem:[%s7651 + $0x78] sm:$0xff]
  %v7670 = vsel %vm7653, %v7452, %v7669
  %7671 = vst [vmem:[%s7651 + $0x78] sm:$0xff] %v7670
  %v7672 = vld [vmem:[%s7651 + $0x90] sm:$0xff]
  %v7673 = vsel %vm7653, %v7459, %v7672
  %7674 = vst [vmem:[%s7651 + $0x90] sm:$0xff] %v7673
  %v7675 = vld [vmem:[%s7651 + $0xa8] sm:$0xff]
  %v7676 = vsel %vm7653, %v7466, %v7675
  %7677 = vst [vmem:[%s7651 + $0xa8] sm:$0xff] %v7676
  %v7678 = vld [vmem:[%s7651 + $0xc0] sm:$0xff]
  %v7679 = vsel %vm7653, %v7473, %v7678
  %7680 = vst [vmem:[%s7651 + $0xc0] sm:$0xff] %v7679
  %v7681 = vld [vmem:[%s7651 + $0xd8] sm:$0xff]
  %v7682 = vsel %vm7653, %v7480, %v7681
  %7683 = vst [vmem:[%s7651 + $0xd8] sm:$0xff] %v7682
  %v7684 = vld [vmem:[%s7651 + $0xf0] sm:$0xff]
  %v7685 = vsel %vm7653, %v7487, %v7684
  %7686 = vst [vmem:[%s7651 + $0xf0] sm:$0xff] %v7685
  %v7687 = vld [vmem:[%s7651 + $0x108] sm:$0xff]
  %v7688 = vsel %vm7653, %v7494, %v7687
  %7689 = vst [vmem:[%s7651 + $0x108] sm:$0xff] %v7688
  %v7690 = vld [vmem:[%s7651 + $0x120] sm:$0xff]
  %v7691 = vsel %vm7653, %v7501, %v7690
  %7692 = vst [vmem:[%s7651 + $0x120] sm:$0xff] %v7691
  %v7693 = vld [vmem:[%s7651 + $0x138] sm:$0xff]
  %v7694 = vsel %vm7653, %v7508, %v7693
  %7695 = vst [vmem:[%s7651 + $0x138] sm:$0xff] %v7694
  %v7696 = vld [vmem:[%s7651 + $0x150] sm:$0xff]
  %v7697 = vsel %vm7653, %v7515, %v7696
  %7698 = vst [vmem:[%s7651 + $0x150] sm:$0xff] %v7697
  %v7699 = vld [vmem:[%s7651 + $0x180] sm:$0xff]
  %v7700 = vsel %vm7653, %v7522, %v7699
  %7701 = vst [vmem:[%s7651 + $0x180] sm:$0xff] %v7700
  %v7702 = vld [vmem:[%s7651 + $0x198] sm:$0xff]
  %v7703 = vsel %vm7653, %v7529, %v7702
  %7704 = vst [vmem:[%s7651 + $0x198] sm:$0xff] %v7703
  %v7705 = vld [vmem:[%s7651 + $0x1b0] sm:$0xff]
  %v7706 = vsel %vm7653, %v7536, %v7705
  %7707 = vst [vmem:[%s7651 + $0x1b0] sm:$0xff] %v7706
  %v7708 = vld [vmem:[%s7651 + $0x1c8] sm:$0xff]
  %v7709 = vsel %vm7653, %v7543, %v7708
  %7710 = vst [vmem:[%s7651 + $0x1c8] sm:$0xff] %v7709
  %v7711 = vld [vmem:[%s7651 + $0x1e0] sm:$0xff]
  %v7712 = vsel %vm7653, %v7550, %v7711
  %7713 = vst [vmem:[%s7651 + $0x1e0] sm:$0xff] %v7712
  %v7714 = vld [vmem:[%s7651 + $0x1f8] sm:$0xff]
  %v7715 = vsel %vm7653, %v7557, %v7714
  %7716 = vst [vmem:[%s7651 + $0x1f8] sm:$0xff] %v7715
  %v7717 = vld [vmem:[%s7651 + $0x210] sm:$0xff]
  %v7718 = vsel %vm7653, %v7564, %v7717
  %7719 = vst [vmem:[%s7651 + $0x210] sm:$0xff] %v7718
  %v7720 = vld [vmem:[%s7651 + $0x228] sm:$0xff]
  %v7721 = vsel %vm7653, %v7571, %v7720
  %7722 = vst [vmem:[%s7651 + $0x228] sm:$0xff] %v7721
  %v7723 = vld [vmem:[%s7651 + $0x240] sm:$0xff]
  %v7724 = vsel %vm7653, %v7578, %v7723
  %7725 = vst [vmem:[%s7651 + $0x240] sm:$0xff] %v7724
  %v7726 = vld [vmem:[%s7651 + $0x258] sm:$0xff]
  %v7727 = vsel %vm7653, %v7585, %v7726
  %7728 = vst [vmem:[%s7651 + $0x258] sm:$0xff] %v7727
  %v7729 = vld [vmem:[%s7651 + $0x270] sm:$0xff]
  %v7730 = vsel %vm7653, %v7592, %v7729
  %7731 = vst [vmem:[%s7651 + $0x270] sm:$0xff] %v7730
  %v7732 = vld [vmem:[%s7651 + $0x288] sm:$0xff]
  %v7733 = vsel %vm7653, %v7599, %v7732
  %7734 = vst [vmem:[%s7651 + $0x288] sm:$0xff] %v7733
  %v7735 = vld [vmem:[%s7651 + $0x2a0] sm:$0xff]
  %v7736 = vsel %vm7653, %v7606, %v7735
  %7737 = vst [vmem:[%s7651 + $0x2a0] sm:$0xff] %v7736
  %v7738 = vld [vmem:[%s7651 + $0x2b8] sm:$0xff]
  %v7739 = vsel %vm7653, %v7613, %v7738
  %7740 = vst [vmem:[%s7651 + $0x2b8] sm:$0xff] %v7739
  %v7741 = vld [vmem:[%s7651 + $0x2d0] sm:$0xff]
  %v7742 = vsel %vm7653, %v7620, %v7741
  %7743 = vst [vmem:[%s7651 + $0x2d0] sm:$0xff] %v7742
  %7745 = vrot.lane.b32.xlu0 %v7280, 32
  %v7746 = vpop.permute.xlu0 %7745
  %vm7748 = vcmask 523520
  %7749 = vst.msk [vmem:[#allocation3] sm:$0xff] %vm7748, %v7746
  %7750 = vst.msk [vmem:[#allocation3 + $0x180] sm:$0xff] %vm7748, %v7746
  %v7751 = vld [vmem:[#allocation4] sm:$0xff]
  %v7752 = vld [vmem:[#allocation4 + $0x8] sm:$0xff]
  %v7753 = vld [vmem:[#allocation4 + $0x10] sm:$0xff]
  %v7754 = vld [vmem:[#allocation4 + $0x18] sm:$0xff]
  %v7755 = vld [vmem:[#allocation4 + $0x20] sm:$0xff]
  %v7756 = vld [vmem:[#allocation4 + $0x28] sm:$0xff]
  %v7757 = vld [vmem:[#allocation4 + $0x30] sm:$0xff]
  %v7758 = vld [vmem:[#allocation4 + $0x38] sm:$0xff]
  %v7759 = vld [vmem:[#allocation4 + $0x40] sm:$0xff]
  %v7760 = vld [vmem:[#allocation4 + $0x48] sm:$0xff]
  %v7761 = vld [vmem:[#allocation4 + $0x50] sm:$0xff]
  %v7762 = vld [vmem:[#allocation4 + $0x58] sm:$0xff]
  %v7763 = vld [vmem:[#allocation4 + $0x60] sm:$0xff]
  %v7764 = vld [vmem:[#allocation4 + $0x68] sm:$0xff]
  %v7765 = vld [vmem:[#allocation4 + $0x70] sm:$0xff]
  %v7766 = vld [vmem:[#allocation4 + $0x80] sm:$0xff]
  %v7767 = vld [vmem:[#allocation4 + $0x88] sm:$0xff]
  %v7768 = vld [vmem:[#allocation4 + $0x90] sm:$0xff]
  %v7769 = vld [vmem:[#allocation4 + $0x98] sm:$0xff]
  %v7770 = vld [vmem:[#allocation4 + $0xa0] sm:$0xff]
  %v7771 = vld [vmem:[#allocation4 + $0xa8] sm:$0xff]
  %v7772 = vld [vmem:[#allocation4 + $0xb0] sm:$0xff]
  %v7773 = vld [vmem:[#allocation4 + $0xb8] sm:$0xff]
  %v7774 = vld [vmem:[#allocation4 + $0xc0] sm:$0xff]
  %v7775 = vld [vmem:[#allocation4 + $0xc8] sm:$0xff]
  %v7776 = vld [vmem:[#allocation4 + $0xd0] sm:$0xff]
  %v7777 = vld [vmem:[#allocation4 + $0xd8] sm:$0xff]
  %v7778 = vld [vmem:[#allocation4 + $0xe0] sm:$0xff]
  %v7779 = vld [vmem:[#allocation4 + $0xe8] sm:$0xff]
  %v7780 = vld [vmem:[#allocation4 + $0xf0] sm:$0xff]
  %7811 = vrot.lane.b32.xlu0 %v7751, 32
  %v7812 = vpop.permute.xlu0 %7811
  %7813 = vrot.lane.b32.xlu0 %v7752, 32
  %v7814 = vpop.permute.xlu0 %7813
  %7815 = vrot.lane.b32.xlu0 %v7753, 32
  %v7816 = vpop.permute.xlu0 %7815
  %7817 = vrot.lane.b32.xlu0 %v7754, 32
  %v7818 = vpop.permute.xlu0 %7817
  %7819 = vrot.lane.b32.xlu0 %v7755, 32
  %v7820 = vpop.permute.xlu0 %7819
  %7821 = vrot.lane.b32.xlu0 %v7756, 32
  %v7822 = vpop.permute.xlu0 %7821
  %7823 = vrot.lane.b32.xlu0 %v7757, 32
  %v7824 = vpop.permute.xlu0 %7823
  %7825 = vrot.lane.b32.xlu0 %v7758, 32
  %v7826 = vpop.permute.xlu0 %7825
  %7827 = vrot.lane.b32.xlu0 %v7759, 32
  %v7828 = vpop.permute.xlu0 %7827
  %7829 = vrot.lane.b32.xlu0 %v7760, 32
  %v7830 = vpop.permute.xlu0 %7829
  %7831 = vrot.lane.b32.xlu0 %v7761, 32
  %v7832 = vpop.permute.xlu0 %7831
  %7833 = vrot.lane.b32.xlu0 %v7762, 32
  %v7834 = vpop.permute.xlu0 %7833
  %7835 = vrot.lane.b32.xlu0 %v7763, 32
  %v7836 = vpop.permute.xlu0 %7835
  %7837 = vrot.lane.b32.xlu0 %v7764, 32
  %v7838 = vpop.permute.xlu0 %7837
  %7839 = vrot.lane.b32.xlu0 %v7765, 32
  %v7840 = vpop.permute.xlu0 %7839
  %7841 = vrot.lane.b32.xlu0 %v7766, 32
  %v7842 = vpop.permute.xlu0 %7841
  %7843 = vrot.lane.b32.xlu0 %v7767, 32
  %v7844 = vpop.permute.xlu0 %7843
  %7845 = vrot.lane.b32.xlu0 %v7768, 32
  %v7846 = vpop.permute.xlu0 %7845
  %7847 = vrot.lane.b32.xlu0 %v7769, 32
  %v7848 = vpop.permute.xlu0 %7847
  %7849 = vrot.lane.b32.xlu0 %v7770, 32
  %v7850 = vpop.permute.xlu0 %7849
  %7851 = vrot.lane.b32.xlu0 %v7771, 32
  %v7852 = vpop.permute.xlu0 %7851
  %7853 = vrot.lane.b32.xlu0 %v7772, 32
  %v7854 = vpop.permute.xlu0 %7853
  %7855 = vrot.lane.b32.xlu0 %v7773, 32
  %v7856 = vpop.permute.xlu0 %7855
  %7857 = vrot.lane.b32.xlu0 %v7774, 32
  %v7858 = vpop.permute.xlu0 %7857
  %7859 = vrot.lane.b32.xlu0 %v7775, 32
  %v7860 = vpop.permute.xlu0 %7859
  %7861 = vrot.lane.b32.xlu0 %v7776, 32
  %v7862 = vpop.permute.xlu0 %7861
  %7863 = vrot.lane.b32.xlu0 %v7777, 32
  %v7864 = vpop.permute.xlu0 %7863
  %7865 = vrot.lane.b32.xlu0 %v7778, 32
  %v7866 = vpop.permute.xlu0 %7865
  %7867 = vrot.lane.b32.xlu0 %v7779, 32
  %v7868 = vpop.permute.xlu0 %7867
  %7869 = vrot.lane.b32.xlu0 %v7780, 32
  %v7870 = vpop.permute.xlu0 %7869
  %7901 = vst.msk [vmem:[%s7651] sm:$0xff] %vm7748, %v7812
  %7902 = vst.msk [vmem:[%s7651 + $0x18] sm:$0xff] %vm7748, %v7814
  %7903 = vst.msk [vmem:[%s7651 + $0x30] sm:$0xff] %vm7748, %v7816
  %7904 = vst.msk [vmem:[%s7651 + $0x48] sm:$0xff] %vm7748, %v7818
  %7905 = vst.msk [vmem:[%s7651 + $0x60] sm:$0xff] %vm7748, %v7820
  %7906 = vst.msk [vmem:[%s7651 + $0x78] sm:$0xff] %vm7748, %v7822
  %7907 = vst.msk [vmem:[%s7651 + $0x90] sm:$0xff] %vm7748, %v7824
  %7908 = vst.msk [vmem:[%s7651 + $0xa8] sm:$0xff] %vm7748, %v7826
  %7909 = vst.msk [vmem:[%s7651 + $0xc0] sm:$0xff] %vm7748, %v7828
  %7910 = vst.msk [vmem:[%s7651 + $0xd8] sm:$0xff] %vm7748, %v7830
  %7911 = vst.msk [vmem:[%s7651 + $0xf0] sm:$0xff] %vm7748, %v7832
  %7912 = vst.msk [vmem:[%s7651 + $0x108] sm:$0xff] %vm7748, %v7834
  %7913 = vst.msk [vmem:[%s7651 + $0x120] sm:$0xff] %vm7748, %v7836
  %7914 = vst.msk [vmem:[%s7651 + $0x138] sm:$0xff] %vm7748, %v7838
  %7915 = vst.msk [vmem:[%s7651 + $0x150] sm:$0xff] %vm7748, %v7840
  %7916 = vst.msk [vmem:[%s7651 + $0x180] sm:$0xff] %vm7748, %v7842
  %7917 = vst.msk [vmem:[%s7651 + $0x198] sm:$0xff] %vm7748, %v7844
  %7918 = vst.msk [vmem:[%s7651 + $0x1b0] sm:$0xff] %vm7748, %v7846
  %7919 = vst.msk [vmem:[%s7651 + $0x1c8] sm:$0xff] %vm7748, %v7848
  %7920 = vst.msk [vmem:[%s7651 + $0x1e0] sm:$0xff] %vm7748, %v7850
  %7921 = vst.msk [vmem:[%s7651 + $0x1f8] sm:$0xff] %vm7748, %v7852
  %7922 = vst.msk [vmem:[%s7651 + $0x210] sm:$0xff] %vm7748, %v7854
  %7923 = vst.msk [vmem:[%s7651 + $0x228] sm:$0xff] %vm7748, %v7856
  %7924 = vst.msk [vmem:[%s7651 + $0x240] sm:$0xff] %vm7748, %v7858
  %7925 = vst.msk [vmem:[%s7651 + $0x258] sm:$0xff] %vm7748, %v7860
  %7926 = vst.msk [vmem:[%s7651 + $0x270] sm:$0xff] %vm7748, %v7862
  %7927 = vst.msk [vmem:[%s7651 + $0x288] sm:$0xff] %vm7748, %v7864
  %7928 = vst.msk [vmem:[%s7651 + $0x2a0] sm:$0xff] %vm7748, %v7866
  %7929 = vst.msk [vmem:[%s7651 + $0x2b8] sm:$0xff] %vm7748, %v7868
  %7930 = vst.msk [vmem:[%s7651 + $0x2d0] sm:$0xff] %vm7748, %v7870
  %7931 = vrot.lane.b32.xlu0 %v7280, 64
  %v7932 = vpop.permute.xlu0 %7931
  %vm7934 = vcmask 785920
  %7935 = vst.msk [vmem:[#allocation3] sm:$0xff] %vm7934, %v7932
  %7936 = vst.msk [vmem:[#allocation3 + $0x180] sm:$0xff] %vm7934, %v7932
  %vm7937 = vcmask 785927
  %vm7938 = vmand %vm7937, %vm1015
  %v7939 = vld [vmem:[#allocation3] sm:$0x80]
  %v7940 = vsel %vm7938, %v7932, %v7939
  %7941 = vst [vmem:[#allocation3] sm:$0x80] %v7940
  %v7942 = vld [vmem:[#allocation3 + $0x18] sm:$0x80]
  %v7943 = vsel %vm7938, %v7932, %v7942
  %7944 = vst [vmem:[#allocation3 + $0x18] sm:$0x80] %v7943
  %v7945 = vld [vmem:[#allocation3 + $0x30] sm:$0x80]
  %v7946 = vsel %vm7938, %v7932, %v7945
  %7947 = vst [vmem:[#allocation3 + $0x30] sm:$0x80] %v7946
  %v7948 = vld [vmem:[#allocation3 + $0x48] sm:$0x80]
  %v7949 = vsel %vm7938, %v7932, %v7948
  %7950 = vst [vmem:[#allocation3 + $0x48] sm:$0x80] %v7949
  %v7951 = vld [vmem:[#allocation3 + $0x60] sm:$0x80]
  %v7952 = vsel %vm7938, %v7932, %v7951
  %7953 = vst [vmem:[#allocation3 + $0x60] sm:$0x80] %v7952
  %v7954 = vld [vmem:[#allocation3 + $0x78] sm:$0x80]
  %v7955 = vsel %vm7938, %v7932, %v7954
  %7956 = vst [vmem:[#allocation3 + $0x78] sm:$0x80] %v7955
  %v7957 = vld [vmem:[#allocation3 + $0x90] sm:$0x80]
  %v7958 = vsel %vm7938, %v7932, %v7957
  %7959 = vst [vmem:[#allocation3 + $0x90] sm:$0x80] %v7958
  %v7960 = vld [vmem:[#allocation3 + $0xa8] sm:$0x80]
  %v7961 = vsel %vm7938, %v7932, %v7960
  %7962 = vst [vmem:[#allocation3 + $0xa8] sm:$0x80] %v7961
  %v7963 = vld [vmem:[#allocation3 + $0xc0] sm:$0x80]
  %v7964 = vsel %vm7938, %v7932, %v7963
  %7965 = vst [vmem:[#allocation3 + $0xc0] sm:$0x80] %v7964
  %v7966 = vld [vmem:[#allocation3 + $0xd8] sm:$0x80]
  %v7967 = vsel %vm7938, %v7932, %v7966
  %7968 = vst [vmem:[#allocation3 + $0xd8] sm:$0x80] %v7967
  %v7969 = vld [vmem:[#allocation3 + $0xf0] sm:$0x80]
  %v7970 = vsel %vm7938, %v7932, %v7969
  %7971 = vst [vmem:[#allocation3 + $0xf0] sm:$0x80] %v7970
  %v7972 = vld [vmem:[#allocation3 + $0x108] sm:$0x80]
  %v7973 = vsel %vm7938, %v7932, %v7972
  %7974 = vst [vmem:[#allocation3 + $0x108] sm:$0x80] %v7973
  %v7975 = vld [vmem:[#allocation3 + $0x120] sm:$0x80]
  %v7976 = vsel %vm7938, %v7932, %v7975
  %7977 = vst [vmem:[#allocation3 + $0x120] sm:$0x80] %v7976
  %v7978 = vld [vmem:[#allocation3 + $0x138] sm:$0x80]
  %v7979 = vsel %vm7938, %v7932, %v7978
  %7980 = vst [vmem:[#allocation3 + $0x138] sm:$0x80] %v7979
  %v7981 = vld [vmem:[#allocation3 + $0x150] sm:$0x80]
  %v7982 = vsel %vm7938, %v7932, %v7981
  %7983 = vst [vmem:[#allocation3 + $0x150] sm:$0x80] %v7982
  %v7984 = vld [vmem:[#allocation3 + $0x168] sm:$0x80]
  %v7985 = vsel %vm7938, %v7932, %v7984
  %7986 = vst [vmem:[#allocation3 + $0x168] sm:$0x80] %v7985
  %v7987 = vld [vmem:[#allocation3 + $0x180] sm:$0x80]
  %v7988 = vsel %vm7938, %v7932, %v7987
  %7989 = vst [vmem:[#allocation3 + $0x180] sm:$0x80] %v7988
  %v7990 = vld [vmem:[#allocation3 + $0x198] sm:$0x80]
  %v7991 = vsel %vm7938, %v7932, %v7990
  %7992 = vst [vmem:[#allocation3 + $0x198] sm:$0x80] %v7991
  %v7993 = vld [vmem:[#allocation3 + $0x1b0] sm:$0x80]
  %v7994 = vsel %vm7938, %v7932, %v7993
  %7995 = vst [vmem:[#allocation3 + $0x1b0] sm:$0x80] %v7994
  %v7996 = vld [vmem:[#allocation3 + $0x1c8] sm:$0x80]
  %v7997 = vsel %vm7938, %v7932, %v7996
  %7998 = vst [vmem:[#allocation3 + $0x1c8] sm:$0x80] %v7997
  %v7999 = vld [vmem:[#allocation3 + $0x1e0] sm:$0x80]
  %v8000 = vsel %vm7938, %v7932, %v7999
  %8001 = vst [vmem:[#allocation3 + $0x1e0] sm:$0x80] %v8000
  %v8002 = vld [vmem:[#allocation3 + $0x1f8] sm:$0x80]
  %v8003 = vsel %vm7938, %v7932, %v8002
  %8004 = vst [vmem:[#allocation3 + $0x1f8] sm:$0x80] %v8003
  %v8005 = vld [vmem:[#allocation3 + $0x210] sm:$0x80]
  %v8006 = vsel %vm7938, %v7932, %v8005
  %8007 = vst [vmem:[#allocation3 + $0x210] sm:$0x80] %v8006
  %v8008 = vld [vmem:[#allocation3 + $0x228] sm:$0x80]
  %v8009 = vsel %vm7938, %v7932, %v8008
  %8010 = vst [vmem:[#allocation3 + $0x228] sm:$0x80] %v8009
  %v8011 = vld [vmem:[#allocation3 + $0x240] sm:$0x80]
  %v8012 = vsel %vm7938, %v7932, %v8011
  %8013 = vst [vmem:[#allocation3 + $0x240] sm:$0x80] %v8012
  %v8014 = vld [vmem:[#allocation3 + $0x258] sm:$0x80]
  %v8015 = vsel %vm7938, %v7932, %v8014
  %8016 = vst [vmem:[#allocation3 + $0x258] sm:$0x80] %v8015
  %v8017 = vld [vmem:[#allocation3 + $0x270] sm:$0x80]
  %v8018 = vsel %vm7938, %v7932, %v8017
  %8019 = vst [vmem:[#allocation3 + $0x270] sm:$0x80] %v8018
  %v8020 = vld [vmem:[#allocation3 + $0x288] sm:$0x80]
  %v8021 = vsel %vm7938, %v7932, %v8020
  %8022 = vst [vmem:[#allocation3 + $0x288] sm:$0x80] %v8021
  %v8023 = vld [vmem:[#allocation3 + $0x2a0] sm:$0x80]
  %v8024 = vsel %vm7938, %v7932, %v8023
  %8025 = vst [vmem:[#allocation3 + $0x2a0] sm:$0x80] %v8024
  %v8026 = vld [vmem:[#allocation3 + $0x2b8] sm:$0x80]
  %v8027 = vsel %vm7938, %v7932, %v8026
  %8028 = vst [vmem:[#allocation3 + $0x2b8] sm:$0x80] %v8027
  %v8029 = vld [vmem:[#allocation3 + $0x2d0] sm:$0x80]
  %v8030 = vsel %vm7938, %v7932, %v8029
  %8031 = vst [vmem:[#allocation3 + $0x2d0] sm:$0x80] %v8030
  %v8032 = vld [vmem:[#allocation3 + $0x2e8] sm:$0x80]
  %v8033 = vsel %vm7938, %v7932, %v8032
  %8034 = vst [vmem:[#allocation3 + $0x2e8] sm:$0x80] %v8033
  %v8035 = vld [vmem:[#allocation4] sm:$0xff]
  %v8036 = vld [vmem:[#allocation4 + $0x8] sm:$0xff]
  %v8037 = vld [vmem:[#allocation4 + $0x10] sm:$0xff]
  %v8038 = vld [vmem:[#allocation4 + $0x18] sm:$0xff]
  %v8039 = vld [vmem:[#allocation4 + $0x20] sm:$0xff]
  %v8040 = vld [vmem:[#allocation4 + $0x28] sm:$0xff]
  %v8041 = vld [vmem:[#allocation4 + $0x30] sm:$0xff]
  %v8042 = vld [vmem:[#allocation4 + $0x38] sm:$0xff]
  %v8043 = vld [vmem:[#allocation4 + $0x40] sm:$0xff]
  %v8044 = vld [vmem:[#allocation4 + $0x48] sm:$0xff]
  %v8045 = vld [vmem:[#allocation4 + $0x50] sm:$0xff]
  %v8046 = vld [vmem:[#allocation4 + $0x58] sm:$0xff]
  %v8047 = vld [vmem:[#allocation4 + $0x60] sm:$0xff]
  %v8048 = vld [vmem:[#allocation4 + $0x68] sm:$0xff]
  %v8049 = vld [vmem:[#allocation4 + $0x70] sm:$0xff]
  %v8050 = vld [vmem:[#allocation4 + $0x80] sm:$0xff]
  %v8051 = vld [vmem:[#allocation4 + $0x88] sm:$0xff]
  %v8052 = vld [vmem:[#allocation4 + $0x90] sm:$0xff]
  %v8053 = vld [vmem:[#allocation4 + $0x98] sm:$0xff]
  %v8054 = vld [vmem:[#allocation4 + $0xa0] sm:$0xff]
  %v8055 = vld [vmem:[#allocation4 + $0xa8] sm:$0xff]
  %v8056 = vld [vmem:[#allocation4 + $0xb0] sm:$0xff]
  %v8057 = vld [vmem:[#allocation4 + $0xb8] sm:$0xff]
  %v8058 = vld [vmem:[#allocation4 + $0xc0] sm:$0xff]
  %v8059 = vld [vmem:[#allocation4 + $0xc8] sm:$0xff]
  %v8060 = vld [vmem:[#allocation4 + $0xd0] sm:$0xff]
  %v8061 = vld [vmem:[#allocation4 + $0xd8] sm:$0xff]
  %v8062 = vld [vmem:[#allocation4 + $0xe0] sm:$0xff]
  %v8063 = vld [vmem:[#allocation4 + $0xe8] sm:$0xff]
  %v8064 = vld [vmem:[#allocation4 + $0xf0] sm:$0xff]
  %v8066 = vshrl.u32 %v8035, 16
  %v8068 = vshll.u32 %v8035, 16
  %v8070 = vrot.slane %v8068, 1
  %v8071 = vor.u32 %v8066, %v8070
  %v8073 = vshrl.u32 %v8036, 16
  %v8075 = vshll.u32 %v8036, 16
  %v8077 = vrot.slane %v8075, 1
  %v8078 = vor.u32 %v8073, %v8077
  %v8080 = vshrl.u32 %v8037, 16
  %v8082 = vshll.u32 %v8037, 16
  %v8084 = vrot.slane %v8082, 1
  %v8085 = vor.u32 %v8080, %v8084
  %v8087 = vshrl.u32 %v8038, 16
  %v8089 = vshll.u32 %v8038, 16
  %v8091 = vrot.slane %v8089, 1
  %v8092 = vor.u32 %v8087, %v8091
  %v8094 = vshrl.u32 %v8039, 16
  %v8096 = vshll.u32 %v8039, 16
  %v8098 = vrot.slane %v8096, 1
  %v8099 = vor.u32 %v8094, %v8098
  %v8101 = vshrl.u32 %v8040, 16
  %v8103 = vshll.u32 %v8040, 16
  %v8105 = vrot.slane %v8103, 1
  %v8106 = vor.u32 %v8101, %v8105
  %v8108 = vshrl.u32 %v8041, 16
  %v8110 = vshll.u32 %v8041, 16
  %v8112 = vrot.slane %v8110, 1
  %v8113 = vor.u32 %v8108, %v8112
  %v8115 = vshrl.u32 %v8042, 16
  %v8117 = vshll.u32 %v8042, 16
  %v8119 = vrot.slane %v8117, 1
  %v8120 = vor.u32 %v8115, %v8119
  %v8122 = vshrl.u32 %v8043, 16
  %v8124 = vshll.u32 %v8043, 16
  %v8126 = vrot.slane %v8124, 1
  %v8127 = vor.u32 %v8122, %v8126
  %v8129 = vshrl.u32 %v8044, 16
  %v8131 = vshll.u32 %v8044, 16
  %v8133 = vrot.slane %v8131, 1
  %v8134 = vor.u32 %v8129, %v8133
  %v8136 = vshrl.u32 %v8045, 16
  %v8138 = vshll.u32 %v8045, 16
  %v8140 = vrot.slane %v8138, 1
  %v8141 = vor.u32 %v8136, %v8140
  %v8143 = vshrl.u32 %v8046, 16
  %v8145 = vshll.u32 %v8046, 16
  %v8147 = vrot.slane %v8145, 1
  %v8148 = vor.u32 %v8143, %v8147
  %v8150 = vshrl.u32 %v8047, 16
  %v8152 = vshll.u32 %v8047, 16
  %v8154 = vrot.slane %v8152, 1
  %v8155 = vor.u32 %v8150, %v8154
  %v8157 = vshrl.u32 %v8048, 16
  %v8159 = vshll.u32 %v8048, 16
  %v8161 = vrot.slane %v8159, 1
  %v8162 = vor.u32 %v8157, %v8161
  %v8164 = vshrl.u32 %v8049, 16
  %v8166 = vshll.u32 %v8049, 16
  %v8168 = vrot.slane %v8166, 1
  %v8169 = vor.u32 %v8164, %v8168
  %v8171 = vshrl.u32 %v8050, 16
  %v8173 = vshll.u32 %v8050, 16
  %v8175 = vrot.slane %v8173, 1
  %v8176 = vor.u32 %v8171, %v8175
  %v8178 = vshrl.u32 %v8051, 16
  %v8180 = vshll.u32 %v8051, 16
  %v8182 = vrot.slane %v8180, 1
  %v8183 = vor.u32 %v8178, %v8182
  %v8185 = vshrl.u32 %v8052, 16
  %v8187 = vshll.u32 %v8052, 16
  %v8189 = vrot.slane %v8187, 1
  %v8190 = vor.u32 %v8185, %v8189
  %v8192 = vshrl.u32 %v8053, 16
  %v8194 = vshll.u32 %v8053, 16
  %v8196 = vrot.slane %v8194, 1
  %v8197 = vor.u32 %v8192, %v8196
  %v8199 = vshrl.u32 %v8054, 16
  %v8201 = vshll.u32 %v8054, 16
  %v8203 = vrot.slane %v8201, 1
  %v8204 = vor.u32 %v8199, %v8203
  %v8206 = vshrl.u32 %v8055, 16
  %v8208 = vshll.u32 %v8055, 16
  %v8210 = vrot.slane %v8208, 1
  %v8211 = vor.u32 %v8206, %v8210
  %v8213 = vshrl.u32 %v8056, 16
  %v8215 = vshll.u32 %v8056, 16
  %v8217 = vrot.slane %v8215, 1
  %v8218 = vor.u32 %v8213, %v8217
  %v8220 = vshrl.u32 %v8057, 16
  %v8222 = vshll.u32 %v8057, 16
  %v8224 = vrot.slane %v8222, 1
  %v8225 = vor.u32 %v8220, %v8224
  %v8227 = vshrl.u32 %v8058, 16
  %v8229 = vshll.u32 %v8058, 16
  %v8231 = vrot.slane %v8229, 1
  %v8232 = vor.u32 %v8227, %v8231
  %v8234 = vshrl.u32 %v8059, 16
  %v8236 = vshll.u32 %v8059, 16
  %v8238 = vrot.slane %v8236, 1
  %v8239 = vor.u32 %v8234, %v8238
  %v8241 = vshrl.u32 %v8060, 16
  %v8243 = vshll.u32 %v8060, 16
  %v8245 = vrot.slane %v8243, 1
  %v8246 = vor.u32 %v8241, %v8245
  %v8248 = vshrl.u32 %v8061, 16
  %v8250 = vshll.u32 %v8061, 16
  %v8252 = vrot.slane %v8250, 1
  %v8253 = vor.u32 %v8248, %v8252
  %v8255 = vshrl.u32 %v8062, 16
  %v8257 = vshll.u32 %v8062, 16
  %v8259 = vrot.slane %v8257, 1
  %v8260 = vor.u32 %v8255, %v8259
  %v8262 = vshrl.u32 %v8063, 16
  %v8264 = vshll.u32 %v8063, 16
  %v8266 = vrot.slane %v8264, 1
  %v8267 = vor.u32 %v8262, %v8266
  %v8269 = vshrl.u32 %v8064, 16
  %v8271 = vshll.u32 %v8064, 16
  %v8273 = vrot.slane %v8271, 1
  %v8274 = vor.u32 %v8269, %v8273
  %8275 = vrot.lane.b32.xlu0 %v8071, 64
  %v8276 = vpop.permute.xlu0 %8275
  %8277 = vrot.lane.b32.xlu0 %v8078, 64
  %v8278 = vpop.permute.xlu0 %8277
  %8279 = vrot.lane.b32.xlu0 %v8085, 64
  %v8280 = vpop.permute.xlu0 %8279
  %8281 = vrot.lane.b32.xlu0 %v8092, 64
  %v8282 = vpop.permute.xlu0 %8281
  %8283 = vrot.lane.b32.xlu0 %v8099, 64
  %v8284 = vpop.permute.xlu0 %8283
  %8285 = vrot.lane.b32.xlu0 %v8106, 64
  %v8286 = vpop.permute.xlu0 %8285
  %8287 = vrot.lane.b32.xlu0 %v8113, 64
  %v8288 = vpop.permute.xlu0 %8287
  %8289 = vrot.lane.b32.xlu0 %v8120, 64
  %v8290 = vpop.permute.xlu0 %8289
  %8291 = vrot.lane.b32.xlu0 %v8127, 64
  %v8292 = vpop.permute.xlu0 %8291
  %8293 = vrot.lane.b32.xlu0 %v8134, 64
  %v8294 = vpop.permute.xlu0 %8293
  %8295 = vrot.lane.b32.xlu0 %v8141, 64
  %v8296 = vpop.permute.xlu0 %8295
  %8297 = vrot.lane.b32.xlu0 %v8148, 64
  %v8298 = vpop.permute.xlu0 %8297
  %8299 = vrot.lane.b32.xlu0 %v8155, 64
  %v8300 = vpop.permute.xlu0 %8299
  %8301 = vrot.lane.b32.xlu0 %v8162, 64
  %v8302 = vpop.permute.xlu0 %8301
  %8303 = vrot.lane.b32.xlu0 %v8169, 64
  %v8304 = vpop.permute.xlu0 %8303
  %8305 = vrot.lane.b32.xlu0 %v8176, 64
  %v8306 = vpop.permute.xlu0 %8305
  %8307 = vrot.lane.b32.xlu0 %v8183, 64
  %v8308 = vpop.permute.xlu0 %8307
  %8309 = vrot.lane.b32.xlu0 %v8190, 64
  %v8310 = vpop.permute.xlu0 %8309
  %8311 = vrot.lane.b32.xlu0 %v8197, 64
  %v8312 = vpop.permute.xlu0 %8311
  %8313 = vrot.lane.b32.xlu0 %v8204, 64
  %v8314 = vpop.permute.xlu0 %8313
  %8315 = vrot.lane.b32.xlu0 %v8211, 64
  %v8316 = vpop.permute.xlu0 %8315
  %8317 = vrot.lane.b32.xlu0 %v8218, 64
  %v8318 = vpop.permute.xlu0 %8317
  %8319 = vrot.lane.b32.xlu0 %v8225, 64
  %v8320 = vpop.permute.xlu0 %8319
  %8321 = vrot.lane.b32.xlu0 %v8232, 64
  %v8322 = vpop.permute.xlu0 %8321
  %8323 = vrot.lane.b32.xlu0 %v8239, 64
  %v8324 = vpop.permute.xlu0 %8323
  %8325 = vrot.lane.b32.xlu0 %v8246, 64
  %v8326 = vpop.permute.xlu0 %8325
  %8327 = vrot.lane.b32.xlu0 %v8253, 64
  %v8328 = vpop.permute.xlu0 %8327
  %8329 = vrot.lane.b32.xlu0 %v8260, 64
  %v8330 = vpop.permute.xlu0 %8329
  %8331 = vrot.lane.b32.xlu0 %v8267, 64
  %v8332 = vpop.permute.xlu0 %8331
  %8333 = vrot.lane.b32.xlu0 %v8274, 64
  %v8334 = vpop.permute.xlu0 %8333
  %vm8365 = vcmask 785920
  %vm8366 = vmand %vm8365, %vm1624
  %v8367 = vld [vmem:[%s7651] sm:$0xff]
  %v8368 = vsel %vm8366, %v8276, %v8367
  %8369 = vst [vmem:[%s7651] sm:$0xff] %v8368
  %v8370 = vld [vmem:[%s7651 + $0x18] sm:$0xff]
  %v8371 = vsel %vm8366, %v8278, %v8370
  %8372 = vst [vmem:[%s7651 + $0x18] sm:$0xff] %v8371
  %v8373 = vld [vmem:[%s7651 + $0x30] sm:$0xff]
  %v8374 = vsel %vm8366, %v8280, %v8373
  %8375 = vst [vmem:[%s7651 + $0x30] sm:$0xff] %v8374
  %v8376 = vld [vmem:[%s7651 + $0x48] sm:$0xff]
  %v8377 = vsel %vm8366, %v8282, %v8376
  %8378 = vst [vmem:[%s7651 + $0x48] sm:$0xff] %v8377
  %v8379 = vld [vmem:[%s7651 + $0x60] sm:$0xff]
  %v8380 = vsel %vm8366, %v8284, %v8379
  %8381 = vst [vmem:[%s7651 + $0x60] sm:$0xff] %v8380
  %v8382 = vld [vmem:[%s7651 + $0x78] sm:$0xff]
  %v8383 = vsel %vm8366, %v8286, %v8382
  %8384 = vst [vmem:[%s7651 + $0x78] sm:$0xff] %v8383
  %v8385 = vld [vmem:[%s7651 + $0x90] sm:$0xff]
  %v8386 = vsel %vm8366, %v8288, %v8385
  %8387 = vst [vmem:[%s7651 + $0x90] sm:$0xff] %v8386
  %v8388 = vld [vmem:[%s7651 + $0xa8] sm:$0xff]
  %v8389 = vsel %vm8366, %v8290, %v8388
  %8390 = vst [vmem:[%s7651 + $0xa8] sm:$0xff] %v8389
  %v8391 = vld [vmem:[%s7651 + $0xc0] sm:$0xff]
  %v8392 = vsel %vm8366, %v8292, %v8391
  %8393 = vst [vmem:[%s7651 + $0xc0] sm:$0xff] %v8392
  %v8394 = vld [vmem:[%s7651 + $0xd8] sm:$0xff]
  %v8395 = vsel %vm8366, %v8294, %v8394
  %8396 = vst [vmem:[%s7651 + $0xd8] sm:$0xff] %v8395
  %v8397 = vld [vmem:[%s7651 + $0xf0] sm:$0xff]
  %v8398 = vsel %vm8366, %v8296, %v8397
  %8399 = vst [vmem:[%s7651 + $0xf0] sm:$0xff] %v8398
  %v8400 = vld [vmem:[%s7651 + $0x108] sm:$0xff]
  %v8401 = vsel %vm8366, %v8298, %v8400
  %8402 = vst [vmem:[%s7651 + $0x108] sm:$0xff] %v8401
  %v8403 = vld [vmem:[%s7651 + $0x120] sm:$0xff]
  %v8404 = vsel %vm8366, %v8300, %v8403
  %8405 = vst [vmem:[%s7651 + $0x120] sm:$0xff] %v8404
  %v8406 = vld [vmem:[%s7651 + $0x138] sm:$0xff]
  %v8407 = vsel %vm8366, %v8302, %v8406
  %8408 = vst [vmem:[%s7651 + $0x138] sm:$0xff] %v8407
  %v8409 = vld [vmem:[%s7651 + $0x150] sm:$0xff]
  %v8410 = vsel %vm8366, %v8304, %v8409
  %8411 = vst [vmem:[%s7651 + $0x150] sm:$0xff] %v8410
  %v8412 = vld [vmem:[%s7651 + $0x180] sm:$0xff]
  %v8413 = vsel %vm8366, %v8306, %v8412
  %8414 = vst [vmem:[%s7651 + $0x180] sm:$0xff] %v8413
  %v8415 = vld [vmem:[%s7651 + $0x198] sm:$0xff]
  %v8416 = vsel %vm8366, %v8308, %v8415
  %8417 = vst [vmem:[%s7651 + $0x198] sm:$0xff] %v8416
  %v8418 = vld [vmem:[%s7651 + $0x1b0] sm:$0xff]
  %v8419 = vsel %vm8366, %v8310, %v8418
  %8420 = vst [vmem:[%s7651 + $0x1b0] sm:$0xff] %v8419
  %v8421 = vld [vmem:[%s7651 + $0x1c8] sm:$0xff]
  %v8422 = vsel %vm8366, %v8312, %v8421
  %8423 = vst [vmem:[%s7651 + $0x1c8] sm:$0xff] %v8422
  %v8424 = vld [vmem:[%s7651 + $0x1e0] sm:$0xff]
  %v8425 = vsel %vm8366, %v8314, %v8424
  %8426 = vst [vmem:[%s7651 + $0x1e0] sm:$0xff] %v8425
  %v8427 = vld [vmem:[%s7651 + $0x1f8] sm:$0xff]
  %v8428 = vsel %vm8366, %v8316, %v8427
  %8429 = vst [vmem:[%s7651 + $0x1f8] sm:$0xff] %v8428
  %v8430 = vld [vmem:[%s7651 + $0x210] sm:$0xff]
  %v8431 = vsel %vm8366, %v8318, %v8430
  %8432 = vst [vmem:[%s7651 + $0x210] sm:$0xff] %v8431
  %v8433 = vld [vmem:[%s7651 + $0x228] sm:$0xff]
  %v8434 = vsel %vm8366, %v8320, %v8433
  %8435 = vst [vmem:[%s7651 + $0x228] sm:$0xff] %v8434
  %v8436 = vld [vmem:[%s7651 + $0x240] sm:$0xff]
  %v8437 = vsel %vm8366, %v8322, %v8436
  %8438 = vst [vmem:[%s7651 + $0x240] sm:$0xff] %v8437
  %v8439 = vld [vmem:[%s7651 + $0x258] sm:$0xff]
  %v8440 = vsel %vm8366, %v8324, %v8439
  %8441 = vst [vmem:[%s7651 + $0x258] sm:$0xff] %v8440
  %v8442 = vld [vmem:[%s7651 + $0x270] sm:$0xff]
  %v8443 = vsel %vm8366, %v8326, %v8442
  %8444 = vst [vmem:[%s7651 + $0x270] sm:$0xff] %v8443
  %v8445 = vld [vmem:[%s7651 + $0x288] sm:$0xff]
  %v8446 = vsel %vm8366, %v8328, %v8445
  %8447 = vst [vmem:[%s7651 + $0x288] sm:$0xff] %v8446
  %v8448 = vld [vmem:[%s7651 + $0x2a0] sm:$0xff]
  %v8449 = vsel %vm8366, %v8330, %v8448
  %8450 = vst [vmem:[%s7651 + $0x2a0] sm:$0xff] %v8449
  %v8451 = vld [vmem:[%s7651 + $0x2b8] sm:$0xff]
  %v8452 = vsel %vm8366, %v8332, %v8451
  %8453 = vst [vmem:[%s7651 + $0x2b8] sm:$0xff] %v8452
  %v8454 = vld [vmem:[%s7651 + $0x2d0] sm:$0xff]
  %v8455 = vsel %vm8366, %v8334, %v8454
  %8456 = vst [vmem:[%s7651 + $0x2d0] sm:$0xff] %v8455
  %8457 = vrot.lane.b32.xlu0 %v7280, 96
  %v8458 = vpop.permute.xlu0 %8457
  %vm8460 = vcmask 1041152
  %vm8461 = vmand %vm8460, %vm36
  %v8462 = vld [vmem:[#allocation3] sm:$0x1]
  %v8463 = vsel %vm8461, %v8458, %v8462
  %8464 = vst [vmem:[#allocation3] sm:$0x1] %v8463
  %v8465 = vld [vmem:[#allocation3 + $0x18] sm:$0x1]
  %v8466 = vsel %vm8461, %v8458, %v8465
  %8467 = vst [vmem:[#allocation3 + $0x18] sm:$0x1] %v8466
  %v8468 = vld [vmem:[#allocation3 + $0x30] sm:$0x1]
  %v8469 = vsel %vm8461, %v8458, %v8468
  %8470 = vst [vmem:[#allocation3 + $0x30] sm:$0x1] %v8469
  %v8471 = vld [vmem:[#allocation3 + $0x48] sm:$0x1]
  %v8472 = vsel %vm8461, %v8458, %v8471
  %8473 = vst [vmem:[#allocation3 + $0x48] sm:$0x1] %v8472
  %v8474 = vld [vmem:[#allocation3 + $0x60] sm:$0x1]
  %v8475 = vsel %vm8461, %v8458, %v8474
  %8476 = vst [vmem:[#allocation3 + $0x60] sm:$0x1] %v8475
  %v8477 = vld [vmem:[#allocation3 + $0x78] sm:$0x1]
  %v8478 = vsel %vm8461, %v8458, %v8477
  %8479 = vst [vmem:[#allocation3 + $0x78] sm:$0x1] %v8478
  %v8480 = vld [vmem:[#allocation3 + $0x90] sm:$0x1]
  %v8481 = vsel %vm8461, %v8458, %v8480
  %8482 = vst [vmem:[#allocation3 + $0x90] sm:$0x1] %v8481
  %v8483 = vld [vmem:[#allocation3 + $0xa8] sm:$0x1]
  %v8484 = vsel %vm8461, %v8458, %v8483
  %8485 = vst [vmem:[#allocation3 + $0xa8] sm:$0x1] %v8484
  %v8486 = vld [vmem:[#allocation3 + $0xc0] sm:$0x1]
  %v8487 = vsel %vm8461, %v8458, %v8486
  %8488 = vst [vmem:[#allocation3 + $0xc0] sm:$0x1] %v8487
  %v8489 = vld [vmem:[#allocation3 + $0xd8] sm:$0x1]
  %v8490 = vsel %vm8461, %v8458, %v8489
  %8491 = vst [vmem:[#allocation3 + $0xd8] sm:$0x1] %v8490
  %v8492 = vld [vmem:[#allocation3 + $0xf0] sm:$0x1]
  %v8493 = vsel %vm8461, %v8458, %v8492
  %8494 = vst [vmem:[#allocation3 + $0xf0] sm:$0x1] %v8493
  %v8495 = vld [vmem:[#allocation3 + $0x108] sm:$0x1]
  %v8496 = vsel %vm8461, %v8458, %v8495
  %8497 = vst [vmem:[#allocation3 + $0x108] sm:$0x1] %v8496
  %v8498 = vld [vmem:[#allocation3 + $0x120] sm:$0x1]
  %v8499 = vsel %vm8461, %v8458, %v8498
  %8500 = vst [vmem:[#allocation3 + $0x120] sm:$0x1] %v8499
  %v8501 = vld [vmem:[#allocation3 + $0x138] sm:$0x1]
  %v8502 = vsel %vm8461, %v8458, %v8501
  %8503 = vst [vmem:[#allocation3 + $0x138] sm:$0x1] %v8502
  %v8504 = vld [vmem:[#allocation3 + $0x150] sm:$0x1]
  %v8505 = vsel %vm8461, %v8458, %v8504
  %8506 = vst [vmem:[#allocation3 + $0x150] sm:$0x1] %v8505
  %v8507 = vld [vmem:[#allocation3 + $0x168] sm:$0x1]
  %v8508 = vsel %vm8461, %v8458, %v8507
  %8509 = vst [vmem:[#allocation3 + $0x168] sm:$0x1] %v8508
  %v8510 = vld [vmem:[#allocation3 + $0x180] sm:$0x1]
  %v8511 = vsel %vm8461, %v8458, %v8510
  %8512 = vst [vmem:[#allocation3 + $0x180] sm:$0x1] %v8511
  %v8513 = vld [vmem:[#allocation3 + $0x198] sm:$0x1]
  %v8514 = vsel %vm8461, %v8458, %v8513
  %8515 = vst [vmem:[#allocation3 + $0x198] sm:$0x1] %v8514
  %v8516 = vld [vmem:[#allocation3 + $0x1b0] sm:$0x1]
  %v8517 = vsel %vm8461, %v8458, %v8516
  %8518 = vst [vmem:[#allocation3 + $0x1b0] sm:$0x1] %v8517
  %v8519 = vld [vmem:[#allocation3 + $0x1c8] sm:$0x1]
  %v8520 = vsel %vm8461, %v8458, %v8519
  %8521 = vst [vmem:[#allocation3 + $0x1c8] sm:$0x1] %v8520
  %v8522 = vld [vmem:[#allocation3 + $0x1e0] sm:$0x1]
  %v8523 = vsel %vm8461, %v8458, %v8522
  %8524 = vst [vmem:[#allocation3 + $0x1e0] sm:$0x1] %v8523
  %v8525 = vld [vmem:[#allocation3 + $0x1f8] sm:$0x1]
  %v8526 = vsel %vm8461, %v8458, %v8525
  %8527 = vst [vmem:[#allocation3 + $0x1f8] sm:$0x1] %v8526
  %v8528 = vld [vmem:[#allocation3 + $0x210] sm:$0x1]
  %v8529 = vsel %vm8461, %v8458, %v8528
  %8530 = vst [vmem:[#allocation3 + $0x210] sm:$0x1] %v8529
  %v8531 = vld [vmem:[#allocation3 + $0x228] sm:$0x1]
  %v8532 = vsel %vm8461, %v8458, %v8531
  %8533 = vst [vmem:[#allocation3 + $0x228] sm:$0x1] %v8532
  %v8534 = vld [vmem:[#allocation3 + $0x240] sm:$0x1]
  %v8535 = vsel %vm8461, %v8458, %v8534
  %8536 = vst [vmem:[#allocation3 + $0x240] sm:$0x1] %v8535
  %v8537 = vld [vmem:[#allocation3 + $0x258] sm:$0x1]
  %v8538 = vsel %vm8461, %v8458, %v8537
  %8539 = vst [vmem:[#allocation3 + $0x258] sm:$0x1] %v8538
  %v8540 = vld [vmem:[#allocation3 + $0x270] sm:$0x1]
  %v8541 = vsel %vm8461, %v8458, %v8540
  %8542 = vst [vmem:[#allocation3 + $0x270] sm:$0x1] %v8541
  %v8543 = vld [vmem:[#allocation3 + $0x288] sm:$0x1]
  %v8544 = vsel %vm8461, %v8458, %v8543
  %8545 = vst [vmem:[#allocation3 + $0x288] sm:$0x1] %v8544
  %v8546 = vld [vmem:[#allocation3 + $0x2a0] sm:$0x1]
  %v8547 = vsel %vm8461, %v8458, %v8546
  %8548 = vst [vmem:[#allocation3 + $0x2a0] sm:$0x1] %v8547
  %v8549 = vld [vmem:[#allocation3 + $0x2b8] sm:$0x1]
  %v8550 = vsel %vm8461, %v8458, %v8549
  %8551 = vst [vmem:[#allocation3 + $0x2b8] sm:$0x1] %v8550
  %v8552 = vld [vmem:[#allocation3 + $0x2d0] sm:$0x1]
  %v8553 = vsel %vm8461, %v8458, %v8552
  %8554 = vst [vmem:[#allocation3 + $0x2d0] sm:$0x1] %v8553
  %v8555 = vld [vmem:[#allocation3 + $0x2e8] sm:$0x1]
  %v8556 = vsel %vm8461, %v8458, %v8555
  %8557 = vst [vmem:[#allocation3 + $0x2e8] sm:$0x1] %v8556
  %v8558 = vld [vmem:[#allocation4] sm:$0xff]
  %v8559 = vld [vmem:[#allocation4 + $0x8] sm:$0xff]
  %v8560 = vld [vmem:[#allocation4 + $0x10] sm:$0xff]
  %v8561 = vld [vmem:[#allocation4 + $0x18] sm:$0xff]
  %v8562 = vld [vmem:[#allocation4 + $0x20] sm:$0xff]
  %v8563 = vld [vmem:[#allocation4 + $0x28] sm:$0xff]
  %v8564 = vld [vmem:[#allocation4 + $0x30] sm:$0xff]
  %v8565 = vld [vmem:[#allocation4 + $0x38] sm:$0xff]
  %v8566 = vld [vmem:[#allocation4 + $0x40] sm:$0xff]
  %v8567 = vld [vmem:[#allocation4 + $0x48] sm:$0xff]
  %v8568 = vld [vmem:[#allocation4 + $0x50] sm:$0xff]
  %v8569 = vld [vmem:[#allocation4 + $0x58] sm:$0xff]
  %v8570 = vld [vmem:[#allocation4 + $0x60] sm:$0xff]
  %v8571 = vld [vmem:[#allocation4 + $0x68] sm:$0xff]
  %v8572 = vld [vmem:[#allocation4 + $0x70] sm:$0xff]
  %v8573 = vld [vmem:[#allocation4 + $0x78] sm:$0xff]
  %v8574 = vld [vmem:[#allocation4 + $0x80] sm:$0xff]
  %v8575 = vld [vmem:[#allocation4 + $0x88] sm:$0xff]
  %v8576 = vld [vmem:[#allocation4 + $0x90] sm:$0xff]
  %v8577 = vld [vmem:[#allocation4 + $0x98] sm:$0xff]
  %v8578 = vld [vmem:[#allocation4 + $0xa0] sm:$0xff]
  %v8579 = vld [vmem:[#allocation4 + $0xa8] sm:$0xff]
  %v8580 = vld [vmem:[#allocation4 + $0xb0] sm:$0xff]
  %v8581 = vld [vmem:[#allocation4 + $0xb8] sm:$0xff]
  %v8582 = vld [vmem:[#allocation4 + $0xc0] sm:$0xff]
  %v8583 = vld [vmem:[#allocation4 + $0xc8] sm:$0xff]
  %v8584 = vld [vmem:[#allocation4 + $0xd0] sm:$0xff]
  %v8585 = vld [vmem:[#allocation4 + $0xd8] sm:$0xff]
  %v8586 = vld [vmem:[#allocation4 + $0xe0] sm:$0xff]
  %v8587 = vld [vmem:[#allocation4 + $0xe8] sm:$0xff]
  %v8588 = vld [vmem:[#allocation4 + $0xf0] sm:$0xff]
  %v8589 = vld [vmem:[#allocation4 + $0xf8] sm:$0xff]
  %v8591 = vshrl.u32 %v8558, 16
  %v8593 = vrot.slane %v8591, 7
  %v8594 = vshll.u32 %v8558, 16
  %v8596 = vor.u32 %v8593, %v8594
  %v8598 = vshrl.u32 %v8559, 16
  %v8600 = vrot.slane %v8598, 7
  %v8601 = vshll.u32 %v8559, 16
  %v8603 = vor.u32 %v8600, %v8601
  %v8605 = vshrl.u32 %v8560, 16
  %v8607 = vrot.slane %v8605, 7
  %v8608 = vshll.u32 %v8560, 16
  %v8610 = vor.u32 %v8607, %v8608
  %v8612 = vshrl.u32 %v8561, 16
  %v8614 = vrot.slane %v8612, 7
  %v8615 = vshll.u32 %v8561, 16
  %v8617 = vor.u32 %v8614, %v8615
  %v8619 = vshrl.u32 %v8562, 16
  %v8621 = vrot.slane %v8619, 7
  %v8622 = vshll.u32 %v8562, 16
  %v8624 = vor.u32 %v8621, %v8622
  %v8626 = vshrl.u32 %v8563, 16
  %v8628 = vrot.slane %v8626, 7
  %v8629 = vshll.u32 %v8563, 16
  %v8631 = vor.u32 %v8628, %v8629
  %v8633 = vshrl.u32 %v8564, 16
  %v8635 = vrot.slane %v8633, 7
  %v8636 = vshll.u32 %v8564, 16
  %v8638 = vor.u32 %v8635, %v8636
  %v8640 = vshrl.u32 %v8565, 16
  %v8642 = vrot.slane %v8640, 7
  %v8643 = vshll.u32 %v8565, 16
  %v8645 = vor.u32 %v8642, %v8643
  %v8647 = vshrl.u32 %v8566, 16
  %v8649 = vrot.slane %v8647, 7
  %v8650 = vshll.u32 %v8566, 16
  %v8652 = vor.u32 %v8649, %v8650
  %v8654 = vshrl.u32 %v8567, 16
  %v8656 = vrot.slane %v8654, 7
  %v8657 = vshll.u32 %v8567, 16
  %v8659 = vor.u32 %v8656, %v8657
  %v8661 = vshrl.u32 %v8568, 16
  %v8663 = vrot.slane %v8661, 7
  %v8664 = vshll.u32 %v8568, 16
  %v8666 = vor.u32 %v8663, %v8664
  %v8668 = vshrl.u32 %v8569, 16
  %v8670 = vrot.slane %v8668, 7
  %v8671 = vshll.u32 %v8569, 16
  %v8673 = vor.u32 %v8670, %v8671
  %v8675 = vshrl.u32 %v8570, 16
  %v8677 = vrot.slane %v8675, 7
  %v8678 = vshll.u32 %v8570, 16
  %v8680 = vor.u32 %v8677, %v8678
  %v8682 = vshrl.u32 %v8571, 16
  %v8684 = vrot.slane %v8682, 7
  %v8685 = vshll.u32 %v8571, 16
  %v8687 = vor.u32 %v8684, %v8685
  %v8689 = vshrl.u32 %v8572, 16
  %v8691 = vrot.slane %v8689, 7
  %v8692 = vshll.u32 %v8572, 16
  %v8694 = vor.u32 %v8691, %v8692
  %v8696 = vshrl.u32 %v8573, 16
  %v8698 = vrot.slane %v8696, 7
  %v8699 = vshll.u32 %v8573, 16
  %v8701 = vor.u32 %v8698, %v8699
  %v8703 = vshrl.u32 %v8574, 16
  %v8705 = vrot.slane %v8703, 7
  %v8706 = vshll.u32 %v8574, 16
  %v8708 = vor.u32 %v8705, %v8706
  %v8710 = vshrl.u32 %v8575, 16
  %v8712 = vrot.slane %v8710, 7
  %v8713 = vshll.u32 %v8575, 16
  %v8715 = vor.u32 %v8712, %v8713
  %v8717 = vshrl.u32 %v8576, 16
  %v8719 = vrot.slane %v8717, 7
  %v8720 = vshll.u32 %v8576, 16
  %v8722 = vor.u32 %v8719, %v8720
  %v8724 = vshrl.u32 %v8577, 16
  %v8726 = vrot.slane %v8724, 7
  %v8727 = vshll.u32 %v8577, 16
  %v8729 = vor.u32 %v8726, %v8727
  %v8731 = vshrl.u32 %v8578, 16
  %v8733 = vrot.slane %v8731, 7
  %v8734 = vshll.u32 %v8578, 16
  %v8736 = vor.u32 %v8733, %v8734
  %v8738 = vshrl.u32 %v8579, 16
  %v8740 = vrot.slane %v8738, 7
  %v8741 = vshll.u32 %v8579, 16
  %v8743 = vor.u32 %v8740, %v8741
  %v8745 = vshrl.u32 %v8580, 16
  %v8747 = vrot.slane %v8745, 7
  %v8748 = vshll.u32 %v8580, 16
  %v8750 = vor.u32 %v8747, %v8748
  %v8752 = vshrl.u32 %v8581, 16
  %v8754 = vrot.slane %v8752, 7
  %v8755 = vshll.u32 %v8581, 16
  %v8757 = vor.u32 %v8754, %v8755
  %v8759 = vshrl.u32 %v8582, 16
  %v8761 = vrot.slane %v8759, 7
  %v8762 = vshll.u32 %v8582, 16
  %v8764 = vor.u32 %v8761, %v8762
  %v8766 = vshrl.u32 %v8583, 16
  %v8768 = vrot.slane %v8766, 7
  %v8769 = vshll.u32 %v8583, 16
  %v8771 = vor.u32 %v8768, %v8769
  %v8773 = vshrl.u32 %v8584, 16
  %v8775 = vrot.slane %v8773, 7
  %v8776 = vshll.u32 %v8584, 16
  %v8778 = vor.u32 %v8775, %v8776
  %v8780 = vshrl.u32 %v8585, 16
  %v8782 = vrot.slane %v8780, 7
  %v8783 = vshll.u32 %v8585, 16
  %v8785 = vor.u32 %v8782, %v8783
  %v8787 = vshrl.u32 %v8586, 16
  %v8789 = vrot.slane %v8787, 7
  %v8790 = vshll.u32 %v8586, 16
  %v8792 = vor.u32 %v8789, %v8790
  %v8794 = vshrl.u32 %v8587, 16
  %v8796 = vrot.slane %v8794, 7
  %v8797 = vshll.u32 %v8587, 16
  %v8799 = vor.u32 %v8796, %v8797
  %v8801 = vshrl.u32 %v8588, 16
  %v8803 = vrot.slane %v8801, 7
  %v8804 = vshll.u32 %v8588, 16
  %v8806 = vor.u32 %v8803, %v8804
  %v8808 = vshrl.u32 %v8589, 16
  %v8810 = vrot.slane %v8808, 7
  %v8811 = vshll.u32 %v8589, 16
  %v8813 = vor.u32 %v8810, %v8811
  %8814 = vrot.lane.b32.xlu0 %v8596, 96
  %v8815 = vpop.permute.xlu0 %8814
  %8816 = vrot.lane.b32.xlu0 %v8603, 96
  %v8817 = vpop.permute.xlu0 %8816
  %8818 = vrot.lane.b32.xlu0 %v8610, 96
  %v8819 = vpop.permute.xlu0 %8818
  %8820 = vrot.lane.b32.xlu0 %v8617, 96
  %v8821 = vpop.permute.xlu0 %8820
  %8822 = vrot.lane.b32.xlu0 %v8624, 96
  %v8823 = vpop.permute.xlu0 %8822
  %8824 = vrot.lane.b32.xlu0 %v8631, 96
  %v8825 = vpop.permute.xlu0 %8824
  %8826 = vrot.lane.b32.xlu0 %v8638, 96
  %v8827 = vpop.permute.xlu0 %8826
  %8828 = vrot.lane.b32.xlu0 %v8645, 96
  %v8829 = vpop.permute.xlu0 %8828
  %8830 = vrot.lane.b32.xlu0 %v8652, 96
  %v8831 = vpop.permute.xlu0 %8830
  %8832 = vrot.lane.b32.xlu0 %v8659, 96
  %v8833 = vpop.permute.xlu0 %8832
  %8834 = vrot.lane.b32.xlu0 %v8666, 96
  %v8835 = vpop.permute.xlu0 %8834
  %8836 = vrot.lane.b32.xlu0 %v8673, 96
  %v8837 = vpop.permute.xlu0 %8836
  %8838 = vrot.lane.b32.xlu0 %v8680, 96
  %v8839 = vpop.permute.xlu0 %8838
  %8840 = vrot.lane.b32.xlu0 %v8687, 96
  %v8841 = vpop.permute.xlu0 %8840
  %8842 = vrot.lane.b32.xlu0 %v8694, 96
  %v8843 = vpop.permute.xlu0 %8842
  %8844 = vrot.lane.b32.xlu0 %v8701, 96
  %v8845 = vpop.permute.xlu0 %8844
  %8846 = vrot.lane.b32.xlu0 %v8708, 96
  %v8847 = vpop.permute.xlu0 %8846
  %8848 = vrot.lane.b32.xlu0 %v8715, 96
  %v8849 = vpop.permute.xlu0 %8848
  %8850 = vrot.lane.b32.xlu0 %v8722, 96
  %v8851 = vpop.permute.xlu0 %8850
  %8852 = vrot.lane.b32.xlu0 %v8729, 96
  %v8853 = vpop.permute.xlu0 %8852
  %8854 = vrot.lane.b32.xlu0 %v8736, 96
  %v8855 = vpop.permute.xlu0 %8854
  %8856 = vrot.lane.b32.xlu0 %v8743, 96
  %v8857 = vpop.permute.xlu0 %8856
  %8858 = vrot.lane.b32.xlu0 %v8750, 96
  %v8859 = vpop.permute.xlu0 %8858
  %8860 = vrot.lane.b32.xlu0 %v8757, 96
  %v8861 = vpop.permute.xlu0 %8860
  %8862 = vrot.lane.b32.xlu0 %v8764, 96
  %v8863 = vpop.permute.xlu0 %8862
  %8864 = vrot.lane.b32.xlu0 %v8771, 96
  %v8865 = vpop.permute.xlu0 %8864
  %8866 = vrot.lane.b32.xlu0 %v8778, 96
  %v8867 = vpop.permute.xlu0 %8866
  %8868 = vrot.lane.b32.xlu0 %v8785, 96
  %v8869 = vpop.permute.xlu0 %8868
  %8870 = vrot.lane.b32.xlu0 %v8792, 96
  %v8871 = vpop.permute.xlu0 %8870
  %8872 = vrot.lane.b32.xlu0 %v8799, 96
  %v8873 = vpop.permute.xlu0 %8872
  %8874 = vrot.lane.b32.xlu0 %v8806, 96
  %v8875 = vpop.permute.xlu0 %8874
  %8876 = vrot.lane.b32.xlu0 %v8813, 96
  %v8877 = vpop.permute.xlu0 %8876
  %vm8910 = vcmask 1048320
  %vm8911 = vmand %vm8910, %vm586
  %v8912 = vld [vmem:[#allocation3] sm:$0xff]
  %v8913 = vsel %vm8911, %v8815, %v8912
  %8914 = vst [vmem:[#allocation3] sm:$0xff] %v8913
  %v8915 = vld [vmem:[#allocation3 + $0x18] sm:$0xff]
  %v8916 = vsel %vm8911, %v8817, %v8915
  %8917 = vst [vmem:[#allocation3 + $0x18] sm:$0xff] %v8916
  %v8918 = vld [vmem:[#allocation3 + $0x30] sm:$0xff]
  %v8919 = vsel %vm8911, %v8819, %v8918
  %8920 = vst [vmem:[#allocation3 + $0x30] sm:$0xff] %v8919
  %v8921 = vld [vmem:[#allocation3 + $0x48] sm:$0xff]
  %v8922 = vsel %vm8911, %v8821, %v8921
  %8923 = vst [vmem:[#allocation3 + $0x48] sm:$0xff] %v8922
  %v8924 = vld [vmem:[#allocation3 + $0x60] sm:$0xff]
  %v8925 = vsel %vm8911, %v8823, %v8924
  %8926 = vst [vmem:[#allocation3 + $0x60] sm:$0xff] %v8925
  %v8927 = vld [vmem:[#allocation3 + $0x78] sm:$0xff]
  %v8928 = vsel %vm8911, %v8825, %v8927
  %8929 = vst [vmem:[#allocation3 + $0x78] sm:$0xff] %v8928
  %v8930 = vld [vmem:[#allocation3 + $0x90] sm:$0xff]
  %v8931 = vsel %vm8911, %v8827, %v8930
  %8932 = vst [vmem:[#allocation3 + $0x90] sm:$0xff] %v8931
  %v8933 = vld [vmem:[#allocation3 + $0xa8] sm:$0xff]
  %v8934 = vsel %vm8911, %v8829, %v8933
  %8935 = vst [vmem:[#allocation3 + $0xa8] sm:$0xff] %v8934
  %v8936 = vld [vmem:[#allocation3 + $0xc0] sm:$0xff]
  %v8937 = vsel %vm8911, %v8831, %v8936
  %8938 = vst [vmem:[#allocation3 + $0xc0] sm:$0xff] %v8937
  %v8939 = vld [vmem:[#allocation3 + $0xd8] sm:$0xff]
  %v8940 = vsel %vm8911, %v8833, %v8939
  %8941 = vst [vmem:[#allocation3 + $0xd8] sm:$0xff] %v8940
  %v8942 = vld [vmem:[#allocation3 + $0xf0] sm:$0xff]
  %v8943 = vsel %vm8911, %v8835, %v8942
  %8944 = vst [vmem:[#allocation3 + $0xf0] sm:$0xff] %v8943
  %v8945 = vld [vmem:[#allocation3 + $0x108] sm:$0xff]
  %v8946 = vsel %vm8911, %v8837, %v8945
  %8947 = vst [vmem:[#allocation3 + $0x108] sm:$0xff] %v8946
  %v8948 = vld [vmem:[#allocation3 + $0x120] sm:$0xff]
  %v8949 = vsel %vm8911, %v8839, %v8948
  %8950 = vst [vmem:[#allocation3 + $0x120] sm:$0xff] %v8949
  %v8951 = vld [vmem:[#allocation3 + $0x138] sm:$0xff]
  %v8952 = vsel %vm8911, %v8841, %v8951
  %8953 = vst [vmem:[#allocation3 + $0x138] sm:$0xff] %v8952
  %v8954 = vld [vmem:[#allocation3 + $0x150] sm:$0xff]
  %v8955 = vsel %vm8911, %v8843, %v8954
  %8956 = vst [vmem:[#allocation3 + $0x150] sm:$0xff] %v8955
  %v8957 = vld [vmem:[#allocation3 + $0x168] sm:$0xff]
  %v8958 = vsel %vm8911, %v8845, %v8957
  %8959 = vst [vmem:[#allocation3 + $0x168] sm:$0xff] %v8958
  %v8960 = vld [vmem:[#allocation3 + $0x180] sm:$0xff]
  %v8961 = vsel %vm8911, %v8847, %v8960
  %8962 = vst [vmem:[#allocation3 + $0x180] sm:$0xff] %v8961
  %v8963 = vld [vmem:[#allocation3 + $0x198] sm:$0xff]
  %v8964 = vsel %vm8911, %v8849, %v8963
  %8965 = vst [vmem:[#allocation3 + $0x198] sm:$0xff] %v8964
  %v8966 = vld [vmem:[#allocation3 + $0x1b0] sm:$0xff]
  %v8967 = vsel %vm8911, %v8851, %v8966
  %8968 = vst [vmem:[#allocation3 + $0x1b0] sm:$0xff] %v8967
  %v8969 = vld [vmem:[#allocation3 + $0x1c8] sm:$0xff]
  %v8970 = vsel %vm8911, %v8853, %v8969
  %8971 = vst [vmem:[#allocation3 + $0x1c8] sm:$0xff] %v8970
  %v8972 = vld [vmem:[#allocation3 + $0x1e0] sm:$0xff]
  %v8973 = vsel %vm8911, %v8855, %v8972
  %8974 = vst [vmem:[#allocation3 + $0x1e0] sm:$0xff] %v8973
  %v8975 = vld [vmem:[#allocation3 + $0x1f8] sm:$0xff]
  %v8976 = vsel %vm8911, %v8857, %v8975
  %8977 = vst [vmem:[#allocation3 + $0x1f8] sm:$0xff] %v8976
  %v8978 = vld [vmem:[#allocation3 + $0x210] sm:$0xff]
  %v8979 = vsel %vm8911, %v8859, %v8978
  %8980 = vst [vmem:[#allocation3 + $0x210] sm:$0xff] %v8979
  %v8981 = vld [vmem:[#allocation3 + $0x228] sm:$0xff]
  %v8982 = vsel %vm8911, %v8861, %v8981
  %8983 = vst [vmem:[#allocation3 + $0x228] sm:$0xff] %v8982
  %v8984 = vld [vmem:[#allocation3 + $0x240] sm:$0xff]
  %v8985 = vsel %vm8911, %v8863, %v8984
  %8986 = vst [vmem:[#allocation3 + $0x240] sm:$0xff] %v8985
  %v8987 = vld [vmem:[#allocation3 + $0x258] sm:$0xff]
  %v8988 = vsel %vm8911, %v8865, %v8987
  %8989 = vst [vmem:[#allocation3 + $0x258] sm:$0xff] %v8988
  %v8990 = vld [vmem:[#allocation3 + $0x270] sm:$0xff]
  %v8991 = vsel %vm8911, %v8867, %v8990
  %8992 = vst [vmem:[#allocation3 + $0x270] sm:$0xff] %v8991
  %v8993 = vld [vmem:[#allocation3 + $0x288] sm:$0xff]
  %v8994 = vsel %vm8911, %v8869, %v8993
  %8995 = vst [vmem:[#allocation3 + $0x288] sm:$0xff] %v8994
  %v8996 = vld [vmem:[#allocation3 + $0x2a0] sm:$0xff]
  %v8997 = vsel %vm8911, %v8871, %v8996
  %8998 = vst [vmem:[#allocation3 + $0x2a0] sm:$0xff] %v8997
  %v8999 = vld [vmem:[#allocation3 + $0x2b8] sm:$0xff]
  %v9000 = vsel %vm8911, %v8873, %v8999
  %9001 = vst [vmem:[#allocation3 + $0x2b8] sm:$0xff] %v9000
  %v9002 = vld [vmem:[#allocation3 + $0x2d0] sm:$0xff]
  %v9003 = vsel %vm8911, %v8875, %v9002
  %9004 = vst [vmem:[#allocation3 + $0x2d0] sm:$0xff] %v9003
  %v9005 = vld [vmem:[#allocation3 + $0x2e8] sm:$0xff]
  %v9006 = vsel %vm8911, %v8877, %v9005
  %9007 = vst [vmem:[#allocation3 + $0x2e8] sm:$0xff] %v9006
  %v9008 = vld [vmem:[#allocation4] sm:$0xff]
  %v9009 = vld [vmem:[#allocation4 + $0x8] sm:$0xff]
  %v9010 = vld [vmem:[#allocation4 + $0x10] sm:$0xff]
  %v9011 = vld [vmem:[#allocation4 + $0x18] sm:$0xff]
  %v9012 = vld [vmem:[#allocation4 + $0x20] sm:$0xff]
  %v9013 = vld [vmem:[#allocation4 + $0x28] sm:$0xff]
  %v9014 = vld [vmem:[#allocation4 + $0x30] sm:$0xff]
  %v9015 = vld [vmem:[#allocation4 + $0x38] sm:$0xff]
  %v9016 = vld [vmem:[#allocation4 + $0x40] sm:$0xff]
  %v9017 = vld [vmem:[#allocation4 + $0x48] sm:$0xff]
  %v9018 = vld [vmem:[#allocation4 + $0x50] sm:$0xff]
  %v9019 = vld [vmem:[#allocation4 + $0x58] sm:$0xff]
  %v9020 = vld [vmem:[#allocation4 + $0x60] sm:$0xff]
  %v9021 = vld [vmem:[#allocation4 + $0x68] sm:$0xff]
  %v9022 = vld [vmem:[#allocation4 + $0x70] sm:$0xff]
  %v9023 = vld [vmem:[#allocation4 + $0x78] sm:$0xff]
  %v9024 = vld [vmem:[#allocation4 + $0x80] sm:$0xff]
  %v9025 = vld [vmem:[#allocation4 + $0x88] sm:$0xff]
  %v9026 = vld [vmem:[#allocation4 + $0x90] sm:$0xff]
  %v9027 = vld [vmem:[#allocation4 + $0x98] sm:$0xff]
  %v9028 = vld [vmem:[#allocation4 + $0xa0] sm:$0xff]
  %v9029 = vld [vmem:[#allocation4 + $0xa8] sm:$0xff]
  %v9030 = vld [vmem:[#allocation4 + $0xb0] sm:$0xff]
  %v9031 = vld [vmem:[#allocation4 + $0xb8] sm:$0xff]
  %v9032 = vld [vmem:[#allocation4 + $0xc0] sm:$0xff]
  %v9033 = vld [vmem:[#allocation4 + $0xc8] sm:$0xff]
  %v9034 = vld [vmem:[#allocation4 + $0xd0] sm:$0xff]
  %v9035 = vld [vmem:[#allocation4 + $0xd8] sm:$0xff]
  %v9036 = vld [vmem:[#allocation4 + $0xe0] sm:$0xff]
  %v9037 = vld [vmem:[#allocation4 + $0xe8] sm:$0xff]
  %v9038 = vld [vmem:[#allocation4 + $0xf0] sm:$0xff]
  %v9039 = vld [vmem:[#allocation4 + $0xf8] sm:$0xff]
  %9040 = vst.msk [vmem:[#allocation3 + $0x8] sm:$0xff] %vm5724, %v9008
  %9041 = vst.msk [vmem:[#allocation3 + $0x20] sm:$0xff] %vm5724, %v9009
  %9042 = vst.msk [vmem:[#allocation3 + $0x38] sm:$0xff] %vm5724, %v9010
  %9043 = vst.msk [vmem:[#allocation3 + $0x50] sm:$0xff] %vm5724, %v9011
  %9044 = vst.msk [vmem:[#allocation3 + $0x68] sm:$0xff] %vm5724, %v9012
  %9045 = vst.msk [vmem:[#allocation3 + $0x80] sm:$0xff] %vm5724, %v9013
  %9046 = vst.msk [vmem:[#allocation3 + $0x98] sm:$0xff] %vm5724, %v9014
  %9047 = vst.msk [vmem:[#allocation3 + $0xb0] sm:$0xff] %vm5724, %v9015
  %9048 = vst.msk [vmem:[#allocation3 + $0xc8] sm:$0xff] %vm5724, %v9016
  %9049 = vst.msk [vmem:[#allocation3 + $0xe0] sm:$0xff] %vm5724, %v9017
  %9050 = vst.msk [vmem:[#allocation3 + $0xf8] sm:$0xff] %vm5724, %v9018
  %9051 = vst.msk [vmem:[#allocation3 + $0x110] sm:$0xff] %vm5724, %v9019
  %9052 = vst.msk [vmem:[#allocation3 + $0x128] sm:$0xff] %vm5724, %v9020
  %9053 = vst.msk [vmem:[#allocation3 + $0x140] sm:$0xff] %vm5724, %v9021
  %9054 = vst.msk [vmem:[#allocation3 + $0x158] sm:$0xff] %vm5724, %v9022
  %9055 = vst.msk [vmem:[#allocation3 + $0x170] sm:$0xff] %vm5724, %v9023
  %9056 = vst.msk [vmem:[#allocation3 + $0x188] sm:$0xff] %vm5724, %v9024
  %9057 = vst.msk [vmem:[#allocation3 + $0x1a0] sm:$0xff] %vm5724, %v9025
  %9058 = vst.msk [vmem:[#allocation3 + $0x1b8] sm:$0xff] %vm5724, %v9026
  %9059 = vst.msk [vmem:[#allocation3 + $0x1d0] sm:$0xff] %vm5724, %v9027
  %9060 = vst.msk [vmem:[#allocation3 + $0x1e8] sm:$0xff] %vm5724, %v9028
  %9061 = vst.msk [vmem:[#allocation3 + $0x200] sm:$0xff] %vm5724, %v9029
  %9062 = vst.msk [vmem:[#allocation3 + $0x218] sm:$0xff] %vm5724, %v9030
  %9063 = vst.msk [vmem:[#allocation3 + $0x230] sm:$0xff] %vm5724, %v9031
  %9064 = vst.msk [vmem:[#allocation3 + $0x248] sm:$0xff] %vm5724, %v9032
  %9065 = vst.msk [vmem:[#allocation3 + $0x260] sm:$0xff] %vm5724, %v9033
  %9066 = vst.msk [vmem:[#allocation3 + $0x278] sm:$0xff] %vm5724, %v9034
  %9067 = vst.msk [vmem:[#allocation3 + $0x290] sm:$0xff] %vm5724, %v9035
  %9068 = vst.msk [vmem:[#allocation3 + $0x2a8] sm:$0xff] %vm5724, %v9036
  %9069 = vst.msk [vmem:[#allocation3 + $0x2c0] sm:$0xff] %vm5724, %v9037
  %9070 = vst.msk [vmem:[#allocation3 + $0x2d8] sm:$0xff] %vm5724, %v9038
  %9071 = vst.msk [vmem:[#allocation3 + $0x2f0] sm:$0xff] %vm5724, %v9039
  %vm9072 = vcmask 523527
  %vm9073 = vmand %vm9072, %vm1015
  %v9074 = vld [vmem:[#allocation3 + $0x8] sm:$0x80]
  %v9075 = vsel %vm9073, %v7746, %v9074
  %9076 = vst [vmem:[#allocation3 + $0x8] sm:$0x80] %v9075
  %v9077 = vld [vmem:[#allocation3 + $0x20] sm:$0x80]
  %v9078 = vsel %vm9073, %v7746, %v9077
  %9079 = vst [vmem:[#allocation3 + $0x20] sm:$0x80] %v9078
  %v9080 = vld [vmem:[#allocation3 + $0x38] sm:$0x80]
  %v9081 = vsel %vm9073, %v7746, %v9080
  %9082 = vst [vmem:[#allocation3 + $0x38] sm:$0x80] %v9081
  %v9083 = vld [vmem:[#allocation3 + $0x50] sm:$0x80]
  %v9084 = vsel %vm9073, %v7746, %v9083
  %9085 = vst [vmem:[#allocation3 + $0x50] sm:$0x80] %v9084
  %v9086 = vld [vmem:[#allocation3 + $0x68] sm:$0x80]
  %v9087 = vsel %vm9073, %v7746, %v9086
  %9088 = vst [vmem:[#allocation3 + $0x68] sm:$0x80] %v9087
  %v9089 = vld [vmem:[#allocation3 + $0x80] sm:$0x80]
  %v9090 = vsel %vm9073, %v7746, %v9089
  %9091 = vst [vmem:[#allocation3 + $0x80] sm:$0x80] %v9090
  %v9092 = vld [vmem:[#allocation3 + $0x98] sm:$0x80]
  %v9093 = vsel %vm9073, %v7746, %v9092
  %9094 = vst [vmem:[#allocation3 + $0x98] sm:$0x80] %v9093
  %v9095 = vld [vmem:[#allocation3 + $0xb0] sm:$0x80]
  %v9096 = vsel %vm9073, %v7746, %v9095
  %9097 = vst [vmem:[#allocation3 + $0xb0] sm:$0x80] %v9096
  %v9098 = vld [vmem:[#allocation3 + $0xc8] sm:$0x80]
  %v9099 = vsel %vm9073, %v7746, %v9098
  %9100 = vst [vmem:[#allocation3 + $0xc8] sm:$0x80] %v9099
  %v9101 = vld [vmem:[#allocation3 + $0xe0] sm:$0x80]
  %v9102 = vsel %vm9073, %v7746, %v9101
  %9103 = vst [vmem:[#allocation3 + $0xe0] sm:$0x80] %v9102
  %v9104 = vld [vmem:[#allocation3 + $0xf8] sm:$0x80]
  %v9105 = vsel %vm9073, %v7746, %v9104
  %9106 = vst [vmem:[#allocation3 + $0xf8] sm:$0x80] %v9105
  %v9107 = vld [vmem:[#allocation3 + $0x110] sm:$0x80]
  %v9108 = vsel %vm9073, %v7746, %v9107
  %9109 = vst [vmem:[#allocation3 + $0x110] sm:$0x80] %v9108
  %v9110 = vld [vmem:[#allocation3 + $0x128] sm:$0x80]
  %v9111 = vsel %vm9073, %v7746, %v9110
  %9112 = vst [vmem:[#allocation3 + $0x128] sm:$0x80] %v9111
  %v9113 = vld [vmem:[#allocation3 + $0x140] sm:$0x80]
  %v9114 = vsel %vm9073, %v7746, %v9113
  %9115 = vst [vmem:[#allocation3 + $0x140] sm:$0x80] %v9114
  %v9116 = vld [vmem:[#allocation3 + $0x158] sm:$0x80]
  %v9117 = vsel %vm9073, %v7746, %v9116
  %9118 = vst [vmem:[#allocation3 + $0x158] sm:$0x80] %v9117
  %v9119 = vld [vmem:[#allocation3 + $0x170] sm:$0x80]
  %v9120 = vsel %vm9073, %v7746, %v9119
  %9121 = vst [vmem:[#allocation3 + $0x170] sm:$0x80] %v9120
  %v9122 = vld [vmem:[#allocation3 + $0x188] sm:$0x80]
  %v9123 = vsel %vm9073, %v7746, %v9122
  %9124 = vst [vmem:[#allocation3 + $0x188] sm:$0x80] %v9123
  %v9125 = vld [vmem:[#allocation3 + $0x1a0] sm:$0x80]
  %v9126 = vsel %vm9073, %v7746, %v9125
  %9127 = vst [vmem:[#allocation3 + $0x1a0] sm:$0x80] %v9126
  %v9128 = vld [vmem:[#allocation3 + $0x1b8] sm:$0x80]
  %v9129 = vsel %vm9073, %v7746, %v9128
  %9130 = vst [vmem:[#allocation3 + $0x1b8] sm:$0x80] %v9129
  %v9131 = vld [vmem:[#allocation3 + $0x1d0] sm:$0x80]
  %v9132 = vsel %vm9073, %v7746, %v9131
  %9133 = vst [vmem:[#allocation3 + $0x1d0] sm:$0x80] %v9132
  %v9134 = vld [vmem:[#allocation3 + $0x1e8] sm:$0x80]
  %v9135 = vsel %vm9073, %v7746, %v9134
  %9136 = vst [vmem:[#allocation3 + $0x1e8] sm:$0x80] %v9135
  %v9137 = vld [vmem:[#allocation3 + $0x200] sm:$0x80]
  %v9138 = vsel %vm9073, %v7746, %v9137
  %9139 = vst [vmem:[#allocation3 + $0x200] sm:$0x80] %v9138
  %v9140 = vld [vmem:[#allocation3 + $0x218] sm:$0x80]
  %v9141 = vsel %vm9073, %v7746, %v9140
  %9142 = vst [vmem:[#allocation3 + $0x218] sm:$0x80] %v9141
  %v9143 = vld [vmem:[#allocation3 + $0x230] sm:$0x80]
  %v9144 = vsel %vm9073, %v7746, %v9143
  %9145 = vst [vmem:[#allocation3 + $0x230] sm:$0x80] %v9144
  %v9146 = vld [vmem:[#allocation3 + $0x248] sm:$0x80]
  %v9147 = vsel %vm9073, %v7746, %v9146
  %9148 = vst [vmem:[#allocation3 + $0x248] sm:$0x80] %v9147
  %v9149 = vld [vmem:[#allocation3 + $0x260] sm:$0x80]
  %v9150 = vsel %vm9073, %v7746, %v9149
  %9151 = vst [vmem:[#allocation3 + $0x260] sm:$0x80] %v9150
  %v9152 = vld [vmem:[#allocation3 + $0x278] sm:$0x80]
  %v9153 = vsel %vm9073, %v7746, %v9152
  %9154 = vst [vmem:[#allocation3 + $0x278] sm:$0x80] %v9153
  %v9155 = vld [vmem:[#allocation3 + $0x290] sm:$0x80]
  %v9156 = vsel %vm9073, %v7746, %v9155
  %9157 = vst [vmem:[#allocation3 + $0x290] sm:$0x80] %v9156
  %v9158 = vld [vmem:[#allocation3 + $0x2a8] sm:$0x80]
  %v9159 = vsel %vm9073, %v7746, %v9158
  %9160 = vst [vmem:[#allocation3 + $0x2a8] sm:$0x80] %v9159
  %v9161 = vld [vmem:[#allocation3 + $0x2c0] sm:$0x80]
  %v9162 = vsel %vm9073, %v7746, %v9161
  %9163 = vst [vmem:[#allocation3 + $0x2c0] sm:$0x80] %v9162
  %v9164 = vld [vmem:[#allocation3 + $0x2d8] sm:$0x80]
  %v9165 = vsel %vm9073, %v7746, %v9164
  %9166 = vst [vmem:[#allocation3 + $0x2d8] sm:$0x80] %v9165
  %v9167 = vld [vmem:[#allocation3 + $0x2f0] sm:$0x80]
  %v9168 = vsel %vm9073, %v7746, %v9167
  %9169 = vst [vmem:[#allocation3 + $0x2f0] sm:$0x80] %v9168
  %v9170 = vld [vmem:[#allocation4] sm:$0xff]
  %v9171 = vld [vmem:[#allocation4 + $0x8] sm:$0xff]
  %v9172 = vld [vmem:[#allocation4 + $0x10] sm:$0xff]
  %v9173 = vld [vmem:[#allocation4 + $0x18] sm:$0xff]
  %v9174 = vld [vmem:[#allocation4 + $0x20] sm:$0xff]
  %v9175 = vld [vmem:[#allocation4 + $0x28] sm:$0xff]
  %v9176 = vld [vmem:[#allocation4 + $0x30] sm:$0xff]
  %v9177 = vld [vmem:[#allocation4 + $0x38] sm:$0xff]
  %v9178 = vld [vmem:[#allocation4 + $0x40] sm:$0xff]
  %v9179 = vld [vmem:[#allocation4 + $0x48] sm:$0xff]
  %v9180 = vld [vmem:[#allocation4 + $0x50] sm:$0xff]
  %v9181 = vld [vmem:[#allocation4 + $0x58] sm:$0xff]
  %v9182 = vld [vmem:[#allocation4 + $0x60] sm:$0xff]
  %v9183 = vld [vmem:[#allocation4 + $0x68] sm:$0xff]
  %v9184 = vld [vmem:[#allocation4 + $0x70] sm:$0xff]
  %v9185 = vld [vmem:[#allocation4 + $0x78] sm:$0xff]
  %v9186 = vld [vmem:[#allocation4 + $0x80] sm:$0xff]
  %v9187 = vld [vmem:[#allocation4 + $0x88] sm:$0xff]
  %v9188 = vld [vmem:[#allocation4 + $0x90] sm:$0xff]
  %v9189 = vld [vmem:[#allocation4 + $0x98] sm:$0xff]
  %v9190 = vld [vmem:[#allocation4 + $0xa0] sm:$0xff]
  %v9191 = vld [vmem:[#allocation4 + $0xa8] sm:$0xff]
  %v9192 = vld [vmem:[#allocation4 + $0xb0] sm:$0xff]
  %v9193 = vld [vmem:[#allocation4 + $0xb8] sm:$0xff]
  %v9194 = vld [vmem:[#allocation4 + $0xc0] sm:$0xff]
  %v9195 = vld [vmem:[#allocation4 + $0xc8] sm:$0xff]
  %v9196 = vld [vmem:[#allocation4 + $0xd0] sm:$0xff]
  %v9197 = vld [vmem:[#allocation4 + $0xd8] sm:$0xff]
  %v9198 = vld [vmem:[#allocation4 + $0xe0] sm:$0xff]
  %v9199 = vld [vmem:[#allocation4 + $0xe8] sm:$0xff]
  %v9200 = vld [vmem:[#allocation4 + $0xf0] sm:$0xff]
  %v9201 = vld [vmem:[#allocation4 + $0xf8] sm:$0xff]
  %v9203 = vshrl.u32 %v9170, 16
  %v9205 = vshll.u32 %v9170, 16
  %v9207 = vrot.slane %v9205, 1
  %v9208 = vor.u32 %v9203, %v9207
  %v9210 = vshrl.u32 %v9171, 16
  %v9212 = vshll.u32 %v9171, 16
  %v9214 = vrot.slane %v9212, 1
  %v9215 = vor.u32 %v9210, %v9214
  %v9217 = vshrl.u32 %v9172, 16
  %v9219 = vshll.u32 %v9172, 16
  %v9221 = vrot.slane %v9219, 1
  %v9222 = vor.u32 %v9217, %v9221
  %v9224 = vshrl.u32 %v9173, 16
  %v9226 = vshll.u32 %v9173, 16
  %v9228 = vrot.slane %v9226, 1
  %v9229 = vor.u32 %v9224, %v9228
  %v9231 = vshrl.u32 %v9174, 16
  %v9233 = vshll.u32 %v9174, 16
  %v9235 = vrot.slane %v9233, 1
  %v9236 = vor.u32 %v9231, %v9235
  %v9238 = vshrl.u32 %v9175, 16
  %v9240 = vshll.u32 %v9175, 16
  %v9242 = vrot.slane %v9240, 1
  %v9243 = vor.u32 %v9238, %v9242
  %v9245 = vshrl.u32 %v9176, 16
  %v9247 = vshll.u32 %v9176, 16
  %v9249 = vrot.slane %v9247, 1
  %v9250 = vor.u32 %v9245, %v9249
  %v9252 = vshrl.u32 %v9177, 16
  %v9254 = vshll.u32 %v9177, 16
  %v9256 = vrot.slane %v9254, 1
  %v9257 = vor.u32 %v9252, %v9256
  %v9259 = vshrl.u32 %v9178, 16
  %v9261 = vshll.u32 %v9178, 16
  %v9263 = vrot.slane %v9261, 1
  %v9264 = vor.u32 %v9259, %v9263
  %v9266 = vshrl.u32 %v9179, 16
  %v9268 = vshll.u32 %v9179, 16
  %v9270 = vrot.slane %v9268, 1
  %v9271 = vor.u32 %v9266, %v9270
  %v9273 = vshrl.u32 %v9180, 16
  %v9275 = vshll.u32 %v9180, 16
  %v9277 = vrot.slane %v9275, 1
  %v9278 = vor.u32 %v9273, %v9277
  %v9280 = vshrl.u32 %v9181, 16
  %v9282 = vshll.u32 %v9181, 16
  %v9284 = vrot.slane %v9282, 1
  %v9285 = vor.u32 %v9280, %v9284
  %v9287 = vshrl.u32 %v9182, 16
  %v9289 = vshll.u32 %v9182, 16
  %v9291 = vrot.slane %v9289, 1
  %v9292 = vor.u32 %v9287, %v9291
  %v9294 = vshrl.u32 %v9183, 16
  %v9296 = vshll.u32 %v9183, 16
  %v9298 = vrot.slane %v9296, 1
  %v9299 = vor.u32 %v9294, %v9298
  %v9301 = vshrl.u32 %v9184, 16
  %v9303 = vshll.u32 %v9184, 16
  %v9305 = vrot.slane %v9303, 1
  %v9306 = vor.u32 %v9301, %v9305
  %v9308 = vshrl.u32 %v9185, 16
  %v9310 = vshll.u32 %v9185, 16
  %v9312 = vrot.slane %v9310, 1
  %v9313 = vor.u32 %v9308, %v9312
  %v9315 = vshrl.u32 %v9186, 16
  %v9317 = vshll.u32 %v9186, 16
  %v9319 = vrot.slane %v9317, 1
  %v9320 = vor.u32 %v9315, %v9319
  %v9322 = vshrl.u32 %v9187, 16
  %v9324 = vshll.u32 %v9187, 16
  %v9326 = vrot.slane %v9324, 1
  %v9327 = vor.u32 %v9322, %v9326
  %v9329 = vshrl.u32 %v9188, 16
  %v9331 = vshll.u32 %v9188, 16
  %v9333 = vrot.slane %v9331, 1
  %v9334 = vor.u32 %v9329, %v9333
  %v9336 = vshrl.u32 %v9189, 16
  %v9338 = vshll.u32 %v9189, 16
  %v9340 = vrot.slane %v9338, 1
  %v9341 = vor.u32 %v9336, %v9340
  %v9343 = vshrl.u32 %v9190, 16
  %v9345 = vshll.u32 %v9190, 16
  %v9347 = vrot.slane %v9345, 1
  %v9348 = vor.u32 %v9343, %v9347
  %v9350 = vshrl.u32 %v9191, 16
  %v9352 = vshll.u32 %v9191, 16
  %v9354 = vrot.slane %v9352, 1
  %v9355 = vor.u32 %v9350, %v9354
  %v9357 = vshrl.u32 %v9192, 16
  %v9359 = vshll.u32 %v9192, 16
  %v9361 = vrot.slane %v9359, 1
  %v9362 = vor.u32 %v9357, %v9361
  %v9364 = vshrl.u32 %v9193, 16
  %v9366 = vshll.u32 %v9193, 16
  %v9368 = vrot.slane %v9366, 1
  %v9369 = vor.u32 %v9364, %v9368
  %v9371 = vshrl.u32 %v9194, 16
  %v9373 = vshll.u32 %v9194, 16
  %v9375 = vrot.slane %v9373, 1
  %v9376 = vor.u32 %v9371, %v9375
  %v9378 = vshrl.u32 %v9195, 16
  %v9380 = vshll.u32 %v9195, 16
  %v9382 = vrot.slane %v9380, 1
  %v9383 = vor.u32 %v9378, %v9382
  %v9385 = vshrl.u32 %v9196, 16
  %v9387 = vshll.u32 %v9196, 16
  %v9389 = vrot.slane %v9387, 1
  %v9390 = vor.u32 %v9385, %v9389
  %v9392 = vshrl.u32 %v9197, 16
  %v9394 = vshll.u32 %v9197, 16
  %v9396 = vrot.slane %v9394, 1
  %v9397 = vor.u32 %v9392, %v9396
  %v9399 = vshrl.u32 %v9198, 16
  %v9401 = vshll.u32 %v9198, 16
  %v9403 = vrot.slane %v9401, 1
  %v9404 = vor.u32 %v9399, %v9403
  %v9406 = vshrl.u32 %v9199, 16
  %v9408 = vshll.u32 %v9199, 16
  %v9410 = vrot.slane %v9408, 1
  %v9411 = vor.u32 %v9406, %v9410
  %v9413 = vshrl.u32 %v9200, 16
  %v9415 = vshll.u32 %v9200, 16
  %v9417 = vrot.slane %v9415, 1
  %v9418 = vor.u32 %v9413, %v9417
  %v9420 = vshrl.u32 %v9201, 16
  %v9422 = vshll.u32 %v9201, 16
  %v9424 = vrot.slane %v9422, 1
  %v9425 = vor.u32 %v9420, %v9424
  %9426 = vrot.lane.b32.xlu0 %v9208, 32
  %v9427 = vpop.permute.xlu0 %9426
  %9428 = vrot.lane.b32.xlu0 %v9215, 32
  %v9429 = vpop.permute.xlu0 %9428
  %9430 = vrot.lane.b32.xlu0 %v9222, 32
  %v9431 = vpop.permute.xlu0 %9430
  %9432 = vrot.lane.b32.xlu0 %v9229, 32
  %v9433 = vpop.permute.xlu0 %9432
  %9434 = vrot.lane.b32.xlu0 %v9236, 32
  %v9435 = vpop.permute.xlu0 %9434
  %9436 = vrot.lane.b32.xlu0 %v9243, 32
  %v9437 = vpop.permute.xlu0 %9436
  %9438 = vrot.lane.b32.xlu0 %v9250, 32
  %v9439 = vpop.permute.xlu0 %9438
  %9440 = vrot.lane.b32.xlu0 %v9257, 32
  %v9441 = vpop.permute.xlu0 %9440
  %9442 = vrot.lane.b32.xlu0 %v9264, 32
  %v9443 = vpop.permute.xlu0 %9442
  %9444 = vrot.lane.b32.xlu0 %v9271, 32
  %v9445 = vpop.permute.xlu0 %9444
  %9446 = vrot.lane.b32.xlu0 %v9278, 32
  %v9447 = vpop.permute.xlu0 %9446
  %9448 = vrot.lane.b32.xlu0 %v9285, 32
  %v9449 = vpop.permute.xlu0 %9448
  %9450 = vrot.lane.b32.xlu0 %v9292, 32
  %v9451 = vpop.permute.xlu0 %9450
  %9452 = vrot.lane.b32.xlu0 %v9299, 32
  %v9453 = vpop.permute.xlu0 %9452
  %9454 = vrot.lane.b32.xlu0 %v9306, 32
  %v9455 = vpop.permute.xlu0 %9454
  %9456 = vrot.lane.b32.xlu0 %v9313, 32
  %v9457 = vpop.permute.xlu0 %9456
  %9458 = vrot.lane.b32.xlu0 %v9320, 32
  %v9459 = vpop.permute.xlu0 %9458
  %9460 = vrot.lane.b32.xlu0 %v9327, 32
  %v9461 = vpop.permute.xlu0 %9460
  %9462 = vrot.lane.b32.xlu0 %v9334, 32
  %v9463 = vpop.permute.xlu0 %9462
  %9464 = vrot.lane.b32.xlu0 %v9341, 32
  %v9465 = vpop.permute.xlu0 %9464
  %9466 = vrot.lane.b32.xlu0 %v9348, 32
  %v9467 = vpop.permute.xlu0 %9466
  %9468 = vrot.lane.b32.xlu0 %v9355, 32
  %v9469 = vpop.permute.xlu0 %9468
  %9470 = vrot.lane.b32.xlu0 %v9362, 32
  %v9471 = vpop.permute.xlu0 %9470
  %9472 = vrot.lane.b32.xlu0 %v9369, 32
  %v9473 = vpop.permute.xlu0 %9472
  %9474 = vrot.lane.b32.xlu0 %v9376, 32
  %v9475 = vpop.permute.xlu0 %9474
  %9476 = vrot.lane.b32.xlu0 %v9383, 32
  %v9477 = vpop.permute.xlu0 %9476
  %9478 = vrot.lane.b32.xlu0 %v9390, 32
  %v9479 = vpop.permute.xlu0 %9478
  %9480 = vrot.lane.b32.xlu0 %v9397, 32
  %v9481 = vpop.permute.xlu0 %9480
  %9482 = vrot.lane.b32.xlu0 %v9404, 32
  %v9483 = vpop.permute.xlu0 %9482
  %9484 = vrot.lane.b32.xlu0 %v9411, 32
  %v9485 = vpop.permute.xlu0 %9484
  %9486 = vrot.lane.b32.xlu0 %v9418, 32
  %v9487 = vpop.permute.xlu0 %9486
  %9488 = vrot.lane.b32.xlu0 %v9425, 32
  %v9489 = vpop.permute.xlu0 %9488
  %vm9522 = vcmask 523520
  %vm9523 = vmand %vm9522, %vm1624
  %v9524 = vld [vmem:[#allocation3 + $0x8] sm:$0xff]
  %v9525 = vsel %vm9523, %v9427, %v9524
  %9526 = vst [vmem:[#allocation3 + $0x8] sm:$0xff] %v9525
  %v9527 = vld [vmem:[#allocation3 + $0x20] sm:$0xff]
  %v9528 = vsel %vm9523, %v9429, %v9527
  %9529 = vst [vmem:[#allocation3 + $0x20] sm:$0xff] %v9528
  %v9530 = vld [vmem:[#allocation3 + $0x38] sm:$0xff]
  %v9531 = vsel %vm9523, %v9431, %v9530
  %9532 = vst [vmem:[#allocation3 + $0x38] sm:$0xff] %v9531
  %v9533 = vld [vmem:[#allocation3 + $0x50] sm:$0xff]
  %v9534 = vsel %vm9523, %v9433, %v9533
  %9535 = vst [vmem:[#allocation3 + $0x50] sm:$0xff] %v9534
  %v9536 = vld [vmem:[#allocation3 + $0x68] sm:$0xff]
  %v9537 = vsel %vm9523, %v9435, %v9536
  %9538 = vst [vmem:[#allocation3 + $0x68] sm:$0xff] %v9537
  %v9539 = vld [vmem:[#allocation3 + $0x80] sm:$0xff]
  %v9540 = vsel %vm9523, %v9437, %v9539
  %9541 = vst [vmem:[#allocation3 + $0x80] sm:$0xff] %v9540
  %v9542 = vld [vmem:[#allocation3 + $0x98] sm:$0xff]
  %v9543 = vsel %vm9523, %v9439, %v9542
  %9544 = vst [vmem:[#allocation3 + $0x98] sm:$0xff] %v9543
  %v9545 = vld [vmem:[#allocation3 + $0xb0] sm:$0xff]
  %v9546 = vsel %vm9523, %v9441, %v9545
  %9547 = vst [vmem:[#allocation3 + $0xb0] sm:$0xff] %v9546
  %v9548 = vld [vmem:[#allocation3 + $0xc8] sm:$0xff]
  %v9549 = vsel %vm9523, %v9443, %v9548
  %9550 = vst [vmem:[#allocation3 + $0xc8] sm:$0xff] %v9549
  %v9551 = vld [vmem:[#allocation3 + $0xe0] sm:$0xff]
  %v9552 = vsel %vm9523, %v9445, %v9551
  %9553 = vst [vmem:[#allocation3 + $0xe0] sm:$0xff] %v9552
  %v9554 = vld [vmem:[#allocation3 + $0xf8] sm:$0xff]
  %v9555 = vsel %vm9523, %v9447, %v9554
  %9556 = vst [vmem:[#allocation3 + $0xf8] sm:$0xff] %v9555
  %v9557 = vld [vmem:[#allocation3 + $0x110] sm:$0xff]
  %v9558 = vsel %vm9523, %v9449, %v9557
  %9559 = vst [vmem:[#allocation3 + $0x110] sm:$0xff] %v9558
  %v9560 = vld [vmem:[#allocation3 + $0x128] sm:$0xff]
  %v9561 = vsel %vm9523, %v9451, %v9560
  %9562 = vst [vmem:[#allocation3 + $0x128] sm:$0xff] %v9561
  %v9563 = vld [vmem:[#allocation3 + $0x140] sm:$0xff]
  %v9564 = vsel %vm9523, %v9453, %v9563
  %9565 = vst [vmem:[#allocation3 + $0x140] sm:$0xff] %v9564
  %v9566 = vld [vmem:[#allocation3 + $0x158] sm:$0xff]
  %v9567 = vsel %vm9523, %v9455, %v9566
  %9568 = vst [vmem:[#allocation3 + $0x158] sm:$0xff] %v9567
  %v9569 = vld [vmem:[#allocation3 + $0x170] sm:$0xff]
  %v9570 = vsel %vm9523, %v9457, %v9569
  %9571 = vst [vmem:[#allocation3 + $0x170] sm:$0xff] %v9570
  %v9572 = vld [vmem:[#allocation3 + $0x188] sm:$0xff]
  %v9573 = vsel %vm9523, %v9459, %v9572
  %9574 = vst [vmem:[#allocation3 + $0x188] sm:$0xff] %v9573
  %v9575 = vld [vmem:[#allocation3 + $0x1a0] sm:$0xff]
  %v9576 = vsel %vm9523, %v9461, %v9575
  %9577 = vst [vmem:[#allocation3 + $0x1a0] sm:$0xff] %v9576
  %v9578 = vld [vmem:[#allocation3 + $0x1b8] sm:$0xff]
  %v9579 = vsel %vm9523, %v9463, %v9578
  %9580 = vst [vmem:[#allocation3 + $0x1b8] sm:$0xff] %v9579
  %v9581 = vld [vmem:[#allocation3 + $0x1d0] sm:$0xff]
  %v9582 = vsel %vm9523, %v9465, %v9581
  %9583 = vst [vmem:[#allocation3 + $0x1d0] sm:$0xff] %v9582
  %v9584 = vld [vmem:[#allocation3 + $0x1e8] sm:$0xff]
  %v9585 = vsel %vm9523, %v9467, %v9584
  %9586 = vst [vmem:[#allocation3 + $0x1e8] sm:$0xff] %v9585
  %v9587 = vld [vmem:[#allocation3 + $0x200] sm:$0xff]
  %v9588 = vsel %vm9523, %v9469, %v9587
  %9589 = vst [vmem:[#allocation3 + $0x200] sm:$0xff] %v9588
  %v9590 = vld [vmem:[#allocation3 + $0x218] sm:$0xff]
  %v9591 = vsel %vm9523, %v9471, %v9590
  %9592 = vst [vmem:[#allocation3 + $0x218] sm:$0xff] %v9591
  %v9593 = vld [vmem:[#allocation3 + $0x230] sm:$0xff]
  %v9594 = vsel %vm9523, %v9473, %v9593
  %9595 = vst [vmem:[#allocation3 + $0x230] sm:$0xff] %v9594
  %v9596 = vld [vmem:[#allocation3 + $0x248] sm:$0xff]
  %v9597 = vsel %vm9523, %v9475, %v9596
  %9598 = vst [vmem:[#allocation3 + $0x248] sm:$0xff] %v9597
  %v9599 = vld [vmem:[#allocation3 + $0x260] sm:$0xff]
  %v9600 = vsel %vm9523, %v9477, %v9599
  %9601 = vst [vmem:[#allocation3 + $0x260] sm:$0xff] %v9600
  %v9602 = vld [vmem:[#allocation3 + $0x278] sm:$0xff]
  %v9603 = vsel %vm9523, %v9479, %v9602
  %9604 = vst [vmem:[#allocation3 + $0x278] sm:$0xff] %v9603
  %v9605 = vld [vmem:[#allocation3 + $0x290] sm:$0xff]
  %v9606 = vsel %vm9523, %v9481, %v9605
  %9607 = vst [vmem:[#allocation3 + $0x290] sm:$0xff] %v9606
  %v9608 = vld [vmem:[#allocation3 + $0x2a8] sm:$0xff]
  %v9609 = vsel %vm9523, %v9483, %v9608
  %9610 = vst [vmem:[#allocation3 + $0x2a8] sm:$0xff] %v9609
  %v9611 = vld [vmem:[#allocation3 + $0x2c0] sm:$0xff]
  %v9612 = vsel %vm9523, %v9485, %v9611
  %9613 = vst [vmem:[#allocation3 + $0x2c0] sm:$0xff] %v9612
  %v9614 = vld [vmem:[#allocation3 + $0x2d8] sm:$0xff]
  %v9615 = vsel %vm9523, %v9487, %v9614
  %9616 = vst [vmem:[#allocation3 + $0x2d8] sm:$0xff] %v9615
  %v9617 = vld [vmem:[#allocation3 + $0x2f0] sm:$0xff]
  %v9618 = vsel %vm9523, %v9489, %v9617
  %9619 = vst [vmem:[#allocation3 + $0x2f0] sm:$0xff] %v9618
  %s9620 = scalar_lea.vmem [#allocation3], 360
  %9621 = vst.msk [vmem:[%s9620 + $0x8] sm:$0xff] %vm7934, %v7932
  %9622 = vst.msk [vmem:[%s9620 + $0x188] sm:$0xff] %vm7934, %v7932
  %vm9623 = vcmask 778752
  %vm9624 = vmand %vm9623, %vm36
  %v9625 = vld [vmem:[#allocation3 + $0x8] sm:$0x1]
  %v9626 = vsel %vm9624, %v7932, %v9625
  %9627 = vst [vmem:[#allocation3 + $0x8] sm:$0x1] %v9626
  %v9628 = vld [vmem:[#allocation3 + $0x20] sm:$0x1]
  %v9629 = vsel %vm9624, %v7932, %v9628
  %9630 = vst [vmem:[#allocation3 + $0x20] sm:$0x1] %v9629
  %v9631 = vld [vmem:[#allocation3 + $0x38] sm:$0x1]
  %v9632 = vsel %vm9624, %v7932, %v9631
  %9633 = vst [vmem:[#allocation3 + $0x38] sm:$0x1] %v9632
  %v9634 = vld [vmem:[#allocation3 + $0x50] sm:$0x1]
  %v9635 = vsel %vm9624, %v7932, %v9634
  %9636 = vst [vmem:[#allocation3 + $0x50] sm:$0x1] %v9635
  %v9637 = vld [vmem:[#allocation3 + $0x68] sm:$0x1]
  %v9638 = vsel %vm9624, %v7932, %v9637
  %9639 = vst [vmem:[#allocation3 + $0x68] sm:$0x1] %v9638
  %v9640 = vld [vmem:[#allocation3 + $0x80] sm:$0x1]
  %v9641 = vsel %vm9624, %v7932, %v9640
  %9642 = vst [vmem:[#allocation3 + $0x80] sm:$0x1] %v9641
  %v9643 = vld [vmem:[#allocation3 + $0x98] sm:$0x1]
  %v9644 = vsel %vm9624, %v7932, %v9643
  %9645 = vst [vmem:[#allocation3 + $0x98] sm:$0x1] %v9644
  %v9646 = vld [vmem:[#allocation3 + $0xb0] sm:$0x1]
  %v9647 = vsel %vm9624, %v7932, %v9646
  %9648 = vst [vmem:[#allocation3 + $0xb0] sm:$0x1] %v9647
  %v9649 = vld [vmem:[#allocation3 + $0xc8] sm:$0x1]
  %v9650 = vsel %vm9624, %v7932, %v9649
  %9651 = vst [vmem:[#allocation3 + $0xc8] sm:$0x1] %v9650
  %v9652 = vld [vmem:[#allocation3 + $0xe0] sm:$0x1]
  %v9653 = vsel %vm9624, %v7932, %v9652
  %9654 = vst [vmem:[#allocation3 + $0xe0] sm:$0x1] %v9653
  %v9655 = vld [vmem:[#allocation3 + $0xf8] sm:$0x1]
  %v9656 = vsel %vm9624, %v7932, %v9655
  %9657 = vst [vmem:[#allocation3 + $0xf8] sm:$0x1] %v9656
  %v9658 = vld [vmem:[#allocation3 + $0x110] sm:$0x1]
  %v9659 = vsel %vm9624, %v7932, %v9658
  %9660 = vst [vmem:[#allocation3 + $0x110] sm:$0x1] %v9659
  %v9661 = vld [vmem:[#allocation3 + $0x128] sm:$0x1]
  %v9662 = vsel %vm9624, %v7932, %v9661
  %9663 = vst [vmem:[#allocation3 + $0x128] sm:$0x1] %v9662
  %v9664 = vld [vmem:[#allocation3 + $0x140] sm:$0x1]
  %v9665 = vsel %vm9624, %v7932, %v9664
  %9666 = vst [vmem:[#allocation3 + $0x140] sm:$0x1] %v9665
  %v9667 = vld [vmem:[#allocation3 + $0x158] sm:$0x1]
  %v9668 = vsel %vm9624, %v7932, %v9667
  %9669 = vst [vmem:[#allocation3 + $0x158] sm:$0x1] %v9668
  %v9670 = vld [vmem:[#allocation3 + $0x170] sm:$0x1]
  %v9671 = vsel %vm9624, %v7932, %v9670
  %9672 = vst [vmem:[#allocation3 + $0x170] sm:$0x1] %v9671
  %v9673 = vld [vmem:[#allocation3 + $0x188] sm:$0x1]
  %v9674 = vsel %vm9624, %v7932, %v9673
  %9675 = vst [vmem:[#allocation3 + $0x188] sm:$0x1] %v9674
  %v9676 = vld [vmem:[#allocation3 + $0x1a0] sm:$0x1]
  %v9677 = vsel %vm9624, %v7932, %v9676
  %9678 = vst [vmem:[#allocation3 + $0x1a0] sm:$0x1] %v9677
  %v9679 = vld [vmem:[#allocation3 + $0x1b8] sm:$0x1]
  %v9680 = vsel %vm9624, %v7932, %v9679
  %9681 = vst [vmem:[#allocation3 + $0x1b8] sm:$0x1] %v9680
  %v9682 = vld [vmem:[#allocation3 + $0x1d0] sm:$0x1]
  %v9683 = vsel %vm9624, %v7932, %v9682
  %9684 = vst [vmem:[#allocation3 + $0x1d0] sm:$0x1] %v9683
  %v9685 = vld [vmem:[#allocation3 + $0x1e8] sm:$0x1]
  %v9686 = vsel %vm9624, %v7932, %v9685
  %9687 = vst [vmem:[#allocation3 + $0x1e8] sm:$0x1] %v9686
  %v9688 = vld [vmem:[#allocation3 + $0x200] sm:$0x1]
  %v9689 = vsel %vm9624, %v7932, %v9688
  %9690 = vst [vmem:[#allocation3 + $0x200] sm:$0x1] %v9689
  %v9691 = vld [vmem:[#allocation3 + $0x218] sm:$0x1]
  %v9692 = vsel %vm9624, %v7932, %v9691
  %9693 = vst [vmem:[#allocation3 + $0x218] sm:$0x1] %v9692
  %v9694 = vld [vmem:[#allocation3 + $0x230] sm:$0x1]
  %v9695 = vsel %vm9624, %v7932, %v9694
  %9696 = vst [vmem:[#allocation3 + $0x230] sm:$0x1] %v9695
  %v9697 = vld [vmem:[#allocation3 + $0x248] sm:$0x1]
  %v9698 = vsel %vm9624, %v7932, %v9697
  %9699 = vst [vmem:[#allocation3 + $0x248] sm:$0x1] %v9698
  %v9700 = vld [vmem:[#allocation3 + $0x260] sm:$0x1]
  %v9701 = vsel %vm9624, %v7932, %v9700
  %9702 = vst [vmem:[#allocation3 + $0x260] sm:$0x1] %v9701
  %v9703 = vld [vmem:[#allocation3 + $0x278] sm:$0x1]
  %v9704 = vsel %vm9624, %v7932, %v9703
  %9705 = vst [vmem:[#allocation3 + $0x278] sm:$0x1] %v9704
  %v9706 = vld [vmem:[#allocation3 + $0x290] sm:$0x1]
  %v9707 = vsel %vm9624, %v7932, %v9706
  %9708 = vst [vmem:[#allocation3 + $0x290] sm:$0x1] %v9707
  %v9709 = vld [vmem:[#allocation3 + $0x2a8] sm:$0x1]
  %v9710 = vsel %vm9624, %v7932, %v9709
  %9711 = vst [vmem:[#allocation3 + $0x2a8] sm:$0x1] %v9710
  %v9712 = vld [vmem:[#allocation3 + $0x2c0] sm:$0x1]
  %v9713 = vsel %vm9624, %v7932, %v9712
  %9714 = vst [vmem:[#allocation3 + $0x2c0] sm:$0x1] %v9713
  %v9715 = vld [vmem:[#allocation3 + $0x2d8] sm:$0x1]
  %v9716 = vsel %vm9624, %v7932, %v9715
  %9717 = vst [vmem:[#allocation3 + $0x2d8] sm:$0x1] %v9716
  %v9718 = vld [vmem:[#allocation3 + $0x2f0] sm:$0x1]
  %v9719 = vsel %vm9624, %v7932, %v9718
  %9720 = vst [vmem:[#allocation3 + $0x2f0] sm:$0x1] %v9719
  %s9721 = scalar_lea.vmem [#allocation4], 8
  %v9722 = vld [vmem:[%s9721] sm:$0xff]
  %v9723 = vld [vmem:[%s9721 + $0x8] sm:$0xff]
  %v9724 = vld [vmem:[%s9721 + $0x10] sm:$0xff]
  %v9725 = vld [vmem:[%s9721 + $0x18] sm:$0xff]
  %v9726 = vld [vmem:[%s9721 + $0x20] sm:$0xff]
  %v9727 = vld [vmem:[%s9721 + $0x28] sm:$0xff]
  %v9728 = vld [vmem:[%s9721 + $0x30] sm:$0xff]
  %v9729 = vld [vmem:[%s9721 + $0x38] sm:$0xff]
  %v9730 = vld [vmem:[%s9721 + $0x40] sm:$0xff]
  %v9731 = vld [vmem:[%s9721 + $0x48] sm:$0xff]
  %v9732 = vld [vmem:[%s9721 + $0x50] sm:$0xff]
  %v9733 = vld [vmem:[%s9721 + $0x58] sm:$0xff]
  %v9734 = vld [vmem:[%s9721 + $0x60] sm:$0xff]
  %v9735 = vld [vmem:[%s9721 + $0x68] sm:$0xff]
  %v9736 = vld [vmem:[%s9721 + $0x70] sm:$0xff]
  %v9737 = vld [vmem:[%s9721 + $0x80] sm:$0xff]
  %v9738 = vld [vmem:[%s9721 + $0x88] sm:$0xff]
  %v9739 = vld [vmem:[%s9721 + $0x90] sm:$0xff]
  %v9740 = vld [vmem:[%s9721 + $0x98] sm:$0xff]
  %v9741 = vld [vmem:[%s9721 + $0xa0] sm:$0xff]
  %v9742 = vld [vmem:[%s9721 + $0xa8] sm:$0xff]
  %v9743 = vld [vmem:[%s9721 + $0xb0] sm:$0xff]
  %v9744 = vld [vmem:[%s9721 + $0xb8] sm:$0xff]
  %v9745 = vld [vmem:[%s9721 + $0xc0] sm:$0xff]
  %v9746 = vld [vmem:[%s9721 + $0xc8] sm:$0xff]
  %v9747 = vld [vmem:[%s9721 + $0xd0] sm:$0xff]
  %v9748 = vld [vmem:[%s9721 + $0xd8] sm:$0xff]
  %v9749 = vld [vmem:[%s9721 + $0xe0] sm:$0xff]
  %v9750 = vld [vmem:[%s9721 + $0xe8] sm:$0xff]
  %v9751 = vld [vmem:[%s9721 + $0xf0] sm:$0xff]
  %v9753 = vshrl.u32 %v9722, 16
  %v9755 = vrot.slane %v9753, 7
  %v9756 = vshll.u32 %v9722, 16
  %v9758 = vor.u32 %v9755, %v9756
  %v9760 = vshrl.u32 %v9723, 16
  %v9762 = vrot.slane %v9760, 7
  %v9763 = vshll.u32 %v9723, 16
  %v9765 = vor.u32 %v9762, %v9763
  %v9767 = vshrl.u32 %v9724, 16
  %v9769 = vrot.slane %v9767, 7
  %v9770 = vshll.u32 %v9724, 16
  %v9772 = vor.u32 %v9769, %v9770
  %v9774 = vshrl.u32 %v9725, 16
  %v9776 = vrot.slane %v9774, 7
  %v9777 = vshll.u32 %v9725, 16
  %v9779 = vor.u32 %v9776, %v9777
  %v9781 = vshrl.u32 %v9726, 16
  %v9783 = vrot.slane %v9781, 7
  %v9784 = vshll.u32 %v9726, 16
  %v9786 = vor.u32 %v9783, %v9784
  %v9788 = vshrl.u32 %v9727, 16
  %v9790 = vrot.slane %v9788, 7
  %v9791 = vshll.u32 %v9727, 16
  %v9793 = vor.u32 %v9790, %v9791
  %v9795 = vshrl.u32 %v9728, 16
  %v9797 = vrot.slane %v9795, 7
  %v9798 = vshll.u32 %v9728, 16
  %v9800 = vor.u32 %v9797, %v9798
  %v9802 = vshrl.u32 %v9729, 16
  %v9804 = vrot.slane %v9802, 7
  %v9805 = vshll.u32 %v9729, 16
  %v9807 = vor.u32 %v9804, %v9805
  %v9809 = vshrl.u32 %v9730, 16
  %v9811 = vrot.slane %v9809, 7
  %v9812 = vshll.u32 %v9730, 16
  %v9814 = vor.u32 %v9811, %v9812
  %v9816 = vshrl.u32 %v9731, 16
  %v9818 = vrot.slane %v9816, 7
  %v9819 = vshll.u32 %v9731, 16
  %v9821 = vor.u32 %v9818, %v9819
  %v9823 = vshrl.u32 %v9732, 16
  %v9825 = vrot.slane %v9823, 7
  %v9826 = vshll.u32 %v9732, 16
  %v9828 = vor.u32 %v9825, %v9826
  %v9830 = vshrl.u32 %v9733, 16
  %v9832 = vrot.slane %v9830, 7
  %v9833 = vshll.u32 %v9733, 16
  %v9835 = vor.u32 %v9832, %v9833
  %v9837 = vshrl.u32 %v9734, 16
  %v9839 = vrot.slane %v9837, 7
  %v9840 = vshll.u32 %v9734, 16
  %v9842 = vor.u32 %v9839, %v9840
  %v9844 = vshrl.u32 %v9735, 16
  %v9846 = vrot.slane %v9844, 7
  %v9847 = vshll.u32 %v9735, 16
  %v9849 = vor.u32 %v9846, %v9847
  %v9851 = vshrl.u32 %v9736, 16
  %v9853 = vrot.slane %v9851, 7
  %v9854 = vshll.u32 %v9736, 16
  %v9856 = vor.u32 %v9853, %v9854
  %v9858 = vshrl.u32 %v9737, 16
  %v9860 = vrot.slane %v9858, 7
  %v9861 = vshll.u32 %v9737, 16
  %v9863 = vor.u32 %v9860, %v9861
  %v9865 = vshrl.u32 %v9738, 16
  %v9867 = vrot.slane %v9865, 7
  %v9868 = vshll.u32 %v9738, 16
  %v9870 = vor.u32 %v9867, %v9868
  %v9872 = vshrl.u32 %v9739, 16
  %v9874 = vrot.slane %v9872, 7
  %v9875 = vshll.u32 %v9739, 16
  %v9877 = vor.u32 %v9874, %v9875
  %v9879 = vshrl.u32 %v9740, 16
  %v9881 = vrot.slane %v9879, 7
  %v9882 = vshll.u32 %v9740, 16
  %v9884 = vor.u32 %v9881, %v9882
  %v9886 = vshrl.u32 %v9741, 16
  %v9888 = vrot.slane %v9886, 7
  %v9889 = vshll.u32 %v9741, 16
  %v9891 = vor.u32 %v9888, %v9889
  %v9893 = vshrl.u32 %v9742, 16
  %v9895 = vrot.slane %v9893, 7
  %v9896 = vshll.u32 %v9742, 16
  %v9898 = vor.u32 %v9895, %v9896
  %v9900 = vshrl.u32 %v9743, 16
  %v9902 = vrot.slane %v9900, 7
  %v9903 = vshll.u32 %v9743, 16
  %v9905 = vor.u32 %v9902, %v9903
  %v9907 = vshrl.u32 %v9744, 16
  %v9909 = vrot.slane %v9907, 7
  %v9910 = vshll.u32 %v9744, 16
  %v9912 = vor.u32 %v9909, %v9910
  %v9914 = vshrl.u32 %v9745, 16
  %v9916 = vrot.slane %v9914, 7
  %v9917 = vshll.u32 %v9745, 16
  %v9919 = vor.u32 %v9916, %v9917
  %v9921 = vshrl.u32 %v9746, 16
  %v9923 = vrot.slane %v9921, 7
  %v9924 = vshll.u32 %v9746, 16
  %v9926 = vor.u32 %v9923, %v9924
  %v9928 = vshrl.u32 %v9747, 16
  %v9930 = vrot.slane %v9928, 7
  %v9931 = vshll.u32 %v9747, 16
  %v9933 = vor.u32 %v9930, %v9931
  %v9935 = vshrl.u32 %v9748, 16
  %v9937 = vrot.slane %v9935, 7
  %v9938 = vshll.u32 %v9748, 16
  %v9940 = vor.u32 %v9937, %v9938
  %v9942 = vshrl.u32 %v9749, 16
  %v9944 = vrot.slane %v9942, 7
  %v9945 = vshll.u32 %v9749, 16
  %v9947 = vor.u32 %v9944, %v9945
  %v9949 = vshrl.u32 %v9750, 16
  %v9951 = vrot.slane %v9949, 7
  %v9952 = vshll.u32 %v9750, 16
  %v9954 = vor.u32 %v9951, %v9952
  %v9956 = vshrl.u32 %v9751, 16
  %v9958 = vrot.slane %v9956, 7
  %v9959 = vshll.u32 %v9751, 16
  %v9961 = vor.u32 %v9958, %v9959
  %9962 = vrot.lane.b32.xlu0 %v9758, 64
  %v9963 = vpop.permute.xlu0 %9962
  %9964 = vrot.lane.b32.xlu0 %v9765, 64
  %v9965 = vpop.permute.xlu0 %9964
  %9966 = vrot.lane.b32.xlu0 %v9772, 64
  %v9967 = vpop.permute.xlu0 %9966
  %9968 = vrot.lane.b32.xlu0 %v9779, 64
  %v9969 = vpop.permute.xlu0 %9968
  %9970 = vrot.lane.b32.xlu0 %v9786, 64
  %v9971 = vpop.permute.xlu0 %9970
  %9972 = vrot.lane.b32.xlu0 %v9793, 64
  %v9973 = vpop.permute.xlu0 %9972
  %9974 = vrot.lane.b32.xlu0 %v9800, 64
  %v9975 = vpop.permute.xlu0 %9974
  %9976 = vrot.lane.b32.xlu0 %v9807, 64
  %v9977 = vpop.permute.xlu0 %9976
  %9978 = vrot.lane.b32.xlu0 %v9814, 64
  %v9979 = vpop.permute.xlu0 %9978
  %9980 = vrot.lane.b32.xlu0 %v9821, 64
  %v9981 = vpop.permute.xlu0 %9980
  %9982 = vrot.lane.b32.xlu0 %v9828, 64
  %v9983 = vpop.permute.xlu0 %9982
  %9984 = vrot.lane.b32.xlu0 %v9835, 64
  %v9985 = vpop.permute.xlu0 %9984
  %9986 = vrot.lane.b32.xlu0 %v9842, 64
  %v9987 = vpop.permute.xlu0 %9986
  %9988 = vrot.lane.b32.xlu0 %v9849, 64
  %v9989 = vpop.permute.xlu0 %9988
  %9990 = vrot.lane.b32.xlu0 %v9856, 64
  %v9991 = vpop.permute.xlu0 %9990
  %9992 = vrot.lane.b32.xlu0 %v9863, 64
  %v9993 = vpop.permute.xlu0 %9992
  %9994 = vrot.lane.b32.xlu0 %v9870, 64
  %v9995 = vpop.permute.xlu0 %9994
  %9996 = vrot.lane.b32.xlu0 %v9877, 64
  %v9997 = vpop.permute.xlu0 %9996
  %9998 = vrot.lane.b32.xlu0 %v9884, 64
  %v9999 = vpop.permute.xlu0 %9998
  %10000 = vrot.lane.b32.xlu0 %v9891, 64
  %v10001 = vpop.permute.xlu0 %10000
  %10002 = vrot.lane.b32.xlu0 %v9898, 64
  %v10003 = vpop.permute.xlu0 %10002
  %10004 = vrot.lane.b32.xlu0 %v9905, 64
  %v10005 = vpop.permute.xlu0 %10004
  %10006 = vrot.lane.b32.xlu0 %v9912, 64
  %v10007 = vpop.permute.xlu0 %10006
  %10008 = vrot.lane.b32.xlu0 %v9919, 64
  %v10009 = vpop.permute.xlu0 %10008
  %10010 = vrot.lane.b32.xlu0 %v9926, 64
  %v10011 = vpop.permute.xlu0 %10010
  %10012 = vrot.lane.b32.xlu0 %v9933, 64
  %v10013 = vpop.permute.xlu0 %10012
  %10014 = vrot.lane.b32.xlu0 %v9940, 64
  %v10015 = vpop.permute.xlu0 %10014
  %10016 = vrot.lane.b32.xlu0 %v9947, 64
  %v10017 = vpop.permute.xlu0 %10016
  %10018 = vrot.lane.b32.xlu0 %v9954, 64
  %v10019 = vpop.permute.xlu0 %10018
  %10020 = vrot.lane.b32.xlu0 %v9961, 64
  %v10021 = vpop.permute.xlu0 %10020
  %vm10052 = vmand %vm8365, %vm586
  %v10053 = vld [vmem:[#allocation3 + $0x8] sm:$0xff]
  %v10054 = vsel %vm10052, %v9963, %v10053
  %10055 = vst [vmem:[#allocation3 + $0x8] sm:$0xff] %v10054
  %v10056 = vld [vmem:[#allocation3 + $0x20] sm:$0xff]
  %v10057 = vsel %vm10052, %v9965, %v10056
  %10058 = vst [vmem:[#allocation3 + $0x20] sm:$0xff] %v10057
  %v10059 = vld [vmem:[#allocation3 + $0x38] sm:$0xff]
  %v10060 = vsel %vm10052, %v9967, %v10059
  %10061 = vst [vmem:[#allocation3 + $0x38] sm:$0xff] %v10060
  %v10062 = vld [vmem:[#allocation3 + $0x50] sm:$0xff]
  %v10063 = vsel %vm10052, %v9969, %v10062
  %10064 = vst [vmem:[#allocation3 + $0x50] sm:$0xff] %v10063
  %v10065 = vld [vmem:[#allocation3 + $0x68] sm:$0xff]
  %v10066 = vsel %vm10052, %v9971, %v10065
  %10067 = vst [vmem:[#allocation3 + $0x68] sm:$0xff] %v10066
  %v10068 = vld [vmem:[#allocation3 + $0x80] sm:$0xff]
  %v10069 = vsel %vm10052, %v9973, %v10068
  %10070 = vst [vmem:[#allocation3 + $0x80] sm:$0xff] %v10069
  %v10071 = vld [vmem:[#allocation3 + $0x98] sm:$0xff]
  %v10072 = vsel %vm10052, %v9975, %v10071
  %10073 = vst [vmem:[#allocation3 + $0x98] sm:$0xff] %v10072
  %v10074 = vld [vmem:[#allocation3 + $0xb0] sm:$0xff]
  %v10075 = vsel %vm10052, %v9977, %v10074
  %10076 = vst [vmem:[#allocation3 + $0xb0] sm:$0xff] %v10075
  %v10077 = vld [vmem:[#allocation3 + $0xc8] sm:$0xff]
  %v10078 = vsel %vm10052, %v9979, %v10077
  %10079 = vst [vmem:[#allocation3 + $0xc8] sm:$0xff] %v10078
  %v10080 = vld [vmem:[#allocation3 + $0xe0] sm:$0xff]
  %v10081 = vsel %vm10052, %v9981, %v10080
  %10082 = vst [vmem:[#allocation3 + $0xe0] sm:$0xff] %v10081
  %v10083 = vld [vmem:[#allocation3 + $0xf8] sm:$0xff]
  %v10084 = vsel %vm10052, %v9983, %v10083
  %10085 = vst [vmem:[#allocation3 + $0xf8] sm:$0xff] %v10084
  %v10086 = vld [vmem:[#allocation3 + $0x110] sm:$0xff]
  %v10087 = vsel %vm10052, %v9985, %v10086
  %10088 = vst [vmem:[#allocation3 + $0x110] sm:$0xff] %v10087
  %v10089 = vld [vmem:[#allocation3 + $0x128] sm:$0xff]
  %v10090 = vsel %vm10052, %v9987, %v10089
  %10091 = vst [vmem:[#allocation3 + $0x128] sm:$0xff] %v10090
  %v10092 = vld [vmem:[#allocation3 + $0x140] sm:$0xff]
  %v10093 = vsel %vm10052, %v9989, %v10092
  %10094 = vst [vmem:[#allocation3 + $0x140] sm:$0xff] %v10093
  %v10095 = vld [vmem:[#allocation3 + $0x158] sm:$0xff]
  %v10096 = vsel %vm10052, %v9991, %v10095
  %10097 = vst [vmem:[#allocation3 + $0x158] sm:$0xff] %v10096
  %v10098 = vld [vmem:[#allocation3 + $0x188] sm:$0xff]
  %v10099 = vsel %vm10052, %v9993, %v10098
  %10100 = vst [vmem:[#allocation3 + $0x188] sm:$0xff] %v10099
  %v10101 = vld [vmem:[#allocation3 + $0x1a0] sm:$0xff]
  %v10102 = vsel %vm10052, %v9995, %v10101
  %10103 = vst [vmem:[#allocation3 + $0x1a0] sm:$0xff] %v10102
  %v10104 = vld [vmem:[#allocation3 + $0x1b8] sm:$0xff]
  %v10105 = vsel %vm10052, %v9997, %v10104
  %10106 = vst [vmem:[#allocation3 + $0x1b8] sm:$0xff] %v10105
  %v10107 = vld [vmem:[#allocation3 + $0x1d0] sm:$0xff]
  %v10108 = vsel %vm10052, %v9999, %v10107
  %10109 = vst [vmem:[#allocation3 + $0x1d0] sm:$0xff] %v10108
  %v10110 = vld [vmem:[#allocation3 + $0x1e8] sm:$0xff]
  %v10111 = vsel %vm10052, %v10001, %v10110
  %10112 = vst [vmem:[#allocation3 + $0x1e8] sm:$0xff] %v10111
  %v10113 = vld [vmem:[#allocation3 + $0x200] sm:$0xff]
  %v10114 = vsel %vm10052, %v10003, %v10113
  %10115 = vst [vmem:[#allocation3 + $0x200] sm:$0xff] %v10114
  %v10116 = vld [vmem:[#allocation3 + $0x218] sm:$0xff]
  %v10117 = vsel %vm10052, %v10005, %v10116
  %10118 = vst [vmem:[#allocation3 + $0x218] sm:$0xff] %v10117
  %v10119 = vld [vmem:[#allocation3 + $0x230] sm:$0xff]
  %v10120 = vsel %vm10052, %v10007, %v10119
  %10121 = vst [vmem:[#allocation3 + $0x230] sm:$0xff] %v10120
  %v10122 = vld [vmem:[#allocation3 + $0x248] sm:$0xff]
  %v10123 = vsel %vm10052, %v10009, %v10122
  %10124 = vst [vmem:[#allocation3 + $0x248] sm:$0xff] %v10123
  %v10125 = vld [vmem:[#allocation3 + $0x260] sm:$0xff]
  %v10126 = vsel %vm10052, %v10011, %v10125
  %10127 = vst [vmem:[#allocation3 + $0x260] sm:$0xff] %v10126
  %v10128 = vld [vmem:[#allocation3 + $0x278] sm:$0xff]
  %v10129 = vsel %vm10052, %v10013, %v10128
  %10130 = vst [vmem:[#allocation3 + $0x278] sm:$0xff] %v10129
  %v10131 = vld [vmem:[#allocation3 + $0x290] sm:$0xff]
  %v10132 = vsel %vm10052, %v10015, %v10131
  %10133 = vst [vmem:[#allocation3 + $0x290] sm:$0xff] %v10132
  %v10134 = vld [vmem:[#allocation3 + $0x2a8] sm:$0xff]
  %v10135 = vsel %vm10052, %v10017, %v10134
  %10136 = vst [vmem:[#allocation3 + $0x2a8] sm:$0xff] %v10135
  %v10137 = vld [vmem:[#allocation3 + $0x2c0] sm:$0xff]
  %v10138 = vsel %vm10052, %v10019, %v10137
  %10139 = vst [vmem:[#allocation3 + $0x2c0] sm:$0xff] %v10138
  %v10140 = vld [vmem:[#allocation3 + $0x2d8] sm:$0xff]
  %v10141 = vsel %vm10052, %v10021, %v10140
  %10142 = vst [vmem:[#allocation3 + $0x2d8] sm:$0xff] %v10141
  %vm10143 = vcmask 1048320
  %10144 = vst.msk [vmem:[%s9620 + $0x8] sm:$0xff] %vm10143, %v8458
  %10145 = vst.msk [vmem:[%s9620 + $0x188] sm:$0xff] %vm10143, %v8458
  %v10146 = vld [vmem:[%s9721] sm:$0xff]
  %v10147 = vld [vmem:[%s9721 + $0x8] sm:$0xff]
  %v10148 = vld [vmem:[%s9721 + $0x10] sm:$0xff]
  %v10149 = vld [vmem:[%s9721 + $0x18] sm:$0xff]
  %v10150 = vld [vmem:[%s9721 + $0x20] sm:$0xff]
  %v10151 = vld [vmem:[%s9721 + $0x28] sm:$0xff]
  %v10152 = vld [vmem:[%s9721 + $0x30] sm:$0xff]
  %v10153 = vld [vmem:[%s9721 + $0x38] sm:$0xff]
  %v10154 = vld [vmem:[%s9721 + $0x40] sm:$0xff]
  %v10155 = vld [vmem:[%s9721 + $0x48] sm:$0xff]
  %v10156 = vld [vmem:[%s9721 + $0x50] sm:$0xff]
  %v10157 = vld [vmem:[%s9721 + $0x58] sm:$0xff]
  %v10158 = vld [vmem:[%s9721 + $0x60] sm:$0xff]
  %v10159 = vld [vmem:[%s9721 + $0x68] sm:$0xff]
  %v10160 = vld [vmem:[%s9721 + $0x70] sm:$0xff]
  %v10161 = vld [vmem:[%s9721 + $0x80] sm:$0xff]
  %v10162 = vld [vmem:[%s9721 + $0x88] sm:$0xff]
  %v10163 = vld [vmem:[%s9721 + $0x90] sm:$0xff]
  %v10164 = vld [vmem:[%s9721 + $0x98] sm:$0xff]
  %v10165 = vld [vmem:[%s9721 + $0xa0] sm:$0xff]
  %v10166 = vld [vmem:[%s9721 + $0xa8] sm:$0xff]
  %v10167 = vld [vmem:[%s9721 + $0xb0] sm:$0xff]
  %v10168 = vld [vmem:[%s9721 + $0xb8] sm:$0xff]
  %v10169 = vld [vmem:[%s9721 + $0xc0] sm:$0xff]
  %v10170 = vld [vmem:[%s9721 + $0xc8] sm:$0xff]
  %v10171 = vld [vmem:[%s9721 + $0xd0] sm:$0xff]
  %v10172 = vld [vmem:[%s9721 + $0xd8] sm:$0xff]
  %v10173 = vld [vmem:[%s9721 + $0xe0] sm:$0xff]
  %v10174 = vld [vmem:[%s9721 + $0xe8] sm:$0xff]
  %v10175 = vld [vmem:[%s9721 + $0xf0] sm:$0xff]
  %10206 = vrot.lane.b32.xlu0 %v10146, 96
  %v10207 = vpop.permute.xlu0 %10206
  %10208 = vrot.lane.b32.xlu0 %v10147, 96
  %v10209 = vpop.permute.xlu0 %10208
  %10210 = vrot.lane.b32.xlu0 %v10148, 96
  %v10211 = vpop.permute.xlu0 %10210
  %10212 = vrot.lane.b32.xlu0 %v10149, 96
  %v10213 = vpop.permute.xlu0 %10212
  %10214 = vrot.lane.b32.xlu0 %v10150, 96
  %v10215 = vpop.permute.xlu0 %10214
  %10216 = vrot.lane.b32.xlu0 %v10151, 96
  %v10217 = vpop.permute.xlu0 %10216
  %10218 = vrot.lane.b32.xlu0 %v10152, 96
  %v10219 = vpop.permute.xlu0 %10218
  %10220 = vrot.lane.b32.xlu0 %v10153, 96
  %v10221 = vpop.permute.xlu0 %10220
  %10222 = vrot.lane.b32.xlu0 %v10154, 96
  %v10223 = vpop.permute.xlu0 %10222
  %10224 = vrot.lane.b32.xlu0 %v10155, 96
  %v10225 = vpop.permute.xlu0 %10224
  %10226 = vrot.lane.b32.xlu0 %v10156, 96
  %v10227 = vpop.permute.xlu0 %10226
  %10228 = vrot.lane.b32.xlu0 %v10157, 96
  %v10229 = vpop.permute.xlu0 %10228
  %10230 = vrot.lane.b32.xlu0 %v10158, 96
  %v10231 = vpop.permute.xlu0 %10230
  %10232 = vrot.lane.b32.xlu0 %v10159, 96
  %v10233 = vpop.permute.xlu0 %10232
  %10234 = vrot.lane.b32.xlu0 %v10160, 96
  %v10235 = vpop.permute.xlu0 %10234
  %10236 = vrot.lane.b32.xlu0 %v10161, 96
  %v10237 = vpop.permute.xlu0 %10236
  %10238 = vrot.lane.b32.xlu0 %v10162, 96
  %v10239 = vpop.permute.xlu0 %10238
  %10240 = vrot.lane.b32.xlu0 %v10163, 96
  %v10241 = vpop.permute.xlu0 %10240
  %10242 = vrot.lane.b32.xlu0 %v10164, 96
  %v10243 = vpop.permute.xlu0 %10242
  %10244 = vrot.lane.b32.xlu0 %v10165, 96
  %v10245 = vpop.permute.xlu0 %10244
  %10246 = vrot.lane.b32.xlu0 %v10166, 96
  %v10247 = vpop.permute.xlu0 %10246
  %10248 = vrot.lane.b32.xlu0 %v10167, 96
  %v10249 = vpop.permute.xlu0 %10248
  %10250 = vrot.lane.b32.xlu0 %v10168, 96
  %v10251 = vpop.permute.xlu0 %10250
  %10252 = vrot.lane.b32.xlu0 %v10169, 96
  %v10253 = vpop.permute.xlu0 %10252
  %10254 = vrot.lane.b32.xlu0 %v10170, 96
  %v10255 = vpop.permute.xlu0 %10254
  %10256 = vrot.lane.b32.xlu0 %v10171, 96
  %v10257 = vpop.permute.xlu0 %10256
  %10258 = vrot.lane.b32.xlu0 %v10172, 96
  %v10259 = vpop.permute.xlu0 %10258
  %10260 = vrot.lane.b32.xlu0 %v10173, 96
  %v10261 = vpop.permute.xlu0 %10260
  %10262 = vrot.lane.b32.xlu0 %v10174, 96
  %v10263 = vpop.permute.xlu0 %10262
  %10264 = vrot.lane.b32.xlu0 %v10175, 96
  %v10265 = vpop.permute.xlu0 %10264
  %10296 = vst.msk [vmem:[#allocation3 + $0x8] sm:$0xff] %vm10143, %v10207
  %10297 = vst.msk [vmem:[#allocation3 + $0x20] sm:$0xff] %vm10143, %v10209
  %10298 = vst.msk [vmem:[#allocation3 + $0x38] sm:$0xff] %vm10143, %v10211
  %10299 = vst.msk [vmem:[#allocation3 + $0x50] sm:$0xff] %vm10143, %v10213
  %10300 = vst.msk [vmem:[#allocation3 + $0x68] sm:$0xff] %vm10143, %v10215
  %10301 = vst.msk [vmem:[#allocation3 + $0x80] sm:$0xff] %vm10143, %v10217
  %10302 = vst.msk [vmem:[#allocation3 + $0x98] sm:$0xff] %vm10143, %v10219
  %10303 = vst.msk [vmem:[#allocation3 + $0xb0] sm:$0xff] %vm10143, %v10221
  %10304 = vst.msk [vmem:[#allocation3 + $0xc8] sm:$0xff] %vm10143, %v10223
  %10305 = vst.msk [vmem:[#allocation3 + $0xe0] sm:$0xff] %vm10143, %v10225
  %10306 = vst.msk [vmem:[#allocation3 + $0xf8] sm:$0xff] %vm10143, %v10227
  %10307 = vst.msk [vmem:[#allocation3 + $0x110] sm:$0xff] %vm10143, %v10229
  %10308 = vst.msk [vmem:[#allocation3 + $0x128] sm:$0xff] %vm10143, %v10231
  %10309 = vst.msk [vmem:[#allocation3 + $0x140] sm:$0xff] %vm10143, %v10233
  %10310 = vst.msk [vmem:[#allocation3 + $0x158] sm:$0xff] %vm10143, %v10235
  %10311 = vst.msk [vmem:[#allocation3 + $0x188] sm:$0xff] %vm10143, %v10237
  %10312 = vst.msk [vmem:[#allocation3 + $0x1a0] sm:$0xff] %vm10143, %v10239
  %10313 = vst.msk [vmem:[#allocation3 + $0x1b8] sm:$0xff] %vm10143, %v10241
  %10314 = vst.msk [vmem:[#allocation3 + $0x1d0] sm:$0xff] %vm10143, %v10243
  %10315 = vst.msk [vmem:[#allocation3 + $0x1e8] sm:$0xff] %vm10143, %v10245
  %10316 = vst.msk [vmem:[#allocation3 + $0x200] sm:$0xff] %vm10143, %v10247
  %10317 = vst.msk [vmem:[#allocation3 + $0x218] sm:$0xff] %vm10143, %v10249
  %10318 = vst.msk [vmem:[#allocation3 + $0x230] sm:$0xff] %vm10143, %v10251
  %10319 = vst.msk [vmem:[#allocation3 + $0x248] sm:$0xff] %vm10143, %v10253
  %10320 = vst.msk [vmem:[#allocation3 + $0x260] sm:$0xff] %vm10143, %v10255
  %10321 = vst.msk [vmem:[#allocation3 + $0x278] sm:$0xff] %vm10143, %v10257
  %10322 = vst.msk [vmem:[#allocation3 + $0x290] sm:$0xff] %vm10143, %v10259
  %10323 = vst.msk [vmem:[#allocation3 + $0x2a8] sm:$0xff] %vm10143, %v10261
  %10324 = vst.msk [vmem:[#allocation3 + $0x2c0] sm:$0xff] %vm10143, %v10263
  %10325 = vst.msk [vmem:[#allocation3 + $0x2d8] sm:$0xff] %vm10143, %v10265
  %10326 = vst.msk [vmem:[%s9620 + $0x10] sm:$0xff] %vm5724, %v7280
  %10327 = vst.msk [vmem:[%s9620 + $0x190] sm:$0xff] %vm5724, %v7280
  %vm10328 = vcmask 261127
  %vm10329 = vmand %vm10328, %vm1015
  %v10330 = vld [vmem:[#allocation3 + $0x10] sm:$0x80]
  %v10331 = vsel %vm10329, %v7280, %v10330
  %10332 = vst [vmem:[#allocation3 + $0x10] sm:$0x80] %v10331
  %v10333 = vld [vmem:[#allocation3 + $0x28] sm:$0x80]
  %v10334 = vsel %vm10329, %v7280, %v10333
  %10335 = vst [vmem:[#allocation3 + $0x28] sm:$0x80] %v10334
  %v10336 = vld [vmem:[#allocation3 + $0x40] sm:$0x80]
  %v10337 = vsel %vm10329, %v7280, %v10336
  %10338 = vst [vmem:[#allocation3 + $0x40] sm:$0x80] %v10337
  %v10339 = vld [vmem:[#allocation3 + $0x58] sm:$0x80]
  %v10340 = vsel %vm10329, %v7280, %v10339
  %10341 = vst [vmem:[#allocation3 + $0x58] sm:$0x80] %v10340
  %v10342 = vld [vmem:[#allocation3 + $0x70] sm:$0x80]
  %v10343 = vsel %vm10329, %v7280, %v10342
  %10344 = vst [vmem:[#allocation3 + $0x70] sm:$0x80] %v10343
  %v10345 = vld [vmem:[#allocation3 + $0x88] sm:$0x80]
  %v10346 = vsel %vm10329, %v7280, %v10345
  %10347 = vst [vmem:[#allocation3 + $0x88] sm:$0x80] %v10346
  %v10348 = vld [vmem:[#allocation3 + $0xa0] sm:$0x80]
  %v10349 = vsel %vm10329, %v7280, %v10348
  %10350 = vst [vmem:[#allocation3 + $0xa0] sm:$0x80] %v10349
  %v10351 = vld [vmem:[#allocation3 + $0xb8] sm:$0x80]
  %v10352 = vsel %vm10329, %v7280, %v10351
  %10353 = vst [vmem:[#allocation3 + $0xb8] sm:$0x80] %v10352
  %v10354 = vld [vmem:[#allocation3 + $0xd0] sm:$0x80]
  %v10355 = vsel %vm10329, %v7280, %v10354
  %10356 = vst [vmem:[#allocation3 + $0xd0] sm:$0x80] %v10355
  %v10357 = vld [vmem:[#allocation3 + $0xe8] sm:$0x80]
  %v10358 = vsel %vm10329, %v7280, %v10357
  %10359 = vst [vmem:[#allocation3 + $0xe8] sm:$0x80] %v10358
  %v10360 = vld [vmem:[#allocation3 + $0x100] sm:$0x80]
  %v10361 = vsel %vm10329, %v7280, %v10360
  %10362 = vst [vmem:[#allocation3 + $0x100] sm:$0x80] %v10361
  %v10363 = vld [vmem:[#allocation3 + $0x118] sm:$0x80]
  %v10364 = vsel %vm10329, %v7280, %v10363
  %10365 = vst [vmem:[#allocation3 + $0x118] sm:$0x80] %v10364
  %v10366 = vld [vmem:[#allocation3 + $0x130] sm:$0x80]
  %v10367 = vsel %vm10329, %v7280, %v10366
  %10368 = vst [vmem:[#allocation3 + $0x130] sm:$0x80] %v10367
  %v10369 = vld [vmem:[#allocation3 + $0x148] sm:$0x80]
  %v10370 = vsel %vm10329, %v7280, %v10369
  %10371 = vst [vmem:[#allocation3 + $0x148] sm:$0x80] %v10370
  %v10372 = vld [vmem:[#allocation3 + $0x160] sm:$0x80]
  %v10373 = vsel %vm10329, %v7280, %v10372
  %10374 = vst [vmem:[#allocation3 + $0x160] sm:$0x80] %v10373
  %v10375 = vld [vmem:[#allocation3 + $0x178] sm:$0x80]
  %v10376 = vsel %vm10329, %v7280, %v10375
  %10377 = vst [vmem:[#allocation3 + $0x178] sm:$0x80] %v10376
  %v10378 = vld [vmem:[#allocation3 + $0x190] sm:$0x80]
  %v10379 = vsel %vm10329, %v7280, %v10378
  %10380 = vst [vmem:[#allocation3 + $0x190] sm:$0x80] %v10379
  %v10381 = vld [vmem:[#allocation3 + $0x1a8] sm:$0x80]
  %v10382 = vsel %vm10329, %v7280, %v10381
  %10383 = vst [vmem:[#allocation3 + $0x1a8] sm:$0x80] %v10382
  %v10384 = vld [vmem:[#allocation3 + $0x1c0] sm:$0x80]
  %v10385 = vsel %vm10329, %v7280, %v10384
  %10386 = vst [vmem:[#allocation3 + $0x1c0] sm:$0x80] %v10385
  %v10387 = vld [vmem:[#allocation3 + $0x1d8] sm:$0x80]
  %v10388 = vsel %vm10329, %v7280, %v10387
  %10389 = vst [vmem:[#allocation3 + $0x1d8] sm:$0x80] %v10388
  %v10390 = vld [vmem:[#allocation3 + $0x1f0] sm:$0x80]
  %v10391 = vsel %vm10329, %v7280, %v10390
  %10392 = vst [vmem:[#allocation3 + $0x1f0] sm:$0x80] %v10391
  %v10393 = vld [vmem:[#allocation3 + $0x208] sm:$0x80]
  %v10394 = vsel %vm10329, %v7280, %v10393
  %10395 = vst [vmem:[#allocation3 + $0x208] sm:$0x80] %v10394
  %v10396 = vld [vmem:[#allocation3 + $0x220] sm:$0x80]
  %v10397 = vsel %vm10329, %v7280, %v10396
  %10398 = vst [vmem:[#allocation3 + $0x220] sm:$0x80] %v10397
  %v10399 = vld [vmem:[#allocation3 + $0x238] sm:$0x80]
  %v10400 = vsel %vm10329, %v7280, %v10399
  %10401 = vst [vmem:[#allocation3 + $0x238] sm:$0x80] %v10400
  %v10402 = vld [vmem:[#allocation3 + $0x250] sm:$0x80]
  %v10403 = vsel %vm10329, %v7280, %v10402
  %10404 = vst [vmem:[#allocation3 + $0x250] sm:$0x80] %v10403
  %v10405 = vld [vmem:[#allocation3 + $0x268] sm:$0x80]
  %v10406 = vsel %vm10329, %v7280, %v10405
  %10407 = vst [vmem:[#allocation3 + $0x268] sm:$0x80] %v10406
  %v10408 = vld [vmem:[#allocation3 + $0x280] sm:$0x80]
  %v10409 = vsel %vm10329, %v7280, %v10408
  %10410 = vst [vmem:[#allocation3 + $0x280] sm:$0x80] %v10409
  %v10411 = vld [vmem:[#allocation3 + $0x298] sm:$0x80]
  %v10412 = vsel %vm10329, %v7280, %v10411
  %10413 = vst [vmem:[#allocation3 + $0x298] sm:$0x80] %v10412
  %v10414 = vld [vmem:[#allocation3 + $0x2b0] sm:$0x80]
  %v10415 = vsel %vm10329, %v7280, %v10414
  %10416 = vst [vmem:[#allocation3 + $0x2b0] sm:$0x80] %v10415
  %v10417 = vld [vmem:[#allocation3 + $0x2c8] sm:$0x80]
  %v10418 = vsel %vm10329, %v7280, %v10417
  %10419 = vst [vmem:[#allocation3 + $0x2c8] sm:$0x80] %v10418
  %v10420 = vld [vmem:[#allocation3 + $0x2e0] sm:$0x80]
  %v10421 = vsel %vm10329, %v7280, %v10420
  %10422 = vst [vmem:[#allocation3 + $0x2e0] sm:$0x80] %v10421
  %v10423 = vld [vmem:[#allocation3 + $0x2f8] sm:$0x80]
  %v10424 = vsel %vm10329, %v7280, %v10423
  %10425 = vst [vmem:[#allocation3 + $0x2f8] sm:$0x80] %v10424
  %v10426 = vld [vmem:[%s9721] sm:$0xff]
  %v10427 = vld [vmem:[%s9721 + $0x8] sm:$0xff]
  %v10428 = vld [vmem:[%s9721 + $0x10] sm:$0xff]
  %v10429 = vld [vmem:[%s9721 + $0x18] sm:$0xff]
  %v10430 = vld [vmem:[%s9721 + $0x20] sm:$0xff]
  %v10431 = vld [vmem:[%s9721 + $0x28] sm:$0xff]
  %v10432 = vld [vmem:[%s9721 + $0x30] sm:$0xff]
  %v10433 = vld [vmem:[%s9721 + $0x38] sm:$0xff]
  %v10434 = vld [vmem:[%s9721 + $0x40] sm:$0xff]
  %v10435 = vld [vmem:[%s9721 + $0x48] sm:$0xff]
  %v10436 = vld [vmem:[%s9721 + $0x50] sm:$0xff]
  %v10437 = vld [vmem:[%s9721 + $0x58] sm:$0xff]
  %v10438 = vld [vmem:[%s9721 + $0x60] sm:$0xff]
  %v10439 = vld [vmem:[%s9721 + $0x68] sm:$0xff]
  %v10440 = vld [vmem:[%s9721 + $0x70] sm:$0xff]
  %v10441 = vld [vmem:[%s9721 + $0x80] sm:$0xff]
  %v10442 = vld [vmem:[%s9721 + $0x88] sm:$0xff]
  %v10443 = vld [vmem:[%s9721 + $0x90] sm:$0xff]
  %v10444 = vld [vmem:[%s9721 + $0x98] sm:$0xff]
  %v10445 = vld [vmem:[%s9721 + $0xa0] sm:$0xff]
  %v10446 = vld [vmem:[%s9721 + $0xa8] sm:$0xff]
  %v10447 = vld [vmem:[%s9721 + $0xb0] sm:$0xff]
  %v10448 = vld [vmem:[%s9721 + $0xb8] sm:$0xff]
  %v10449 = vld [vmem:[%s9721 + $0xc0] sm:$0xff]
  %v10450 = vld [vmem:[%s9721 + $0xc8] sm:$0xff]
  %v10451 = vld [vmem:[%s9721 + $0xd0] sm:$0xff]
  %v10452 = vld [vmem:[%s9721 + $0xd8] sm:$0xff]
  %v10453 = vld [vmem:[%s9721 + $0xe0] sm:$0xff]
  %v10454 = vld [vmem:[%s9721 + $0xe8] sm:$0xff]
  %v10455 = vld [vmem:[%s9721 + $0xf0] sm:$0xff]
  %v10457 = vshrl.u32 %v10426, 16
  %v10459 = vshll.u32 %v10426, 16
  %v10461 = vrot.slane %v10459, 1
  %v10462 = vor.u32 %v10457, %v10461
  %v10464 = vshrl.u32 %v10427, 16
  %v10466 = vshll.u32 %v10427, 16
  %v10468 = vrot.slane %v10466, 1
  %v10469 = vor.u32 %v10464, %v10468
  %v10471 = vshrl.u32 %v10428, 16
  %v10473 = vshll.u32 %v10428, 16
  %v10475 = vrot.slane %v10473, 1
  %v10476 = vor.u32 %v10471, %v10475
  %v10478 = vshrl.u32 %v10429, 16
  %v10480 = vshll.u32 %v10429, 16
  %v10482 = vrot.slane %v10480, 1
  %v10483 = vor.u32 %v10478, %v10482
  %v10485 = vshrl.u32 %v10430, 16
  %v10487 = vshll.u32 %v10430, 16
  %v10489 = vrot.slane %v10487, 1
  %v10490 = vor.u32 %v10485, %v10489
  %v10492 = vshrl.u32 %v10431, 16
  %v10494 = vshll.u32 %v10431, 16
  %v10496 = vrot.slane %v10494, 1
  %v10497 = vor.u32 %v10492, %v10496
  %v10499 = vshrl.u32 %v10432, 16
  %v10501 = vshll.u32 %v10432, 16
  %v10503 = vrot.slane %v10501, 1
  %v10504 = vor.u32 %v10499, %v10503
  %v10506 = vshrl.u32 %v10433, 16
  %v10508 = vshll.u32 %v10433, 16
  %v10510 = vrot.slane %v10508, 1
  %v10511 = vor.u32 %v10506, %v10510
  %v10513 = vshrl.u32 %v10434, 16
  %v10515 = vshll.u32 %v10434, 16
  %v10517 = vrot.slane %v10515, 1
  %v10518 = vor.u32 %v10513, %v10517
  %v10520 = vshrl.u32 %v10435, 16
  %v10522 = vshll.u32 %v10435, 16
  %v10524 = vrot.slane %v10522, 1
  %v10525 = vor.u32 %v10520, %v10524
  %v10527 = vshrl.u32 %v10436, 16
  %v10529 = vshll.u32 %v10436, 16
  %v10531 = vrot.slane %v10529, 1
  %v10532 = vor.u32 %v10527, %v10531
  %v10534 = vshrl.u32 %v10437, 16
  %v10536 = vshll.u32 %v10437, 16
  %v10538 = vrot.slane %v10536, 1
  %v10539 = vor.u32 %v10534, %v10538
  %v10541 = vshrl.u32 %v10438, 16
  %v10543 = vshll.u32 %v10438, 16
  %v10545 = vrot.slane %v10543, 1
  %v10546 = vor.u32 %v10541, %v10545
  %v10548 = vshrl.u32 %v10439, 16
  %v10550 = vshll.u32 %v10439, 16
  %v10552 = vrot.slane %v10550, 1
  %v10553 = vor.u32 %v10548, %v10552
  %v10555 = vshrl.u32 %v10440, 16
  %v10557 = vshll.u32 %v10440, 16
  %v10559 = vrot.slane %v10557, 1
  %v10560 = vor.u32 %v10555, %v10559
  %v10562 = vshrl.u32 %v10441, 16
  %v10564 = vshll.u32 %v10441, 16
  %v10566 = vrot.slane %v10564, 1
  %v10567 = vor.u32 %v10562, %v10566
  %v10569 = vshrl.u32 %v10442, 16
  %v10571 = vshll.u32 %v10442, 16
  %v10573 = vrot.slane %v10571, 1
  %v10574 = vor.u32 %v10569, %v10573
  %v10576 = vshrl.u32 %v10443, 16
  %v10578 = vshll.u32 %v10443, 16
  %v10580 = vrot.slane %v10578, 1
  %v10581 = vor.u32 %v10576, %v10580
  %v10583 = vshrl.u32 %v10444, 16
  %v10585 = vshll.u32 %v10444, 16
  %v10587 = vrot.slane %v10585, 1
  %v10588 = vor.u32 %v10583, %v10587
  %v10590 = vshrl.u32 %v10445, 16
  %v10592 = vshll.u32 %v10445, 16
  %v10594 = vrot.slane %v10592, 1
  %v10595 = vor.u32 %v10590, %v10594
  %v10597 = vshrl.u32 %v10446, 16
  %v10599 = vshll.u32 %v10446, 16
  %v10601 = vrot.slane %v10599, 1
  %v10602 = vor.u32 %v10597, %v10601
  %v10604 = vshrl.u32 %v10447, 16
  %v10606 = vshll.u32 %v10447, 16
  %v10608 = vrot.slane %v10606, 1
  %v10609 = vor.u32 %v10604, %v10608
  %v10611 = vshrl.u32 %v10448, 16
  %v10613 = vshll.u32 %v10448, 16
  %v10615 = vrot.slane %v10613, 1
  %v10616 = vor.u32 %v10611, %v10615
  %v10618 = vshrl.u32 %v10449, 16
  %v10620 = vshll.u32 %v10449, 16
  %v10622 = vrot.slane %v10620, 1
  %v10623 = vor.u32 %v10618, %v10622
  %v10625 = vshrl.u32 %v10450, 16
  %v10627 = vshll.u32 %v10450, 16
  %v10629 = vrot.slane %v10627, 1
  %v10630 = vor.u32 %v10625, %v10629
  %v10632 = vshrl.u32 %v10451, 16
  %v10634 = vshll.u32 %v10451, 16
  %v10636 = vrot.slane %v10634, 1
  %v10637 = vor.u32 %v10632, %v10636
  %v10639 = vshrl.u32 %v10452, 16
  %v10641 = vshll.u32 %v10452, 16
  %v10643 = vrot.slane %v10641, 1
  %v10644 = vor.u32 %v10639, %v10643
  %v10646 = vshrl.u32 %v10453, 16
  %v10648 = vshll.u32 %v10453, 16
  %v10650 = vrot.slane %v10648, 1
  %v10651 = vor.u32 %v10646, %v10650
  %v10653 = vshrl.u32 %v10454, 16
  %v10655 = vshll.u32 %v10454, 16
  %v10657 = vrot.slane %v10655, 1
  %v10658 = vor.u32 %v10653, %v10657
  %v10660 = vshrl.u32 %v10455, 16
  %v10662 = vshll.u32 %v10455, 16
  %v10664 = vrot.slane %v10662, 1
  %v10665 = vor.u32 %v10660, %v10664
  %vm10696 = vmand %vm7652, %vm1624
  %v10697 = vld [vmem:[#allocation3 + $0x10] sm:$0xff]
  %v10698 = vsel %vm10696, %v10462, %v10697
  %10699 = vst [vmem:[#allocation3 + $0x10] sm:$0xff] %v10698
  %v10700 = vld [vmem:[#allocation3 + $0x28] sm:$0xff]
  %v10701 = vsel %vm10696, %v10469, %v10700
  %10702 = vst [vmem:[#allocation3 + $0x28] sm:$0xff] %v10701
  %v10703 = vld [vmem:[#allocation3 + $0x40] sm:$0xff]
  %v10704 = vsel %vm10696, %v10476, %v10703
  %10705 = vst [vmem:[#allocation3 + $0x40] sm:$0xff] %v10704
  %v10706 = vld [vmem:[#allocation3 + $0x58] sm:$0xff]
  %v10707 = vsel %vm10696, %v10483, %v10706
  %10708 = vst [vmem:[#allocation3 + $0x58] sm:$0xff] %v10707
  %v10709 = vld [vmem:[#allocation3 + $0x70] sm:$0xff]
  %v10710 = vsel %vm10696, %v10490, %v10709
  %10711 = vst [vmem:[#allocation3 + $0x70] sm:$0xff] %v10710
  %v10712 = vld [vmem:[#allocation3 + $0x88] sm:$0xff]
  %v10713 = vsel %vm10696, %v10497, %v10712
  %10714 = vst [vmem:[#allocation3 + $0x88] sm:$0xff] %v10713
  %v10715 = vld [vmem:[#allocation3 + $0xa0] sm:$0xff]
  %v10716 = vsel %vm10696, %v10504, %v10715
  %10717 = vst [vmem:[#allocation3 + $0xa0] sm:$0xff] %v10716
  %v10718 = vld [vmem:[#allocation3 + $0xb8] sm:$0xff]
  %v10719 = vsel %vm10696, %v10511, %v10718
  %10720 = vst [vmem:[#allocation3 + $0xb8] sm:$0xff] %v10719
  %v10721 = vld [vmem:[#allocation3 + $0xd0] sm:$0xff]
  %v10722 = vsel %vm10696, %v10518, %v10721
  %10723 = vst [vmem:[#allocation3 + $0xd0] sm:$0xff] %v10722
  %v10724 = vld [vmem:[#allocation3 + $0xe8] sm:$0xff]
  %v10725 = vsel %vm10696, %v10525, %v10724
  %10726 = vst [vmem:[#allocation3 + $0xe8] sm:$0xff] %v10725
  %v10727 = vld [vmem:[#allocation3 + $0x100] sm:$0xff]
  %v10728 = vsel %vm10696, %v10532, %v10727
  %10729 = vst [vmem:[#allocation3 + $0x100] sm:$0xff] %v10728
  %v10730 = vld [vmem:[#allocation3 + $0x118] sm:$0xff]
  %v10731 = vsel %vm10696, %v10539, %v10730
  %10732 = vst [vmem:[#allocation3 + $0x118] sm:$0xff] %v10731
  %v10733 = vld [vmem:[#allocation3 + $0x130] sm:$0xff]
  %v10734 = vsel %vm10696, %v10546, %v10733
  %10735 = vst [vmem:[#allocation3 + $0x130] sm:$0xff] %v10734
  %v10736 = vld [vmem:[#allocation3 + $0x148] sm:$0xff]
  %v10737 = vsel %vm10696, %v10553, %v10736
  %10738 = vst [vmem:[#allocation3 + $0x148] sm:$0xff] %v10737
  %v10739 = vld [vmem:[#allocation3 + $0x160] sm:$0xff]
  %v10740 = vsel %vm10696, %v10560, %v10739
  %10741 = vst [vmem:[#allocation3 + $0x160] sm:$0xff] %v10740
  %v10742 = vld [vmem:[#allocation3 + $0x190] sm:$0xff]
  %v10743 = vsel %vm10696, %v10567, %v10742
  %10744 = vst [vmem:[#allocation3 + $0x190] sm:$0xff] %v10743
  %v10745 = vld [vmem:[#allocation3 + $0x1a8] sm:$0xff]
  %v10746 = vsel %vm10696, %v10574, %v10745
  %10747 = vst [vmem:[#allocation3 + $0x1a8] sm:$0xff] %v10746
  %v10748 = vld [vmem:[#allocation3 + $0x1c0] sm:$0xff]
  %v10749 = vsel %vm10696, %v10581, %v10748
  %10750 = vst [vmem:[#allocation3 + $0x1c0] sm:$0xff] %v10749
  %v10751 = vld [vmem:[#allocation3 + $0x1d8] sm:$0xff]
  %v10752 = vsel %vm10696, %v10588, %v10751
  %10753 = vst [vmem:[#allocation3 + $0x1d8] sm:$0xff] %v10752
  %v10754 = vld [vmem:[#allocation3 + $0x1f0] sm:$0xff]
  %v10755 = vsel %vm10696, %v10595, %v10754
  %10756 = vst [vmem:[#allocation3 + $0x1f0] sm:$0xff] %v10755
  %v10757 = vld [vmem:[#allocation3 + $0x208] sm:$0xff]
  %v10758 = vsel %vm10696, %v10602, %v10757
  %10759 = vst [vmem:[#allocation3 + $0x208] sm:$0xff] %v10758
  %v10760 = vld [vmem:[#allocation3 + $0x220] sm:$0xff]
  %v10761 = vsel %vm10696, %v10609, %v10760
  %10762 = vst [vmem:[#allocation3 + $0x220] sm:$0xff] %v10761
  %v10763 = vld [vmem:[#allocation3 + $0x238] sm:$0xff]
  %v10764 = vsel %vm10696, %v10616, %v10763
  %10765 = vst [vmem:[#allocation3 + $0x238] sm:$0xff] %v10764
  %v10766 = vld [vmem:[#allocation3 + $0x250] sm:$0xff]
  %v10767 = vsel %vm10696, %v10623, %v10766
  %10768 = vst [vmem:[#allocation3 + $0x250] sm:$0xff] %v10767
  %v10769 = vld [vmem:[#allocation3 + $0x268] sm:$0xff]
  %v10770 = vsel %vm10696, %v10630, %v10769
  %10771 = vst [vmem:[#allocation3 + $0x268] sm:$0xff] %v10770
  %v10772 = vld [vmem:[#allocation3 + $0x280] sm:$0xff]
  %v10773 = vsel %vm10696, %v10637, %v10772
  %10774 = vst [vmem:[#allocation3 + $0x280] sm:$0xff] %v10773
  %v10775 = vld [vmem:[#allocation3 + $0x298] sm:$0xff]
  %v10776 = vsel %vm10696, %v10644, %v10775
  %10777 = vst [vmem:[#allocation3 + $0x298] sm:$0xff] %v10776
  %v10778 = vld [vmem:[#allocation3 + $0x2b0] sm:$0xff]
  %v10779 = vsel %vm10696, %v10651, %v10778
  %10780 = vst [vmem:[#allocation3 + $0x2b0] sm:$0xff] %v10779
  %v10781 = vld [vmem:[#allocation3 + $0x2c8] sm:$0xff]
  %v10782 = vsel %vm10696, %v10658, %v10781
  %10783 = vst [vmem:[#allocation3 + $0x2c8] sm:$0xff] %v10782
  %v10784 = vld [vmem:[#allocation3 + $0x2e0] sm:$0xff]
  %v10785 = vsel %vm10696, %v10665, %v10784
  %10786 = vst [vmem:[#allocation3 + $0x2e0] sm:$0xff] %v10785
  %v10787 = vld [vmem:[#allocation3] sm:$0xff]
  %v10788 = vld [vmem:[#allocation3 + $0x8] sm:$0xff]
  %v10789 = vld [vmem:[#allocation3 + $0x10] sm:$0xff]
  %v10790 = vld [vmem:[#allocation3 + $0x18] sm:$0xff]
  %v10791 = vld [vmem:[#allocation3 + $0x20] sm:$0xff]
  %v10792 = vld [vmem:[#allocation3 + $0x28] sm:$0xff]
  %v10793 = vld [vmem:[#allocation3 + $0x30] sm:$0xff]
  %v10794 = vld [vmem:[#allocation3 + $0x38] sm:$0xff]
  %v10795 = vld [vmem:[#allocation3 + $0x40] sm:$0xff]
  %v10796 = vld [vmem:[#allocation3 + $0x48] sm:$0xff]
  %v10797 = vld [vmem:[#allocation3 + $0x50] sm:$0xff]
  %v10798 = vld [vmem:[#allocation3 + $0x58] sm:$0xff]
  %v10799 = vld [vmem:[#allocation3 + $0x60] sm:$0xff]
  %v10800 = vld [vmem:[#allocation3 + $0x68] sm:$0xff]
  %v10801 = vld [vmem:[#allocation3 + $0x70] sm:$0xff]
  %v10802 = vld [vmem:[#allocation3 + $0x78] sm:$0xff]
  %v10803 = vld [vmem:[#allocation3 + $0x80] sm:$0xff]
  %v10804 = vld [vmem:[#allocation3 + $0x88] sm:$0xff]
  %v10805 = vld [vmem:[#allocation3 + $0x90] sm:$0xff]
  %v10806 = vld [vmem:[#allocation3 + $0x98] sm:$0xff]
  %v10807 = vld [vmem:[#allocation3 + $0xa0] sm:$0xff]
  %v10808 = vld [vmem:[#allocation3 + $0xa8] sm:$0xff]
  %v10809 = vld [vmem:[#allocation3 + $0xb0] sm:$0xff]
  %v10810 = vld [vmem:[#allocation3 + $0xb8] sm:$0xff]
  %v10811 = vld [vmem:[#allocation3 + $0xc0] sm:$0xff]
  %v10812 = vld [vmem:[#allocation3 + $0xc8] sm:$0xff]
  %v10813 = vld [vmem:[#allocation3 + $0xd0] sm:$0xff]
  %v10814 = vld [vmem:[#allocation3 + $0xd8] sm:$0xff]
  %v10815 = vld [vmem:[#allocation3 + $0xe0] sm:$0xff]
  %v10816 = vld [vmem:[#allocation3 + $0xe8] sm:$0xff]
  %v10817 = vld [vmem:[#allocation3 + $0xf0] sm:$0xff]
  %v10818 = vld [vmem:[#allocation3 + $0xf8] sm:$0xff]
  %v10819 = vld [vmem:[#allocation3 + $0x100] sm:$0xff]
  %v10820 = vld [vmem:[#allocation3 + $0x108] sm:$0xff]
  %v10821 = vld [vmem:[#allocation3 + $0x110] sm:$0xff]
  %v10822 = vld [vmem:[#allocation3 + $0x118] sm:$0xff]
  %v10823 = vld [vmem:[#allocation3 + $0x120] sm:$0xff]
  %v10824 = vld [vmem:[#allocation3 + $0x128] sm:$0xff]
  %v10825 = vld [vmem:[#allocation3 + $0x130] sm:$0xff]
  %v10826 = vld [vmem:[#allocation3 + $0x138] sm:$0xff]
  %v10827 = vld [vmem:[#allocation3 + $0x140] sm:$0xff]
  %v10828 = vld [vmem:[#allocation3 + $0x148] sm:$0xff]
  %v10829 = vld [vmem:[#allocation3 + $0x150] sm:$0xff]
  %v10830 = vld [vmem:[#allocation3 + $0x158] sm:$0xff]
  %v10831 = vld [vmem:[#allocation3 + $0x160] sm:$0xff]
  %v10832 = vld [vmem:[#allocation3 + $0x168] sm:$0xff]
  %v10833 = vld [vmem:[#allocation3 + $0x170] sm:$0xff]
  %v10834 = vld [vmem:[#allocation3 + $0x178] sm:$0xff]
  %v10835 = vld [vmem:[#allocation3 + $0x180] sm:$0xff]
  %v10836 = vld [vmem:[#allocation3 + $0x188] sm:$0xff]
  %v10837 = vld [vmem:[#allocation3 + $0x190] sm:$0xff]
  %v10838 = vld [vmem:[#allocation3 + $0x198] sm:$0xff]
  %v10839 = vld [vmem:[#allocation3 + $0x1a0] sm:$0xff]
  %v10840 = vld [vmem:[#allocation3 + $0x1a8] sm:$0xff]
  %v10841 = vld [vmem:[#allocation3 + $0x1b0] sm:$0xff]
  %v10842 = vld [vmem:[#allocation3 + $0x1b8] sm:$0xff]
  %v10843 = vld [vmem:[#allocation3 + $0x1c0] sm:$0xff]
  %v10844 = vld [vmem:[#allocation3 + $0x1c8] sm:$0xff]
  %v10845 = vld [vmem:[#allocation3 + $0x1d0] sm:$0xff]
  %v10846 = vld [vmem:[#allocation3 + $0x1d8] sm:$0xff]
  %v10847 = vld [vmem:[#allocation3 + $0x1e0] sm:$0xff]
  %v10848 = vld [vmem:[#allocation3 + $0x1e8] sm:$0xff]
  %v10849 = vld [vmem:[#allocation3 + $0x1f0] sm:$0xff]
  %v10850 = vld [vmem:[#allocation3 + $0x1f8] sm:$0xff]
  %v10851 = vld [vmem:[#allocation3 + $0x200] sm:$0xff]
  %v10852 = vld [vmem:[#allocation3 + $0x208] sm:$0xff]
  %v10853 = vld [vmem:[#allocation3 + $0x210] sm:$0xff]
  %v10854 = vld [vmem:[#allocation3 + $0x218] sm:$0xff]
  %v10855 = vld [vmem:[#allocation3 + $0x220] sm:$0xff]
  %v10856 = vld [vmem:[#allocation3 + $0x228] sm:$0xff]
  %v10857 = vld [vmem:[#allocation3 + $0x230] sm:$0xff]
  %v10858 = vld [vmem:[#allocation3 + $0x238] sm:$0xff]
  %v10859 = vld [vmem:[#allocation3 + $0x240] sm:$0xff]
  %v10860 = vld [vmem:[#allocation3 + $0x248] sm:$0xff]
  %v10861 = vld [vmem:[#allocation3 + $0x250] sm:$0xff]
  %v10862 = vld [vmem:[#allocation3 + $0x258] sm:$0xff]
  %v10863 = vld [vmem:[#allocation3 + $0x260] sm:$0xff]
  %v10864 = vld [vmem:[#allocation3 + $0x268] sm:$0xff]
  %v10865 = vld [vmem:[#allocation3 + $0x270] sm:$0xff]
  %v10866 = vld [vmem:[#allocation3 + $0x278] sm:$0xff]
  %v10867 = vld [vmem:[#allocation3 + $0x280] sm:$0xff]
  %v10868 = vld [vmem:[#allocation3 + $0x288] sm:$0xff]
  %v10869 = vld [vmem:[#allocation3 + $0x290] sm:$0xff]
  %v10870 = vld [vmem:[#allocation3 + $0x298] sm:$0xff]
  %v10871 = vld [vmem:[#allocation3 + $0x2a0] sm:$0xff]
  %v10872 = vld [vmem:[#allocation3 + $0x2a8] sm:$0xff]
  %v10873 = vld [vmem:[#allocation3 + $0x2b0] sm:$0xff]
  %v10874 = vld [vmem:[#allocation3 + $0x2b8] sm:$0xff]
  %v10875 = vld [vmem:[#allocation3 + $0x2c0] sm:$0xff]
  %v10876 = vld [vmem:[#allocation3 + $0x2c8] sm:$0xff]
  %v10877 = vld [vmem:[#allocation3 + $0x2d0] sm:$0xff]
  %v10878 = vld [vmem:[#allocation3 + $0x2d8] sm:$0xff]
  %v10879 = vld [vmem:[#allocation3 + $0x2e0] sm:$0xff]
  %v10880 = vld [vmem:[#allocation3 + $0x2e8] sm:$0xff]
  %v10881 = vld [vmem:[#allocation3 + $0x2f0] sm:$0xff]
  %v10882 = vld [vmem:[#allocation3 + $0x2f8] sm:$0xff]
  %v10883 = vld [vmem:[%s4] sm:$0xf]
  %v10884 = vld [vmem:[%s4 + $0x4] sm:$0xf]
  %v10885 = vld [vmem:[%s4 + $0x8] sm:$0xf]
  %v10886 = vld [vmem:[%s4 + $0xc] sm:$0xf]
  %v10887 = vld [vmem:[%s4 + $0x10] sm:$0xf]
  %v10888 = vld [vmem:[%s4 + $0x14] sm:$0xf]
  %v10889 = vld [vmem:[%s4 + $0x18] sm:$0xf]
  %v10890 = vld [vmem:[%s4 + $0x1c] sm:$0xf]
  %v10891 = vld [vmem:[%s4 + $0x20] sm:$0xf]
  %v10892 = vld [vmem:[%s4 + $0x24] sm:$0xf]
  %v10893 = vld [vmem:[%s4 + $0x28] sm:$0xf]
  %v10894 = vld [vmem:[%s4 + $0x2c] sm:$0xf]
  %v10895 = vld [vmem:[%s4 + $0x30] sm:$0xf]
  %v10896 = vld [vmem:[%s4 + $0x34] sm:$0xf]
  %v10897 = vld [vmem:[%s4 + $0x38] sm:$0xf]
  %v10898 = vld [vmem:[%s4 + $0x3c] sm:$0xf]
  %v10899 = vld [vmem:[%s4 + $0x40] sm:$0xf]
  %v10900 = vld [vmem:[%s4 + $0x44] sm:$0xf]
  %v10901 = vld [vmem:[%s4 + $0x48] sm:$0xf]
  %v10902 = vld [vmem:[%s4 + $0x4c] sm:$0xf]
  %v10903 = vld [vmem:[%s4 + $0x50] sm:$0xf]
  %v10904 = vld [vmem:[%s4 + $0x54] sm:$0xf]
  %v10905 = vld [vmem:[%s4 + $0x58] sm:$0xf]
  %v10906 = vld [vmem:[%s4 + $0x5c] sm:$0xf]
  %v10907 = vld [vmem:[%s4 + $0x60] sm:$0xf]
  %v10908 = vld [vmem:[%s4 + $0x64] sm:$0xf]
  %v10909 = vld [vmem:[%s4 + $0x68] sm:$0xf]
  %v10910 = vld [vmem:[%s4 + $0x6c] sm:$0xf]
  %v10911 = vld [vmem:[%s4 + $0x70] sm:$0xf]
  %v10912 = vld [vmem:[%s4 + $0x74] sm:$0xf]
  %v10913 = vld [vmem:[%s4 + $0x78] sm:$0xf]
  %v10914 = vld [vmem:[%s4 + $0x7c] sm:$0xf]
  %v10915 = vld [vmem:[%s4 + $0x80] sm:$0xf]
  %v10916 = vld [vmem:[%s4 + $0x84] sm:$0xf]
  %v10917 = vld [vmem:[%s4 + $0x88] sm:$0xf]
  %v10918 = vld [vmem:[%s4 + $0x8c] sm:$0xf]
  %v10919 = vld [vmem:[%s6] sm:$0x1]
  %v10921 = vlaneseq
  %v10922 = vshrl.u32 %v10921, 7
  %v10923 = vsub.s32 0, %v10922
  %v10924 = vrot.slane %v10919, %v10923
  %v10962 = vunpack.c.l.b16 %v10883
  %v10963 = vunpack.c.l.b16 %v10884
  %v10964 = vunpack.c.l.b16 %v10885
  %v10965 = vunpack.c.l.b16 %v10886
  %v10966 = vunpack.c.l.b16 %v10887
  %v10967 = vunpack.c.l.b16 %v10888
  %v10968 = vunpack.c.l.b16 %v10889
  %v10969 = vunpack.c.l.b16 %v10890
  %v10970 = vunpack.c.l.b16 %v10891
  %v10971 = vunpack.c.l.b16 %v10892
  %v10972 = vunpack.c.l.b16 %v10893
  %v10973 = vunpack.c.l.b16 %v10894
  %v10974 = vunpack.c.l.b16 %v10895
  %v10975 = vunpack.c.l.b16 %v10896
  %v10976 = vunpack.c.l.b16 %v10897
  %v10977 = vunpack.c.l.b16 %v10898
  %v10978 = vunpack.c.l.b16 %v10899
  %v10979 = vunpack.c.l.b16 %v10900
  %v10980 = vunpack.c.l.b16 %v10901
  %v10981 = vunpack.c.l.b16 %v10902
  %v10982 = vunpack.c.l.b16 %v10903
  %v10983 = vunpack.c.l.b16 %v10904
  %v10984 = vunpack.c.l.b16 %v10905
  %v10985 = vunpack.c.l.b16 %v10906
  %v10986 = vunpack.c.l.b16 %v10907
  %v10987 = vunpack.c.l.b16 %v10908
  %v10988 = vunpack.c.l.b16 %v10909
  %v10989 = vunpack.c.l.b16 %v10910
  %v10990 = vunpack.c.l.b16 %v10911
  %v10991 = vunpack.c.l.b16 %v10912
  %v10992 = vunpack.c.l.b16 %v10913
  %v10993 = vunpack.c.l.b16 %v10914
  %v10994 = vunpack.c.l.b16 %v10915
  %v10995 = vunpack.c.l.b16 %v10916
  %v10996 = vunpack.c.l.b16 %v10917
  %v10997 = vunpack.c.l.b16 %v10918
  %v10998 = vpack.c.b16 %v10963, %v10962
  %v10999 = vpack.c.b16 %v10965, %v10964
  %v11000 = vpack.c.b16 %v10967, %v10966
  %v11001 = vpack.c.b16 %v10969, %v10968
  %v11002 = vpack.c.b16 %v10971, %v10970
  %v11003 = vpack.c.b16 %v10973, %v10972
  %v11004 = vpack.c.b16 %v10975, %v10974
  %v11005 = vpack.c.b16 %v10977, %v10976
  %v11006 = vpack.c.b16 %v10979, %v10978
  %v11007 = vpack.c.b16 %v10981, %v10980
  %v11008 = vpack.c.b16 %v10983, %v10982
  %v11009 = vpack.c.b16 %v10985, %v10984
  %v11010 = vpack.c.b16 %v10987, %v10986
  %v11011 = vpack.c.b16 %v10989, %v10988
  %v11012 = vpack.c.b16 %v10991, %v10990
  %v11013 = vpack.c.b16 %v10993, %v10992
  %v11014 = vpack.c.b16 %v10995, %v10994
  %v11015 = vpack.c.b16 %v10997, %v10996
  %v11035 = vsel %vm5724, %v10789, 0
  %v11038 = vsel %vm5724, %v10792, 0
  %v11041 = vsel %vm5724, %v10795, 0
  %v11044 = vsel %vm5724, %v10798, 0
  %v11047 = vsel %vm5724, %v10801, 0
  %v11050 = vsel %vm5724, %v10804, 0
  %v11053 = vsel %vm5724, %v10807, 0
  %v11056 = vsel %vm5724, %v10810, 0
  %v11059 = vsel %vm5724, %v10813, 0
  %v11062 = vsel %vm5724, %v10816, 0
  %v11065 = vsel %vm5724, %v10819, 0
  %v11068 = vsel %vm5724, %v10822, 0
  %v11071 = vsel %vm5724, %v10825, 0
  %v11074 = vsel %vm5724, %v10828, 0
  %v11077 = vsel %vm5724, %v10831, 0
  %v11080 = vsel %vm5724, %v10834, 0
  %v11083 = vsel %vm5724, %v10837, 0
  %v11086 = vsel %vm5724, %v10840, 0
  %v11089 = vsel %vm5724, %v10843, 0
  %v11092 = vsel %vm5724, %v10846, 0
  %v11095 = vsel %vm5724, %v10849, 0
  %v11098 = vsel %vm5724, %v10852, 0
  %v11101 = vsel %vm5724, %v10855, 0
  %v11104 = vsel %vm5724, %v10858, 0
  %v11107 = vsel %vm5724, %v10861, 0
  %v11110 = vsel %vm5724, %v10864, 0
  %v11113 = vsel %vm5724, %v10867, 0
  %v11116 = vsel %vm5724, %v10870, 0
  %v11119 = vsel %vm5724, %v10873, 0
  %v11122 = vsel %vm5724, %v10876, 0
  %v11125 = vsel %vm5724, %v10879, 0
  %v11128 = vsel %vm5724, %v10882, 0
  %11130 = vmatprep.subr.bf16.mxu0 0
  %11131 = vmatpush1.bf16.msra.mxu0 %v10998
  %11132 = vmatprep.subr.bf16.mxu0 0
  %11133 = vmatpush1.bf16.msra.mxu0 %v10999
  %11134 = vmatprep.subr.bf16.mxu0 0
  %11135 = vmatpush1.bf16.msra.mxu0 %v11000
  %11136 = vmatprep.subr.bf16.mxu0 0
  %11137 = vmatpush1.bf16.msra.mxu0 %v11001
  %11138 = vmatprep.subr.bf16.mxu0 0
  %11139 = vmatpush1.bf16.msra.mxu0 %v11002
  %11140 = vmatprep.subr.bf16.mxu0 0
  %11141 = vmatpush1.bf16.msra.mxu0 %v11003
  %11142 = vmatprep.subr.bf16.mxu0 0
  %11143 = vmatpush1.bf16.msra.mxu0 %v11004
  %11144 = vmatprep.subr.bf16.mxu0 0
  %11145 = vmatpush1.bf16.msra.mxu0 %v11005
  %11146 = vmatprep.subr.bf16.mxu0 0
  %11147 = vmatpush1.bf16.msra.mxu0 %v11006
  %11148 = vmatprep.subr.bf16.mxu0 0
  %11149 = vmatpush1.bf16.msra.mxu0 %v11007
  %11150 = vmatprep.subr.bf16.mxu0 0
  %11151 = vmatpush1.bf16.msra.mxu0 %v11008
  %11152 = vmatprep.subr.bf16.mxu0 0
  %11153 = vmatpush1.bf16.msra.mxu0 %v11009
  %11154 = vmatprep.subr.bf16.mxu0 0
  %11155 = vmatpush1.bf16.msra.mxu0 %v11010
  %11156 = vmatprep.subr.bf16.mxu0 0
  %11157 = vmatpush1.bf16.msra.mxu0 %v11011
  %11158 = vmatprep.subr.bf16.mxu0 0
  %11159 = vmatpush1.bf16.msra.mxu0 %v11012
  %11160 = vmatprep.subr.bf16.mxu0 0
  %11161 = vmatpush1.bf16.msra.mxu0 %v11013
  %11162 = vmatprep.mubr.bf16.mxu0 %v10788
  %11163 = vmatmul.mubr.bf16.gmra.mrb[0].mxu0 %v10787
  %v11164 = vpop.f32.mrb[0].mxu0
  %v11165 = vadd.f32 %v10924, %v11164
  %v11166 = vpop.f32.mrb[0].mxu0
  %v11167 = vpop.f32.mrb[0].mxu0
  %v11168 = vadd.f32 %v10924, %v11167
  %v11169 = vpop.f32.mrb[0].mxu0
  %11170 = vmatprep.mubr.bf16.mxu0 %v10791
  %11171 = vmatmul.mubr.bf16.gmra.mrb[0].mxu0 %v10790
  %v11172 = vpop.f32.mrb[0].mxu0
  %v11173 = vadd.f32 %v10924, %v11172
  %v11174 = vpop.f32.mrb[0].mxu0
  %v11175 = vpop.f32.mrb[0].mxu0
  %v11176 = vadd.f32 %v10924, %v11175
  %v11177 = vpop.f32.mrb[0].mxu0
  %11178 = vmatprep.mubr.bf16.mxu0 %v10794
  %11179 = vmatmul.mubr.bf16.gmra.mrb[0].mxu0 %v10793
  %v11180 = vpop.f32.mrb[0].mxu0
  %v11181 = vadd.f32 %v10924, %v11180
  %v11182 = vpop.f32.mrb[0].mxu0
  %v11183 = vpop.f32.mrb[0].mxu0
  %v11184 = vadd.f32 %v10924, %v11183
  %v11185 = vpop.f32.mrb[0].mxu0
  %11186 = vmatprep.mubr.bf16.mxu0 %v10797
  %11187 = vmatmul.mubr.bf16.gmra.mrb[0].mxu0 %v10796
  %v11188 = vpop.f32.mrb[0].mxu0
  %v11189 = vadd.f32 %v10924, %v11188
  %v11190 = vpop.f32.mrb[0].mxu0
  %v11191 = vpop.f32.mrb[0].mxu0
  %v11192 = vadd.f32 %v10924, %v11191
  %v11193 = vpop.f32.mrb[0].mxu0
  %11194 = vmatprep.mubr.bf16.mxu0 %v10800
  %11195 = vmatmul.mubr.bf16.gmra.mrb[0].mxu0 %v10799
  %v11196 = vpop.f32.mrb[0].mxu0
  %v11197 = vadd.f32 %v10924, %v11196
  %v11198 = vpop.f32.mrb[0].mxu0
  %v11199 = vpop.f32.mrb[0].mxu0
  %v11200 = vadd.f32 %v10924, %v11199
  %v11201 = vpop.f32.mrb[0].mxu0
  %11202 = vmatprep.mubr.bf16.mxu0 %v10803
  %11203 = vmatmul.mubr.bf16.gmra.mrb[0].mxu0 %v10802
  %v11204 = vpop.f32.mrb[0].mxu0
  %v11205 = vadd.f32 %v10924, %v11204
  %v11206 = vpop.f32.mrb[0].mxu0
  %v11207 = vpop.f32.mrb[0].mxu0
  %v11208 = vadd.f32 %v10924, %v11207
  %v11209 = vpop.f32.mrb[0].mxu0
  %11210 = vmatprep.mubr.bf16.mxu0 %v10806
  %11211 = vmatmul.mubr.bf16.gmra.mrb[0].mxu0 %v10805
  %v11212 = vpop.f32.mrb[0].mxu0
  %v11213 = vadd.f32 %v10924, %v11212
  %v11214 = vpop.f32.mrb[0].mxu0
  %v11215 = vpop.f32.mrb[0].mxu0
  %v11216 = vadd.f32 %v10924, %v11215
  %v11217 = vpop.f32.mrb[0].mxu0
  %11218 = vmatprep.mubr.bf16.mxu0 %v10809
  %11219 = vmatmul.mubr.bf16.gmra.mrb[0].mxu0 %v10808
  %v11220 = vpop.f32.mrb[0].mxu0
  %v11221 = vadd.f32 %v10924, %v11220
  %v11222 = vpop.f32.mrb[0].mxu0
  %v11223 = vpop.f32.mrb[0].mxu0
  %v11224 = vadd.f32 %v10924, %v11223
  %v11225 = vpop.f32.mrb[0].mxu0
  %11226 = vmatprep.mubr.bf16.mxu0 %v10812
  %11227 = vmatmul.mubr.bf16.gmra.mrb[0].mxu0 %v10811
  %v11228 = vpop.f32.mrb[0].mxu0
  %v11229 = vadd.f32 %v10924, %v11228
  %v11230 = vpop.f32.mrb[0].mxu0
  %v11231 = vpop.f32.mrb[0].mxu0
  %v11232 = vadd.f32 %v10924, %v11231
  %v11233 = vpop.f32.mrb[0].mxu0
  %11234 = vmatprep.mubr.bf16.mxu0 %v10815
  %11235 = vmatmul.mubr.bf16.gmra.mrb[0].mxu0 %v10814
  %v11236 = vpop.f32.mrb[0].mxu0
  %v11237 = vadd.f32 %v10924, %v11236
  %v11238 = vpop.f32.mrb[0].mxu0
  %v11239 = vpop.f32.mrb[0].mxu0
  %v11240 = vadd.f32 %v10924, %v11239
  %v11241 = vpop.f32.mrb[0].mxu0
  %11242 = vmatprep.mubr.bf16.mxu0 %v10818
  %11243 = vmatmul.mubr.bf16.gmra.mrb[0].mxu0 %v10817
  %v11244 = vpop.f32.mrb[0].mxu0
  %v11245 = vadd.f32 %v10924, %v11244
  %v11246 = vpop.f32.mrb[0].mxu0
  %v11247 = vpop.f32.mrb[0].mxu0
  %v11248 = vadd.f32 %v10924, %v11247
  %v11249 = vpop.f32.mrb[0].mxu0
  %11250 = vmatprep.mubr.bf16.mxu0 %v10821
  %11251 = vmatmul.mubr.bf16.gmra.mrb[0].mxu0 %v10820
  %v11252 = vpop.f32.mrb[0].mxu0
  %v11253 = vadd.f32 %v10924, %v11252
  %v11254 = vpop.f32.mrb[0].mxu0
  %v11255 = vpop.f32.mrb[0].mxu0
  %v11256 = vadd.f32 %v10924, %v11255
  %v11257 = vpop.f32.mrb[0].mxu0
  %11258 = vmatprep.mubr.bf16.mxu0 %v10824
  %11259 = vmatmul.mubr.bf16.gmra.mrb[0].mxu0 %v10823
  %v11260 = vpop.f32.mrb[0].mxu0
  %v11261 = vadd.f32 %v10924, %v11260
  %v11262 = vpop.f32.mrb[0].mxu0
  %v11263 = vpop.f32.mrb[0].mxu0
  %v11264 = vadd.f32 %v10924, %v11263
  %v11265 = vpop.f32.mrb[0].mxu0
  %11266 = vmatprep.mubr.bf16.mxu0 %v10827
  %11267 = vmatmul.mubr.bf16.gmra.mrb[0].mxu0 %v10826
  %v11268 = vpop.f32.mrb[0].mxu0
  %v11269 = vadd.f32 %v10924, %v11268
  %v11270 = vpop.f32.mrb[0].mxu0
  %v11271 = vpop.f32.mrb[0].mxu0
  %v11272 = vadd.f32 %v10924, %v11271
  %v11273 = vpop.f32.mrb[0].mxu0
  %11274 = vmatprep.mubr.bf16.mxu0 %v10830
  %11275 = vmatmul.mubr.bf16.gmra.mrb[0].mxu0 %v10829
  %v11276 = vpop.f32.mrb[0].mxu0
  %v11277 = vadd.f32 %v10924, %v11276
  %v11278 = vpop.f32.mrb[0].mxu0
  %v11279 = vpop.f32.mrb[0].mxu0
  %v11280 = vadd.f32 %v10924, %v11279
  %v11281 = vpop.f32.mrb[0].mxu0
  %11282 = vmatprep.mubr.bf16.mxu0 %v10833
  %11283 = vmatmul.mubr.bf16.gmra.mrb[0].mxu0 %v10832
  %v11284 = vpop.f32.mrb[0].mxu0
  %v11285 = vadd.f32 %v10924, %v11284
  %v11286 = vpop.f32.mrb[0].mxu0
  %v11287 = vpop.f32.mrb[0].mxu0
  %v11288 = vadd.f32 %v10924, %v11287
  %v11289 = vpop.f32.mrb[0].mxu0
  %11290 = vmatprep.mubr.bf16.mxu0 %v10836
  %11291 = vmatmul.mubr.bf16.gmra.mrb[0].mxu0 %v10835
  %v11292 = vpop.f32.mrb[0].mxu0
  %v11293 = vadd.f32 %v10924, %v11292
  %v11294 = vpop.f32.mrb[0].mxu0
  %v11295 = vpop.f32.mrb[0].mxu0
  %v11296 = vadd.f32 %v10924, %v11295
  %v11297 = vpop.f32.mrb[0].mxu0
  %11298 = vmatprep.mubr.bf16.mxu0 %v10839
  %11299 = vmatmul.mubr.bf16.gmra.mrb[0].mxu0 %v10838
  %v11300 = vpop.f32.mrb[0].mxu0
  %v11301 = vadd.f32 %v10924, %v11300
  %v11302 = vpop.f32.mrb[0].mxu0
  %v11303 = vpop.f32.mrb[0].mxu0
  %v11304 = vadd.f32 %v10924, %v11303
  %v11305 = vpop.f32.mrb[0].mxu0
  %11306 = vmatprep.mubr.bf16.mxu0 %v10842
  %11307 = vmatmul.mubr.bf16.gmra.mrb[0].mxu0 %v10841
  %v11308 = vpop.f32.mrb[0].mxu0
  %v11309 = vadd.f32 %v10924, %v11308
  %v11310 = vpop.f32.mrb[0].mxu0
  %v11311 = vpop.f32.mrb[0].mxu0
  %v11312 = vadd.f32 %v10924, %v11311
  %v11313 = vpop.f32.mrb[0].mxu0
  %11314 = vmatprep.mubr.bf16.mxu0 %v10845
  %11315 = vmatmul.mubr.bf16.gmra.mrb[0].mxu0 %v10844
  %v11316 = vpop.f32.mrb[0].mxu0
  %v11317 = vadd.f32 %v10924, %v11316
  %v11318 = vpop.f32.mrb[0].mxu0
  %v11319 = vpop.f32.mrb[0].mxu0
  %v11320 = vadd.f32 %v10924, %v11319
  %v11321 = vpop.f32.mrb[0].mxu0
  %11322 = vmatprep.mubr.bf16.mxu0 %v10848
  %11323 = vmatmul.mubr.bf16.gmra.mrb[0].mxu0 %v10847
  %v11324 = vpop.f32.mrb[0].mxu0
  %v11325 = vadd.f32 %v10924, %v11324
  %v11326 = vpop.f32.mrb[0].mxu0
  %v11327 = vpop.f32.mrb[0].mxu0
  %v11328 = vadd.f32 %v10924, %v11327
  %v11329 = vpop.f32.mrb[0].mxu0
  %11330 = vmatprep.mubr.bf16.mxu0 %v10851
  %11331 = vmatmul.mubr.bf16.gmra.mrb[0].mxu0 %v10850
  %v11332 = vpop.f32.mrb[0].mxu0
  %v11333 = vadd.f32 %v10924, %v11332
  %v11334 = vpop.f32.mrb[0].mxu0
  %v11335 = vpop.f32.mrb[0].mxu0
  %v11336 = vadd.f32 %v10924, %v11335
  %v11337 = vpop.f32.mrb[0].mxu0
  %11338 = vmatprep.mubr.bf16.mxu0 %v10854
  %11339 = vmatmul.mubr.bf16.gmra.mrb[0].mxu0 %v10853
  %v11340 = vpop.f32.mrb[0].mxu0
  %v11341 = vadd.f32 %v10924, %v11340
  %v11342 = vpop.f32.mrb[0].mxu0
  %v11343 = vpop.f32.mrb[0].mxu0
  %v11344 = vadd.f32 %v10924, %v11343
  %v11345 = vpop.f32.mrb[0].mxu0
  %11346 = vmatprep.mubr.bf16.mxu0 %v10857
  %11347 = vmatmul.mubr.bf16.gmra.mrb[0].mxu0 %v10856
  %v11348 = vpop.f32.mrb[0].mxu0
  %v11349 = vadd.f32 %v10924, %v11348
  %v11350 = vpop.f32.mrb[0].mxu0
  %v11351 = vpop.f32.mrb[0].mxu0
  %v11352 = vadd.f32 %v10924, %v11351
  %v11353 = vpop.f32.mrb[0].mxu0
  %11354 = vmatprep.mubr.bf16.mxu0 %v10860
  %11355 = vmatmul.mubr.bf16.gmra.mrb[0].mxu0 %v10859
  %v11356 = vpop.f32.mrb[0].mxu0
  %v11357 = vadd.f32 %v10924, %v11356
  %v11358 = vpop.f32.mrb[0].mxu0
  %v11359 = vpop.f32.mrb[0].mxu0
  %v11360 = vadd.f32 %v10924, %v11359
  %v11361 = vpop.f32.mrb[0].mxu0
  %11362 = vmatprep.mubr.bf16.mxu0 %v10863
  %11363 = vmatmul.mubr.bf16.gmra.mrb[0].mxu0 %v10862
  %v11364 = vpop.f32.mrb[0].mxu0
  %v11365 = vadd.f32 %v10924, %v11364
  %v11366 = vpop.f32.mrb[0].mxu0
  %v11367 = vpop.f32.mrb[0].mxu0
  %v11368 = vadd.f32 %v10924, %v11367
  %v11369 = vpop.f32.mrb[0].mxu0
  %11370 = vmatprep.mubr.bf16.mxu0 %v10866
  %11371 = vmatmul.mubr.bf16.gmra.mrb[0].mxu0 %v10865
  %v11372 = vpop.f32.mrb[0].mxu0
  %v11373 = vadd.f32 %v10924, %v11372
  %v11374 = vpop.f32.mrb[0].mxu0
  %v11375 = vpop.f32.mrb[0].mxu0
  %v11376 = vadd.f32 %v10924, %v11375
  %v11377 = vpop.f32.mrb[0].mxu0
  %11378 = vmatprep.mubr.bf16.mxu0 %v10869
  %11379 = vmatmul.mubr.bf16.gmra.mrb[0].mxu0 %v10868
  %v11380 = vpop.f32.mrb[0].mxu0
  %v11381 = vadd.f32 %v10924, %v11380
  %v11382 = vpop.f32.mrb[0].mxu0
  %v11383 = vpop.f32.mrb[0].mxu0
  %v11384 = vadd.f32 %v10924, %v11383
  %v11385 = vpop.f32.mrb[0].mxu0
  %11386 = vmatprep.mubr.bf16.mxu0 %v10872
  %11387 = vmatmul.mubr.bf16.gmra.mrb[0].mxu0 %v10871
  %v11388 = vpop.f32.mrb[0].mxu0
  %v11389 = vadd.f32 %v10924, %v11388
  %v11390 = vpop.f32.mrb[0].mxu0
  %v11391 = vpop.f32.mrb[0].mxu0
  %v11392 = vadd.f32 %v10924, %v11391
  %v11393 = vpop.f32.mrb[0].mxu0
  %11394 = vmatprep.mubr.bf16.mxu0 %v10875
  %11395 = vmatmul.mubr.bf16.gmra.mrb[0].mxu0 %v10874
  %v11396 = vpop.f32.mrb[0].mxu0
  %v11397 = vadd.f32 %v10924, %v11396
  %v11398 = vpop.f32.mrb[0].mxu0
  %v11399 = vpop.f32.mrb[0].mxu0
  %v11400 = vadd.f32 %v10924, %v11399
  %v11401 = vpop.f32.mrb[0].mxu0
  %11402 = vmatprep.mubr.bf16.mxu0 %v10878
  %11403 = vmatmul.mubr.bf16.gmra.mrb[0].mxu0 %v10877
  %v11404 = vpop.f32.mrb[0].mxu0
  %v11405 = vadd.f32 %v10924, %v11404
  %v11406 = vpop.f32.mrb[0].mxu0
  %v11407 = vpop.f32.mrb[0].mxu0
  %v11408 = vadd.f32 %v10924, %v11407
  %v11409 = vpop.f32.mrb[0].mxu0
  %11410 = vmatprep.mubr.bf16.mxu0 %v10881
  %11411 = vmatmul.mubr.bf16.gmra.mrb[0].mxu0 %v10880
  %v11412 = vpop.f32.mrb[0].mxu0
  %v11413 = vadd.f32 %v10924, %v11412
  %v11414 = vpop.f32.mrb[0].mxu0
  %v11415 = vpop.f32.mrb[0].mxu0
  %v11416 = vadd.f32 %v10924, %v11415
  %v11417 = vpop.f32.mrb[0].mxu0
  %11418 = vdwg.mxu0
  %11419 = vmatprep.subr.bf16.mxu0 0
  %11420 = vmatpush1.bf16.msra.mxu0 %v11014
  %11421 = vmatprep.subr.bf16.mxu0 0
  %11422 = vmatpush1.bf16.msra.mxu0 %v11015
  %11423 = vmatprep.subr.bf16.mxu0 0
  %11424 = vmatpush1.bf16.msra.mxu0 0
  %11425 = vmatprep.subr.bf16.mxu0 0
  %11426 = vmatpush1.bf16.msra.mxu0 0
  %11427 = vmatprep.subr.bf16.mxu0 0
  %11428 = vmatpush1.bf16.msra.mxu0 0
  %11429 = vmatprep.subr.bf16.mxu0 0
  %11430 = vmatpush1.bf16.msra.mxu0 0
  %11431 = vmatprep.subr.bf16.mxu0 0
  %11432 = vmatpush1.bf16.msra.mxu0 0
  %11433 = vmatprep.subr.bf16.mxu0 0
  %11434 = vmatpush1.bf16.msra.mxu0 0
  %11435 = vmatprep.subr.bf16.mxu0 0
  %11436 = vmatpush1.bf16.msra.mxu0 0
  %11437 = vmatprep.subr.bf16.mxu0 0
  %11438 = vmatpush1.bf16.msra.mxu0 0
  %11439 = vmatprep.subr.bf16.mxu0 0
  %11440 = vmatpush1.bf16.msra.mxu0 0
  %11441 = vmatprep.subr.bf16.mxu0 0
  %11442 = vmatpush1.bf16.msra.mxu0 0
  %11443 = vmatprep.subr.bf16.mxu0 0
  %11444 = vmatpush1.bf16.msra.mxu0 0
  %11445 = vmatprep.subr.bf16.mxu0 0
  %11446 = vmatpush1.bf16.msra.mxu0 0
  %11447 = vmatprep.subr.bf16.mxu0 0
  %11448 = vmatpush1.bf16.msra.mxu0 0
  %11449 = vmatprep.subr.bf16.mxu0 0
  %11450 = vmatpush1.bf16.msra.mxu0 0
  %11451 = vmatprep.mubr.bf16.mxu0 0
  %11452 = vmatmul.mubr.bf16.gmra.mrb[0].mxu0 %v11035
  %v11453 = vpop.f32.mrb[0].mxu0
  %v11454 = vadd.f32 %v11165, %v11453
  %v11455 = vpop.f32.mrb[0].mxu0
  %v11456 = vpop.f32.mrb[0].mxu0
  %v11457 = vadd.f32 %v11168, %v11456
  %v11458 = vpop.f32.mrb[0].mxu0
  %11459 = vmatprep.mubr.bf16.mxu0 0
  %11460 = vmatmul.mubr.bf16.gmra.mrb[0].mxu0 %v11038
  %v11461 = vpop.f32.mrb[0].mxu0
  %v11462 = vadd.f32 %v11173, %v11461
  %v11463 = vpop.f32.mrb[0].mxu0
  %v11464 = vpop.f32.mrb[0].mxu0
  %v11465 = vadd.f32 %v11176, %v11464
  %v11466 = vpop.f32.mrb[0].mxu0
  %11467 = vmatprep.mubr.bf16.mxu0 0
  %11468 = vmatmul.mubr.bf16.gmra.mrb[0].mxu0 %v11041
  %v11469 = vpop.f32.mrb[0].mxu0
  %v11470 = vadd.f32 %v11181, %v11469
  %v11471 = vpop.f32.mrb[0].mxu0
  %v11472 = vpop.f32.mrb[0].mxu0
  %v11473 = vadd.f32 %v11184, %v11472
  %v11474 = vpop.f32.mrb[0].mxu0
  %11475 = vmatprep.mubr.bf16.mxu0 0
  %11476 = vmatmul.mubr.bf16.gmra.mrb[0].mxu0 %v11044
  %v11477 = vpop.f32.mrb[0].mxu0
  %v11478 = vadd.f32 %v11189, %v11477
  %v11479 = vpop.f32.mrb[0].mxu0
  %v11480 = vpop.f32.mrb[0].mxu0
  %v11481 = vadd.f32 %v11192, %v11480
  %v11482 = vpop.f32.mrb[0].mxu0
  %11483 = vmatprep.mubr.bf16.mxu0 0
  %11484 = vmatmul.mubr.bf16.gmra.mrb[0].mxu0 %v11047
  %v11485 = vpop.f32.mrb[0].mxu0
  %v11486 = vadd.f32 %v11197, %v11485
  %v11487 = vpop.f32.mrb[0].mxu0
  %v11488 = vpop.f32.mrb[0].mxu0
  %v11489 = vadd.f32 %v11200, %v11488
  %v11490 = vpop.f32.mrb[0].mxu0
  %11491 = vmatprep.mubr.bf16.mxu0 0
  %11492 = vmatmul.mubr.bf16.gmra.mrb[0].mxu0 %v11050
  %v11493 = vpop.f32.mrb[0].mxu0
  %v11494 = vadd.f32 %v11205, %v11493
  %v11495 = vpop.f32.mrb[0].mxu0
  %v11496 = vpop.f32.mrb[0].mxu0
  %v11497 = vadd.f32 %v11208, %v11496
  %v11498 = vpop.f32.mrb[0].mxu0
  %11499 = vmatprep.mubr.bf16.mxu0 0
  %11500 = vmatmul.mubr.bf16.gmra.mrb[0].mxu0 %v11053
  %v11501 = vpop.f32.mrb[0].mxu0
  %v11502 = vadd.f32 %v11213, %v11501
  %v11503 = vpop.f32.mrb[0].mxu0
  %v11504 = vpop.f32.mrb[0].mxu0
  %v11505 = vadd.f32 %v11216, %v11504
  %v11506 = vpop.f32.mrb[0].mxu0
  %11507 = vmatprep.mubr.bf16.mxu0 0
  %11508 = vmatmul.mubr.bf16.gmra.mrb[0].mxu0 %v11056
  %v11509 = vpop.f32.mrb[0].mxu0
  %v11510 = vadd.f32 %v11221, %v11509
  %v11511 = vpop.f32.mrb[0].mxu0
  %v11512 = vpop.f32.mrb[0].mxu0
  %v11513 = vadd.f32 %v11224, %v11512
  %v11514 = vpop.f32.mrb[0].mxu0
  %11515 = vmatprep.mubr.bf16.mxu0 0
  %11516 = vmatmul.mubr.bf16.gmra.mrb[0].mxu0 %v11059
  %v11517 = vpop.f32.mrb[0].mxu0
  %v11518 = vadd.f32 %v11229, %v11517
  %v11519 = vpop.f32.mrb[0].mxu0
  %v11520 = vpop.f32.mrb[0].mxu0
  %v11521 = vadd.f32 %v11232, %v11520
  %v11522 = vpop.f32.mrb[0].mxu0
  %11523 = vmatprep.mubr.bf16.mxu0 0
  %11524 = vmatmul.mubr.bf16.gmra.mrb[0].mxu0 %v11062
  %v11525 = vpop.f32.mrb[0].mxu0
  %v11526 = vadd.f32 %v11237, %v11525
  %v11527 = vpop.f32.mrb[0].mxu0
  %v11528 = vpop.f32.mrb[0].mxu0
  %v11529 = vadd.f32 %v11240, %v11528
  %v11530 = vpop.f32.mrb[0].mxu0
  %11531 = vmatprep.mubr.bf16.mxu0 0
  %11532 = vmatmul.mubr.bf16.gmra.mrb[0].mxu0 %v11065
  %v11533 = vpop.f32.mrb[0].mxu0
  %v11534 = vadd.f32 %v11245, %v11533
  %v11535 = vpop.f32.mrb[0].mxu0
  %v11536 = vpop.f32.mrb[0].mxu0
  %v11537 = vadd.f32 %v11248, %v11536
  %v11538 = vpop.f32.mrb[0].mxu0
  %11539 = vmatprep.mubr.bf16.mxu0 0
  %11540 = vmatmul.mubr.bf16.gmra.mrb[0].mxu0 %v11068
  %v11541 = vpop.f32.mrb[0].mxu0
  %v11542 = vadd.f32 %v11253, %v11541
  %v11543 = vpop.f32.mrb[0].mxu0
  %v11544 = vpop.f32.mrb[0].mxu0
  %v11545 = vadd.f32 %v11256, %v11544
  %v11546 = vpop.f32.mrb[0].mxu0
  %11547 = vmatprep.mubr.bf16.mxu0 0
  %11548 = vmatmul.mubr.bf16.gmra.mrb[0].mxu0 %v11071
  %v11549 = vpop.f32.mrb[0].mxu0
  %v11550 = vadd.f32 %v11261, %v11549
  %v11551 = vpop.f32.mrb[0].mxu0
  %v11552 = vpop.f32.mrb[0].mxu0
  %v11553 = vadd.f32 %v11264, %v11552
  %v11554 = vpop.f32.mrb[0].mxu0
  %11555 = vmatprep.mubr.bf16.mxu0 0
  %11556 = vmatmul.mubr.bf16.gmra.mrb[0].mxu0 %v11074
  %v11557 = vpop.f32.mrb[0].mxu0
  %v11558 = vadd.f32 %v11269, %v11557
  %v11559 = vpop.f32.mrb[0].mxu0
  %v11560 = vpop.f32.mrb[0].mxu0
  %v11561 = vadd.f32 %v11272, %v11560
  %v11562 = vpop.f32.mrb[0].mxu0
  %11563 = vmatprep.mubr.bf16.mxu0 0
  %11564 = vmatmul.mubr.bf16.gmra.mrb[0].mxu0 %v11077
  %v11565 = vpop.f32.mrb[0].mxu0
  %v11566 = vadd.f32 %v11277, %v11565
  %v11567 = vpop.f32.mrb[0].mxu0
  %v11568 = vpop.f32.mrb[0].mxu0
  %v11569 = vadd.f32 %v11280, %v11568
  %v11570 = vpop.f32.mrb[0].mxu0
  %11571 = vmatprep.mubr.bf16.mxu0 0
  %11572 = vmatmul.mubr.bf16.gmra.mrb[0].mxu0 %v11080
  %v11573 = vpop.f32.mrb[0].mxu0
  %v11574 = vadd.f32 %v11285, %v11573
  %v11575 = vpop.f32.mrb[0].mxu0
  %v11576 = vpop.f32.mrb[0].mxu0
  %v11577 = vadd.f32 %v11288, %v11576
  %v11578 = vpop.f32.mrb[0].mxu0
  %11579 = vmatprep.mubr.bf16.mxu0 0
  %11580 = vmatmul.mubr.bf16.gmra.mrb[0].mxu0 %v11083
  %v11581 = vpop.f32.mrb[0].mxu0
  %v11582 = vadd.f32 %v11293, %v11581
  %v11583 = vpop.f32.mrb[0].mxu0
  %v11584 = vpop.f32.mrb[0].mxu0
  %v11585 = vadd.f32 %v11296, %v11584
  %v11586 = vpop.f32.mrb[0].mxu0
  %11587 = vmatprep.mubr.bf16.mxu0 0
  %11588 = vmatmul.mubr.bf16.gmra.mrb[0].mxu0 %v11086
  %v11589 = vpop.f32.mrb[0].mxu0
  %v11590 = vadd.f32 %v11301, %v11589
  %v11591 = vpop.f32.mrb[0].mxu0
  %v11592 = vpop.f32.mrb[0].mxu0
  %v11593 = vadd.f32 %v11304, %v11592
  %v11594 = vpop.f32.mrb[0].mxu0
  %11595 = vmatprep.mubr.bf16.mxu0 0
  %11596 = vmatmul.mubr.bf16.gmra.mrb[0].mxu0 %v11089
  %v11597 = vpop.f32.mrb[0].mxu0
  %v11598 = vadd.f32 %v11309, %v11597
  %v11599 = vpop.f32.mrb[0].mxu0
  %v11600 = vpop.f32.mrb[0].mxu0
  %v11601 = vadd.f32 %v11312, %v11600
  %v11602 = vpop.f32.mrb[0].mxu0
  %11603 = vmatprep.mubr.bf16.mxu0 0
  %11604 = vmatmul.mubr.bf16.gmra.mrb[0].mxu0 %v11092
  %v11605 = vpop.f32.mrb[0].mxu0
  %v11606 = vadd.f32 %v11317, %v11605
  %v11607 = vpop.f32.mrb[0].mxu0
  %v11608 = vpop.f32.mrb[0].mxu0
  %v11609 = vadd.f32 %v11320, %v11608
  %v11610 = vpop.f32.mrb[0].mxu0
  %11611 = vmatprep.mubr.bf16.mxu0 0
  %11612 = vmatmul.mubr.bf16.gmra.mrb[0].mxu0 %v11095
  %v11613 = vpop.f32.mrb[0].mxu0
  %v11614 = vadd.f32 %v11325, %v11613
  %v11615 = vpop.f32.mrb[0].mxu0
  %v11616 = vpop.f32.mrb[0].mxu0
  %v11617 = vadd.f32 %v11328, %v11616
  %v11618 = vpop.f32.mrb[0].mxu0
  %11619 = vmatprep.mubr.bf16.mxu0 0
  %11620 = vmatmul.mubr.bf16.gmra.mrb[0].mxu0 %v11098
  %v11621 = vpop.f32.mrb[0].mxu0
  %v11622 = vadd.f32 %v11333, %v11621
  %v11623 = vpop.f32.mrb[0].mxu0
  %v11624 = vpop.f32.mrb[0].mxu0
  %v11625 = vadd.f32 %v11336, %v11624
  %v11626 = vpop.f32.mrb[0].mxu0
  %11627 = vmatprep.mubr.bf16.mxu0 0
  %11628 = vmatmul.mubr.bf16.gmra.mrb[0].mxu0 %v11101
  %v11629 = vpop.f32.mrb[0].mxu0
  %v11630 = vadd.f32 %v11341, %v11629
  %v11631 = vpop.f32.mrb[0].mxu0
  %v11632 = vpop.f32.mrb[0].mxu0
  %v11633 = vadd.f32 %v11344, %v11632
  %v11634 = vpop.f32.mrb[0].mxu0
  %11635 = vmatprep.mubr.bf16.mxu0 0
  %11636 = vmatmul.mubr.bf16.gmra.mrb[0].mxu0 %v11104
  %v11637 = vpop.f32.mrb[0].mxu0
  %v11638 = vadd.f32 %v11349, %v11637
  %v11639 = vpop.f32.mrb[0].mxu0
  %v11640 = vpop.f32.mrb[0].mxu0
  %v11641 = vadd.f32 %v11352, %v11640
  %v11642 = vpop.f32.mrb[0].mxu0
  %11643 = vmatprep.mubr.bf16.mxu0 0
  %11644 = vmatmul.mubr.bf16.gmra.mrb[0].mxu0 %v11107
  %v11645 = vpop.f32.mrb[0].mxu0
  %v11646 = vadd.f32 %v11357, %v11645
  %v11647 = vpop.f32.mrb[0].mxu0
  %v11648 = vpop.f32.mrb[0].mxu0
  %v11649 = vadd.f32 %v11360, %v11648
  %v11650 = vpop.f32.mrb[0].mxu0
  %11651 = vmatprep.mubr.bf16.mxu0 0
  %11652 = vmatmul.mubr.bf16.gmra.mrb[0].mxu0 %v11110
  %v11653 = vpop.f32.mrb[0].mxu0
  %v11654 = vadd.f32 %v11365, %v11653
  %v11655 = vpop.f32.mrb[0].mxu0
  %v11656 = vpop.f32.mrb[0].mxu0
  %v11657 = vadd.f32 %v11368, %v11656
  %v11658 = vpop.f32.mrb[0].mxu0
  %11659 = vmatprep.mubr.bf16.mxu0 0
  %11660 = vmatmul.mubr.bf16.gmra.mrb[0].mxu0 %v11113
  %v11661 = vpop.f32.mrb[0].mxu0
  %v11662 = vadd.f32 %v11373, %v11661
  %v11663 = vpop.f32.mrb[0].mxu0
  %v11664 = vpop.f32.mrb[0].mxu0
  %v11665 = vadd.f32 %v11376, %v11664
  %v11666 = vpop.f32.mrb[0].mxu0
  %11667 = vmatprep.mubr.bf16.mxu0 0
  %11668 = vmatmul.mubr.bf16.gmra.mrb[0].mxu0 %v11116
  %v11669 = vpop.f32.mrb[0].mxu0
  %v11670 = vadd.f32 %v11381, %v11669
  %v11671 = vpop.f32.mrb[0].mxu0
  %v11672 = vpop.f32.mrb[0].mxu0
  %v11673 = vadd.f32 %v11384, %v11672
  %v11674 = vpop.f32.mrb[0].mxu0
  %11675 = vmatprep.mubr.bf16.mxu0 0
  %11676 = vmatmul.mubr.bf16.gmra.mrb[0].mxu0 %v11119
  %v11677 = vpop.f32.mrb[0].mxu0
  %v11678 = vadd.f32 %v11389, %v11677
  %v11679 = vpop.f32.mrb[0].mxu0
  %v11680 = vpop.f32.mrb[0].mxu0
  %v11681 = vadd.f32 %v11392, %v11680
  %v11682 = vpop.f32.mrb[0].mxu0
  %11683 = vmatprep.mubr.bf16.mxu0 0
  %11684 = vmatmul.mubr.bf16.gmra.mrb[0].mxu0 %v11122
  %v11685 = vpop.f32.mrb[0].mxu0
  %v11686 = vadd.f32 %v11397, %v11685
  %v11687 = vpop.f32.mrb[0].mxu0
  %v11688 = vpop.f32.mrb[0].mxu0
  %v11689 = vadd.f32 %v11400, %v11688
  %v11690 = vpop.f32.mrb[0].mxu0
  %11691 = vmatprep.mubr.bf16.mxu0 0
  %11692 = vmatmul.mubr.bf16.gmra.mrb[0].mxu0 %v11125
  %v11693 = vpop.f32.mrb[0].mxu0
  %v11694 = vadd.f32 %v11405, %v11693
  %v11695 = vpop.f32.mrb[0].mxu0
  %v11696 = vpop.f32.mrb[0].mxu0
  %v11697 = vadd.f32 %v11408, %v11696
  %v11698 = vpop.f32.mrb[0].mxu0
  %11699 = vmatprep.mubr.bf16.mxu0 0
  %11700 = vmatmul.mubr.bf16.gmra.mrb[0].mxu0 %v11128
  %v11701 = vpop.f32.mrb[0].mxu0
  %v11702 = vadd.f32 %v11413, %v11701
  %v11703 = vpop.f32.mrb[0].mxu0
  %v11704 = vpop.f32.mrb[0].mxu0
  %v11705 = vadd.f32 %v11416, %v11704
  %v11706 = vpop.f32.mrb[0].mxu0
  %11707 = vdwg.mxu0
  %v11708 = vld [vmem:[%s5] sm:$0xf]
  %v11709 = vld [vmem:[%s5 + $0x4] sm:$0xf]
  %v11710 = vld [vmem:[%s5 + $0x8] sm:$0xf]
  %v11711 = vld [vmem:[%s5 + $0xc] sm:$0xf]
  %v11712 = vld [vmem:[%s5 + $0x10] sm:$0xf]
  %v11713 = vld [vmem:[%s5 + $0x14] sm:$0xf]
  %v11714 = vld [vmem:[%s5 + $0x18] sm:$0xf]
  %v11715 = vld [vmem:[%s5 + $0x1c] sm:$0xf]
  %v11716 = vld [vmem:[%s5 + $0x20] sm:$0xf]
  %v11717 = vld [vmem:[%s5 + $0x24] sm:$0xf]
  %v11718 = vld [vmem:[%s5 + $0x28] sm:$0xf]
  %v11719 = vld [vmem:[%s5 + $0x2c] sm:$0xf]
  %v11720 = vld [vmem:[%s5 + $0x30] sm:$0xf]
  %v11721 = vld [vmem:[%s5 + $0x34] sm:$0xf]
  %v11722 = vld [vmem:[%s5 + $0x38] sm:$0xf]
  %v11723 = vld [vmem:[%s5 + $0x3c] sm:$0xf]
  %v11724 = vld [vmem:[%s5 + $0x40] sm:$0xf]
  %v11725 = vld [vmem:[%s5 + $0x44] sm:$0xf]
  %v11726 = vld [vmem:[%s5 + $0x48] sm:$0xf]
  %v11727 = vld [vmem:[%s5 + $0x4c] sm:$0xf]
  %v11728 = vld [vmem:[%s5 + $0x50] sm:$0xf]
  %v11729 = vld [vmem:[%s5 + $0x54] sm:$0xf]
  %v11730 = vld [vmem:[%s5 + $0x58] sm:$0xf]
  %v11731 = vld [vmem:[%s5 + $0x5c] sm:$0xf]
  %v11732 = vld [vmem:[%s5 + $0x60] sm:$0xf]
  %v11733 = vld [vmem:[%s5 + $0x64] sm:$0xf]
  %v11734 = vld [vmem:[%s5 + $0x68] sm:$0xf]
  %v11735 = vld [vmem:[%s5 + $0x6c] sm:$0xf]
  %v11736 = vld [vmem:[%s5 + $0x70] sm:$0xf]
  %v11737 = vld [vmem:[%s5 + $0x74] sm:$0xf]
  %v11738 = vld [vmem:[%s5 + $0x78] sm:$0xf]
  %v11739 = vld [vmem:[%s5 + $0x7c] sm:$0xf]
  %v11740 = vld [vmem:[%s5 + $0x80] sm:$0xf]
  %v11741 = vld [vmem:[%s5 + $0x84] sm:$0xf]
  %v11742 = vld [vmem:[%s5 + $0x88] sm:$0xf]
  %v11743 = vld [vmem:[%s5 + $0x8c] sm:$0xf]
  %v11744 = vld [vmem:[%s7] sm:$0x1]
  %v11746 = vlaneseq
  %v11747 = vshrl.u32 %v11746, 7
  %v11748 = vsub.s32 0, %v11747
  %v11749 = vrot.slane %v11744, %v11748
  %v11787 = vunpack.c.l.b16 %v11708
  %v11788 = vunpack.c.l.b16 %v11709
  %v11789 = vunpack.c.l.b16 %v11710
  %v11790 = vunpack.c.l.b16 %v11711
  %v11791 = vunpack.c.l.b16 %v11712
  %v11792 = vunpack.c.l.b16 %v11713
  %v11793 = vunpack.c.l.b16 %v11714
  %v11794 = vunpack.c.l.b16 %v11715
  %v11795 = vunpack.c.l.b16 %v11716
  %v11796 = vunpack.c.l.b16 %v11717
  %v11797 = vunpack.c.l.b16 %v11718
  %v11798 = vunpack.c.l.b16 %v11719
  %v11799 = vunpack.c.l.b16 %v11720
  %v11800 = vunpack.c.l.b16 %v11721
  %v11801 = vunpack.c.l.b16 %v11722
  %v11802 = vunpack.c.l.b16 %v11723
  %v11803 = vunpack.c.l.b16 %v11724
  %v11804 = vunpack.c.l.b16 %v11725
  %v11805 = vunpack.c.l.b16 %v11726
  %v11806 = vunpack.c.l.b16 %v11727
  %v11807 = vunpack.c.l.b16 %v11728
  %v11808 = vunpack.c.l.b16 %v11729
  %v11809 = vunpack.c.l.b16 %v11730
  %v11810 = vunpack.c.l.b16 %v11731
  %v11811 = vunpack.c.l.b16 %v11732
  %v11812 = vunpack.c.l.b16 %v11733
  %v11813 = vunpack.c.l.b16 %v11734
  %v11814 = vunpack.c.l.b16 %v11735
  %v11815 = vunpack.c.l.b16 %v11736
  %v11816 = vunpack.c.l.b16 %v11737
  %v11817 = vunpack.c.l.b16 %v11738
  %v11818 = vunpack.c.l.b16 %v11739
  %v11819 = vunpack.c.l.b16 %v11740
  %v11820 = vunpack.c.l.b16 %v11741
  %v11821 = vunpack.c.l.b16 %v11742
  %v11822 = vunpack.c.l.b16 %v11743
  %v11823 = vpack.c.b16 %v11788, %v11787
  %v11824 = vpack.c.b16 %v11790, %v11789
  %v11825 = vpack.c.b16 %v11792, %v11791
  %v11826 = vpack.c.b16 %v11794, %v11793
  %v11827 = vpack.c.b16 %v11796, %v11795
  %v11828 = vpack.c.b16 %v11798, %v11797
  %v11829 = vpack.c.b16 %v11800, %v11799
  %v11830 = vpack.c.b16 %v11802, %v11801
  %v11831 = vpack.c.b16 %v11804, %v11803
  %v11832 = vpack.c.b16 %v11806, %v11805
  %v11833 = vpack.c.b16 %v11808, %v11807
  %v11834 = vpack.c.b16 %v11810, %v11809
  %v11835 = vpack.c.b16 %v11812, %v11811
  %v11836 = vpack.c.b16 %v11814, %v11813
  %v11837 = vpack.c.b16 %v11816, %v11815
  %v11838 = vpack.c.b16 %v11818, %v11817
  %v11839 = vpack.c.b16 %v11820, %v11819
  %v11840 = vpack.c.b16 %v11822, %v11821
  %11859 = vmatprep.subr.bf16.mxu0 0
  %11860 = vmatpush1.bf16.msra.mxu0 %v11823
  %11861 = vmatprep.subr.bf16.mxu0 0
  %11862 = vmatpush1.bf16.msra.mxu0 %v11824
  %11863 = vmatprep.subr.bf16.mxu0 0
  %11864 = vmatpush1.bf16.msra.mxu0 %v11825
  %11865 = vmatprep.subr.bf16.mxu0 0
  %11866 = vmatpush1.bf16.msra.mxu0 %v11826
  %11867 = vmatprep.subr.bf16.mxu0 0
  %11868 = vmatpush1.bf16.msra.mxu0 %v11827
  %11869 = vmatprep.subr.bf16.mxu0 0
  %11870 = vmatpush1.bf16.msra.mxu0 %v11828
  %11871 = vmatprep.subr.bf16.mxu0 0
  %11872 = vmatpush1.bf16.msra.mxu0 %v11829
  %11873 = vmatprep.subr.bf16.mxu0 0
  %11874 = vmatpush1.bf16.msra.mxu0 %v11830
  %11875 = vmatprep.subr.bf16.mxu0 0
  %11876 = vmatpush1.bf16.msra.mxu0 %v11831
  %11877 = vmatprep.subr.bf16.mxu0 0
  %11878 = vmatpush1.bf16.msra.mxu0 %v11832
  %11879 = vmatprep.subr.bf16.mxu0 0
  %11880 = vmatpush1.bf16.msra.mxu0 %v11833
  %11881 = vmatprep.subr.bf16.mxu0 0
  %11882 = vmatpush1.bf16.msra.mxu0 %v11834
  %11883 = vmatprep.subr.bf16.mxu0 0
  %11884 = vmatpush1.bf16.msra.mxu0 %v11835
  %11885 = vmatprep.subr.bf16.mxu0 0
  %11886 = vmatpush1.bf16.msra.mxu0 %v11836
  %11887 = vmatprep.subr.bf16.mxu0 0
  %11888 = vmatpush1.bf16.msra.mxu0 %v11837
  %11889 = vmatprep.subr.bf16.mxu0 0
  %11890 = vmatpush1.bf16.msra.mxu0 %v11838
  %11891 = vmatprep.mubr.bf16.mxu0 %v10788
  %11892 = vmatmul.mubr.bf16.gmra.mrb[0].mxu0 %v10787
  %v11893 = vpop.f32.mrb[0].mxu0
  %v11894 = vadd.f32 %v11749, %v11893
  %v11895 = vpop.f32.mrb[0].mxu0
  %v11896 = vpop.f32.mrb[0].mxu0
  %v11897 = vadd.f32 %v11749, %v11896
  %v11898 = vpop.f32.mrb[0].mxu0
  %11899 = vmatprep.mubr.bf16.mxu0 %v10791
  %11900 = vmatmul.mubr.bf16.gmra.mrb[0].mxu0 %v10790
  %v11901 = vpop.f32.mrb[0].mxu0
  %v11902 = vadd.f32 %v11749, %v11901
  %v11903 = vpop.f32.mrb[0].mxu0
  %v11904 = vpop.f32.mrb[0].mxu0
  %v11905 = vadd.f32 %v11749, %v11904
  %v11906 = vpop.f32.mrb[0].mxu0
  %11907 = vmatprep.mubr.bf16.mxu0 %v10794
  %11908 = vmatmul.mubr.bf16.gmra.mrb[0].mxu0 %v10793
  %v11909 = vpop.f32.mrb[0].mxu0
  %v11910 = vadd.f32 %v11749, %v11909
  %v11911 = vpop.f32.mrb[0].mxu0
  %v11912 = vpop.f32.mrb[0].mxu0
  %v11913 = vadd.f32 %v11749, %v11912
  %v11914 = vpop.f32.mrb[0].mxu0
  %11915 = vmatprep.mubr.bf16.mxu0 %v10797
  %11916 = vmatmul.mubr.bf16.gmra.mrb[0].mxu0 %v10796
  %v11917 = vpop.f32.mrb[0].mxu0
  %v11918 = vadd.f32 %v11749, %v11917
  %v11919 = vpop.f32.mrb[0].mxu0
  %v11920 = vpop.f32.mrb[0].mxu0
  %v11921 = vadd.f32 %v11749, %v11920
  %v11922 = vpop.f32.mrb[0].mxu0
  %11923 = vmatprep.mubr.bf16.mxu0 %v10800
  %11924 = vmatmul.mubr.bf16.gmra.mrb[0].mxu0 %v10799
  %v11925 = vpop.f32.mrb[0].mxu0
  %v11926 = vadd.f32 %v11749, %v11925
  %v11927 = vpop.f32.mrb[0].mxu0
  %v11928 = vpop.f32.mrb[0].mxu0
  %v11929 = vadd.f32 %v11749, %v11928
  %v11930 = vpop.f32.mrb[0].mxu0
  %11931 = vmatprep.mubr.bf16.mxu0 %v10803
  %11932 = vmatmul.mubr.bf16.gmra.mrb[0].mxu0 %v10802
  %v11933 = vpop.f32.mrb[0].mxu0
  %v11934 = vadd.f32 %v11749, %v11933
  %v11935 = vpop.f32.mrb[0].mxu0
  %v11936 = vpop.f32.mrb[0].mxu0
  %v11937 = vadd.f32 %v11749, %v11936
  %v11938 = vpop.f32.mrb[0].mxu0
  %11939 = vmatprep.mubr.bf16.mxu0 %v10806
  %11940 = vmatmul.mubr.bf16.gmra.mrb[0].mxu0 %v10805
  %v11941 = vpop.f32.mrb[0].mxu0
  %v11942 = vadd.f32 %v11749, %v11941
  %v11943 = vpop.f32.mrb[0].mxu0
  %v11944 = vpop.f32.mrb[0].mxu0
  %v11945 = vadd.f32 %v11749, %v11944
  %v11946 = vpop.f32.mrb[0].mxu0
  %11947 = vmatprep.mubr.bf16.mxu0 %v10809
  %11948 = vmatmul.mubr.bf16.gmra.mrb[0].mxu0 %v10808
  %v11949 = vpop.f32.mrb[0].mxu0
  %v11950 = vadd.f32 %v11749, %v11949
  %v11951 = vpop.f32.mrb[0].mxu0
  %v11952 = vpop.f32.mrb[0].mxu0
  %v11953 = vadd.f32 %v11749, %v11952
  %v11954 = vpop.f32.mrb[0].mxu0
  %11955 = vmatprep.mubr.bf16.mxu0 %v10812
  %11956 = vmatmul.mubr.bf16.gmra.mrb[0].mxu0 %v10811
  %v11957 = vpop.f32.mrb[0].mxu0
  %v11958 = vadd.f32 %v11749, %v11957
  %v11959 = vpop.f32.mrb[0].mxu0
  %v11960 = vpop.f32.mrb[0].mxu0
  %v11961 = vadd.f32 %v11749, %v11960
  %v11962 = vpop.f32.mrb[0].mxu0
  %11963 = vmatprep.mubr.bf16.mxu0 %v10815
  %11964 = vmatmul.mubr.bf16.gmra.mrb[0].mxu0 %v10814
  %v11965 = vpop.f32.mrb[0].mxu0
  %v11966 = vadd.f32 %v11749, %v11965
  %v11967 = vpop.f32.mrb[0].mxu0
  %v11968 = vpop.f32.mrb[0].mxu0
  %v11969 = vadd.f32 %v11749, %v11968
  %v11970 = vpop.f32.mrb[0].mxu0
  %11971 = vmatprep.mubr.bf16.mxu0 %v10818
  %11972 = vmatmul.mubr.bf16.gmra.mrb[0].mxu0 %v10817
  %v11973 = vpop.f32.mrb[0].mxu0
  %v11974 = vadd.f32 %v11749, %v11973
  %v11975 = vpop.f32.mrb[0].mxu0
  %v11976 = vpop.f32.mrb[0].mxu0
  %v11977 = vadd.f32 %v11749, %v11976
  %v11978 = vpop.f32.mrb[0].mxu0
  %11979 = vmatprep.mubr.bf16.mxu0 %v10821
  %11980 = vmatmul.mubr.bf16.gmra.mrb[0].mxu0 %v10820
  %v11981 = vpop.f32.mrb[0].mxu0
  %v11982 = vadd.f32 %v11749, %v11981
  %v11983 = vpop.f32.mrb[0].mxu0
  %v11984 = vpop.f32.mrb[0].mxu0
  %v11985 = vadd.f32 %v11749, %v11984
  %v11986 = vpop.f32.mrb[0].mxu0
  %11987 = vmatprep.mubr.bf16.mxu0 %v10824
  %11988 = vmatmul.mubr.bf16.gmra.mrb[0].mxu0 %v10823
  %v11989 = vpop.f32.mrb[0].mxu0
  %v11990 = vadd.f32 %v11749, %v11989
  %v11991 = vpop.f32.mrb[0].mxu0
  %v11992 = vpop.f32.mrb[0].mxu0
  %v11993 = vadd.f32 %v11749, %v11992
  %v11994 = vpop.f32.mrb[0].mxu0
  %11995 = vmatprep.mubr.bf16.mxu0 %v10827
  %11996 = vmatmul.mubr.bf16.gmra.mrb[0].mxu0 %v10826
  %v11997 = vpop.f32.mrb[0].mxu0
  %v11998 = vadd.f32 %v11749, %v11997
  %v11999 = vpop.f32.mrb[0].mxu0
  %v12000 = vpop.f32.mrb[0].mxu0
  %v12001 = vadd.f32 %v11749, %v12000
  %v12002 = vpop.f32.mrb[0].mxu0
  %12003 = vmatprep.mubr.bf16.mxu0 %v10830
  %12004 = vmatmul.mubr.bf16.gmra.mrb[0].mxu0 %v10829
  %v12005 = vpop.f32.mrb[0].mxu0
  %v12006 = vadd.f32 %v11749, %v12005
  %v12007 = vpop.f32.mrb[0].mxu0
  %v12008 = vpop.f32.mrb[0].mxu0
  %v12009 = vadd.f32 %v11749, %v12008
  %v12010 = vpop.f32.mrb[0].mxu0
  %12011 = vmatprep.mubr.bf16.mxu0 %v10833
  %12012 = vmatmul.mubr.bf16.gmra.mrb[0].mxu0 %v10832
  %v12013 = vpop.f32.mrb[0].mxu0
  %v12014 = vadd.f32 %v11749, %v12013
  %v12015 = vpop.f32.mrb[0].mxu0
  %v12016 = vpop.f32.mrb[0].mxu0
  %v12017 = vadd.f32 %v11749, %v12016
  %v12018 = vpop.f32.mrb[0].mxu0
  %12019 = vmatprep.mubr.bf16.mxu0 %v10836
  %12020 = vmatmul.mubr.bf16.gmra.mrb[0].mxu0 %v10835
  %v12021 = vpop.f32.mrb[0].mxu0
  %v12022 = vadd.f32 %v11749, %v12021
  %v12023 = vpop.f32.mrb[0].mxu0
  %v12024 = vpop.f32.mrb[0].mxu0
  %v12025 = vadd.f32 %v11749, %v12024
  %v12026 = vpop.f32.mrb[0].mxu0
  %12027 = vmatprep.mubr.bf16.mxu0 %v10839
  %12028 = vmatmul.mubr.bf16.gmra.mrb[0].mxu0 %v10838
  %v12029 = vpop.f32.mrb[0].mxu0
  %v12030 = vadd.f32 %v11749, %v12029
  %v12031 = vpop.f32.mrb[0].mxu0
  %v12032 = vpop.f32.mrb[0].mxu0
  %v12033 = vadd.f32 %v11749, %v12032
  %v12034 = vpop.f32.mrb[0].mxu0
  %12035 = vmatprep.mubr.bf16.mxu0 %v10842
  %12036 = vmatmul.mubr.bf16.gmra.mrb[0].mxu0 %v10841
  %v12037 = vpop.f32.mrb[0].mxu0
  %v12038 = vadd.f32 %v11749, %v12037
  %v12039 = vpop.f32.mrb[0].mxu0
  %v12040 = vpop.f32.mrb[0].mxu0
  %v12041 = vadd.f32 %v11749, %v12040
  %v12042 = vpop.f32.mrb[0].mxu0
  %12043 = vmatprep.mubr.bf16.mxu0 %v10845
  %12044 = vmatmul.mubr.bf16.gmra.mrb[0].mxu0 %v10844
  %v12045 = vpop.f32.mrb[0].mxu0
  %v12046 = vadd.f32 %v11749, %v12045
  %v12047 = vpop.f32.mrb[0].mxu0
  %v12048 = vpop.f32.mrb[0].mxu0
  %v12049 = vadd.f32 %v11749, %v12048
  %v12050 = vpop.f32.mrb[0].mxu0
  %12051 = vmatprep.mubr.bf16.mxu0 %v10848
  %12052 = vmatmul.mubr.bf16.gmra.mrb[0].mxu0 %v10847
  %v12053 = vpop.f32.mrb[0].mxu0
  %v12054 = vadd.f32 %v11749, %v12053
  %v12055 = vpop.f32.mrb[0].mxu0
  %v12056 = vpop.f32.mrb[0].mxu0
  %v12057 = vadd.f32 %v11749, %v12056
  %v12058 = vpop.f32.mrb[0].mxu0
  %12059 = vmatprep.mubr.bf16.mxu0 %v10851
  %12060 = vmatmul.mubr.bf16.gmra.mrb[0].mxu0 %v10850
  %v12061 = vpop.f32.mrb[0].mxu0
  %v12062 = vadd.f32 %v11749, %v12061
  %v12063 = vpop.f32.mrb[0].mxu0
  %v12064 = vpop.f32.mrb[0].mxu0
  %v12065 = vadd.f32 %v11749, %v12064
  %v12066 = vpop.f32.mrb[0].mxu0
  %12067 = vmatprep.mubr.bf16.mxu0 %v10854
  %12068 = vmatmul.mubr.bf16.gmra.mrb[0].mxu0 %v10853
  %v12069 = vpop.f32.mrb[0].mxu0
  %v12070 = vadd.f32 %v11749, %v12069
  %v12071 = vpop.f32.mrb[0].mxu0
  %v12072 = vpop.f32.mrb[0].mxu0
  %v12073 = vadd.f32 %v11749, %v12072
  %v12074 = vpop.f32.mrb[0].mxu0
  %12075 = vmatprep.mubr.bf16.mxu0 %v10857
  %12076 = vmatmul.mubr.bf16.gmra.mrb[0].mxu0 %v10856
  %v12077 = vpop.f32.mrb[0].mxu0
  %v12078 = vadd.f32 %v11749, %v12077
  %v12079 = vpop.f32.mrb[0].mxu0
  %v12080 = vpop.f32.mrb[0].mxu0
  %v12081 = vadd.f32 %v11749, %v12080
  %v12082 = vpop.f32.mrb[0].mxu0
  %12083 = vmatprep.mubr.bf16.mxu0 %v10860
  %12084 = vmatmul.mubr.bf16.gmra.mrb[0].mxu0 %v10859
  %v12085 = vpop.f32.mrb[0].mxu0
  %v12086 = vadd.f32 %v11749, %v12085
  %v12087 = vpop.f32.mrb[0].mxu0
  %v12088 = vpop.f32.mrb[0].mxu0
  %v12089 = vadd.f32 %v11749, %v12088
  %v12090 = vpop.f32.mrb[0].mxu0
  %12091 = vmatprep.mubr.bf16.mxu0 %v10863
  %12092 = vmatmul.mubr.bf16.gmra.mrb[0].mxu0 %v10862
  %v12093 = vpop.f32.mrb[0].mxu0
  %v12094 = vadd.f32 %v11749, %v12093
  %v12095 = vpop.f32.mrb[0].mxu0
  %v12096 = vpop.f32.mrb[0].mxu0
  %v12097 = vadd.f32 %v11749, %v12096
  %v12098 = vpop.f32.mrb[0].mxu0
  %12099 = vmatprep.mubr.bf16.mxu0 %v10866
  %12100 = vmatmul.mubr.bf16.gmra.mrb[0].mxu0 %v10865
  %v12101 = vpop.f32.mrb[0].mxu0
  %v12102 = vadd.f32 %v11749, %v12101
  %v12103 = vpop.f32.mrb[0].mxu0
  %v12104 = vpop.f32.mrb[0].mxu0
  %v12105 = vadd.f32 %v11749, %v12104
  %v12106 = vpop.f32.mrb[0].mxu0
  %12107 = vmatprep.mubr.bf16.mxu0 %v10869
  %12108 = vmatmul.mubr.bf16.gmra.mrb[0].mxu0 %v10868
  %v12109 = vpop.f32.mrb[0].mxu0
  %v12110 = vadd.f32 %v11749, %v12109
  %v12111 = vpop.f32.mrb[0].mxu0
  %v12112 = vpop.f32.mrb[0].mxu0
  %v12113 = vadd.f32 %v11749, %v12112
  %v12114 = vpop.f32.mrb[0].mxu0
  %12115 = vmatprep.mubr.bf16.mxu0 %v10872
  %12116 = vmatmul.mubr.bf16.gmra.mrb[0].mxu0 %v10871
  %v12117 = vpop.f32.mrb[0].mxu0
  %v12118 = vadd.f32 %v11749, %v12117
  %v12119 = vpop.f32.mrb[0].mxu0
  %v12120 = vpop.f32.mrb[0].mxu0
  %v12121 = vadd.f32 %v11749, %v12120
  %v12122 = vpop.f32.mrb[0].mxu0
  %12123 = vmatprep.mubr.bf16.mxu0 %v10875
  %12124 = vmatmul.mubr.bf16.gmra.mrb[0].mxu0 %v10874
  %v12125 = vpop.f32.mrb[0].mxu0
  %v12126 = vadd.f32 %v11749, %v12125
  %v12127 = vpop.f32.mrb[0].mxu0
  %v12128 = vpop.f32.mrb[0].mxu0
  %v12129 = vadd.f32 %v11749, %v12128
  %v12130 = vpop.f32.mrb[0].mxu0
  %12131 = vmatprep.mubr.bf16.mxu0 %v10878
  %12132 = vmatmul.mubr.bf16.gmra.mrb[0].mxu0 %v10877
  %v12133 = vpop.f32.mrb[0].mxu0
  %v12134 = vadd.f32 %v11749, %v12133
  %v12135 = vpop.f32.mrb[0].mxu0
  %v12136 = vpop.f32.mrb[0].mxu0
  %v12137 = vadd.f32 %v11749, %v12136
  %v12138 = vpop.f32.mrb[0].mxu0
  %12139 = vmatprep.mubr.bf16.mxu0 %v10881
  %12140 = vmatmul.mubr.bf16.gmra.mrb[0].mxu0 %v10880
  %v12141 = vpop.f32.mrb[0].mxu0
  %v12142 = vadd.f32 %v11749, %v12141
  %v12143 = vpop.f32.mrb[0].mxu0
  %v12144 = vpop.f32.mrb[0].mxu0
  %v12145 = vadd.f32 %v11749, %v12144
  %v12146 = vpop.f32.mrb[0].mxu0
  %12147 = vdwg.mxu0
  %12148 = vmatprep.subr.bf16.mxu0 0
  %12149 = vmatpush1.bf16.msra.mxu0 %v11839
  %12150 = vmatprep.subr.bf16.mxu0 0
  %12151 = vmatpush1.bf16.msra.mxu0 %v11840
  %12152 = vmatprep.subr.bf16.mxu0 0
  %12153 = vmatpush1.bf16.msra.mxu0 0
  %12154 = vmatprep.subr.bf16.mxu0 0
  %12155 = vmatpush1.bf16.msra.mxu0 0
  %12156 = vmatprep.subr.bf16.mxu0 0
  %12157 = vmatpush1.bf16.msra.mxu0 0
  %12158 = vmatprep.subr.bf16.mxu0 0
  %12159 = vmatpush1.bf16.msra.mxu0 0
  %12160 = vmatprep.subr.bf16.mxu0 0
  %12161 = vmatpush1.bf16.msra.mxu0 0
  %12162 = vmatprep.subr.bf16.mxu0 0
  %12163 = vmatpush1.bf16.msra.mxu0 0
  %12164 = vmatprep.subr.bf16.mxu0 0
  %12165 = vmatpush1.bf16.msra.mxu0 0
  %12166 = vmatprep.subr.bf16.mxu0 0
  %12167 = vmatpush1.bf16.msra.mxu0 0
  %12168 = vmatprep.subr.bf16.mxu0 0
  %12169 = vmatpush1.bf16.msra.mxu0 0
  %12170 = vmatprep.subr.bf16.mxu0 0
  %12171 = vmatpush1.bf16.msra.mxu0 0
  %12172 = vmatprep.subr.bf16.mxu0 0
  %12173 = vmatpush1.bf16.msra.mxu0 0
  %12174 = vmatprep.subr.bf16.mxu0 0
  %12175 = vmatpush1.bf16.msra.mxu0 0
  %12176 = vmatprep.subr.bf16.mxu0 0
  %12177 = vmatpush1.bf16.msra.mxu0 0
  %12178 = vmatprep.subr.bf16.mxu0 0
  %12179 = vmatpush1.bf16.msra.mxu0 0
  %12180 = vmatprep.mubr.bf16.mxu0 0
  %12181 = vmatmul.mubr.bf16.gmra.mrb[0].mxu0 %v11035
  %v12182 = vpop.f32.mrb[0].mxu0
  %v12183 = vadd.f32 %v11894, %v12182
  %v12184 = vpop.f32.mrb[0].mxu0
  %v12185 = vpop.f32.mrb[0].mxu0
  %v12186 = vadd.f32 %v11897, %v12185
  %v12187 = vpop.f32.mrb[0].mxu0
  %12188 = vmatprep.mubr.bf16.mxu0 0
  %12189 = vmatmul.mubr.bf16.gmra.mrb[0].mxu0 %v11038
  %v12190 = vpop.f32.mrb[0].mxu0
  %v12191 = vadd.f32 %v11902, %v12190
  %v12192 = vpop.f32.mrb[0].mxu0
  %v12193 = vpop.f32.mrb[0].mxu0
  %v12194 = vadd.f32 %v11905, %v12193
  %v12195 = vpop.f32.mrb[0].mxu0
  %12196 = vmatprep.mubr.bf16.mxu0 0
  %12197 = vmatmul.mubr.bf16.gmra.mrb[0].mxu0 %v11041
  %v12198 = vpop.f32.mrb[0].mxu0
  %v12199 = vadd.f32 %v11910, %v12198
  %v12200 = vpop.f32.mrb[0].mxu0
  %v12201 = vpop.f32.mrb[0].mxu0
  %v12202 = vadd.f32 %v11913, %v12201
  %v12203 = vpop.f32.mrb[0].mxu0
  %12204 = vmatprep.mubr.bf16.mxu0 0
  %12205 = vmatmul.mubr.bf16.gmra.mrb[0].mxu0 %v11044
  %v12206 = vpop.f32.mrb[0].mxu0
  %v12207 = vadd.f32 %v11918, %v12206
  %v12208 = vpop.f32.mrb[0].mxu0
  %v12209 = vpop.f32.mrb[0].mxu0
  %v12210 = vadd.f32 %v11921, %v12209
  %v12211 = vpop.f32.mrb[0].mxu0
  %12212 = vmatprep.mubr.bf16.mxu0 0
  %12213 = vmatmul.mubr.bf16.gmra.mrb[0].mxu0 %v11047
  %v12214 = vpop.f32.mrb[0].mxu0
  %v12215 = vadd.f32 %v11926, %v12214
  %v12216 = vpop.f32.mrb[0].mxu0
  %v12217 = vpop.f32.mrb[0].mxu0
  %v12218 = vadd.f32 %v11929, %v12217
  %v12219 = vpop.f32.mrb[0].mxu0
  %12220 = vmatprep.mubr.bf16.mxu0 0
  %12221 = vmatmul.mubr.bf16.gmra.mrb[0].mxu0 %v11050
  %v12222 = vpop.f32.mrb[0].mxu0
  %v12223 = vadd.f32 %v11934, %v12222
  %v12224 = vpop.f32.mrb[0].mxu0
  %v12225 = vpop.f32.mrb[0].mxu0
  %v12226 = vadd.f32 %v11937, %v12225
  %v12227 = vpop.f32.mrb[0].mxu0
  %12228 = vmatprep.mubr.bf16.mxu0 0
  %12229 = vmatmul.mubr.bf16.gmra.mrb[0].mxu0 %v11053
  %v12230 = vpop.f32.mrb[0].mxu0
  %v12231 = vadd.f32 %v11942, %v12230
  %v12232 = vpop.f32.mrb[0].mxu0
  %v12233 = vpop.f32.mrb[0].mxu0
  %v12234 = vadd.f32 %v11945, %v12233
  %v12235 = vpop.f32.mrb[0].mxu0
  %12236 = vmatprep.mubr.bf16.mxu0 0
  %12237 = vmatmul.mubr.bf16.gmra.mrb[0].mxu0 %v11056
  %v12238 = vpop.f32.mrb[0].mxu0
  %v12239 = vadd.f32 %v11950, %v12238
  %v12240 = vpop.f32.mrb[0].mxu0
  %v12241 = vpop.f32.mrb[0].mxu0
  %v12242 = vadd.f32 %v11953, %v12241
  %v12243 = vpop.f32.mrb[0].mxu0
  %12244 = vmatprep.mubr.bf16.mxu0 0
  %12245 = vmatmul.mubr.bf16.gmra.mrb[0].mxu0 %v11059
  %v12246 = vpop.f32.mrb[0].mxu0
  %v12247 = vadd.f32 %v11958, %v12246
  %v12248 = vpop.f32.mrb[0].mxu0
  %v12249 = vpop.f32.mrb[0].mxu0
  %v12250 = vadd.f32 %v11961, %v12249
  %v12251 = vpop.f32.mrb[0].mxu0
  %12252 = vmatprep.mubr.bf16.mxu0 0
  %12253 = vmatmul.mubr.bf16.gmra.mrb[0].mxu0 %v11062
  %v12254 = vpop.f32.mrb[0].mxu0
  %v12255 = vadd.f32 %v11966, %v12254
  %v12256 = vpop.f32.mrb[0].mxu0
  %v12257 = vpop.f32.mrb[0].mxu0
  %v12258 = vadd.f32 %v11969, %v12257
  %v12259 = vpop.f32.mrb[0].mxu0
  %12260 = vmatprep.mubr.bf16.mxu0 0
  %12261 = vmatmul.mubr.bf16.gmra.mrb[0].mxu0 %v11065
  %v12262 = vpop.f32.mrb[0].mxu0
  %v12263 = vadd.f32 %v11974, %v12262
  %v12264 = vpop.f32.mrb[0].mxu0
  %v12265 = vpop.f32.mrb[0].mxu0
  %v12266 = vadd.f32 %v11977, %v12265
  %v12267 = vpop.f32.mrb[0].mxu0
  %12268 = vmatprep.mubr.bf16.mxu0 0
  %12269 = vmatmul.mubr.bf16.gmra.mrb[0].mxu0 %v11068
  %v12270 = vpop.f32.mrb[0].mxu0
  %v12271 = vadd.f32 %v11982, %v12270
  %v12272 = vpop.f32.mrb[0].mxu0
  %v12273 = vpop.f32.mrb[0].mxu0
  %v12274 = vadd.f32 %v11985, %v12273
  %v12275 = vpop.f32.mrb[0].mxu0
  %12276 = vmatprep.mubr.bf16.mxu0 0
  %12277 = vmatmul.mubr.bf16.gmra.mrb[0].mxu0 %v11071
  %v12278 = vpop.f32.mrb[0].mxu0
  %v12279 = vadd.f32 %v11990, %v12278
  %v12280 = vpop.f32.mrb[0].mxu0
  %v12281 = vpop.f32.mrb[0].mxu0
  %v12282 = vadd.f32 %v11993, %v12281
  %v12283 = vpop.f32.mrb[0].mxu0
  %12284 = vmatprep.mubr.bf16.mxu0 0
  %12285 = vmatmul.mubr.bf16.gmra.mrb[0].mxu0 %v11074
  %v12286 = vpop.f32.mrb[0].mxu0
  %v12287 = vadd.f32 %v11998, %v12286
  %v12288 = vpop.f32.mrb[0].mxu0
  %v12289 = vpop.f32.mrb[0].mxu0
  %v12290 = vadd.f32 %v12001, %v12289
  %v12291 = vpop.f32.mrb[0].mxu0
  %12292 = vmatprep.mubr.bf16.mxu0 0
  %12293 = vmatmul.mubr.bf16.gmra.mrb[0].mxu0 %v11077
  %v12294 = vpop.f32.mrb[0].mxu0
  %v12295 = vadd.f32 %v12006, %v12294
  %v12296 = vpop.f32.mrb[0].mxu0
  %v12297 = vpop.f32.mrb[0].mxu0
  %v12298 = vadd.f32 %v12009, %v12297
  %v12299 = vpop.f32.mrb[0].mxu0
  %12300 = vmatprep.mubr.bf16.mxu0 0
  %12301 = vmatmul.mubr.bf16.gmra.mrb[0].mxu0 %v11080
  %v12302 = vpop.f32.mrb[0].mxu0
  %v12303 = vadd.f32 %v12014, %v12302
  %v12304 = vpop.f32.mrb[0].mxu0
  %v12305 = vpop.f32.mrb[0].mxu0
  %v12306 = vadd.f32 %v12017, %v12305
  %v12307 = vpop.f32.mrb[0].mxu0
  %12308 = vmatprep.mubr.bf16.mxu0 0
  %12309 = vmatmul.mubr.bf16.gmra.mrb[0].mxu0 %v11083
  %v12310 = vpop.f32.mrb[0].mxu0
  %v12311 = vadd.f32 %v12022, %v12310
  %v12312 = vpop.f32.mrb[0].mxu0
  %v12313 = vpop.f32.mrb[0].mxu0
  %v12314 = vadd.f32 %v12025, %v12313
  %v12315 = vpop.f32.mrb[0].mxu0
  %12316 = vmatprep.mubr.bf16.mxu0 0
  %12317 = vmatmul.mubr.bf16.gmra.mrb[0].mxu0 %v11086
  %v12318 = vpop.f32.mrb[0].mxu0
  %v12319 = vadd.f32 %v12030, %v12318
  %v12320 = vpop.f32.mrb[0].mxu0
  %v12321 = vpop.f32.mrb[0].mxu0
  %v12322 = vadd.f32 %v12033, %v12321
  %v12323 = vpop.f32.mrb[0].mxu0
  %12324 = vmatprep.mubr.bf16.mxu0 0
  %12325 = vmatmul.mubr.bf16.gmra.mrb[0].mxu0 %v11089
  %v12326 = vpop.f32.mrb[0].mxu0
  %v12327 = vadd.f32 %v12038, %v12326
  %v12328 = vpop.f32.mrb[0].mxu0
  %v12329 = vpop.f32.mrb[0].mxu0
  %v12330 = vadd.f32 %v12041, %v12329
  %v12331 = vpop.f32.mrb[0].mxu0
  %12332 = vmatprep.mubr.bf16.mxu0 0
  %12333 = vmatmul.mubr.bf16.gmra.mrb[0].mxu0 %v11092
  %v12334 = vpop.f32.mrb[0].mxu0
  %v12335 = vadd.f32 %v12046, %v12334
  %v12336 = vpop.f32.mrb[0].mxu0
  %v12337 = vpop.f32.mrb[0].mxu0
  %v12338 = vadd.f32 %v12049, %v12337
  %v12339 = vpop.f32.mrb[0].mxu0
  %12340 = vmatprep.mubr.bf16.mxu0 0
  %12341 = vmatmul.mubr.bf16.gmra.mrb[0].mxu0 %v11095
  %v12342 = vpop.f32.mrb[0].mxu0
  %v12343 = vadd.f32 %v12054, %v12342
  %v12344 = vpop.f32.mrb[0].mxu0
  %v12345 = vpop.f32.mrb[0].mxu0
  %v12346 = vadd.f32 %v12057, %v12345
  %v12347 = vpop.f32.mrb[0].mxu0
  %12348 = vmatprep.mubr.bf16.mxu0 0
  %12349 = vmatmul.mubr.bf16.gmra.mrb[0].mxu0 %v11098
  %v12350 = vpop.f32.mrb[0].mxu0
  %v12351 = vadd.f32 %v12062, %v12350
  %v12352 = vpop.f32.mrb[0].mxu0
  %v12353 = vpop.f32.mrb[0].mxu0
  %v12354 = vadd.f32 %v12065, %v12353
  %v12355 = vpop.f32.mrb[0].mxu0
  %12356 = vmatprep.mubr.bf16.mxu0 0
  %12357 = vmatmul.mubr.bf16.gmra.mrb[0].mxu0 %v11101
  %v12358 = vpop.f32.mrb[0].mxu0
  %v12359 = vadd.f32 %v12070, %v12358
  %v12360 = vpop.f32.mrb[0].mxu0
  %v12361 = vpop.f32.mrb[0].mxu0
  %v12362 = vadd.f32 %v12073, %v12361
  %v12363 = vpop.f32.mrb[0].mxu0
  %12364 = vmatprep.mubr.bf16.mxu0 0
  %12365 = vmatmul.mubr.bf16.gmra.mrb[0].mxu0 %v11104
  %v12366 = vpop.f32.mrb[0].mxu0
  %v12367 = vadd.f32 %v12078, %v12366
  %v12368 = vpop.f32.mrb[0].mxu0
  %v12369 = vpop.f32.mrb[0].mxu0
  %v12370 = vadd.f32 %v12081, %v12369
  %v12371 = vpop.f32.mrb[0].mxu0
  %12372 = vmatprep.mubr.bf16.mxu0 0
  %12373 = vmatmul.mubr.bf16.gmra.mrb[0].mxu0 %v11107
  %v12374 = vpop.f32.mrb[0].mxu0
  %v12375 = vadd.f32 %v12086, %v12374
  %v12376 = vpop.f32.mrb[0].mxu0
  %v12377 = vpop.f32.mrb[0].mxu0
  %v12378 = vadd.f32 %v12089, %v12377
  %v12379 = vpop.f32.mrb[0].mxu0
  %12380 = vmatprep.mubr.bf16.mxu0 0
  %12381 = vmatmul.mubr.bf16.gmra.mrb[0].mxu0 %v11110
  %v12382 = vpop.f32.mrb[0].mxu0
  %v12383 = vadd.f32 %v12094, %v12382
  %v12384 = vpop.f32.mrb[0].mxu0
  %v12385 = vpop.f32.mrb[0].mxu0
  %v12386 = vadd.f32 %v12097, %v12385
  %v12387 = vpop.f32.mrb[0].mxu0
  %12388 = vmatprep.mubr.bf16.mxu0 0
  %12389 = vmatmul.mubr.bf16.gmra.mrb[0].mxu0 %v11113
  %v12390 = vpop.f32.mrb[0].mxu0
  %v12391 = vadd.f32 %v12102, %v12390
  %v12392 = vpop.f32.mrb[0].mxu0
  %v12393 = vpop.f32.mrb[0].mxu0
  %v12394 = vadd.f32 %v12105, %v12393
  %v12395 = vpop.f32.mrb[0].mxu0
  %12396 = vmatprep.mubr.bf16.mxu0 0
  %12397 = vmatmul.mubr.bf16.gmra.mrb[0].mxu0 %v11116
  %v12398 = vpop.f32.mrb[0].mxu0
  %v12399 = vadd.f32 %v12110, %v12398
  %v12400 = vpop.f32.mrb[0].mxu0
  %v12401 = vpop.f32.mrb[0].mxu0
  %v12402 = vadd.f32 %v12113, %v12401
  %v12403 = vpop.f32.mrb[0].mxu0
  %12404 = vmatprep.mubr.bf16.mxu0 0
  %12405 = vmatmul.mubr.bf16.gmra.mrb[0].mxu0 %v11119
  %v12406 = vpop.f32.mrb[0].mxu0
  %v12407 = vadd.f32 %v12118, %v12406
  %v12408 = vpop.f32.mrb[0].mxu0
  %v12409 = vpop.f32.mrb[0].mxu0
  %v12410 = vadd.f32 %v12121, %v12409
  %v12411 = vpop.f32.mrb[0].mxu0
  %12412 = vmatprep.mubr.bf16.mxu0 0
  %12413 = vmatmul.mubr.bf16.gmra.mrb[0].mxu0 %v11122
  %v12414 = vpop.f32.mrb[0].mxu0
  %v12415 = vadd.f32 %v12126, %v12414
  %v12416 = vpop.f32.mrb[0].mxu0
  %v12417 = vpop.f32.mrb[0].mxu0
  %v12418 = vadd.f32 %v12129, %v12417
  %v12419 = vpop.f32.mrb[0].mxu0
  %12420 = vmatprep.mubr.bf16.mxu0 0
  %12421 = vmatmul.mubr.bf16.gmra.mrb[0].mxu0 %v11125
  %v12422 = vpop.f32.mrb[0].mxu0
  %v12423 = vadd.f32 %v12134, %v12422
  %v12424 = vpop.f32.mrb[0].mxu0
  %v12425 = vpop.f32.mrb[0].mxu0
  %v12426 = vadd.f32 %v12137, %v12425
  %v12427 = vpop.f32.mrb[0].mxu0
  %12428 = vmatprep.mubr.bf16.mxu0 0
  %12429 = vmatmul.mubr.bf16.gmra.mrb[0].mxu0 %v11128
  %v12430 = vpop.f32.mrb[0].mxu0
  %v12431 = vadd.f32 %v12142, %v12430
  %v12432 = vpop.f32.mrb[0].mxu0
  %v12433 = vpop.f32.mrb[0].mxu0
  %v12434 = vadd.f32 %v12145, %v12433
  %v12435 = vpop.f32.mrb[0].mxu0
  %12436 = vdwg.mxu0
  %v12437 = vadd.f32 %v12183, 2.0
  %v12438 = vadd.f32 %v12186, 2.0
  %v12439 = vadd.f32 %v12191, 2.0
  %v12440 = vadd.f32 %v12194, 2.0
  %v12441 = vadd.f32 %v12199, 2.0
  %v12442 = vadd.f32 %v12202, 2.0
  %v12443 = vadd.f32 %v12207, 2.0
  %v12444 = vadd.f32 %v12210, 2.0
  %v12445 = vadd.f32 %v12215, 2.0
  %v12446 = vadd.f32 %v12218, 2.0
  %v12447 = vadd.f32 %v12223, 2.0
  %v12448 = vadd.f32 %v12226, 2.0
  %v12449 = vadd.f32 %v12231, 2.0
  %v12450 = vadd.f32 %v12234, 2.0
  %v12451 = vadd.f32 %v12239, 2.0
  %v12452 = vadd.f32 %v12242, 2.0
  %v12453 = vadd.f32 %v12247, 2.0
  %v12454 = vadd.f32 %v12250, 2.0
  %v12455 = vadd.f32 %v12255, 2.0
  %v12456 = vadd.f32 %v12258, 2.0
  %v12457 = vadd.f32 %v12263, 2.0
  %v12458 = vadd.f32 %v12266, 2.0
  %v12459 = vadd.f32 %v12271, 2.0
  %v12460 = vadd.f32 %v12274, 2.0
  %v12461 = vadd.f32 %v12279, 2.0
  %v12462 = vadd.f32 %v12282, 2.0
  %v12463 = vadd.f32 %v12287, 2.0
  %v12464 = vadd.f32 %v12290, 2.0
  %v12465 = vadd.f32 %v12295, 2.0
  %v12466 = vadd.f32 %v12298, 2.0
  %v12467 = vadd.f32 %v12303, 2.0
  %v12468 = vadd.f32 %v12306, 2.0
  %v12469 = vadd.f32 %v12311, 2.0
  %v12470 = vadd.f32 %v12314, 2.0
  %v12471 = vadd.f32 %v12319, 2.0
  %v12472 = vadd.f32 %v12322, 2.0
  %v12473 = vadd.f32 %v12327, 2.0
  %v12474 = vadd.f32 %v12330, 2.0
  %v12475 = vadd.f32 %v12335, 2.0
  %v12476 = vadd.f32 %v12338, 2.0
  %v12477 = vadd.f32 %v12343, 2.0
  %v12478 = vadd.f32 %v12346, 2.0
  %v12479 = vadd.f32 %v12351, 2.0
  %v12480 = vadd.f32 %v12354, 2.0
  %v12481 = vadd.f32 %v12359, 2.0
  %v12482 = vadd.f32 %v12362, 2.0
  %v12483 = vadd.f32 %v12367, 2.0
  %v12484 = vadd.f32 %v12370, 2.0
  %v12485 = vadd.f32 %v12375, 2.0
  %v12486 = vadd.f32 %v12378, 2.0
  %v12487 = vadd.f32 %v12383, 2.0
  %v12488 = vadd.f32 %v12386, 2.0
  %v12489 = vadd.f32 %v12391, 2.0
  %v12490 = vadd.f32 %v12394, 2.0
  %v12491 = vadd.f32 %v12399, 2.0
  %v12492 = vadd.f32 %v12402, 2.0
  %v12493 = vadd.f32 %v12407, 2.0
  %v12494 = vadd.f32 %v12410, 2.0
  %v12495 = vadd.f32 %v12415, 2.0
  %v12496 = vadd.f32 %v12418, 2.0
  %v12497 = vadd.f32 %v12423, 2.0
  %v12498 = vadd.f32 %v12426, 2.0
  %v12499 = vadd.f32 %v12431, 2.0
  %v12500 = vadd.f32 %v12434, 2.0
  %12501 = vxpose.xlu0.b32.start [1/16] %v11454, 128
  %12502 = vxpose.xlu0.b32.cont [2/16] %v11457, 128
  %12503 = vxpose.xlu0.b32.cont [3/16] %v11462, 128
  %12504 = vxpose.xlu0.b32.cont [4/16] %v11465, 128
  %12505 = vxpose.xlu0.b32.cont [5/16] %v11470, 128
  %12506 = vxpose.xlu0.b32.cont [6/16] %v11473, 128
  %12507 = vxpose.xlu0.b32.cont [7/16] %v11478, 128
  %12508 = vxpose.xlu0.b32.cont [8/16] %v11481, 128
  %12509 = vxpose.xlu0.b32.cont [9/16] %v11486, 128
  %12510 = vxpose.xlu0.b32.cont [10/16] %v11489, 128
  %12511 = vxpose.xlu0.b32.cont [11/16] %v11494, 128
  %12512 = vxpose.xlu0.b32.cont [12/16] %v11497, 128
  %12513 = vxpose.xlu0.b32.cont [13/16] %v11502, 128
  %12514 = vxpose.xlu0.b32.cont [14/16] %v11505, 128
  %12515 = vxpose.xlu0.b32.cont [15/16] %v11510, 128
  %12516 = vxpose.xlu0.b32.end [16/16] %v11513, 128
  %v12517 = vpop.trf.xlu0
  %v12518 = vpop.trf.xlu0
  %v12519 = vpop.trf.xlu0
  %v12520 = vpop.trf.xlu0
  %v12521 = vpop.trf.xlu0
  %v12522 = vpop.trf.xlu0
  %v12523 = vpop.trf.xlu0
  %v12524 = vpop.trf.xlu0
  %v12525 = vpop.trf.xlu0
  %v12526 = vpop.trf.xlu0
  %v12527 = vpop.trf.xlu0
  %v12528 = vpop.trf.xlu0
  %v12529 = vpop.trf.xlu0
  %v12530 = vpop.trf.xlu0
  %v12531 = vpop.trf.xlu0
  %v12532 = vpop.trf.xlu0
  %12533 = vxpose.xlu0.b32.start [1/16] %v11518, 128
  %12534 = vxpose.xlu0.b32.cont [2/16] %v11521, 128
  %12535 = vxpose.xlu0.b32.cont [3/16] %v11526, 128
  %12536 = vxpose.xlu0.b32.cont [4/16] %v11529, 128
  %12537 = vxpose.xlu0.b32.cont [5/16] %v11534, 128
  %12538 = vxpose.xlu0.b32.cont [6/16] %v11537, 128
  %12539 = vxpose.xlu0.b32.cont [7/16] %v11542, 128
  %12540 = vxpose.xlu0.b32.cont [8/16] %v11545, 128
  %12541 = vxpose.xlu0.b32.cont [9/16] %v11550, 128
  %12542 = vxpose.xlu0.b32.cont [10/16] %v11553, 128
  %12543 = vxpose.xlu0.b32.cont [11/16] %v11558, 128
  %12544 = vxpose.xlu0.b32.cont [12/16] %v11561, 128
  %12545 = vxpose.xlu0.b32.cont [13/16] %v11566, 128
  %12546 = vxpose.xlu0.b32.cont [14/16] %v11569, 128
  %12547 = vxpose.xlu0.b32.cont [15/16] %v11574, 128
  %12548 = vxpose.xlu0.b32.end [16/16] %v11577, 128
  %v12549 = vpop.trf.xlu0
  %v12550 = vpop.trf.xlu0
  %v12551 = vpop.trf.xlu0
  %v12552 = vpop.trf.xlu0
  %v12553 = vpop.trf.xlu0
  %v12554 = vpop.trf.xlu0
  %v12555 = vpop.trf.xlu0
  %v12556 = vpop.trf.xlu0
  %v12557 = vpop.trf.xlu0
  %v12558 = vpop.trf.xlu0
  %v12559 = vpop.trf.xlu0
  %v12560 = vpop.trf.xlu0
  %v12561 = vpop.trf.xlu0
  %v12562 = vpop.trf.xlu0
  %v12563 = vpop.trf.xlu0
  %v12564 = vpop.trf.xlu0
  %12565 = vxpose.xlu0.b32.start [1/16] %v12437, 128
  %12566 = vxpose.xlu0.b32.cont [2/16] %v12438, 128
  %12567 = vxpose.xlu0.b32.cont [3/16] %v12439, 128
  %12568 = vxpose.xlu0.b32.cont [4/16] %v12440, 128
  %12569 = vxpose.xlu0.b32.cont [5/16] %v12441, 128
  %12570 = vxpose.xlu0.b32.cont [6/16] %v12442, 128
  %12571 = vxpose.xlu0.b32.cont [7/16] %v12443, 128
  %12572 = vxpose.xlu0.b32.cont [8/16] %v12444, 128
  %12573 = vxpose.xlu0.b32.cont [9/16] %v12445, 128
  %12574 = vxpose.xlu0.b32.cont [10/16] %v12446, 128
  %12575 = vxpose.xlu0.b32.cont [11/16] %v12447, 128
  %12576 = vxpose.xlu0.b32.cont [12/16] %v12448, 128
  %12577 = vxpose.xlu0.b32.cont [13/16] %v12449, 128
  %12578 = vxpose.xlu0.b32.cont [14/16] %v12450, 128
  %12579 = vxpose.xlu0.b32.cont [15/16] %v12451, 128
  %12580 = vxpose.xlu0.b32.end [16/16] %v12452, 128
  %v12581 = vpop.trf.xlu0
  %v12582 = vpop.trf.xlu0
  %v12583 = vpop.trf.xlu0
  %v12584 = vpop.trf.xlu0
  %v12585 = vpop.trf.xlu0
  %v12586 = vpop.trf.xlu0
  %v12587 = vpop.trf.xlu0
  %v12588 = vpop.trf.xlu0
  %v12589 = vpop.trf.xlu0
  %v12590 = vpop.trf.xlu0
  %v12591 = vpop.trf.xlu0
  %v12592 = vpop.trf.xlu0
  %v12593 = vpop.trf.xlu0
  %v12594 = vpop.trf.xlu0
  %v12595 = vpop.trf.xlu0
  %v12596 = vpop.trf.xlu0
  %12597 = vxpose.xlu0.b32.start [1/16] %v12453, 128
  %12598 = vxpose.xlu0.b32.cont [2/16] %v12454, 128
  %12599 = vxpose.xlu0.b32.cont [3/16] %v12455, 128
  %12600 = vxpose.xlu0.b32.cont [4/16] %v12456, 128
  %12601 = vxpose.xlu0.b32.cont [5/16] %v12457, 128
  %12602 = vxpose.xlu0.b32.cont [6/16] %v12458, 128
  %12603 = vxpose.xlu0.b32.cont [7/16] %v12459, 128
  %12604 = vxpose.xlu0.b32.cont [8/16] %v12460, 128
  %12605 = vxpose.xlu0.b32.cont [9/16] %v12461, 128
  %12606 = vxpose.xlu0.b32.cont [10/16] %v12462, 128
  %12607 = vxpose.xlu0.b32.cont [11/16] %v12463, 128
  %12608 = vxpose.xlu0.b32.cont [12/16] %v12464, 128
  %12609 = vxpose.xlu0.b32.cont [13/16] %v12465, 128
  %12610 = vxpose.xlu0.b32.cont [14/16] %v12466, 128
  %12611 = vxpose.xlu0.b32.cont [15/16] %v12467, 128
  %12612 = vxpose.xlu0.b32.end [16/16] %v12468, 128
  %v12613 = vpop.trf.xlu0
  %v12614 = vpop.trf.xlu0
  %v12615 = vpop.trf.xlu0
  %v12616 = vpop.trf.xlu0
  %v12617 = vpop.trf.xlu0
  %v12618 = vpop.trf.xlu0
  %v12619 = vpop.trf.xlu0
  %v12620 = vpop.trf.xlu0
  %v12621 = vpop.trf.xlu0
  %v12622 = vpop.trf.xlu0
  %v12623 = vpop.trf.xlu0
  %v12624 = vpop.trf.xlu0
  %v12625 = vpop.trf.xlu0
  %v12626 = vpop.trf.xlu0
  %v12627 = vpop.trf.xlu0
  %v12628 = vpop.trf.xlu0
  %v12629 = vsub.f32 0.0, %v12581
  %v12630 = vsub.f32 0.0, %v12613
  %v12631 = vmul.f32 %v12629, 1.442695
  %v12632 = vpow.pop %v12631
  %v12633 = vmul.f32 %v12630, 1.442695
  %v12634 = vpow.pop %v12633
  %v12635 = vadd.f32 %v12632, 1.0
  %v12636 = vadd.f32 %v12634, 1.0
  %v12637 = vrcp.pop %v12635
  %v12638 = vmul.f32 1.0, %v12637
  %v12639 = vrcp.pop %v12636
  %v12640 = vmul.f32 1.0, %v12639
  %v12641 = vld [vmem:[%s0] sm:$0xf]
  %v12644 = vunpack.c.l.s4 1983009808
  %v12645 = vunpack.c.0.s8 %v12644
  %v12646 = vlaneseq
  %v12647 = vshrl.u32 %v12646, 7
  %v12648 = vsub.s32 %v12645, %v12647
  %v12649 = vrot.slane %v12641, %v12648
  %v12650 = vcombine.high %v12649, %v12649
  %v12653 = vmul.f32 %v12638, %v12649
  %v12654 = vmul.f32 %v12640, %v12650
  %v12655 = vadd.f32 %v12653, %v12517
  %v12656 = vadd.f32 %v12654, %v12549
  %v12659 = vcombine.low %v12655, %v12656
  %v12661 = vunpack.c.l.s4 1983009808
  %v12662 = vunpack.c.0.s8 %v12661
  %v12663 = vlaneseq
  %v12664 = vshrl.u32 %v12663, 7
  %v12665 = vsub.s32 %v12662, %v12664
  %v12666 = vrot.slane %v12659, %v12665
  %12668 = vst [vmem:[%s8] sm:$0xf] %v12666
  %v12669 = vlog2.pop %v12635
  %v12670 = vmul.f32 %v12669, 0.6931472
  %v12671 = vlog2.pop %v12636
  %v12672 = vmul.f32 %v12671, 0.6931472
  %v12673 = vsub.f32 0.0, %v12670
  %v12674 = vsub.f32 0.0, %v12672
  %vm12675 = vcmask 1041408
  %v12676 = vsel %vm12675, %v12673, 0.0
  %v12677 = vsel %vm12675, %v12674, 0.0
  %v12678 = vadd.f32 %v12676, %v12677
  %12679 = vadd.xlane.f32.xlu0 %v12678
  %v12680 = vpop.xlane.xlu0 %12679
  %v12681 = vrot.slane %v12680, 4
  %v12682 = vadd.f32 %v12680, %v12681
  %v12683 = vrot.slane %v12682, 2
  %v12684 = vadd.f32 %v12682, %v12683
  %v12685 = vrot.slane %v12684, 1
  %v12686 = vadd.f32 %v12684, %v12685
  %s12687 = vtos %v12686
  %v12688 = vstv %s12687
  %vm12689 = vcmask 0
  %12690 = vst.msk [vmem:[%s9] sm:$0x1] %vm12689, %v12688
  %12691 = vxpose.xlu0.b32.start [1/16] %v11582, 128
  %12692 = vxpose.xlu0.b32.cont [2/16] %v11585, 128
  %12693 = vxpose.xlu0.b32.cont [3/16] %v11590, 128
  %12694 = vxpose.xlu0.b32.cont [4/16] %v11593, 128
  %12695 = vxpose.xlu0.b32.cont [5/16] %v11598, 128
  %12696 = vxpose.xlu0.b32.cont [6/16] %v11601, 128
  %12697 = vxpose.xlu0.b32.cont [7/16] %v11606, 128
  %12698 = vxpose.xlu0.b32.cont [8/16] %v11609, 128
  %12699 = vxpose.xlu0.b32.cont [9/16] %v11614, 128
  %12700 = vxpose.xlu0.b32.cont [10/16] %v11617, 128
  %12701 = vxpose.xlu0.b32.cont [11/16] %v11622, 128
  %12702 = vxpose.xlu0.b32.cont [12/16] %v11625, 128
  %12703 = vxpose.xlu0.b32.cont [13/16] %v11630, 128
  %12704 = vxpose.xlu0.b32.cont [14/16] %v11633, 128
  %12705 = vxpose.xlu0.b32.cont [15/16] %v11638, 128
  %12706 = vxpose.xlu0.b32.end [16/16] %v11641, 128
  %v12707 = vpop.trf.xlu0
  %v12708 = vpop.trf.xlu0
  %v12709 = vpop.trf.xlu0
  %v12710 = vpop.trf.xlu0
  %v12711 = vpop.trf.xlu0
  %v12712 = vpop.trf.xlu0
  %v12713 = vpop.trf.xlu0
  %v12714 = vpop.trf.xlu0
  %v12715 = vpop.trf.xlu0
  %v12716 = vpop.trf.xlu0
  %v12717 = vpop.trf.xlu0
  %v12718 = vpop.trf.xlu0
  %v12719 = vpop.trf.xlu0
  %v12720 = vpop.trf.xlu0
  %v12721 = vpop.trf.xlu0
  %v12722 = vpop.trf.xlu0
  %12723 = vxpose.xlu0.b32.start [1/16] %v11646, 128
  %12724 = vxpose.xlu0.b32.cont [2/16] %v11649, 128
  %12725 = vxpose.xlu0.b32.cont [3/16] %v11654, 128
  %12726 = vxpose.xlu0.b32.cont [4/16] %v11657, 128
  %12727 = vxpose.xlu0.b32.cont [5/16] %v11662, 128
  %12728 = vxpose.xlu0.b32.cont [6/16] %v11665, 128
  %12729 = vxpose.xlu0.b32.cont [7/16] %v11670, 128
  %12730 = vxpose.xlu0.b32.cont [8/16] %v11673, 128
  %12731 = vxpose.xlu0.b32.cont [9/16] %v11678, 128
  %12732 = vxpose.xlu0.b32.cont [10/16] %v11681, 128
  %12733 = vxpose.xlu0.b32.cont [11/16] %v11686, 128
  %12734 = vxpose.xlu0.b32.cont [12/16] %v11689, 128
  %12735 = vxpose.xlu0.b32.cont [13/16] %v11694, 128
  %12736 = vxpose.xlu0.b32.cont [14/16] %v11697, 128
  %12737 = vxpose.xlu0.b32.cont [15/16] %v11702, 128
  %12738 = vxpose.xlu0.b32.end [16/16] %v11705, 128
  %v12739 = vpop.trf.xlu0
  %v12740 = vpop.trf.xlu0
  %v12741 = vpop.trf.xlu0
  %v12742 = vpop.trf.xlu0
  %v12743 = vpop.trf.xlu0
  %v12744 = vpop.trf.xlu0
  %v12745 = vpop.trf.xlu0
  %v12746 = vpop.trf.xlu0
  %v12747 = vpop.trf.xlu0
  %v12748 = vpop.trf.xlu0
  %v12749 = vpop.trf.xlu0
  %v12750 = vpop.trf.xlu0
  %v12751 = vpop.trf.xlu0
  %v12752 = vpop.trf.xlu0
  %v12753 = vpop.trf.xlu0
  %v12754 = vpop.trf.xlu0
  %12755 = vxpose.xlu0.b32.start [1/16] %v12469, 128
  %12756 = vxpose.xlu0.b32.cont [2/16] %v12470, 128
  %12757 = vxpose.xlu0.b32.cont [3/16] %v12471, 128
  %12758 = vxpose.xlu0.b32.cont [4/16] %v12472, 128
  %12759 = vxpose.xlu0.b32.cont [5/16] %v12473, 128
  %12760 = vxpose.xlu0.b32.cont [6/16] %v12474, 128
  %12761 = vxpose.xlu0.b32.cont [7/16] %v12475, 128
  %12762 = vxpose.xlu0.b32.cont [8/16] %v12476, 128
  %12763 = vxpose.xlu0.b32.cont [9/16] %v12477, 128
  %12764 = vxpose.xlu0.b32.cont [10/16] %v12478, 128
  %12765 = vxpose.xlu0.b32.cont [11/16] %v12479, 128
  %12766 = vxpose.xlu0.b32.cont [12/16] %v12480, 128
  %12767 = vxpose.xlu0.b32.cont [13/16] %v12481, 128
  %12768 = vxpose.xlu0.b32.cont [14/16] %v12482, 128
  %12769 = vxpose.xlu0.b32.cont [15/16] %v12483, 128
  %12770 = vxpose.xlu0.b32.end [16/16] %v12484, 128
  %v12771 = vpop.trf.xlu0
  %v12772 = vpop.trf.xlu0
  %v12773 = vpop.trf.xlu0
  %v12774 = vpop.trf.xlu0
  %v12775 = vpop.trf.xlu0
  %v12776 = vpop.trf.xlu0
  %v12777 = vpop.trf.xlu0
  %v12778 = vpop.trf.xlu0
  %v12779 = vpop.trf.xlu0
  %v12780 = vpop.trf.xlu0
  %v12781 = vpop.trf.xlu0
  %v12782 = vpop.trf.xlu0
  %v12783 = vpop.trf.xlu0
  %v12784 = vpop.trf.xlu0
  %v12785 = vpop.trf.xlu0
  %v12786 = vpop.trf.xlu0
  %12787 = vxpose.xlu0.b32.start [1/16] %v12485, 128
  %12788 = vxpose.xlu0.b32.cont [2/16] %v12486, 128
  %12789 = vxpose.xlu0.b32.cont [3/16] %v12487, 128
  %12790 = vxpose.xlu0.b32.cont [4/16] %v12488, 128
  %12791 = vxpose.xlu0.b32.cont [5/16] %v12489, 128
  %12792 = vxpose.xlu0.b32.cont [6/16] %v12490, 128
  %12793 = vxpose.xlu0.b32.cont [7/16] %v12491, 128
  %12794 = vxpose.xlu0.b32.cont [8/16] %v12492, 128
  %12795 = vxpose.xlu0.b32.cont [9/16] %v12493, 128
  %12796 = vxpose.xlu0.b32.cont [10/16] %v12494, 128
  %12797 = vxpose.xlu0.b32.cont [11/16] %v12495, 128
  %12798 = vxpose.xlu0.b32.cont [12/16] %v12496, 128
  %12799 = vxpose.xlu0.b32.cont [13/16] %v12497, 128
  %12800 = vxpose.xlu0.b32.cont [14/16] %v12498, 128
  %12801 = vxpose.xlu0.b32.cont [15/16] %v12499, 128
  %12802 = vxpose.xlu0.b32.end [16/16] %v12500, 128
  %v12803 = vpop.trf.xlu0
  %v12804 = vpop.trf.xlu0
  %v12805 = vpop.trf.xlu0
  %v12806 = vpop.trf.xlu0
  %v12807 = vpop.trf.xlu0
  %v12808 = vpop.trf.xlu0
  %v12809 = vpop.trf.xlu0
  %v12810 = vpop.trf.xlu0
  %v12811 = vpop.trf.xlu0
  %v12812 = vpop.trf.xlu0
  %v12813 = vpop.trf.xlu0
  %v12814 = vpop.trf.xlu0
  %v12815 = vpop.trf.xlu0
  %v12816 = vpop.trf.xlu0
  %v12817 = vpop.trf.xlu0
  %v12818 = vpop.trf.xlu0
  %v12819 = vsub.f32 0.0, %v12771
  %v12820 = vsub.f32 0.0, %v12803
  %v12821 = vmul.f32 %v12819, 1.442695
  %v12822 = vpow.pop %v12821
  %v12823 = vmul.f32 %v12820, 1.442695
  %v12824 = vpow.pop %v12823
  %v12825 = vadd.f32 %v12822, 1.0
  %v12826 = vadd.f32 %v12824, 1.0
  %v12827 = vrcp.pop %v12825
  %v12828 = vmul.f32 1.0, %v12827
  %v12829 = vrcp.pop %v12826
  %v12830 = vmul.f32 1.0, %v12829
  %s12831 = scalar_lea.vmem %s0, 4
  %v12832 = vld [vmem:[%s12831] sm:$0xf]
  %v12835 = vunpack.c.l.s4 1983009808
  %v12836 = vunpack.c.0.s8 %v12835
  %v12837 = vlaneseq
  %v12838 = vshrl.u32 %v12837, 7
  %v12839 = vsub.s32 %v12836, %v12838
  %v12840 = vrot.slane %v12832, %v12839
  %v12841 = vcombine.high %v12840, %v12840
  %v12844 = vmul.f32 %v12828, %v12840
  %v12845 = vmul.f32 %v12830, %v12841
  %v12846 = vadd.f32 %v12844, %v12707
  %v12847 = vadd.f32 %v12845, %v12739
  %v12850 = vcombine.low %v12846, %v12847
  %v12852 = vunpack.c.l.s4 1983009808
  %v12853 = vunpack.c.0.s8 %v12852
  %v12854 = vlaneseq
  %v12855 = vshrl.u32 %v12854, 7
  %v12856 = vsub.s32 %v12853, %v12855
  %v12857 = vrot.slane %v12850, %v12856
  %s12859 = scalar_lea.vmem %s8, 4
  %12860 = vst [vmem:[%s12859] sm:$0xf] %v12857
  %v12861 = vlog2.pop %v12825
  %v12862 = vmul.f32 %v12861, 0.6931472
  %v12863 = vlog2.pop %v12826
  %v12864 = vmul.f32 %v12863, 0.6931472
  %v12865 = vsub.f32 0.0, %v12862
  %v12866 = vsub.f32 0.0, %v12864
  %v12867 = vsel %vm12675, %v12865, 0.0
  %v12868 = vsel %vm12675, %v12866, 0.0
  %v12869 = vadd.f32 %v12867, %v12868
  %12870 = vadd.xlane.f32.xlu0 %v12869
  %v12871 = vpop.xlane.xlu0 %12870
  %v12872 = vrot.slane %v12871, 4
  %v12873 = vadd.f32 %v12871, %v12872
  %v12874 = vrot.slane %v12873, 2
  %v12875 = vadd.f32 %v12873, %v12874
  %v12876 = vrot.slane %v12875, 1
  %v12877 = vadd.f32 %v12875, %v12876
  %s12878 = vtos %v12877
  %v12879 = vstv %s12878
  %12880 = vst.msk [vmem:[%s9 + $0x1] sm:$0x1] %vm12689, %v12879
  // Predicated region
  $region34: #{affine_coupling_forward.1} parent=0 // pred_check
    _
  $region35: #{affine_coupling_forward.1} parent=0 // pred_check_branch
    %12882 = sbr.rel (0) target = $region37
  $region36: #{affine_coupling_forward.1} parent=0 // pred_region
    _
  $region37: #{affine_coupling_forward.1} parent=0 // pred_fallthru
    _
  // Predicated region
  $region38: #{affine_coupling_forward.1} parent=0 // pred_check
    _
  $region39: #{affine_coupling_forward.1} parent=0 // pred_check_branch
    %12884 = sbr.rel (0) target = $region41
  $region40: #{affine_coupling_forward.1} parent=0 // pred_region
    _
  $region41: #{affine_coupling_forward.1} parent=0 // pred_fallthru
    _
  // Predicated region
  $region42: #{affine_coupling_forward.1} parent=0 // pred_check
    _
  $region43: #{affine_coupling_forward.1} parent=0 // pred_check_branch
    %12886 = sbr.rel (0) target = $region45
  $region44: #{affine_coupling_forward.1} parent=0 // pred_region
    _
  $region45: #{affine_coupling_forward.1} parent=0 // pred_fallthru
    _
  // Predicated region
  $region46: #{affine_coupling_forward.1} parent=0 // pred_check
    _
  $region47: #{affine_coupling_forward.1} parent=0 // pred_check_branch
    %12888 = sbr.rel (0) target = $region49
  $region48: #{affine_coupling_forward.1} parent=0 // pred_region
    _
  $region49: #{affine_coupling_forward.1} parent=0 // pred_fallthru
    _

</llo_original>
